<compile_context>
chip_gen: v7x
topology: tpu7x:2x2x1
jax: 0.10.0
libtpu: 0.0.40
codegen_flags: <defaults>
</compile_context>

<pallas_src>
import functools

import jax
import jax.numpy as jnp
from jax.experimental import pallas as pl
from jax.experimental.pallas import tpu as pltpu


def _conv3x3_taps(src_ref, w_ref, bias, *, H, W, Cout, compute_dtype):
    """'same' 3x3 conv on a zero-padded VMEM ref via 9 shifted MXU matmuls.

    src_ref: (H+2, W+2, Cin) zero-padded activation scratch (VMEM)
    w_ref:   (9, Cin, Cout) weight slab (tap-major)
    bias:    (Cout,) value
    returns: (H*W, Cout) float32 accumulator
    """
    Cin = src_ref.shape[-1]
    acc = jnp.zeros((H * W, Cout), jnp.float32)
    for ky in range(3):
        for kx in range(3):
            t = ky * 3 + kx
            patch = src_ref[ky:ky + H, kx:kx + W, :].reshape(H * W, Cin)
            acc = acc + jnp.dot(patch.astype(compute_dtype),
                                w_ref[t].astype(compute_dtype),
                                preferred_element_type=jnp.float32)
    return acc + bias[None, :]


def _noise_adder_kernel(x_ref, w1_ref, b1_ref, w2_ref, b2_ref, o_ref,
                        xpad_ref, hpad_ref, *, H, W, compute_dtype):
    # x_ref:  (1, H, W, Cin)        input tile for this batch element
    # w1_ref: (9, Cin, Chid)        conv1 weights (tap-major slab)
    # b1_ref: (1, Chid)
    # w2_ref: (9, Chid, Cout)       conv2 weights
    # b2_ref: (1, Cout)
    # o_ref:  (1, H, W, Cout)       output tile
    # xpad_ref: (H+2, W+2, Cin)  f32 VMEM scratch (zero halo for x)
    # hpad_ref: (H+2, W+2, Chid) f32 VMEM scratch (zero halo for hidden h)
    Chid = b1_ref.shape[-1]
    Cout = o_ref.shape[-1]

    # ---- conv1 + tanh: build zero halo in VMEM, 9 tap matmuls, fused tanh.
    xpad_ref[...] = jnp.zeros_like(xpad_ref)
    xpad_ref[1:H + 1, 1:W + 1, :] = x_ref[0]
    h = jnp.tanh(_conv3x3_taps(xpad_ref, w1_ref, b1_ref[0],
                               H=H, W=W, Cout=Chid,
                               compute_dtype=compute_dtype))      # (H*W, Chid)

    # ---- conv2: hidden activation stays resident in VMEM (no HBM trip).
    hpad_ref[...] = jnp.zeros_like(hpad_ref)
    hpad_ref[1:H + 1, 1:W + 1, :] = h.reshape(H, W, Chid)
    y = _conv3x3_taps(hpad_ref, w2_ref, b2_ref[0],
                      H=H, W=W, Cout=Cout,
                      compute_dtype=compute_dtype)                # (H*W, Cout)
    o_ref[0] = y.reshape(H, W, Cout).astype(o_ref.dtype)


def noise_adder_forward(x, params, *, compute_dtype=jnp.float32):
    """Fused NoiseAdder forward: tanh(conv3x3(x)) -> conv3x3, one pallas_call.

    x: (N, H, W, num_bands) float32 -> (N, H, W, num_bands) float32
    Set compute_dtype=jnp.bfloat16 on v6e/v7x for MXU-native matmuls
    (f32 accumulation is kept either way).
    """
    N, H, W, Cin = x.shape
    Chid = params["b1"].shape[0]
    Cout = params["b2"].shape[0]

    # One-time weight re-layout to matmul-friendly (tap, Cin, Cout) slabs.
    w1 = params["w1"].reshape(9, Cin, Chid)
    w2 = params["w2"].reshape(9, Chid, Cout)
    b1 = params["b1"].reshape(1, Chid)
    b2 = params["b2"].reshape(1, Cout)

    kernel = functools.partial(_noise_adder_kernel, H=H, W=W,
                               compute_dtype=compute_dtype)
    return pl.pallas_call(
        kernel,
        out_shape=jax.ShapeDtypeStruct((N, H, W, Cout), jnp.float32),
        grid_spec=pltpu.PrefetchScalarGridSpec(
            num_scalar_prefetch=0,
            grid=(N,),
            in_specs=[
                pl.BlockSpec((1, H, W, Cin), lambda n: (n, 0, 0, 0)),
                pl.BlockSpec((9, Cin, Chid), lambda n: (0, 0, 0)),
                pl.BlockSpec((1, Chid), lambda n: (0, 0)),
                pl.BlockSpec((9, Chid, Cout), lambda n: (0, 0, 0)),
                pl.BlockSpec((1, Cout), lambda n: (0, 0)),
            ],
            out_specs=pl.BlockSpec((1, H, W, Cout), lambda n: (n, 0, 0, 0)),
            scratch_shapes=[
                pltpu.VMEM((H + 2, W + 2, Cin), jnp.float32),   # x halo
                pltpu.VMEM((H + 2, W + 2, Chid), jnp.float32),  # hidden halo
            ],
        ),
        compiler_params=pltpu.CompilerParams(
            dimension_semantics=("parallel",)),
    )(x, w1, b1, w2, b2)


def init_params(num_bands, hidden=64, seed=0):
    key = jax.random.PRNGKey(seed)
    k1, k2, k3, k4 = jax.random.split(key, 4)
    s1 = 1.0 / jnp.sqrt(9.0 * num_bands)
    s2 = 1.0 / jnp.sqrt(9.0 * hidden)
    return {
        "w1": jax.random.uniform(k1, (3, 3, num_bands, hidden), jnp.float32, -s1, s1),
        "b1": jax.random.uniform(k2, (hidden,), jnp.float32, -s1, s1),
        "w2": jax.random.uniform(k3, (3, 3, hidden, num_bands), jnp.float32, -s2, s2),
        "b2": jax.random.uniform(k4, (num_bands,), jnp.float32, -s2, s2),
    }


def _ref_forward(x, params):
    def conv(x, w, b):
        y = jax.lax.conv_general_dilated(
            x, w, window_strides=(1, 1), padding="SAME",
            dimension_numbers=("NHWC", "HWIO", "NHWC"))
        return y + b
    h = jnp.tanh(conv(x, params["w1"], params["b1"]))
    return conv(h, params["w2"], params["b2"])


if __name__ == "__main__":
    N, H, W, num_bands = 2, 16, 16, 4
    params = init_params(num_bands)

    key = jax.random.PRNGKey(0)
    # (equivalent to an NCHW input of shape [2, 4, 16, 16] in PyTorch)
    x = jax.random.normal(key, (N, H, W, num_bands), jnp.float32)

    out = noise_adder_forward(x, params)
    out = jax.block_until_ready(out)

    ref = _ref_forward(x, params)
    assert out.shape == (N, H, W, num_bands)
    assert jnp.allclose(out, ref, rtol=1e-4, atol=1e-4), "mismatch vs reference conv"

    print("KERNEL_OK")
</pallas_src>

<mosaic_0001>
module attributes {stable_mosaic.version = 11 : i64} {
  func.func @_noise_adder_kernel(%arg0: i32, %arg1: memref<1x16x16x4xf32, #tpu.memory_space<vmem>>, %arg2: memref<9x4x64xf32, #tpu.memory_space<vmem>>, %arg3: memref<1x64xf32, #tpu.memory_space<vmem>>, %arg4: memref<9x64x4xf32, #tpu.memory_space<vmem>>, %arg5: memref<1x4xf32, #tpu.memory_space<vmem>>, %arg6: memref<1x16x16x4xf32, #tpu.memory_space<vmem>>, %arg7: memref<18x18x4xf32, #tpu.memory_space<vmem>>, %arg8: memref<18x18x64xf32, #tpu.memory_space<vmem>>) attributes {dimension_semantics = [#tpu.dimension_semantics<parallel>], iteration_bounds = array<i64: 2>, scalar_prefetch = 0 : i64, scratch_operands = 2 : i64, tpu.core_type = #tpu.core_type<tc>, window_params = [{transform_indices = @transform_0, window_bounds = array<i64: 1, 16, 16, 4>}, {pipeline_mode = #tpu.pipeline_mode<synchronous>, transform_indices = @transform_1, window_bounds = array<i64: 9, 4, 64>}, {pipeline_mode = #tpu.pipeline_mode<synchronous>, transform_indices = @transform_2, window_bounds = array<i64: 1, 64>}, {pipeline_mode = #tpu.pipeline_mode<synchronous>, transform_indices = @transform_3, window_bounds = array<i64: 9, 64, 4>}, {pipeline_mode = #tpu.pipeline_mode<synchronous>, transform_indices = @transform_4, window_bounds = array<i64: 1, 4>}, {transform_indices = @transform_5, window_bounds = array<i64: 1, 16, 16, 4>}]} {
    %cst = arith.constant 0.000000e+00 : f32
    %0 = vector.broadcast %cst : f32 to vector<18x18x4xf32>
    %c0 = arith.constant 0 : index
    %c0_0 = arith.constant 0 : index
    %c0_1 = arith.constant 0 : index
    %1 = vector.load %arg7[%c0, %c0_0, %c0_1] : memref<18x18x4xf32, #tpu.memory_space<vmem>>, vector<18x18x4xf32>
    tpu.vector_store %arg7[%c0, %c0_0, %c0_1], %0 {strides = array<i32>} : memref<18x18x4xf32, #tpu.memory_space<vmem>>, vector<18x18x4xf32>,
    %c0_2 = arith.constant 0 : index
    %c0_3 = arith.constant 0 : index
    %c0_4 = arith.constant 0 : index
    %c0_5 = arith.constant 0 : index
    %2 = vector.load %arg1[%c0_2, %c0_3, %c0_4, %c0_5] : memref<1x16x16x4xf32, #tpu.memory_space<vmem>>, vector<1x16x16x4xf32>
    %3 = vector.shape_cast %2 : vector<1x16x16x4xf32> to vector<16x16x4xf32>
    %c1 = arith.constant 1 : index
    %c1_6 = arith.constant 1 : index
    %c0_7 = arith.constant 0 : index
    %4 = vector.load %arg7[%c1, %c1_6, %c0_7] : memref<18x18x4xf32, #tpu.memory_space<vmem>>, vector<16x16x4xf32>
    tpu.vector_store %arg7[%c1, %c1_6, %c0_7], %3 {strides = array<i32>} : memref<18x18x4xf32, #tpu.memory_space<vmem>>, vector<16x16x4xf32>,
    %c0_8 = arith.constant 0 : index
    %c0_9 = arith.constant 0 : index
    %5 = vector.load %arg3[%c0_8, %c0_9] : memref<1x64xf32, #tpu.memory_space<vmem>>, vector<1x64xf32>
    %6 = vector.shape_cast %5 : vector<1x64xf32> to vector<64xf32>
    %cst_10 = arith.constant 0.000000e+00 : f32
    %7 = vector.broadcast %cst_10 : f32 to vector<256x64xf32>
    %c0_11 = arith.constant 0 : index
    %c0_12 = arith.constant 0 : index
    %c0_13 = arith.constant 0 : index
    %8 = vector.load %arg7[%c0_11, %c0_12, %c0_13] : memref<18x18x4xf32, #tpu.memory_space<vmem>>, vector<16x16x4xf32>
    %9 = vector.shape_cast %8 : vector<16x16x4xf32> to vector<256x4xf32>
    %c0_14 = arith.constant 0 : index
    %c0_15 = arith.constant 0 : index
    %c0_16 = arith.constant 0 : index
    %10 = vector.load %arg2[%c0_14, %c0_15, %c0_16] : memref<9x4x64xf32, #tpu.memory_space<vmem>>, vector<1x4x64xf32>
    %11 = vector.shape_cast %10 : vector<1x4x64xf32> to vector<4x64xf32>
    %cst_17 = arith.constant dense<0.000000e+00> : vector<256x64xf32>
    %12 = tpu.matmul %9, %11, %cst_17 {dimension_numbers = #tpu.dot_dimension_numbers<[1], [0], [0], [1], [0, 0, 1, 1], [], []>} : vector<256x4xf32>, vector<4x64xf32>, vector<256x64xf32> -> vector<256x64xf32>
    %13 = arith.addf %7, %12 : vector<256x64xf32>
    %c0_18 = arith.constant 0 : index
    %c1_19 = arith.constant 1 : index
    %c0_20 = arith.constant 0 : index
    %14 = vector.load %arg7[%c0_18, %c1_19, %c0_20] : memref<18x18x4xf32, #tpu.memory_space<vmem>>, vector<16x16x4xf32>
    %15 = vector.shape_cast %14 : vector<16x16x4xf32> to vector<256x4xf32>
    %c1_21 = arith.constant 1 : index
    %c0_22 = arith.constant 0 : index
    %c0_23 = arith.constant 0 : index
    %16 = vector.load %arg2[%c1_21, %c0_22, %c0_23] : memref<9x4x64xf32, #tpu.memory_space<vmem>>, vector<1x4x64xf32>
    %17 = vector.shape_cast %16 : vector<1x4x64xf32> to vector<4x64xf32>
    %cst_24 = arith.constant dense<0.000000e+00> : vector<256x64xf32>
    %18 = tpu.matmul %15, %17, %cst_24 {dimension_numbers = #tpu.dot_dimension_numbers<[1], [0], [0], [1], [0, 0, 1, 1], [], []>} : vector<256x4xf32>, vector<4x64xf32>, vector<256x64xf32> -> vector<256x64xf32>
    %19 = arith.addf %13, %18 : vector<256x64xf32>
    %c0_25 = arith.constant 0 : index
    %c2 = arith.constant 2 : index
    %c0_26 = arith.constant 0 : index
    %20 = vector.load %arg7[%c0_25, %c2, %c0_26] : memref<18x18x4xf32, #tpu.memory_space<vmem>>, vector<16x16x4xf32>
    %21 = vector.shape_cast %20 : vector<16x16x4xf32> to vector<256x4xf32>
    %c2_27 = arith.constant 2 : index
    %c0_28 = arith.constant 0 : index
    %c0_29 = arith.constant 0 : index
    %22 = vector.load %arg2[%c2_27, %c0_28, %c0_29] : memref<9x4x64xf32, #tpu.memory_space<vmem>>, vector<1x4x64xf32>
    %23 = vector.shape_cast %22 : vector<1x4x64xf32> to vector<4x64xf32>
    %cst_30 = arith.constant dense<0.000000e+00> : vector<256x64xf32>
    %24 = tpu.matmul %21, %23, %cst_30 {dimension_numbers = #tpu.dot_dimension_numbers<[1], [0], [0], [1], [0, 0, 1, 1], [], []>} : vector<256x4xf32>, vector<4x64xf32>, vector<256x64xf32> -> vector<256x64xf32>
    %25 = arith.addf %19, %24 : vector<256x64xf32>
    %c1_31 = arith.constant 1 : index
    %c0_32 = arith.constant 0 : index
    %c0_33 = arith.constant 0 : index
    %26 = vector.load %arg7[%c1_31, %c0_32, %c0_33] : memref<18x18x4xf32, #tpu.memory_space<vmem>>, vector<16x16x4xf32>
    %27 = vector.shape_cast %26 : vector<16x16x4xf32> to vector<256x4xf32>
    %c3 = arith.constant 3 : index
    %c0_34 = arith.constant 0 : index
    %c0_35 = arith.constant 0 : index
    %28 = vector.load %arg2[%c3, %c0_34, %c0_35] : memref<9x4x64xf32, #tpu.memory_space<vmem>>, vector<1x4x64xf32>
    %29 = vector.shape_cast %28 : vector<1x4x64xf32> to vector<4x64xf32>
    %cst_36 = arith.constant dense<0.000000e+00> : vector<256x64xf32>
    %30 = tpu.matmul %27, %29, %cst_36 {dimension_numbers = #tpu.dot_dimension_numbers<[1], [0], [0], [1], [0, 0, 1, 1], [], []>} : vector<256x4xf32>, vector<4x64xf32>, vector<256x64xf32> -> vector<256x64xf32>
    %31 = arith.addf %25, %30 : vector<256x64xf32>
    %c1_37 = arith.constant 1 : index
    %c1_38 = arith.constant 1 : index
    %c0_39 = arith.constant 0 : index
    %32 = vector.load %arg7[%c1_37, %c1_38, %c0_39] : memref<18x18x4xf32, #tpu.memory_space<vmem>>, vector<16x16x4xf32>
    %33 = vector.shape_cast %32 : vector<16x16x4xf32> to vector<256x4xf32>
    %c4 = arith.constant 4 : index
    %c0_40 = arith.constant 0 : index
    %c0_41 = arith.constant 0 : index
    %34 = vector.load %arg2[%c4, %c0_40, %c0_41] : memref<9x4x64xf32, #tpu.memory_space<vmem>>, vector<1x4x64xf32>
    %35 = vector.shape_cast %34 : vector<1x4x64xf32> to vector<4x64xf32>
    %cst_42 = arith.constant dense<0.000000e+00> : vector<256x64xf32>
    %36 = tpu.matmul %33, %35, %cst_42 {dimension_numbers = #tpu.dot_dimension_numbers<[1], [0], [0], [1], [0, 0, 1, 1], [], []>} : vector<256x4xf32>, vector<4x64xf32>, vector<256x64xf32> -> vector<256x64xf32>
    %37 = arith.addf %31, %36 : vector<256x64xf32>
    %c1_43 = arith.constant 1 : index
    %c2_44 = arith.constant 2 : index
    %c0_45 = arith.constant 0 : index
    %38 = vector.load %arg7[%c1_43, %c2_44, %c0_45] : memref<18x18x4xf32, #tpu.memory_space<vmem>>, vector<16x16x4xf32>
    %39 = vector.shape_cast %38 : vector<16x16x4xf32> to vector<256x4xf32>
    %c5 = arith.constant 5 : index
    %c0_46 = arith.constant 0 : index
    %c0_47 = arith.constant 0 : index
    %40 = vector.load %arg2[%c5, %c0_46, %c0_47] : memref<9x4x64xf32, #tpu.memory_space<vmem>>, vector<1x4x64xf32>
    %41 = vector.shape_cast %40 : vector<1x4x64xf32> to vector<4x64xf32>
    %cst_48 = arith.constant dense<0.000000e+00> : vector<256x64xf32>
    %42 = tpu.matmul %39, %41, %cst_48 {dimension_numbers = #tpu.dot_dimension_numbers<[1], [0], [0], [1], [0, 0, 1, 1], [], []>} : vector<256x4xf32>, vector<4x64xf32>, vector<256x64xf32> -> vector<256x64xf32>
    %43 = arith.addf %37, %42 : vector<256x64xf32>
    %c2_49 = arith.constant 2 : index
    %c0_50 = arith.constant 0 : index
    %c0_51 = arith.constant 0 : index
    %44 = vector.load %arg7[%c2_49, %c0_50, %c0_51] : memref<18x18x4xf32, #tpu.memory_space<vmem>>, vector<16x16x4xf32>
    %45 = vector.shape_cast %44 : vector<16x16x4xf32> to vector<256x4xf32>
    %c6 = arith.constant 6 : index
    %c0_52 = arith.constant 0 : index
    %c0_53 = arith.constant 0 : index
    %46 = vector.load %arg2[%c6, %c0_52, %c0_53] : memref<9x4x64xf32, #tpu.memory_space<vmem>>, vector<1x4x64xf32>
    %47 = vector.shape_cast %46 : vector<1x4x64xf32> to vector<4x64xf32>
    %cst_54 = arith.constant dense<0.000000e+00> : vector<256x64xf32>
    %48 = tpu.matmul %45, %47, %cst_54 {dimension_numbers = #tpu.dot_dimension_numbers<[1], [0], [0], [1], [0, 0, 1, 1], [], []>} : vector<256x4xf32>, vector<4x64xf32>, vector<256x64xf32> -> vector<256x64xf32>
    %49 = arith.addf %43, %48 : vector<256x64xf32>
    %c2_55 = arith.constant 2 : index
    %c1_56 = arith.constant 1 : index
    %c0_57 = arith.constant 0 : index
    %50 = vector.load %arg7[%c2_55, %c1_56, %c0_57] : memref<18x18x4xf32, #tpu.memory_space<vmem>>, vector<16x16x4xf32>
    %51 = vector.shape_cast %50 : vector<16x16x4xf32> to vector<256x4xf32>
    %c7 = arith.constant 7 : index
    %c0_58 = arith.constant 0 : index
    %c0_59 = arith.constant 0 : index
    %52 = vector.load %arg2[%c7, %c0_58, %c0_59] : memref<9x4x64xf32, #tpu.memory_space<vmem>>, vector<1x4x64xf32>
    %53 = vector.shape_cast %52 : vector<1x4x64xf32> to vector<4x64xf32>
    %cst_60 = arith.constant dense<0.000000e+00> : vector<256x64xf32>
    %54 = tpu.matmul %51, %53, %cst_60 {dimension_numbers = #tpu.dot_dimension_numbers<[1], [0], [0], [1], [0, 0, 1, 1], [], []>} : vector<256x4xf32>, vector<4x64xf32>, vector<256x64xf32> -> vector<256x64xf32>
    %55 = arith.addf %49, %54 : vector<256x64xf32>
    %c2_61 = arith.constant 2 : index
    %c2_62 = arith.constant 2 : index
    %c0_63 = arith.constant 0 : index
    %56 = vector.load %arg7[%c2_61, %c2_62, %c0_63] : memref<18x18x4xf32, #tpu.memory_space<vmem>>, vector<16x16x4xf32>
    %57 = vector.shape_cast %56 : vector<16x16x4xf32> to vector<256x4xf32>
    %c8 = arith.constant 8 : index
    %c0_64 = arith.constant 0 : index
    %c0_65 = arith.constant 0 : index
    %58 = vector.load %arg2[%c8, %c0_64, %c0_65] : memref<9x4x64xf32, #tpu.memory_space<vmem>>, vector<1x4x64xf32>
    %59 = vector.shape_cast %58 : vector<1x4x64xf32> to vector<4x64xf32>
    %cst_66 = arith.constant dense<0.000000e+00> : vector<256x64xf32>
    %60 = tpu.matmul %57, %59, %cst_66 {dimension_numbers = #tpu.dot_dimension_numbers<[1], [0], [0], [1], [0, 0, 1, 1], [], []>} : vector<256x4xf32>, vector<4x64xf32>, vector<256x64xf32> -> vector<256x64xf32>
    %61 = arith.addf %55, %60 : vector<256x64xf32>
    %62 = vector.shape_cast %6 : vector<64xf32> to vector<1x64xf32>
    %63 = vector.broadcast %62 : vector<1x64xf32> to vector<256x64xf32>
    %64 = arith.addf %61, %63 : vector<256x64xf32>
    %65 = math.tanh %64 : vector<256x64xf32>
    %cst_67 = arith.constant 0.000000e+00 : f32
    %66 = vector.broadcast %cst_67 : f32 to vector<18x18x64xf32>
    %c0_68 = arith.constant 0 : index
    %c0_69 = arith.constant 0 : index
    %c0_70 = arith.constant 0 : index
    %67 = vector.load %arg8[%c0_68, %c0_69, %c0_70] : memref<18x18x64xf32, #tpu.memory_space<vmem>>, vector<18x18x64xf32>
    tpu.vector_store %arg8[%c0_68, %c0_69, %c0_70], %66 {strides = array<i32>} : memref<18x18x64xf32, #tpu.memory_space<vmem>>, vector<18x18x64xf32>,
    %68 = vector.shape_cast %65 : vector<256x64xf32> to vector<16x16x64xf32>
    %c1_71 = arith.constant 1 : index
    %c1_72 = arith.constant 1 : index
    %c0_73 = arith.constant 0 : index
    %69 = vector.load %arg8[%c1_71, %c1_72, %c0_73] : memref<18x18x64xf32, #tpu.memory_space<vmem>>, vector<16x16x64xf32>
    tpu.vector_store %arg8[%c1_71, %c1_72, %c0_73], %68 {strides = array<i32>} : memref<18x18x64xf32, #tpu.memory_space<vmem>>, vector<16x16x64xf32>,
    %c0_74 = arith.constant 0 : index
    %c0_75 = arith.constant 0 : index
    %70 = vector.load %arg5[%c0_74, %c0_75] : memref<1x4xf32, #tpu.memory_space<vmem>>, vector<1x4xf32>
    %71 = vector.shape_cast %70 : vector<1x4xf32> to vector<4xf32>
    %cst_76 = arith.constant 0.000000e+00 : f32
    %72 = vector.broadcast %cst_76 : f32 to vector<256x4xf32>
    %c0_77 = arith.constant 0 : index
    %c0_78 = arith.constant 0 : index
    %c0_79 = arith.constant 0 : index
    %73 = vector.load %arg8[%c0_77, %c0_78, %c0_79] : memref<18x18x64xf32, #tpu.memory_space<vmem>>, vector<16x16x64xf32>
    %74 = vector.shape_cast %73 : vector<16x16x64xf32> to vector<256x64xf32>
    %c0_80 = arith.constant 0 : index
    %c0_81 = arith.constant 0 : index
    %c0_82 = arith.constant 0 : index
    %75 = vector.load %arg4[%c0_80, %c0_81, %c0_82] : memref<9x64x4xf32, #tpu.memory_space<vmem>>, vector<1x64x4xf32>
    %76 = vector.shape_cast %75 : vector<1x64x4xf32> to vector<64x4xf32>
    %cst_83 = arith.constant dense<0.000000e+00> : vector<256x4xf32>
    %77 = tpu.matmul %74, %76, %cst_83 {dimension_numbers = #tpu.dot_dimension_numbers<[1], [0], [0], [1], [0, 0, 1, 1], [], []>} : vector<256x64xf32>, vector<64x4xf32>, vector<256x4xf32> -> vector<256x4xf32>
    %78 = arith.addf %72, %77 : vector<256x4xf32>
    %c0_84 = arith.constant 0 : index
    %c1_85 = arith.constant 1 : index
    %c0_86 = arith.constant 0 : index
    %79 = vector.load %arg8[%c0_84, %c1_85, %c0_86] : memref<18x18x64xf32, #tpu.memory_space<vmem>>, vector<16x16x64xf32>
    %80 = vector.shape_cast %79 : vector<16x16x64xf32> to vector<256x64xf32>
    %c1_87 = arith.constant 1 : index
    %c0_88 = arith.constant 0 : index
    %c0_89 = arith.constant 0 : index
    %81 = vector.load %arg4[%c1_87, %c0_88, %c0_89] : memref<9x64x4xf32, #tpu.memory_space<vmem>>, vector<1x64x4xf32>
    %82 = vector.shape_cast %81 : vector<1x64x4xf32> to vector<64x4xf32>
    %cst_90 = arith.constant dense<0.000000e+00> : vector<256x4xf32>
    %83 = tpu.matmul %80, %82, %cst_90 {dimension_numbers = #tpu.dot_dimension_numbers<[1], [0], [0], [1], [0, 0, 1, 1], [], []>} : vector<256x64xf32>, vector<64x4xf32>, vector<256x4xf32> -> vector<256x4xf32>
    %84 = arith.addf %78, %83 : vector<256x4xf32>
    %c0_91 = arith.constant 0 : index
    %c2_92 = arith.constant 2 : index
    %c0_93 = arith.constant 0 : index
    %85 = vector.load %arg8[%c0_91, %c2_92, %c0_93] : memref<18x18x64xf32, #tpu.memory_space<vmem>>, vector<16x16x64xf32>
    %86 = vector.shape_cast %85 : vector<16x16x64xf32> to vector<256x64xf32>
    %c2_94 = arith.constant 2 : index
    %c0_95 = arith.constant 0 : index
    %c0_96 = arith.constant 0 : index
    %87 = vector.load %arg4[%c2_94, %c0_95, %c0_96] : memref<9x64x4xf32, #tpu.memory_space<vmem>>, vector<1x64x4xf32>
    %88 = vector.shape_cast %87 : vector<1x64x4xf32> to vector<64x4xf32>
    %cst_97 = arith.constant dense<0.000000e+00> : vector<256x4xf32>
    %89 = tpu.matmul %86, %88, %cst_97 {dimension_numbers = #tpu.dot_dimension_numbers<[1], [0], [0], [1], [0, 0, 1, 1], [], []>} : vector<256x64xf32>, vector<64x4xf32>, vector<256x4xf32> -> vector<256x4xf32>
    %90 = arith.addf %84, %89 : vector<256x4xf32>
    %c1_98 = arith.constant 1 : index
    %c0_99 = arith.constant 0 : index
    %c0_100 = arith.constant 0 : index
    %91 = vector.load %arg8[%c1_98, %c0_99, %c0_100] : memref<18x18x64xf32, #tpu.memory_space<vmem>>, vector<16x16x64xf32>
    %92 = vector.shape_cast %91 : vector<16x16x64xf32> to vector<256x64xf32>
    %c3_101 = arith.constant 3 : index
    %c0_102 = arith.constant 0 : index
    %c0_103 = arith.constant 0 : index
    %93 = vector.load %arg4[%c3_101, %c0_102, %c0_103] : memref<9x64x4xf32, #tpu.memory_space<vmem>>, vector<1x64x4xf32>
    %94 = vector.shape_cast %93 : vector<1x64x4xf32> to vector<64x4xf32>
    %cst_104 = arith.constant dense<0.000000e+00> : vector<256x4xf32>
    %95 = tpu.matmul %92, %94, %cst_104 {dimension_numbers = #tpu.dot_dimension_numbers<[1], [0], [0], [1], [0, 0, 1, 1], [], []>} : vector<256x64xf32>, vector<64x4xf32>, vector<256x4xf32> -> vector<256x4xf32>
    %96 = arith.addf %90, %95 : vector<256x4xf32>
    %c1_105 = arith.constant 1 : index
    %c1_106 = arith.constant 1 : index
    %c0_107 = arith.constant 0 : index
    %97 = vector.load %arg8[%c1_105, %c1_106, %c0_107] : memref<18x18x64xf32, #tpu.memory_space<vmem>>, vector<16x16x64xf32>
    %98 = vector.shape_cast %97 : vector<16x16x64xf32> to vector<256x64xf32>
    %c4_108 = arith.constant 4 : index
    %c0_109 = arith.constant 0 : index
    %c0_110 = arith.constant 0 : index
    %99 = vector.load %arg4[%c4_108, %c0_109, %c0_110] : memref<9x64x4xf32, #tpu.memory_space<vmem>>, vector<1x64x4xf32>
    %100 = vector.shape_cast %99 : vector<1x64x4xf32> to vector<64x4xf32>
    %cst_111 = arith.constant dense<0.000000e+00> : vector<256x4xf32>
    %101 = tpu.matmul %98, %100, %cst_111 {dimension_numbers = #tpu.dot_dimension_numbers<[1], [0], [0], [1], [0, 0, 1, 1], [], []>} : vector<256x64xf32>, vector<64x4xf32>, vector<256x4xf32> -> vector<256x4xf32>
    %102 = arith.addf %96, %101 : vector<256x4xf32>
    %c1_112 = arith.constant 1 : index
    %c2_113 = arith.constant 2 : index
    %c0_114 = arith.constant 0 : index
    %103 = vector.load %arg8[%c1_112, %c2_113, %c0_114] : memref<18x18x64xf32, #tpu.memory_space<vmem>>, vector<16x16x64xf32>
    %104 = vector.shape_cast %103 : vector<16x16x64xf32> to vector<256x64xf32>
    %c5_115 = arith.constant 5 : index
    %c0_116 = arith.constant 0 : index
    %c0_117 = arith.constant 0 : index
    %105 = vector.load %arg4[%c5_115, %c0_116, %c0_117] : memref<9x64x4xf32, #tpu.memory_space<vmem>>, vector<1x64x4xf32>
    %106 = vector.shape_cast %105 : vector<1x64x4xf32> to vector<64x4xf32>
    %cst_118 = arith.constant dense<0.000000e+00> : vector<256x4xf32>
    %107 = tpu.matmul %104, %106, %cst_118 {dimension_numbers = #tpu.dot_dimension_numbers<[1], [0], [0], [1], [0, 0, 1, 1], [], []>} : vector<256x64xf32>, vector<64x4xf32>, vector<256x4xf32> -> vector<256x4xf32>
    %108 = arith.addf %102, %107 : vector<256x4xf32>
    %c2_119 = arith.constant 2 : index
    %c0_120 = arith.constant 0 : index
    %c0_121 = arith.constant 0 : index
    %109 = vector.load %arg8[%c2_119, %c0_120, %c0_121] : memref<18x18x64xf32, #tpu.memory_space<vmem>>, vector<16x16x64xf32>
    %110 = vector.shape_cast %109 : vector<16x16x64xf32> to vector<256x64xf32>
    %c6_122 = arith.constant 6 : index
    %c0_123 = arith.constant 0 : index
    %c0_124 = arith.constant 0 : index
    %111 = vector.load %arg4[%c6_122, %c0_123, %c0_124] : memref<9x64x4xf32, #tpu.memory_space<vmem>>, vector<1x64x4xf32>
    %112 = vector.shape_cast %111 : vector<1x64x4xf32> to vector<64x4xf32>
    %cst_125 = arith.constant dense<0.000000e+00> : vector<256x4xf32>
    %113 = tpu.matmul %110, %112, %cst_125 {dimension_numbers = #tpu.dot_dimension_numbers<[1], [0], [0], [1], [0, 0, 1, 1], [], []>} : vector<256x64xf32>, vector<64x4xf32>, vector<256x4xf32> -> vector<256x4xf32>
    %114 = arith.addf %108, %113 : vector<256x4xf32>
    %c2_126 = arith.constant 2 : index
    %c1_127 = arith.constant 1 : index
    %c0_128 = arith.constant 0 : index
    %115 = vector.load %arg8[%c2_126, %c1_127, %c0_128] : memref<18x18x64xf32, #tpu.memory_space<vmem>>, vector<16x16x64xf32>
    %116 = vector.shape_cast %115 : vector<16x16x64xf32> to vector<256x64xf32>
    %c7_129 = arith.constant 7 : index
    %c0_130 = arith.constant 0 : index
    %c0_131 = arith.constant 0 : index
    %117 = vector.load %arg4[%c7_129, %c0_130, %c0_131] : memref<9x64x4xf32, #tpu.memory_space<vmem>>, vector<1x64x4xf32>
    %118 = vector.shape_cast %117 : vector<1x64x4xf32> to vector<64x4xf32>
    %cst_132 = arith.constant dense<0.000000e+00> : vector<256x4xf32>
    %119 = tpu.matmul %116, %118, %cst_132 {dimension_numbers = #tpu.dot_dimension_numbers<[1], [0], [0], [1], [0, 0, 1, 1], [], []>} : vector<256x64xf32>, vector<64x4xf32>, vector<256x4xf32> -> vector<256x4xf32>
    %120 = arith.addf %114, %119 : vector<256x4xf32>
    %c2_133 = arith.constant 2 : index
    %c2_134 = arith.constant 2 : index
    %c0_135 = arith.constant 0 : index
    %121 = vector.load %arg8[%c2_133, %c2_134, %c0_135] : memref<18x18x64xf32, #tpu.memory_space<vmem>>, vector<16x16x64xf32>
    %122 = vector.shape_cast %121 : vector<16x16x64xf32> to vector<256x64xf32>
    %c8_136 = arith.constant 8 : index
    %c0_137 = arith.constant 0 : index
    %c0_138 = arith.constant 0 : index
    %123 = vector.load %arg4[%c8_136, %c0_137, %c0_138] : memref<9x64x4xf32, #tpu.memory_space<vmem>>, vector<1x64x4xf32>
    %124 = vector.shape_cast %123 : vector<1x64x4xf32> to vector<64x4xf32>
    %cst_139 = arith.constant dense<0.000000e+00> : vector<256x4xf32>
    %125 = tpu.matmul %122, %124, %cst_139 {dimension_numbers = #tpu.dot_dimension_numbers<[1], [0], [0], [1], [0, 0, 1, 1], [], []>} : vector<256x64xf32>, vector<64x4xf32>, vector<256x4xf32> -> vector<256x4xf32>
    %126 = arith.addf %120, %125 : vector<256x4xf32>
    %127 = vector.shape_cast %71 : vector<4xf32> to vector<1x4xf32>
    %128 = vector.broadcast %127 : vector<1x4xf32> to vector<256x4xf32>
    %129 = arith.addf %126, %128 : vector<256x4xf32>
    %130 = vector.shape_cast %129 : vector<256x4xf32> to vector<16x16x4xf32>
    %c0_140 = arith.constant 0 : index
    %c0_141 = arith.constant 0 : index
    %c0_142 = arith.constant 0 : index
    %c0_143 = arith.constant 0 : index
    %131 = vector.load %arg6[%c0_140, %c0_141, %c0_142, %c0_143] : memref<1x16x16x4xf32, #tpu.memory_space<vmem>>, vector<1x16x16x4xf32>
    %132 = vector.shape_cast %131 : vector<1x16x16x4xf32> to vector<16x16x4xf32>
    %133 = vector.shape_cast %130 : vector<16x16x4xf32> to vector<1x16x16x4xf32>
    tpu.vector_store %arg6[%c0_140, %c0_141, %c0_142, %c0_143], %133 {strides = array<i32>} : memref<1x16x16x4xf32, #tpu.memory_space<vmem>>, vector<1x16x16x4xf32>,
    return
  }
  func.func @transform_0(%arg0: i32) -> (i32, i32, i32, i32) {
    %c0_i32 = arith.constant 0 : i32
    %c0_i32_0 = arith.constant 0 : i32
    %c0_i32_1 = arith.constant 0 : i32
    %c0_i32_2 = arith.constant 0 : i32
    return %arg0, %c0_i32, %c0_i32_0, %c0_i32_1 : i32, i32, i32, i32
  }
  func.func @transform_1(%arg0: i32) -> (i32, i32, i32) {
    %c0_i32 = arith.constant 0 : i32
    %c0_i32_0 = arith.constant 0 : i32
    %c0_i32_1 = arith.constant 0 : i32
    %c0_i32_2 = arith.constant 0 : i32
    return %c0_i32, %c0_i32_0, %c0_i32_1 : i32, i32, i32
  }
  func.func @transform_2(%arg0: i32) -> (i32, i32) {
    %c0_i32 = arith.constant 0 : i32
    %c0_i32_0 = arith.constant 0 : i32
    %c0_i32_1 = arith.constant 0 : i32
    return %c0_i32, %c0_i32_0 : i32, i32
  }
  func.func @transform_3(%arg0: i32) -> (i32, i32, i32) {
    %c0_i32 = arith.constant 0 : i32
    %c0_i32_0 = arith.constant 0 : i32
    %c0_i32_1 = arith.constant 0 : i32
    %c0_i32_2 = arith.constant 0 : i32
    return %c0_i32, %c0_i32_0, %c0_i32_1 : i32, i32, i32
  }
  func.func @transform_4(%arg0: i32) -> (i32, i32) {
    %c0_i32 = arith.constant 0 : i32
    %c0_i32_0 = arith.constant 0 : i32
    %c0_i32_1 = arith.constant 0 : i32
    return %c0_i32, %c0_i32_0 : i32, i32
  }
  func.func @transform_5(%arg0: i32) -> (i32, i32, i32, i32) {
    %c0_i32 = arith.constant 0 : i32
    %c0_i32_0 = arith.constant 0 : i32
    %c0_i32_1 = arith.constant 0 : i32
    %c0_i32_2 = arith.constant 0 : i32
    return %arg0, %c0_i32, %c0_i32_0, %c0_i32_1 : i32, i32, i32, i32
  }
}

</mosaic_0001>

<llo_original>
// kernel: tpu_custom_call.1
$region0: #{tpu_custom_call.1}
  #allocation0 [shape = 'u32[]', space=smem, size = 0x4, offset = 0x4, fixed_abs, tag = 'smem constant byte address 0x4 - core index']
  #allocation1 [shape = 'u32[144,128]{1,0:T(1,128)}', space=vmem, size = 0x12000, scoped, tag = 'internal scratch']
  #allocation2 [shape = 'f32[18,18,4]{2,1,0:T(8,128)}', space=vmem, size = 0x36000, scoped, tag = 'scratch operand']
  #allocation3 [shape = 'f32[18,18,64]{2,1,0:T(8,128)}', space=vmem, size = 0x36000, scoped, tag = 'scratch operand']
  %s0 = inlined_call_operand.vmem [shape: f32[2,16,16,4], index: 0, kind: input, shape index: {}]
  %s1 = inlined_call_operand.vmem [shape: f32[9,4,64], index: 1, kind: input, shape index: {}]
  %s2 = inlined_call_operand.vmem [shape: f32[1,64], index: 2, kind: input, shape index: {}]
  %s3 = inlined_call_operand.vmem [shape: f32[9,64,4], index: 3, kind: input, shape index: {}]
  %s4 = inlined_call_operand.vmem [shape: f32[1,4], index: 4, kind: input, shape index: {}]
  %s5 = inlined_call_operand.vmem [shape: f32[2,16,16,4], index: 5, kind: output, shape index: {}]
  %s6 = sld [smem:[#allocation0]]
  $region53: #{tpu_custom_call.1} parent=0
    _
  %s8 = ssub.s32 1, %s6
  %s9 = scalar_select 0, %s8, %s6
  loop: start=0, step=1, limit=4
  $region2: #{tpu_custom_call.1} parent=0 // loop_pre_header
    _
  $region3: #{tpu_custom_call.1} parent=0 // loop_header
    %s11 = sphi 0, %s15
    %p12 = scmp.ge.s32.totalorder %s11, 4
    %s21 = sphi 0, %s23
    %s24 = sphi 0, %s21
    %s25 = sphi 0, %s24
    %s41 = sphi 0, %s25
    %s45 = sphi 0, %s45
    %s47 = sphi 0, %s45
    %s48 = sphi 0, %s47
    %s62 = sphi 0, %s48
    %s66 = sphi 0, %s66
    %s68 = sphi 0, %s66
    %s69 = sphi 0, %s68
    %s83 = sphi 0, %s69
    %s87 = sphi 0, %s87
    %s89 = sphi 0, %s87
    %s90 = sphi 0, %s89
    %s104 = sphi 0, %s90
    %s108 = sphi 0, %s108
    %s110 = sphi 0, %s108
    %s111 = sphi 0, %s110
    %s125 = sphi 0, %s111
    %s131 = sphi 0, %s133
    %s134 = sphi 0, %s131
    %s135 = sphi 0, %s134
    %s151 = sphi 0, %s135
  $region4: #{tpu_custom_call.1} parent=0 // loop_header_branch
    %14 = sbr.rel (%p12) target = $region8
  $region5: #{tpu_custom_call.1} parent=0 // loop_body
    %s16 = ssub.s32 %s11, 1
    %s17 = ssub.s32 %s11, 2
    %s18 = sadd.s32 %s11, 1
    %s19 = ssub.s32 %s11, %s18
    %p20 = scmp.eq.s32.totalorder %s19, 0
    %s22 = sadd.s32 %s21, 1
    %s23 = scalar_select %p20, %s21, %s22
    %p26 = pneg %p20
    %p27 = scmp.eq.s32.totalorder %s11, 1
    %p28 = por %p26, %p27
    %p29 = scmp.ne.s32.totalorder %s21, %s24
    %p30 = scmp.eq.s32.totalorder %s11, 0
    %p31 = por %p29, %p30
    %p32 = scmp.ne.s32.totalorder %s21, %s24
    %p33 = scmp.eq.s32.totalorder %s16, 1
    %p34 = por %p32, %p33
    %p35 = scmp.ne.s32.totalorder %s24, %s25
    %p36 = scmp.eq.s32.totalorder %s16, 0
    %p37 = por %p35, %p36
    %p38 = scmp.ne.s32.totalorder %s24, %s25
    %p39 = scmp.eq.s32.totalorder %s17, 1
    %p40 = por %p38, %p39
    %p42 = scmp.ne.s32.totalorder %s25, %s41
    %p43 = scmp.eq.s32.totalorder %s17, 0
    %p44 = por %p42, %p43
    %s46 = sadd.s32 %s45, 1
    %p49 = scmp.eq.s32.totalorder %s11, 1
    %p50 = scmp.ne.s32.totalorder %s45, %s47
    %p51 = scmp.eq.s32.totalorder %s11, 0
    %p52 = por %p50, %p51
    %p53 = scmp.ne.s32.totalorder %s45, %s47
    %p54 = scmp.eq.s32.totalorder %s16, 1
    %p55 = por %p53, %p54
    %p56 = scmp.ne.s32.totalorder %s47, %s48
    %p57 = scmp.eq.s32.totalorder %s16, 0
    %p58 = por %p56, %p57
    %p59 = scmp.ne.s32.totalorder %s47, %s48
    %p60 = scmp.eq.s32.totalorder %s17, 1
    %p61 = por %p59, %p60
    %p63 = scmp.ne.s32.totalorder %s48, %s62
    %p64 = scmp.eq.s32.totalorder %s17, 0
    %p65 = por %p63, %p64
    %s67 = sadd.s32 %s66, 1
    %p70 = scmp.eq.s32.totalorder %s11, 1
    %p71 = scmp.ne.s32.totalorder %s66, %s68
    %p72 = scmp.eq.s32.totalorder %s11, 0
    %p73 = por %p71, %p72
    %p74 = scmp.ne.s32.totalorder %s66, %s68
    %p75 = scmp.eq.s32.totalorder %s16, 1
    %p76 = por %p74, %p75
    %p77 = scmp.ne.s32.totalorder %s68, %s69
    %p78 = scmp.eq.s32.totalorder %s16, 0
    %p79 = por %p77, %p78
    %p80 = scmp.ne.s32.totalorder %s68, %s69
    %p81 = scmp.eq.s32.totalorder %s17, 1
    %p82 = por %p80, %p81
    %p84 = scmp.ne.s32.totalorder %s69, %s83
    %p85 = scmp.eq.s32.totalorder %s17, 0
    %p86 = por %p84, %p85
    %s88 = sadd.s32 %s87, 1
    %p91 = scmp.eq.s32.totalorder %s11, 1
    %p92 = scmp.ne.s32.totalorder %s87, %s89
    %p93 = scmp.eq.s32.totalorder %s11, 0
    %p94 = por %p92, %p93
    %p95 = scmp.ne.s32.totalorder %s87, %s89
    %p96 = scmp.eq.s32.totalorder %s16, 1
    %p97 = por %p95, %p96
    %p98 = scmp.ne.s32.totalorder %s89, %s90
    %p99 = scmp.eq.s32.totalorder %s16, 0
    %p100 = por %p98, %p99
    %p101 = scmp.ne.s32.totalorder %s89, %s90
    %p102 = scmp.eq.s32.totalorder %s17, 1
    %p103 = por %p101, %p102
    %p105 = scmp.ne.s32.totalorder %s90, %s104
    %p106 = scmp.eq.s32.totalorder %s17, 0
    %p107 = por %p105, %p106
    %s109 = sadd.s32 %s108, 1
    %p112 = scmp.eq.s32.totalorder %s11, 1
    %p113 = scmp.ne.s32.totalorder %s108, %s110
    %p114 = scmp.eq.s32.totalorder %s11, 0
    %p115 = por %p113, %p114
    %p116 = scmp.ne.s32.totalorder %s108, %s110
    %p117 = scmp.eq.s32.totalorder %s16, 1
    %p118 = por %p116, %p117
    %p119 = scmp.ne.s32.totalorder %s110, %s111
    %p120 = scmp.eq.s32.totalorder %s16, 0
    %p121 = por %p119, %p120
    %p122 = scmp.ne.s32.totalorder %s110, %s111
    %p123 = scmp.eq.s32.totalorder %s17, 1
    %p124 = por %p122, %p123
    %p126 = scmp.ne.s32.totalorder %s111, %s125
    %p127 = scmp.eq.s32.totalorder %s17, 0
    %p128 = por %p126, %p127
    %s129 = ssub.s32 %s11, %s18
    %p130 = scmp.eq.s32.totalorder %s129, 0
    %s132 = sadd.s32 %s131, 1
    %s133 = scalar_select %p130, %s131, %s132
    %p136 = pneg %p130
    %p137 = scmp.eq.s32.totalorder %s11, 1
    %p138 = por %p136, %p137
    %p139 = scmp.ne.s32.totalorder %s131, %s134
    %p140 = scmp.eq.s32.totalorder %s11, 0
    %p141 = por %p139, %p140
    %p142 = scmp.ne.s32.totalorder %s131, %s134
    %p143 = scmp.eq.s32.totalorder %s16, 1
    %p144 = por %p142, %p143
    %p145 = scmp.ne.s32.totalorder %s134, %s135
    %p146 = scmp.eq.s32.totalorder %s16, 0
    %p147 = por %p145, %p146
    %p148 = scmp.ne.s32.totalorder %s134, %s135
    %p149 = scmp.eq.s32.totalorder %s17, 1
    %p150 = por %p148, %p149
    %p152 = scmp.ne.s32.totalorder %s135, %s151
    %p153 = scmp.eq.s32.totalorder %s17, 0
    %p154 = por %p152, %p153
    %p155 = scmp.le.s32.totalorder 1, %s11
    %p156 = scmp.lt.s32.totalorder %s11, 3
    %p157 = pnand %p155, %p156
    %p158 = pneg %p157
    // Predicated region
    $region9: #{tpu_custom_call.1} parent=5 // pred_check
      _
    $region10: #{tpu_custom_call.1} parent=5 // pred_check_branch
      %160 = sbr.rel (%p157) target = $region12
    $region11: #{tpu_custom_call.1} parent=5 // pred_region
      %s161 = ssub.s32 %s11, 1
      // Predicated region
      $region13: #{tpu_custom_call.1} parent=11 // pred_check
        %p162 = pneg %p58
      $region14: #{tpu_custom_call.1} parent=11 // pred_check_branch
        %164 = sbr.rel (%p162) target = $region16
      $region15: #{tpu_custom_call.1} parent=11 // pred_region
        _
      $region16: #{tpu_custom_call.1} parent=11 // pred_fallthru
        _
      // Predicated region
      $region17: #{tpu_custom_call.1} parent=11 // pred_check
        %p165 = pneg %p79
      $region18: #{tpu_custom_call.1} parent=11 // pred_check_branch
        %167 = sbr.rel (%p165) target = $region20
      $region19: #{tpu_custom_call.1} parent=11 // pred_region
        _
      $region20: #{tpu_custom_call.1} parent=11 // pred_fallthru
        _
      // Predicated region
      $region21: #{tpu_custom_call.1} parent=11 // pred_check
        %p168 = pneg %p100
      $region22: #{tpu_custom_call.1} parent=11 // pred_check_branch
        %170 = sbr.rel (%p168) target = $region24
      $region23: #{tpu_custom_call.1} parent=11 // pred_region
        _
      $region24: #{tpu_custom_call.1} parent=11 // pred_fallthru
        _
      // Predicated region
      $region25: #{tpu_custom_call.1} parent=11 // pred_check
        %p171 = pneg %p121
      $region26: #{tpu_custom_call.1} parent=11 // pred_check_branch
        %173 = sbr.rel (%p171) target = $region28
      $region27: #{tpu_custom_call.1} parent=11 // pred_region
        _
      $region28: #{tpu_custom_call.1} parent=11 // pred_fallthru
        _
    $region12: #{tpu_custom_call.1} parent=5 // pred_fallthru
      _
    %p174 = scmp.lt.s32.totalorder %s11, 2
    // Predicated region
    $region29: #{tpu_custom_call.1} parent=5 // pred_check
      %p175 = pneg %p174
    $region30: #{tpu_custom_call.1} parent=5 // pred_check_branch
      %177 = sbr.rel (%p175) target = $region32
    $region31: #{tpu_custom_call.1} parent=5 // pred_region
      // Predicated region
      $region33: #{tpu_custom_call.1} parent=31 // pred_check
        %p178 = pneg %p31
      $region34: #{tpu_custom_call.1} parent=31 // pred_check_branch
        %180 = sbr.rel (%p178) target = $region36
      $region35: #{tpu_custom_call.1} parent=31 // pred_region
        %p181 = scmp.lt.s32.totalorder %s11, 1
        %s182 = scalar_select %p181, %s11, 1
        %s183 = smul.addr %s182, 32
        %s184 = smul.addr %s183, 8
        %s185 = scalar_lea.vmem %s0, %s184
      $region36: #{tpu_custom_call.1} parent=31 // pred_fallthru
        _
    $region32: #{tpu_custom_call.1} parent=5 // pred_fallthru
      _
    %p186 = scmp.le.s32.totalorder 1, %s11
    %p187 = scmp.lt.s32.totalorder %s11, 3
    %p188 = pnand %p186, %p187
    %p189 = pneg %p188
    // Predicated region
    $region37: #{tpu_custom_call.1} parent=5 // pred_check
      _
    $region38: #{tpu_custom_call.1} parent=5 // pred_check_branch
      %191 = sbr.rel (%p188) target = $region40
    $region39: #{tpu_custom_call.1} parent=5 // pred_region
      %s192 = ssub.s32 %s11, 1
      %p193 = scmp.lt.s32.totalorder %s16, 1
      %s194 = scalar_select %p193, %s16, 1
      %s195 = smul.addr %s194, 32
      %s196 = smul.addr %s195, 8
      %s197 = scalar_lea.vmem %s0, %s196
      %p198 = pneg %p37
      %p199 = pneg %p34
      %p200 = pneg %p58
      %p201 = pneg %p55
      %p202 = pneg %p79
      %p203 = pneg %p76
      %p204 = pneg %p100
      %p205 = pneg %p97
      %p206 = pneg %p121
      %p207 = pneg %p118
      %p208 = pneg %p147
      %p209 = pneg %p144
      %p210 = scmp.lt.s32.totalorder %s16, 1
      %s211 = scalar_select %p210, %s16, 1
      %s212 = smul.addr %s211, 32
      %s213 = smul.addr %s212, 8
      %s214 = scalar_lea.vmem %s5, %s213
      %p215 = scmp.lt.s32.totalorder %s16, 1
      %s216 = scalar_select %p215, %s16, 1
      %s217 = smul.addr %s216, 32
      %s218 = smul.addr %s217, 8
      %s219 = scalar_lea.vmem %s0, %s218
      %p220 = scmp.lt.s32.totalorder %s16, 1
      %s221 = scalar_select %p220, %s16, 1
      %s222 = smul.addr %s221, 32
      %s223 = smul.addr %s222, 8
      %s224 = scalar_lea.vmem %s5, %s223
      %vm225 = vcmask 31744
      %226 = vst.msk [vmem:[#allocation2] sm:$0xff] %vm225, 0.0
      %227 = vst.msk [vmem:[#allocation2 + $0x8] sm:$0xff] %vm225, 0.0
      %vm228 = vcmask 25600
      %229 = vst.msk [vmem:[#allocation2 + $0x10] sm:$0x3] %vm228, 0.0
      %230 = vst.msk [vmem:[#allocation2 + $0x18] sm:$0xff] %vm225, 0.0
      %231 = vst.msk [vmem:[#allocation2 + $0x20] sm:$0xff] %vm225, 0.0
      %232 = vst.msk [vmem:[#allocation2 + $0x28] sm:$0x3] %vm228, 0.0
      %233 = vst.msk [vmem:[#allocation2 + $0x30] sm:$0xff] %vm225, 0.0
      %234 = vst.msk [vmem:[#allocation2 + $0x38] sm:$0xff] %vm225, 0.0
      %235 = vst.msk [vmem:[#allocation2 + $0x40] sm:$0x3] %vm228, 0.0
      %236 = vst.msk [vmem:[#allocation2 + $0x48] sm:$0xff] %vm225, 0.0
      %237 = vst.msk [vmem:[#allocation2 + $0x50] sm:$0xff] %vm225, 0.0
      %238 = vst.msk [vmem:[#allocation2 + $0x58] sm:$0x3] %vm228, 0.0
      %239 = vst.msk [vmem:[#allocation2 + $0x60] sm:$0xff] %vm225, 0.0
      %240 = vst.msk [vmem:[#allocation2 + $0x68] sm:$0xff] %vm225, 0.0
      %241 = vst.msk [vmem:[#allocation2 + $0x70] sm:$0x3] %vm228, 0.0
      %242 = vst.msk [vmem:[#allocation2 + $0x78] sm:$0xff] %vm225, 0.0
      %243 = vst.msk [vmem:[#allocation2 + $0x80] sm:$0xff] %vm225, 0.0
      %244 = vst.msk [vmem:[#allocation2 + $0x88] sm:$0x3] %vm228, 0.0
      %245 = vst.msk [vmem:[#allocation2 + $0x90] sm:$0xff] %vm225, 0.0
      %246 = vst.msk [vmem:[#allocation2 + $0x98] sm:$0xff] %vm225, 0.0
      %247 = vst.msk [vmem:[#allocation2 + $0xa0] sm:$0x3] %vm228, 0.0
      %248 = vst.msk [vmem:[#allocation2 + $0xa8] sm:$0xff] %vm225, 0.0
      %249 = vst.msk [vmem:[#allocation2 + $0xb0] sm:$0xff] %vm225, 0.0
      %250 = vst.msk [vmem:[#allocation2 + $0xb8] sm:$0x3] %vm228, 0.0
      %251 = vst.msk [vmem:[#allocation2 + $0xc0] sm:$0xff] %vm225, 0.0
      %252 = vst.msk [vmem:[#allocation2 + $0xc8] sm:$0xff] %vm225, 0.0
      %253 = vst.msk [vmem:[#allocation2 + $0xd0] sm:$0x3] %vm228, 0.0
      %254 = vst.msk [vmem:[#allocation2 + $0xd8] sm:$0xff] %vm225, 0.0
      %255 = vst.msk [vmem:[#allocation2 + $0xe0] sm:$0xff] %vm225, 0.0
      %256 = vst.msk [vmem:[#allocation2 + $0xe8] sm:$0x3] %vm228, 0.0
      %257 = vst.msk [vmem:[#allocation2 + $0xf0] sm:$0xff] %vm225, 0.0
      %258 = vst.msk [vmem:[#allocation2 + $0xf8] sm:$0xff] %vm225, 0.0
      %259 = vst.msk [vmem:[#allocation2 + $0x100] sm:$0x3] %vm228, 0.0
      %260 = vst.msk [vmem:[#allocation2 + $0x108] sm:$0xff] %vm225, 0.0
      %261 = vst.msk [vmem:[#allocation2 + $0x110] sm:$0xff] %vm225, 0.0
      %262 = vst.msk [vmem:[#allocation2 + $0x118] sm:$0x3] %vm228, 0.0
      %263 = vst.msk [vmem:[#allocation2 + $0x120] sm:$0xff] %vm225, 0.0
      %264 = vst.msk [vmem:[#allocation2 + $0x128] sm:$0xff] %vm225, 0.0
      %265 = vst.msk [vmem:[#allocation2 + $0x130] sm:$0x3] %vm228, 0.0
      %266 = vst.msk [vmem:[#allocation2 + $0x138] sm:$0xff] %vm225, 0.0
      %267 = vst.msk [vmem:[#allocation2 + $0x140] sm:$0xff] %vm225, 0.0
      %268 = vst.msk [vmem:[#allocation2 + $0x148] sm:$0x3] %vm228, 0.0
      %269 = vst.msk [vmem:[#allocation2 + $0x150] sm:$0xff] %vm225, 0.0
      %270 = vst.msk [vmem:[#allocation2 + $0x158] sm:$0xff] %vm225, 0.0
      %271 = vst.msk [vmem:[#allocation2 + $0x160] sm:$0x3] %vm228, 0.0
      %272 = vst.msk [vmem:[#allocation2 + $0x168] sm:$0xff] %vm225, 0.0
      %273 = vst.msk [vmem:[#allocation2 + $0x170] sm:$0xff] %vm225, 0.0
      %274 = vst.msk [vmem:[#allocation2 + $0x178] sm:$0x3] %vm228, 0.0
      %275 = vst.msk [vmem:[#allocation2 + $0x180] sm:$0xff] %vm225, 0.0
      %276 = vst.msk [vmem:[#allocation2 + $0x188] sm:$0xff] %vm225, 0.0
      %277 = vst.msk [vmem:[#allocation2 + $0x190] sm:$0x3] %vm228, 0.0
      %278 = vst.msk [vmem:[#allocation2 + $0x198] sm:$0xff] %vm225, 0.0
      %279 = vst.msk [vmem:[#allocation2 + $0x1a0] sm:$0xff] %vm225, 0.0
      %280 = vst.msk [vmem:[#allocation2 + $0x1a8] sm:$0x3] %vm228, 0.0
      %v281 = vld [vmem:[%s219] sm:$0xff]
      %v282 = vld [vmem:[%s219 + $0x8] sm:$0xff]
      %v283 = vld [vmem:[%s219 + $0x10] sm:$0xff]
      %v284 = vld [vmem:[%s219 + $0x18] sm:$0xff]
      %v285 = vld [vmem:[%s219 + $0x20] sm:$0xff]
      %v286 = vld [vmem:[%s219 + $0x28] sm:$0xff]
      %v287 = vld [vmem:[%s219 + $0x30] sm:$0xff]
      %v288 = vld [vmem:[%s219 + $0x38] sm:$0xff]
      %v289 = vld [vmem:[%s219 + $0x40] sm:$0xff]
      %v290 = vld [vmem:[%s219 + $0x48] sm:$0xff]
      %v291 = vld [vmem:[%s219 + $0x50] sm:$0xff]
      %v292 = vld [vmem:[%s219 + $0x58] sm:$0xff]
      %v293 = vld [vmem:[%s219 + $0x60] sm:$0xff]
      %v294 = vld [vmem:[%s219 + $0x68] sm:$0xff]
      %v295 = vld [vmem:[%s219 + $0x70] sm:$0xff]
      %v296 = vld [vmem:[%s219 + $0x78] sm:$0xff]
      %v297 = vld [vmem:[%s219 + $0x80] sm:$0xff]
      %v298 = vld [vmem:[%s219 + $0x88] sm:$0xff]
      %v299 = vld [vmem:[%s219 + $0x90] sm:$0xff]
      %v300 = vld [vmem:[%s219 + $0x98] sm:$0xff]
      %v301 = vld [vmem:[%s219 + $0xa0] sm:$0xff]
      %v302 = vld [vmem:[%s219 + $0xa8] sm:$0xff]
      %v303 = vld [vmem:[%s219 + $0xb0] sm:$0xff]
      %v304 = vld [vmem:[%s219 + $0xb8] sm:$0xff]
      %v305 = vld [vmem:[%s219 + $0xc0] sm:$0xff]
      %v306 = vld [vmem:[%s219 + $0xc8] sm:$0xff]
      %v307 = vld [vmem:[%s219 + $0xd0] sm:$0xff]
      %v308 = vld [vmem:[%s219 + $0xd8] sm:$0xff]
      %v309 = vld [vmem:[%s219 + $0xe0] sm:$0xff]
      %v310 = vld [vmem:[%s219 + $0xe8] sm:$0xff]
      %v311 = vld [vmem:[%s219 + $0xf0] sm:$0xff]
      %v312 = vld [vmem:[%s219 + $0xf8] sm:$0xff]
      %s313 = scalar_lea.vmem [#allocation2], 24
      %314 = vst.msk [vmem:[%s313 + $0x1] sm:$0xff] %vm225, %v281
      %315 = vst.msk [vmem:[%s313 + $0x9] sm:$0xff] %vm225, %v282
      %316 = vst.msk [vmem:[%s313 + $0x19] sm:$0xff] %vm225, %v283
      %317 = vst.msk [vmem:[%s313 + $0x21] sm:$0xff] %vm225, %v284
      %318 = vst.msk [vmem:[%s313 + $0x31] sm:$0xff] %vm225, %v285
      %319 = vst.msk [vmem:[%s313 + $0x39] sm:$0xff] %vm225, %v286
      %320 = vst.msk [vmem:[%s313 + $0x49] sm:$0xff] %vm225, %v287
      %321 = vst.msk [vmem:[%s313 + $0x51] sm:$0xff] %vm225, %v288
      %322 = vst.msk [vmem:[%s313 + $0x61] sm:$0xff] %vm225, %v289
      %323 = vst.msk [vmem:[%s313 + $0x69] sm:$0xff] %vm225, %v290
      %324 = vst.msk [vmem:[%s313 + $0x79] sm:$0xff] %vm225, %v291
      %325 = vst.msk [vmem:[%s313 + $0x81] sm:$0xff] %vm225, %v292
      %326 = vst.msk [vmem:[%s313 + $0x91] sm:$0xff] %vm225, %v293
      %327 = vst.msk [vmem:[%s313 + $0x99] sm:$0xff] %vm225, %v294
      %328 = vst.msk [vmem:[%s313 + $0xa9] sm:$0xff] %vm225, %v295
      %329 = vst.msk [vmem:[%s313 + $0xb1] sm:$0xff] %vm225, %v296
      %330 = vst.msk [vmem:[%s313 + $0xc1] sm:$0xff] %vm225, %v297
      %331 = vst.msk [vmem:[%s313 + $0xc9] sm:$0xff] %vm225, %v298
      %332 = vst.msk [vmem:[%s313 + $0xd9] sm:$0xff] %vm225, %v299
      %333 = vst.msk [vmem:[%s313 + $0xe1] sm:$0xff] %vm225, %v300
      %334 = vst.msk [vmem:[%s313 + $0xf1] sm:$0xff] %vm225, %v301
      %335 = vst.msk [vmem:[%s313 + $0xf9] sm:$0xff] %vm225, %v302
      %336 = vst.msk [vmem:[%s313 + $0x109] sm:$0xff] %vm225, %v303
      %337 = vst.msk [vmem:[%s313 + $0x111] sm:$0xff] %vm225, %v304
      %338 = vst.msk [vmem:[%s313 + $0x121] sm:$0xff] %vm225, %v305
      %339 = vst.msk [vmem:[%s313 + $0x129] sm:$0xff] %vm225, %v306
      %340 = vst.msk [vmem:[%s313 + $0x139] sm:$0xff] %vm225, %v307
      %341 = vst.msk [vmem:[%s313 + $0x141] sm:$0xff] %vm225, %v308
      %342 = vst.msk [vmem:[%s313 + $0x151] sm:$0xff] %vm225, %v309
      %343 = vst.msk [vmem:[%s313 + $0x159] sm:$0xff] %vm225, %v310
      %344 = vst.msk [vmem:[%s313 + $0x169] sm:$0xff] %vm225, %v311
      %345 = vst.msk [vmem:[%s313 + $0x171] sm:$0xff] %vm225, %v312
      %v346 = vld [vmem:[%s2] sm:$0x1]
      %v347 = vld [vmem:[#allocation2] sm:$0xff]
      %v348 = vld [vmem:[#allocation2 + $0x8] sm:$0xff]
      %v349 = vld [vmem:[#allocation2 + $0x18] sm:$0xff]
      %v350 = vld [vmem:[#allocation2 + $0x20] sm:$0xff]
      %v351 = vld [vmem:[#allocation2 + $0x30] sm:$0xff]
      %v352 = vld [vmem:[#allocation2 + $0x38] sm:$0xff]
      %v353 = vld [vmem:[#allocation2 + $0x48] sm:$0xff]
      %v354 = vld [vmem:[#allocation2 + $0x50] sm:$0xff]
      %v355 = vld [vmem:[#allocation2 + $0x60] sm:$0xff]
      %v356 = vld [vmem:[#allocation2 + $0x68] sm:$0xff]
      %v357 = vld [vmem:[#allocation2 + $0x78] sm:$0xff]
      %v358 = vld [vmem:[#allocation2 + $0x80] sm:$0xff]
      %v359 = vld [vmem:[#allocation2 + $0x90] sm:$0xff]
      %v360 = vld [vmem:[#allocation2 + $0x98] sm:$0xff]
      %v361 = vld [vmem:[#allocation2 + $0xa8] sm:$0xff]
      %v362 = vld [vmem:[#allocation2 + $0xb0] sm:$0xff]
      %v363 = vld [vmem:[#allocation2 + $0xc0] sm:$0xff]
      %v364 = vld [vmem:[#allocation2 + $0xc8] sm:$0xff]
      %v365 = vld [vmem:[#allocation2 + $0xd8] sm:$0xff]
      %v366 = vld [vmem:[#allocation2 + $0xe0] sm:$0xff]
      %v367 = vld [vmem:[#allocation2 + $0xf0] sm:$0xff]
      %v368 = vld [vmem:[#allocation2 + $0xf8] sm:$0xff]
      %v369 = vld [vmem:[#allocation2 + $0x108] sm:$0xff]
      %v370 = vld [vmem:[#allocation2 + $0x110] sm:$0xff]
      %v371 = vld [vmem:[#allocation2 + $0x120] sm:$0xff]
      %v372 = vld [vmem:[#allocation2 + $0x128] sm:$0xff]
      %v373 = vld [vmem:[#allocation2 + $0x138] sm:$0xff]
      %v374 = vld [vmem:[#allocation2 + $0x140] sm:$0xff]
      %v375 = vld [vmem:[#allocation2 + $0x150] sm:$0xff]
      %v376 = vld [vmem:[#allocation2 + $0x158] sm:$0xff]
      %v377 = vld [vmem:[#allocation2 + $0x168] sm:$0xff]
      %v378 = vld [vmem:[#allocation2 + $0x170] sm:$0xff]
      %v379 = vld [vmem:[%s1] sm:$0xf]
      %v380 = vld [vmem:[#allocation2 + $0x1] sm:$0xff]
      %v381 = vld [vmem:[#allocation2 + $0x9] sm:$0xff]
      %v382 = vld [vmem:[#allocation2 + $0x19] sm:$0xff]
      %v383 = vld [vmem:[#allocation2 + $0x21] sm:$0xff]
      %v384 = vld [vmem:[#allocation2 + $0x31] sm:$0xff]
      %v385 = vld [vmem:[#allocation2 + $0x39] sm:$0xff]
      %v386 = vld [vmem:[#allocation2 + $0x49] sm:$0xff]
      %v387 = vld [vmem:[#allocation2 + $0x51] sm:$0xff]
      %v388 = vld [vmem:[#allocation2 + $0x61] sm:$0xff]
      %v389 = vld [vmem:[#allocation2 + $0x69] sm:$0xff]
      %v390 = vld [vmem:[#allocation2 + $0x79] sm:$0xff]
      %v391 = vld [vmem:[#allocation2 + $0x81] sm:$0xff]
      %v392 = vld [vmem:[#allocation2 + $0x91] sm:$0xff]
      %v393 = vld [vmem:[#allocation2 + $0x99] sm:$0xff]
      %v394 = vld [vmem:[#allocation2 + $0xa9] sm:$0xff]
      %v395 = vld [vmem:[#allocation2 + $0xb1] sm:$0xff]
      %v396 = vld [vmem:[#allocation2 + $0xc1] sm:$0xff]
      %v397 = vld [vmem:[#allocation2 + $0xc9] sm:$0xff]
      %v398 = vld [vmem:[#allocation2 + $0xd9] sm:$0xff]
      %v399 = vld [vmem:[#allocation2 + $0xe1] sm:$0xff]
      %v400 = vld [vmem:[#allocation2 + $0xf1] sm:$0xff]
      %v401 = vld [vmem:[#allocation2 + $0xf9] sm:$0xff]
      %v402 = vld [vmem:[#allocation2 + $0x109] sm:$0xff]
      %v403 = vld [vmem:[#allocation2 + $0x111] sm:$0xff]
      %v404 = vld [vmem:[#allocation2 + $0x121] sm:$0xff]
      %v405 = vld [vmem:[#allocation2 + $0x129] sm:$0xff]
      %v406 = vld [vmem:[#allocation2 + $0x139] sm:$0xff]
      %v407 = vld [vmem:[#allocation2 + $0x141] sm:$0xff]
      %v408 = vld [vmem:[#allocation2 + $0x151] sm:$0xff]
      %v409 = vld [vmem:[#allocation2 + $0x159] sm:$0xff]
      %v410 = vld [vmem:[#allocation2 + $0x169] sm:$0xff]
      %v411 = vld [vmem:[#allocation2 + $0x171] sm:$0xff]
      %s412 = scalar_lea.vmem %s1, 4
      %v413 = vld [vmem:[%s412] sm:$0xf]
      %v415 = vsel %vm225, %v380, 0
      %v418 = vsel %vm225, %v381, 0
      %v421 = vsel %vm225, %v382, 0
      %v424 = vsel %vm225, %v383, 0
      %v427 = vsel %vm225, %v384, 0
      %v430 = vsel %vm225, %v385, 0
      %v433 = vsel %vm225, %v386, 0
      %v436 = vsel %vm225, %v387, 0
      %v439 = vsel %vm225, %v388, 0
      %v442 = vsel %vm225, %v389, 0
      %v445 = vsel %vm225, %v390, 0
      %v448 = vsel %vm225, %v391, 0
      %v451 = vsel %vm225, %v392, 0
      %v454 = vsel %vm225, %v393, 0
      %v457 = vsel %vm225, %v394, 0
      %v460 = vsel %vm225, %v395, 0
      %v463 = vsel %vm225, %v396, 0
      %v466 = vsel %vm225, %v397, 0
      %v469 = vsel %vm225, %v398, 0
      %v472 = vsel %vm225, %v399, 0
      %v475 = vsel %vm225, %v400, 0
      %v478 = vsel %vm225, %v401, 0
      %v481 = vsel %vm225, %v402, 0
      %v484 = vsel %vm225, %v403, 0
      %v487 = vsel %vm225, %v404, 0
      %v490 = vsel %vm225, %v405, 0
      %v493 = vsel %vm225, %v406, 0
      %v496 = vsel %vm225, %v407, 0
      %v499 = vsel %vm225, %v408, 0
      %v502 = vsel %vm225, %v409, 0
      %v505 = vsel %vm225, %v410, 0
      %v508 = vsel %vm225, %v411, 0
      %vm510 = vcmask 1043456
      %v512 = vsel %vm510, %v413, 0
      %514 = vmatprep.subr.mxu0 0.0
      %515 = vmatpush1.msra.mxu0 %v512
      %516 = vmatprep.subr.mxu0 0.0
      %517 = vmatpush1.msra.mxu0 0.0
      %518 = vmatprep.subr.mxu0 0.0
      %519 = vmatpush1.msra.mxu0 0.0
      %520 = vmatprep.subr.mxu0 0.0
      %521 = vmatpush1.msra.mxu0 0.0
      %522 = vmatprep.subr.mxu0 0.0
      %523 = vmatpush1.msra.mxu0 0.0
      %524 = vmatprep.subr.mxu0 0.0
      %525 = vmatpush1.msra.mxu0 0.0
      %526 = vmatprep.subr.mxu0 0.0
      %527 = vmatpush1.msra.mxu0 0.0
      %528 = vmatprep.subr.mxu0 0.0
      %529 = vmatpush1.msra.mxu0 0.0
      %530 = vmatprep.subr.mxu0 0.0
      %531 = vmatpush1.msra.mxu0 0.0
      %532 = vmatprep.subr.mxu0 0.0
      %533 = vmatpush1.msra.mxu0 0.0
      %534 = vmatprep.subr.mxu0 0.0
      %535 = vmatpush1.msra.mxu0 0.0
      %536 = vmatprep.subr.mxu0 0.0
      %537 = vmatpush1.msra.mxu0 0.0
      %538 = vmatprep.subr.mxu0 0.0
      %539 = vmatpush1.msra.mxu0 0.0
      %540 = vmatprep.subr.mxu0 0.0
      %541 = vmatpush1.msra.mxu0 0.0
      %542 = vmatprep.subr.mxu0 0.0
      %543 = vmatpush1.msra.mxu0 0.0
      %544 = vmatprep.subr.mxu0 0.0
      %545 = vmatpush1.msra.mxu0 0.0
      %546 = vmatprep.subr.mxu0 0.0
      %547 = vmatpush1.msra.mxu0 0.0
      %548 = vmatprep.subr.mxu0 0.0
      %549 = vmatpush1.msra.mxu0 0.0
      %550 = vmatprep.subr.mxu0 0.0
      %551 = vmatpush1.msra.mxu0 0.0
      %552 = vmatprep.subr.mxu0 0.0
      %553 = vmatpush1.msra.mxu0 0.0
      %554 = vmatprep.subr.mxu0 0.0
      %555 = vmatpush1.msra.mxu0 0.0
      %556 = vmatprep.subr.mxu0 0.0
      %557 = vmatpush1.msra.mxu0 0.0
      %558 = vmatprep.subr.mxu0 0.0
      %559 = vmatpush1.msra.mxu0 0.0
      %560 = vmatprep.subr.mxu0 0.0
      %561 = vmatpush1.msra.mxu0 0.0
      %562 = vmatprep.subr.mxu0 0.0
      %563 = vmatpush1.msra.mxu0 0.0
      %564 = vmatprep.subr.mxu0 0.0
      %565 = vmatpush1.msra.mxu0 0.0
      %566 = vmatprep.subr.mxu0 0.0
      %567 = vmatpush1.msra.mxu0 0.0
      %568 = vmatprep.subr.mxu0 0.0
      %569 = vmatpush1.msra.mxu0 0.0
      %570 = vmatprep.subr.mxu0 0.0
      %571 = vmatpush1.msra.mxu0 0.0
      %572 = vmatprep.subr.mxu0 0.0
      %573 = vmatpush1.msra.mxu0 0.0
      %574 = vmatprep.subr.mxu0 0.0
      %575 = vmatpush1.msra.mxu0 0.0
      %576 = vmatprep.subr.mxu0 0.0
      %577 = vmatpush1.msra.mxu0 0.0
      %578 = vmatprep.mubr.f32.mxu0 0.0
      %579 = vmatmul.mubr.f32.gmra.mrb[0].mxu0 %v415
      %v580 = vpop.f32.mrb[0].mxu0
      %v581 = vadd.f32 0.0, %v580
      %v582 = vpop.f32.mrb[0].mxu0
      %583 = vmatprep.mubr.f32.mxu0 0.0
      %584 = vmatmul.mubr.f32.gmra.mrb[0].mxu0 %v418
      %v585 = vpop.f32.mrb[0].mxu0
      %v586 = vadd.f32 0.0, %v585
      %v587 = vpop.f32.mrb[0].mxu0
      %588 = vmatprep.mubr.f32.mxu0 0.0
      %589 = vmatmul.mubr.f32.gmra.mrb[0].mxu0 %v421
      %v590 = vpop.f32.mrb[0].mxu0
      %v591 = vadd.f32 0.0, %v590
      %v592 = vpop.f32.mrb[0].mxu0
      %593 = vmatprep.mubr.f32.mxu0 0.0
      %594 = vmatmul.mubr.f32.gmra.mrb[0].mxu0 %v424
      %v595 = vpop.f32.mrb[0].mxu0
      %v596 = vadd.f32 0.0, %v595
      %v597 = vpop.f32.mrb[0].mxu0
      %598 = vmatprep.mubr.f32.mxu0 0.0
      %599 = vmatmul.mubr.f32.gmra.mrb[0].mxu0 %v427
      %v600 = vpop.f32.mrb[0].mxu0
      %v601 = vadd.f32 0.0, %v600
      %v602 = vpop.f32.mrb[0].mxu0
      %603 = vmatprep.mubr.f32.mxu0 0.0
      %604 = vmatmul.mubr.f32.gmra.mrb[0].mxu0 %v430
      %v605 = vpop.f32.mrb[0].mxu0
      %v606 = vadd.f32 0.0, %v605
      %v607 = vpop.f32.mrb[0].mxu0
      %608 = vmatprep.mubr.f32.mxu0 0.0
      %609 = vmatmul.mubr.f32.gmra.mrb[0].mxu0 %v433
      %v610 = vpop.f32.mrb[0].mxu0
      %v611 = vadd.f32 0.0, %v610
      %v612 = vpop.f32.mrb[0].mxu0
      %613 = vmatprep.mubr.f32.mxu0 0.0
      %614 = vmatmul.mubr.f32.gmra.mrb[0].mxu0 %v436
      %v615 = vpop.f32.mrb[0].mxu0
      %v616 = vadd.f32 0.0, %v615
      %v617 = vpop.f32.mrb[0].mxu0
      %618 = vmatprep.mubr.f32.mxu0 0.0
      %619 = vmatmul.mubr.f32.gmra.mrb[0].mxu0 %v439
      %v620 = vpop.f32.mrb[0].mxu0
      %v621 = vadd.f32 0.0, %v620
      %v622 = vpop.f32.mrb[0].mxu0
      %623 = vmatprep.mubr.f32.mxu0 0.0
      %624 = vmatmul.mubr.f32.gmra.mrb[0].mxu0 %v442
      %v625 = vpop.f32.mrb[0].mxu0
      %v626 = vadd.f32 0.0, %v625
      %v627 = vpop.f32.mrb[0].mxu0
      %628 = vmatprep.mubr.f32.mxu0 0.0
      %629 = vmatmul.mubr.f32.gmra.mrb[0].mxu0 %v445
      %v630 = vpop.f32.mrb[0].mxu0
      %v631 = vadd.f32 0.0, %v630
      %v632 = vpop.f32.mrb[0].mxu0
      %633 = vmatprep.mubr.f32.mxu0 0.0
      %634 = vmatmul.mubr.f32.gmra.mrb[0].mxu0 %v448
      %v635 = vpop.f32.mrb[0].mxu0
      %v636 = vadd.f32 0.0, %v635
      %v637 = vpop.f32.mrb[0].mxu0
      %638 = vmatprep.mubr.f32.mxu0 0.0
      %639 = vmatmul.mubr.f32.gmra.mrb[0].mxu0 %v451
      %v640 = vpop.f32.mrb[0].mxu0
      %v641 = vadd.f32 0.0, %v640
      %v642 = vpop.f32.mrb[0].mxu0
      %643 = vmatprep.mubr.f32.mxu0 0.0
      %644 = vmatmul.mubr.f32.gmra.mrb[0].mxu0 %v454
      %v645 = vpop.f32.mrb[0].mxu0
      %v646 = vadd.f32 0.0, %v645
      %v647 = vpop.f32.mrb[0].mxu0
      %648 = vmatprep.mubr.f32.mxu0 0.0
      %649 = vmatmul.mubr.f32.gmra.mrb[0].mxu0 %v457
      %v650 = vpop.f32.mrb[0].mxu0
      %v651 = vadd.f32 0.0, %v650
      %v652 = vpop.f32.mrb[0].mxu0
      %653 = vmatprep.mubr.f32.mxu0 0.0
      %654 = vmatmul.mubr.f32.gmra.mrb[0].mxu0 %v460
      %v655 = vpop.f32.mrb[0].mxu0
      %v656 = vadd.f32 0.0, %v655
      %v657 = vpop.f32.mrb[0].mxu0
      %658 = vmatprep.mubr.f32.mxu0 0.0
      %659 = vmatmul.mubr.f32.gmra.mrb[0].mxu0 %v463
      %v660 = vpop.f32.mrb[0].mxu0
      %v661 = vadd.f32 0.0, %v660
      %v662 = vpop.f32.mrb[0].mxu0
      %663 = vmatprep.mubr.f32.mxu0 0.0
      %664 = vmatmul.mubr.f32.gmra.mrb[0].mxu0 %v466
      %v665 = vpop.f32.mrb[0].mxu0
      %v666 = vadd.f32 0.0, %v665
      %v667 = vpop.f32.mrb[0].mxu0
      %668 = vmatprep.mubr.f32.mxu0 0.0
      %669 = vmatmul.mubr.f32.gmra.mrb[0].mxu0 %v469
      %v670 = vpop.f32.mrb[0].mxu0
      %v671 = vadd.f32 0.0, %v670
      %v672 = vpop.f32.mrb[0].mxu0
      %673 = vmatprep.mubr.f32.mxu0 0.0
      %674 = vmatmul.mubr.f32.gmra.mrb[0].mxu0 %v472
      %v675 = vpop.f32.mrb[0].mxu0
      %v676 = vadd.f32 0.0, %v675
      %v677 = vpop.f32.mrb[0].mxu0
      %678 = vmatprep.mubr.f32.mxu0 0.0
      %679 = vmatmul.mubr.f32.gmra.mrb[0].mxu0 %v475
      %v680 = vpop.f32.mrb[0].mxu0
      %v681 = vadd.f32 0.0, %v680
      %v682 = vpop.f32.mrb[0].mxu0
      %683 = vmatprep.mubr.f32.mxu0 0.0
      %684 = vmatmul.mubr.f32.gmra.mrb[0].mxu0 %v478
      %v685 = vpop.f32.mrb[0].mxu0
      %v686 = vadd.f32 0.0, %v685
      %v687 = vpop.f32.mrb[0].mxu0
      %688 = vmatprep.mubr.f32.mxu0 0.0
      %689 = vmatmul.mubr.f32.gmra.mrb[0].mxu0 %v481
      %v690 = vpop.f32.mrb[0].mxu0
      %v691 = vadd.f32 0.0, %v690
      %v692 = vpop.f32.mrb[0].mxu0
      %693 = vmatprep.mubr.f32.mxu0 0.0
      %694 = vmatmul.mubr.f32.gmra.mrb[0].mxu0 %v484
      %v695 = vpop.f32.mrb[0].mxu0
      %v696 = vadd.f32 0.0, %v695
      %v697 = vpop.f32.mrb[0].mxu0
      %698 = vmatprep.mubr.f32.mxu0 0.0
      %699 = vmatmul.mubr.f32.gmra.mrb[0].mxu0 %v487
      %v700 = vpop.f32.mrb[0].mxu0
      %v701 = vadd.f32 0.0, %v700
      %v702 = vpop.f32.mrb[0].mxu0
      %703 = vmatprep.mubr.f32.mxu0 0.0
      %704 = vmatmul.mubr.f32.gmra.mrb[0].mxu0 %v490
      %v705 = vpop.f32.mrb[0].mxu0
      %v706 = vadd.f32 0.0, %v705
      %v707 = vpop.f32.mrb[0].mxu0
      %708 = vmatprep.mubr.f32.mxu0 0.0
      %709 = vmatmul.mubr.f32.gmra.mrb[0].mxu0 %v493
      %v710 = vpop.f32.mrb[0].mxu0
      %v711 = vadd.f32 0.0, %v710
      %v712 = vpop.f32.mrb[0].mxu0
      %713 = vmatprep.mubr.f32.mxu0 0.0
      %714 = vmatmul.mubr.f32.gmra.mrb[0].mxu0 %v496
      %v715 = vpop.f32.mrb[0].mxu0
      %v716 = vadd.f32 0.0, %v715
      %v717 = vpop.f32.mrb[0].mxu0
      %718 = vmatprep.mubr.f32.mxu0 0.0
      %719 = vmatmul.mubr.f32.gmra.mrb[0].mxu0 %v499
      %v720 = vpop.f32.mrb[0].mxu0
      %v721 = vadd.f32 0.0, %v720
      %v722 = vpop.f32.mrb[0].mxu0
      %723 = vmatprep.mubr.f32.mxu0 0.0
      %724 = vmatmul.mubr.f32.gmra.mrb[0].mxu0 %v502
      %v725 = vpop.f32.mrb[0].mxu0
      %v726 = vadd.f32 0.0, %v725
      %v727 = vpop.f32.mrb[0].mxu0
      %728 = vmatprep.mubr.f32.mxu0 0.0
      %729 = vmatmul.mubr.f32.gmra.mrb[0].mxu0 %v505
      %v730 = vpop.f32.mrb[0].mxu0
      %v731 = vadd.f32 0.0, %v730
      %v732 = vpop.f32.mrb[0].mxu0
      %733 = vmatprep.mubr.f32.mxu0 0.0
      %734 = vmatmul.mubr.f32.gmra.mrb[0].mxu0 %v508
      %v735 = vpop.f32.mrb[0].mxu0
      %v736 = vadd.f32 0.0, %v735
      %v737 = vpop.f32.mrb[0].mxu0
      %738 = vdwg.mxu0
      %v740 = vsel %vm225, %v347, 0
      %v743 = vsel %vm225, %v348, 0
      %v746 = vsel %vm225, %v349, 0
      %v749 = vsel %vm225, %v350, 0
      %v752 = vsel %vm225, %v351, 0
      %v755 = vsel %vm225, %v352, 0
      %v758 = vsel %vm225, %v353, 0
      %v761 = vsel %vm225, %v354, 0
      %v764 = vsel %vm225, %v355, 0
      %v767 = vsel %vm225, %v356, 0
      %v770 = vsel %vm225, %v357, 0
      %v773 = vsel %vm225, %v358, 0
      %v776 = vsel %vm225, %v359, 0
      %v779 = vsel %vm225, %v360, 0
      %v782 = vsel %vm225, %v361, 0
      %v785 = vsel %vm225, %v362, 0
      %v788 = vsel %vm225, %v363, 0
      %v791 = vsel %vm225, %v364, 0
      %v794 = vsel %vm225, %v365, 0
      %v797 = vsel %vm225, %v366, 0
      %v800 = vsel %vm225, %v367, 0
      %v803 = vsel %vm225, %v368, 0
      %v806 = vsel %vm225, %v369, 0
      %v809 = vsel %vm225, %v370, 0
      %v812 = vsel %vm225, %v371, 0
      %v815 = vsel %vm225, %v372, 0
      %v818 = vsel %vm225, %v373, 0
      %v821 = vsel %vm225, %v374, 0
      %v824 = vsel %vm225, %v375, 0
      %v827 = vsel %vm225, %v376, 0
      %v830 = vsel %vm225, %v377, 0
      %v833 = vsel %vm225, %v378, 0
      %v836 = vsel %vm510, %v379, 0
      %838 = vmatprep.subr.mxu0 0.0
      %839 = vmatpush1.msra.mxu0 %v836
      %840 = vmatprep.subr.mxu0 0.0
      %841 = vmatpush1.msra.mxu0 0.0
      %842 = vmatprep.subr.mxu0 0.0
      %843 = vmatpush1.msra.mxu0 0.0
      %844 = vmatprep.subr.mxu0 0.0
      %845 = vmatpush1.msra.mxu0 0.0
      %846 = vmatprep.subr.mxu0 0.0
      %847 = vmatpush1.msra.mxu0 0.0
      %848 = vmatprep.subr.mxu0 0.0
      %849 = vmatpush1.msra.mxu0 0.0
      %850 = vmatprep.subr.mxu0 0.0
      %851 = vmatpush1.msra.mxu0 0.0
      %852 = vmatprep.subr.mxu0 0.0
      %853 = vmatpush1.msra.mxu0 0.0
      %854 = vmatprep.subr.mxu0 0.0
      %855 = vmatpush1.msra.mxu0 0.0
      %856 = vmatprep.subr.mxu0 0.0
      %857 = vmatpush1.msra.mxu0 0.0
      %858 = vmatprep.subr.mxu0 0.0
      %859 = vmatpush1.msra.mxu0 0.0
      %860 = vmatprep.subr.mxu0 0.0
      %861 = vmatpush1.msra.mxu0 0.0
      %862 = vmatprep.subr.mxu0 0.0
      %863 = vmatpush1.msra.mxu0 0.0
      %864 = vmatprep.subr.mxu0 0.0
      %865 = vmatpush1.msra.mxu0 0.0
      %866 = vmatprep.subr.mxu0 0.0
      %867 = vmatpush1.msra.mxu0 0.0
      %868 = vmatprep.subr.mxu0 0.0
      %869 = vmatpush1.msra.mxu0 0.0
      %870 = vmatprep.subr.mxu0 0.0
      %871 = vmatpush1.msra.mxu0 0.0
      %872 = vmatprep.subr.mxu0 0.0
      %873 = vmatpush1.msra.mxu0 0.0
      %874 = vmatprep.subr.mxu0 0.0
      %875 = vmatpush1.msra.mxu0 0.0
      %876 = vmatprep.subr.mxu0 0.0
      %877 = vmatpush1.msra.mxu0 0.0
      %878 = vmatprep.subr.mxu0 0.0
      %879 = vmatpush1.msra.mxu0 0.0
      %880 = vmatprep.subr.mxu0 0.0
      %881 = vmatpush1.msra.mxu0 0.0
      %882 = vmatprep.subr.mxu0 0.0
      %883 = vmatpush1.msra.mxu0 0.0
      %884 = vmatprep.subr.mxu0 0.0
      %885 = vmatpush1.msra.mxu0 0.0
      %886 = vmatprep.subr.mxu0 0.0
      %887 = vmatpush1.msra.mxu0 0.0
      %888 = vmatprep.subr.mxu0 0.0
      %889 = vmatpush1.msra.mxu0 0.0
      %890 = vmatprep.subr.mxu0 0.0
      %891 = vmatpush1.msra.mxu0 0.0
      %892 = vmatprep.subr.mxu0 0.0
      %893 = vmatpush1.msra.mxu0 0.0
      %894 = vmatprep.subr.mxu0 0.0
      %895 = vmatpush1.msra.mxu0 0.0
      %896 = vmatprep.subr.mxu0 0.0
      %897 = vmatpush1.msra.mxu0 0.0
      %898 = vmatprep.subr.mxu0 0.0
      %899 = vmatpush1.msra.mxu0 0.0
      %900 = vmatprep.subr.mxu0 0.0
      %901 = vmatpush1.msra.mxu0 0.0
      %902 = vmatprep.mubr.f32.mxu0 0.0
      %903 = vmatmul.mubr.f32.gmra.mrb[0].mxu0 %v740
      %v904 = vpop.f32.mrb[0].mxu0
      %v905 = vadd.f32 %v581, %v904
      %v906 = vpop.f32.mrb[0].mxu0
      %907 = vmatprep.mubr.f32.mxu0 0.0
      %908 = vmatmul.mubr.f32.gmra.mrb[0].mxu0 %v743
      %v909 = vpop.f32.mrb[0].mxu0
      %v910 = vadd.f32 %v586, %v909
      %v911 = vpop.f32.mrb[0].mxu0
      %912 = vmatprep.mubr.f32.mxu0 0.0
      %913 = vmatmul.mubr.f32.gmra.mrb[0].mxu0 %v746
      %v914 = vpop.f32.mrb[0].mxu0
      %v915 = vadd.f32 %v591, %v914
      %v916 = vpop.f32.mrb[0].mxu0
      %917 = vmatprep.mubr.f32.mxu0 0.0
      %918 = vmatmul.mubr.f32.gmra.mrb[0].mxu0 %v749
      %v919 = vpop.f32.mrb[0].mxu0
      %v920 = vadd.f32 %v596, %v919
      %v921 = vpop.f32.mrb[0].mxu0
      %922 = vmatprep.mubr.f32.mxu0 0.0
      %923 = vmatmul.mubr.f32.gmra.mrb[0].mxu0 %v752
      %v924 = vpop.f32.mrb[0].mxu0
      %v925 = vadd.f32 %v601, %v924
      %v926 = vpop.f32.mrb[0].mxu0
      %927 = vmatprep.mubr.f32.mxu0 0.0
      %928 = vmatmul.mubr.f32.gmra.mrb[0].mxu0 %v755
      %v929 = vpop.f32.mrb[0].mxu0
      %v930 = vadd.f32 %v606, %v929
      %v931 = vpop.f32.mrb[0].mxu0
      %932 = vmatprep.mubr.f32.mxu0 0.0
      %933 = vmatmul.mubr.f32.gmra.mrb[0].mxu0 %v758
      %v934 = vpop.f32.mrb[0].mxu0
      %v935 = vadd.f32 %v611, %v934
      %v936 = vpop.f32.mrb[0].mxu0
      %937 = vmatprep.mubr.f32.mxu0 0.0
      %938 = vmatmul.mubr.f32.gmra.mrb[0].mxu0 %v761
      %v939 = vpop.f32.mrb[0].mxu0
      %v940 = vadd.f32 %v616, %v939
      %v941 = vpop.f32.mrb[0].mxu0
      %942 = vmatprep.mubr.f32.mxu0 0.0
      %943 = vmatmul.mubr.f32.gmra.mrb[0].mxu0 %v764
      %v944 = vpop.f32.mrb[0].mxu0
      %v945 = vadd.f32 %v621, %v944
      %v946 = vpop.f32.mrb[0].mxu0
      %947 = vmatprep.mubr.f32.mxu0 0.0
      %948 = vmatmul.mubr.f32.gmra.mrb[0].mxu0 %v767
      %v949 = vpop.f32.mrb[0].mxu0
      %v950 = vadd.f32 %v626, %v949
      %v951 = vpop.f32.mrb[0].mxu0
      %952 = vmatprep.mubr.f32.mxu0 0.0
      %953 = vmatmul.mubr.f32.gmra.mrb[0].mxu0 %v770
      %v954 = vpop.f32.mrb[0].mxu0
      %v955 = vadd.f32 %v631, %v954
      %v956 = vpop.f32.mrb[0].mxu0
      %957 = vmatprep.mubr.f32.mxu0 0.0
      %958 = vmatmul.mubr.f32.gmra.mrb[0].mxu0 %v773
      %v959 = vpop.f32.mrb[0].mxu0
      %v960 = vadd.f32 %v636, %v959
      %v961 = vpop.f32.mrb[0].mxu0
      %962 = vmatprep.mubr.f32.mxu0 0.0
      %963 = vmatmul.mubr.f32.gmra.mrb[0].mxu0 %v776
      %v964 = vpop.f32.mrb[0].mxu0
      %v965 = vadd.f32 %v641, %v964
      %v966 = vpop.f32.mrb[0].mxu0
      %967 = vmatprep.mubr.f32.mxu0 0.0
      %968 = vmatmul.mubr.f32.gmra.mrb[0].mxu0 %v779
      %v969 = vpop.f32.mrb[0].mxu0
      %v970 = vadd.f32 %v646, %v969
      %v971 = vpop.f32.mrb[0].mxu0
      %972 = vmatprep.mubr.f32.mxu0 0.0
      %973 = vmatmul.mubr.f32.gmra.mrb[0].mxu0 %v782
      %v974 = vpop.f32.mrb[0].mxu0
      %v975 = vadd.f32 %v651, %v974
      %v976 = vpop.f32.mrb[0].mxu0
      %977 = vmatprep.mubr.f32.mxu0 0.0
      %978 = vmatmul.mubr.f32.gmra.mrb[0].mxu0 %v785
      %v979 = vpop.f32.mrb[0].mxu0
      %v980 = vadd.f32 %v656, %v979
      %v981 = vpop.f32.mrb[0].mxu0
      %982 = vmatprep.mubr.f32.mxu0 0.0
      %983 = vmatmul.mubr.f32.gmra.mrb[0].mxu0 %v788
      %v984 = vpop.f32.mrb[0].mxu0
      %v985 = vadd.f32 %v661, %v984
      %v986 = vpop.f32.mrb[0].mxu0
      %987 = vmatprep.mubr.f32.mxu0 0.0
      %988 = vmatmul.mubr.f32.gmra.mrb[0].mxu0 %v791
      %v989 = vpop.f32.mrb[0].mxu0
      %v990 = vadd.f32 %v666, %v989
      %v991 = vpop.f32.mrb[0].mxu0
      %992 = vmatprep.mubr.f32.mxu0 0.0
      %993 = vmatmul.mubr.f32.gmra.mrb[0].mxu0 %v794
      %v994 = vpop.f32.mrb[0].mxu0
      %v995 = vadd.f32 %v671, %v994
      %v996 = vpop.f32.mrb[0].mxu0
      %997 = vmatprep.mubr.f32.mxu0 0.0
      %998 = vmatmul.mubr.f32.gmra.mrb[0].mxu0 %v797
      %v999 = vpop.f32.mrb[0].mxu0
      %v1000 = vadd.f32 %v676, %v999
      %v1001 = vpop.f32.mrb[0].mxu0
      %1002 = vmatprep.mubr.f32.mxu0 0.0
      %1003 = vmatmul.mubr.f32.gmra.mrb[0].mxu0 %v800
      %v1004 = vpop.f32.mrb[0].mxu0
      %v1005 = vadd.f32 %v681, %v1004
      %v1006 = vpop.f32.mrb[0].mxu0
      %1007 = vmatprep.mubr.f32.mxu0 0.0
      %1008 = vmatmul.mubr.f32.gmra.mrb[0].mxu0 %v803
      %v1009 = vpop.f32.mrb[0].mxu0
      %v1010 = vadd.f32 %v686, %v1009
      %v1011 = vpop.f32.mrb[0].mxu0
      %1012 = vmatprep.mubr.f32.mxu0 0.0
      %1013 = vmatmul.mubr.f32.gmra.mrb[0].mxu0 %v806
      %v1014 = vpop.f32.mrb[0].mxu0
      %v1015 = vadd.f32 %v691, %v1014
      %v1016 = vpop.f32.mrb[0].mxu0
      %1017 = vmatprep.mubr.f32.mxu0 0.0
      %1018 = vmatmul.mubr.f32.gmra.mrb[0].mxu0 %v809
      %v1019 = vpop.f32.mrb[0].mxu0
      %v1020 = vadd.f32 %v696, %v1019
      %v1021 = vpop.f32.mrb[0].mxu0
      %1022 = vmatprep.mubr.f32.mxu0 0.0
      %1023 = vmatmul.mubr.f32.gmra.mrb[0].mxu0 %v812
      %v1024 = vpop.f32.mrb[0].mxu0
      %v1025 = vadd.f32 %v701, %v1024
      %v1026 = vpop.f32.mrb[0].mxu0
      %1027 = vmatprep.mubr.f32.mxu0 0.0
      %1028 = vmatmul.mubr.f32.gmra.mrb[0].mxu0 %v815
      %v1029 = vpop.f32.mrb[0].mxu0
      %v1030 = vadd.f32 %v706, %v1029
      %v1031 = vpop.f32.mrb[0].mxu0
      %1032 = vmatprep.mubr.f32.mxu0 0.0
      %1033 = vmatmul.mubr.f32.gmra.mrb[0].mxu0 %v818
      %v1034 = vpop.f32.mrb[0].mxu0
      %v1035 = vadd.f32 %v711, %v1034
      %v1036 = vpop.f32.mrb[0].mxu0
      %1037 = vmatprep.mubr.f32.mxu0 0.0
      %1038 = vmatmul.mubr.f32.gmra.mrb[0].mxu0 %v821
      %v1039 = vpop.f32.mrb[0].mxu0
      %v1040 = vadd.f32 %v716, %v1039
      %v1041 = vpop.f32.mrb[0].mxu0
      %1042 = vmatprep.mubr.f32.mxu0 0.0
      %1043 = vmatmul.mubr.f32.gmra.mrb[0].mxu0 %v824
      %v1044 = vpop.f32.mrb[0].mxu0
      %v1045 = vadd.f32 %v721, %v1044
      %v1046 = vpop.f32.mrb[0].mxu0
      %1047 = vmatprep.mubr.f32.mxu0 0.0
      %1048 = vmatmul.mubr.f32.gmra.mrb[0].mxu0 %v827
      %v1049 = vpop.f32.mrb[0].mxu0
      %v1050 = vadd.f32 %v726, %v1049
      %v1051 = vpop.f32.mrb[0].mxu0
      %1052 = vmatprep.mubr.f32.mxu0 0.0
      %1053 = vmatmul.mubr.f32.gmra.mrb[0].mxu0 %v830
      %v1054 = vpop.f32.mrb[0].mxu0
      %v1055 = vadd.f32 %v731, %v1054
      %v1056 = vpop.f32.mrb[0].mxu0
      %1057 = vmatprep.mubr.f32.mxu0 0.0
      %1058 = vmatmul.mubr.f32.gmra.mrb[0].mxu0 %v833
      %v1059 = vpop.f32.mrb[0].mxu0
      %v1060 = vadd.f32 %v736, %v1059
      %v1061 = vpop.f32.mrb[0].mxu0
      %1062 = vdwg.mxu0
      %v1063 = vld [vmem:[#allocation2 + $0x2] sm:$0xff]
      %v1064 = vld [vmem:[#allocation2 + $0xa] sm:$0xff]
      %v1065 = vld [vmem:[#allocation2 + $0x1a] sm:$0xff]
      %v1066 = vld [vmem:[#allocation2 + $0x22] sm:$0xff]
      %v1067 = vld [vmem:[#allocation2 + $0x32] sm:$0xff]
      %v1068 = vld [vmem:[#allocation2 + $0x3a] sm:$0xff]
      %v1069 = vld [vmem:[#allocation2 + $0x4a] sm:$0xff]
      %v1070 = vld [vmem:[#allocation2 + $0x52] sm:$0xff]
      %v1071 = vld [vmem:[#allocation2 + $0x62] sm:$0xff]
      %v1072 = vld [vmem:[#allocation2 + $0x6a] sm:$0xff]
      %v1073 = vld [vmem:[#allocation2 + $0x7a] sm:$0xff]
      %v1074 = vld [vmem:[#allocation2 + $0x82] sm:$0xff]
      %v1075 = vld [vmem:[#allocation2 + $0x92] sm:$0xff]
      %v1076 = vld [vmem:[#allocation2 + $0x9a] sm:$0xff]
      %v1077 = vld [vmem:[#allocation2 + $0xaa] sm:$0xff]
      %v1078 = vld [vmem:[#allocation2 + $0xb2] sm:$0xff]
      %v1079 = vld [vmem:[#allocation2 + $0xc2] sm:$0xff]
      %v1080 = vld [vmem:[#allocation2 + $0xca] sm:$0xff]
      %v1081 = vld [vmem:[#allocation2 + $0xda] sm:$0xff]
      %v1082 = vld [vmem:[#allocation2 + $0xe2] sm:$0xff]
      %v1083 = vld [vmem:[#allocation2 + $0xf2] sm:$0xff]
      %v1084 = vld [vmem:[#allocation2 + $0xfa] sm:$0xff]
      %v1085 = vld [vmem:[#allocation2 + $0x10a] sm:$0xff]
      %v1086 = vld [vmem:[#allocation2 + $0x112] sm:$0xff]
      %v1087 = vld [vmem:[#allocation2 + $0x122] sm:$0xff]
      %v1088 = vld [vmem:[#allocation2 + $0x12a] sm:$0xff]
      %v1089 = vld [vmem:[#allocation2 + $0x13a] sm:$0xff]
      %v1090 = vld [vmem:[#allocation2 + $0x142] sm:$0xff]
      %v1091 = vld [vmem:[#allocation2 + $0x152] sm:$0xff]
      %v1092 = vld [vmem:[#allocation2 + $0x15a] sm:$0xff]
      %v1093 = vld [vmem:[#allocation2 + $0x16a] sm:$0xff]
      %v1094 = vld [vmem:[#allocation2 + $0x172] sm:$0xff]
      %s1095 = scalar_lea.vmem %s1, 8
      %v1096 = vld [vmem:[%s1095] sm:$0xf]
      %v1098 = vsel %vm225, %v1063, 0
      %v1101 = vsel %vm225, %v1064, 0
      %v1104 = vsel %vm225, %v1065, 0
      %v1107 = vsel %vm225, %v1066, 0
      %v1110 = vsel %vm225, %v1067, 0
      %v1113 = vsel %vm225, %v1068, 0
      %v1116 = vsel %vm225, %v1069, 0
      %v1119 = vsel %vm225, %v1070, 0
      %v1122 = vsel %vm225, %v1071, 0
      %v1125 = vsel %vm225, %v1072, 0
      %v1128 = vsel %vm225, %v1073, 0
      %v1131 = vsel %vm225, %v1074, 0
      %v1134 = vsel %vm225, %v1075, 0
      %v1137 = vsel %vm225, %v1076, 0
      %v1140 = vsel %vm225, %v1077, 0
      %v1143 = vsel %vm225, %v1078, 0
      %v1146 = vsel %vm225, %v1079, 0
      %v1149 = vsel %vm225, %v1080, 0
      %v1152 = vsel %vm225, %v1081, 0
      %v1155 = vsel %vm225, %v1082, 0
      %v1158 = vsel %vm225, %v1083, 0
      %v1161 = vsel %vm225, %v1084, 0
      %v1164 = vsel %vm225, %v1085, 0
      %v1167 = vsel %vm225, %v1086, 0
      %v1170 = vsel %vm225, %v1087, 0
      %v1173 = vsel %vm225, %v1088, 0
      %v1176 = vsel %vm225, %v1089, 0
      %v1179 = vsel %vm225, %v1090, 0
      %v1182 = vsel %vm225, %v1091, 0
      %v1185 = vsel %vm225, %v1092, 0
      %v1188 = vsel %vm225, %v1093, 0
      %v1191 = vsel %vm225, %v1094, 0
      %v1194 = vsel %vm510, %v1096, 0
      %1196 = vmatprep.subr.mxu0 0.0
      %1197 = vmatpush1.msra.mxu0 %v1194
      %1198 = vmatprep.subr.mxu0 0.0
      %1199 = vmatpush1.msra.mxu0 0.0
      %1200 = vmatprep.subr.mxu0 0.0
      %1201 = vmatpush1.msra.mxu0 0.0
      %1202 = vmatprep.subr.mxu0 0.0
      %1203 = vmatpush1.msra.mxu0 0.0
      %1204 = vmatprep.subr.mxu0 0.0
      %1205 = vmatpush1.msra.mxu0 0.0
      %1206 = vmatprep.subr.mxu0 0.0
      %1207 = vmatpush1.msra.mxu0 0.0
      %1208 = vmatprep.subr.mxu0 0.0
      %1209 = vmatpush1.msra.mxu0 0.0
      %1210 = vmatprep.subr.mxu0 0.0
      %1211 = vmatpush1.msra.mxu0 0.0
      %1212 = vmatprep.subr.mxu0 0.0
      %1213 = vmatpush1.msra.mxu0 0.0
      %1214 = vmatprep.subr.mxu0 0.0
      %1215 = vmatpush1.msra.mxu0 0.0
      %1216 = vmatprep.subr.mxu0 0.0
      %1217 = vmatpush1.msra.mxu0 0.0
      %1218 = vmatprep.subr.mxu0 0.0
      %1219 = vmatpush1.msra.mxu0 0.0
      %1220 = vmatprep.subr.mxu0 0.0
      %1221 = vmatpush1.msra.mxu0 0.0
      %1222 = vmatprep.subr.mxu0 0.0
      %1223 = vmatpush1.msra.mxu0 0.0
      %1224 = vmatprep.subr.mxu0 0.0
      %1225 = vmatpush1.msra.mxu0 0.0
      %1226 = vmatprep.subr.mxu0 0.0
      %1227 = vmatpush1.msra.mxu0 0.0
      %1228 = vmatprep.subr.mxu0 0.0
      %1229 = vmatpush1.msra.mxu0 0.0
      %1230 = vmatprep.subr.mxu0 0.0
      %1231 = vmatpush1.msra.mxu0 0.0
      %1232 = vmatprep.subr.mxu0 0.0
      %1233 = vmatpush1.msra.mxu0 0.0
      %1234 = vmatprep.subr.mxu0 0.0
      %1235 = vmatpush1.msra.mxu0 0.0
      %1236 = vmatprep.subr.mxu0 0.0
      %1237 = vmatpush1.msra.mxu0 0.0
      %1238 = vmatprep.subr.mxu0 0.0
      %1239 = vmatpush1.msra.mxu0 0.0
      %1240 = vmatprep.subr.mxu0 0.0
      %1241 = vmatpush1.msra.mxu0 0.0
      %1242 = vmatprep.subr.mxu0 0.0
      %1243 = vmatpush1.msra.mxu0 0.0
      %1244 = vmatprep.subr.mxu0 0.0
      %1245 = vmatpush1.msra.mxu0 0.0
      %1246 = vmatprep.subr.mxu0 0.0
      %1247 = vmatpush1.msra.mxu0 0.0
      %1248 = vmatprep.subr.mxu0 0.0
      %1249 = vmatpush1.msra.mxu0 0.0
      %1250 = vmatprep.subr.mxu0 0.0
      %1251 = vmatpush1.msra.mxu0 0.0
      %1252 = vmatprep.subr.mxu0 0.0
      %1253 = vmatpush1.msra.mxu0 0.0
      %1254 = vmatprep.subr.mxu0 0.0
      %1255 = vmatpush1.msra.mxu0 0.0
      %1256 = vmatprep.subr.mxu0 0.0
      %1257 = vmatpush1.msra.mxu0 0.0
      %1258 = vmatprep.subr.mxu0 0.0
      %1259 = vmatpush1.msra.mxu0 0.0
      %1260 = vmatprep.mubr.f32.mxu0 0.0
      %1261 = vmatmul.mubr.f32.gmra.mrb[0].mxu0 %v1098
      %v1262 = vpop.f32.mrb[0].mxu0
      %v1263 = vadd.f32 0.0, %v1262
      %v1264 = vpop.f32.mrb[0].mxu0
      %1265 = vmatprep.mubr.f32.mxu0 0.0
      %1266 = vmatmul.mubr.f32.gmra.mrb[0].mxu0 %v1101
      %v1267 = vpop.f32.mrb[0].mxu0
      %v1268 = vadd.f32 0.0, %v1267
      %v1269 = vpop.f32.mrb[0].mxu0
      %1270 = vmatprep.mubr.f32.mxu0 0.0
      %1271 = vmatmul.mubr.f32.gmra.mrb[0].mxu0 %v1104
      %v1272 = vpop.f32.mrb[0].mxu0
      %v1273 = vadd.f32 0.0, %v1272
      %v1274 = vpop.f32.mrb[0].mxu0
      %1275 = vmatprep.mubr.f32.mxu0 0.0
      %1276 = vmatmul.mubr.f32.gmra.mrb[0].mxu0 %v1107
      %v1277 = vpop.f32.mrb[0].mxu0
      %v1278 = vadd.f32 0.0, %v1277
      %v1279 = vpop.f32.mrb[0].mxu0
      %1280 = vmatprep.mubr.f32.mxu0 0.0
      %1281 = vmatmul.mubr.f32.gmra.mrb[0].mxu0 %v1110
      %v1282 = vpop.f32.mrb[0].mxu0
      %v1283 = vadd.f32 0.0, %v1282
      %v1284 = vpop.f32.mrb[0].mxu0
      %1285 = vmatprep.mubr.f32.mxu0 0.0
      %1286 = vmatmul.mubr.f32.gmra.mrb[0].mxu0 %v1113
      %v1287 = vpop.f32.mrb[0].mxu0
      %v1288 = vadd.f32 0.0, %v1287
      %v1289 = vpop.f32.mrb[0].mxu0
      %1290 = vmatprep.mubr.f32.mxu0 0.0
      %1291 = vmatmul.mubr.f32.gmra.mrb[0].mxu0 %v1116
      %v1292 = vpop.f32.mrb[0].mxu0
      %v1293 = vadd.f32 0.0, %v1292
      %v1294 = vpop.f32.mrb[0].mxu0
      %1295 = vmatprep.mubr.f32.mxu0 0.0
      %1296 = vmatmul.mubr.f32.gmra.mrb[0].mxu0 %v1119
      %v1297 = vpop.f32.mrb[0].mxu0
      %v1298 = vadd.f32 0.0, %v1297
      %v1299 = vpop.f32.mrb[0].mxu0
      %1300 = vmatprep.mubr.f32.mxu0 0.0
      %1301 = vmatmul.mubr.f32.gmra.mrb[0].mxu0 %v1122
      %v1302 = vpop.f32.mrb[0].mxu0
      %v1303 = vadd.f32 0.0, %v1302
      %v1304 = vpop.f32.mrb[0].mxu0
      %1305 = vmatprep.mubr.f32.mxu0 0.0
      %1306 = vmatmul.mubr.f32.gmra.mrb[0].mxu0 %v1125
      %v1307 = vpop.f32.mrb[0].mxu0
      %v1308 = vadd.f32 0.0, %v1307
      %v1309 = vpop.f32.mrb[0].mxu0
      %1310 = vmatprep.mubr.f32.mxu0 0.0
      %1311 = vmatmul.mubr.f32.gmra.mrb[0].mxu0 %v1128
      %v1312 = vpop.f32.mrb[0].mxu0
      %v1313 = vadd.f32 0.0, %v1312
      %v1314 = vpop.f32.mrb[0].mxu0
      %1315 = vmatprep.mubr.f32.mxu0 0.0
      %1316 = vmatmul.mubr.f32.gmra.mrb[0].mxu0 %v1131
      %v1317 = vpop.f32.mrb[0].mxu0
      %v1318 = vadd.f32 0.0, %v1317
      %v1319 = vpop.f32.mrb[0].mxu0
      %1320 = vmatprep.mubr.f32.mxu0 0.0
      %1321 = vmatmul.mubr.f32.gmra.mrb[0].mxu0 %v1134
      %v1322 = vpop.f32.mrb[0].mxu0
      %v1323 = vadd.f32 0.0, %v1322
      %v1324 = vpop.f32.mrb[0].mxu0
      %1325 = vmatprep.mubr.f32.mxu0 0.0
      %1326 = vmatmul.mubr.f32.gmra.mrb[0].mxu0 %v1137
      %v1327 = vpop.f32.mrb[0].mxu0
      %v1328 = vadd.f32 0.0, %v1327
      %v1329 = vpop.f32.mrb[0].mxu0
      %1330 = vmatprep.mubr.f32.mxu0 0.0
      %1331 = vmatmul.mubr.f32.gmra.mrb[0].mxu0 %v1140
      %v1332 = vpop.f32.mrb[0].mxu0
      %v1333 = vadd.f32 0.0, %v1332
      %v1334 = vpop.f32.mrb[0].mxu0
      %1335 = vmatprep.mubr.f32.mxu0 0.0
      %1336 = vmatmul.mubr.f32.gmra.mrb[0].mxu0 %v1143
      %v1337 = vpop.f32.mrb[0].mxu0
      %v1338 = vadd.f32 0.0, %v1337
      %v1339 = vpop.f32.mrb[0].mxu0
      %1340 = vmatprep.mubr.f32.mxu0 0.0
      %1341 = vmatmul.mubr.f32.gmra.mrb[0].mxu0 %v1146
      %v1342 = vpop.f32.mrb[0].mxu0
      %v1343 = vadd.f32 0.0, %v1342
      %v1344 = vpop.f32.mrb[0].mxu0
      %1345 = vmatprep.mubr.f32.mxu0 0.0
      %1346 = vmatmul.mubr.f32.gmra.mrb[0].mxu0 %v1149
      %v1347 = vpop.f32.mrb[0].mxu0
      %v1348 = vadd.f32 0.0, %v1347
      %v1349 = vpop.f32.mrb[0].mxu0
      %1350 = vmatprep.mubr.f32.mxu0 0.0
      %1351 = vmatmul.mubr.f32.gmra.mrb[0].mxu0 %v1152
      %v1352 = vpop.f32.mrb[0].mxu0
      %v1353 = vadd.f32 0.0, %v1352
      %v1354 = vpop.f32.mrb[0].mxu0
      %1355 = vmatprep.mubr.f32.mxu0 0.0
      %1356 = vmatmul.mubr.f32.gmra.mrb[0].mxu0 %v1155
      %v1357 = vpop.f32.mrb[0].mxu0
      %v1358 = vadd.f32 0.0, %v1357
      %v1359 = vpop.f32.mrb[0].mxu0
      %1360 = vmatprep.mubr.f32.mxu0 0.0
      %1361 = vmatmul.mubr.f32.gmra.mrb[0].mxu0 %v1158
      %v1362 = vpop.f32.mrb[0].mxu0
      %v1363 = vadd.f32 0.0, %v1362
      %v1364 = vpop.f32.mrb[0].mxu0
      %1365 = vmatprep.mubr.f32.mxu0 0.0
      %1366 = vmatmul.mubr.f32.gmra.mrb[0].mxu0 %v1161
      %v1367 = vpop.f32.mrb[0].mxu0
      %v1368 = vadd.f32 0.0, %v1367
      %v1369 = vpop.f32.mrb[0].mxu0
      %1370 = vmatprep.mubr.f32.mxu0 0.0
      %1371 = vmatmul.mubr.f32.gmra.mrb[0].mxu0 %v1164
      %v1372 = vpop.f32.mrb[0].mxu0
      %v1373 = vadd.f32 0.0, %v1372
      %v1374 = vpop.f32.mrb[0].mxu0
      %1375 = vmatprep.mubr.f32.mxu0 0.0
      %1376 = vmatmul.mubr.f32.gmra.mrb[0].mxu0 %v1167
      %v1377 = vpop.f32.mrb[0].mxu0
      %v1378 = vadd.f32 0.0, %v1377
      %v1379 = vpop.f32.mrb[0].mxu0
      %1380 = vmatprep.mubr.f32.mxu0 0.0
      %1381 = vmatmul.mubr.f32.gmra.mrb[0].mxu0 %v1170
      %v1382 = vpop.f32.mrb[0].mxu0
      %v1383 = vadd.f32 0.0, %v1382
      %v1384 = vpop.f32.mrb[0].mxu0
      %1385 = vmatprep.mubr.f32.mxu0 0.0
      %1386 = vmatmul.mubr.f32.gmra.mrb[0].mxu0 %v1173
      %v1387 = vpop.f32.mrb[0].mxu0
      %v1388 = vadd.f32 0.0, %v1387
      %v1389 = vpop.f32.mrb[0].mxu0
      %1390 = vmatprep.mubr.f32.mxu0 0.0
      %1391 = vmatmul.mubr.f32.gmra.mrb[0].mxu0 %v1176
      %v1392 = vpop.f32.mrb[0].mxu0
      %v1393 = vadd.f32 0.0, %v1392
      %v1394 = vpop.f32.mrb[0].mxu0
      %1395 = vmatprep.mubr.f32.mxu0 0.0
      %1396 = vmatmul.mubr.f32.gmra.mrb[0].mxu0 %v1179
      %v1397 = vpop.f32.mrb[0].mxu0
      %v1398 = vadd.f32 0.0, %v1397
      %v1399 = vpop.f32.mrb[0].mxu0
      %1400 = vmatprep.mubr.f32.mxu0 0.0
      %1401 = vmatmul.mubr.f32.gmra.mrb[0].mxu0 %v1182
      %v1402 = vpop.f32.mrb[0].mxu0
      %v1403 = vadd.f32 0.0, %v1402
      %v1404 = vpop.f32.mrb[0].mxu0
      %1405 = vmatprep.mubr.f32.mxu0 0.0
      %1406 = vmatmul.mubr.f32.gmra.mrb[0].mxu0 %v1185
      %v1407 = vpop.f32.mrb[0].mxu0
      %v1408 = vadd.f32 0.0, %v1407
      %v1409 = vpop.f32.mrb[0].mxu0
      %1410 = vmatprep.mubr.f32.mxu0 0.0
      %1411 = vmatmul.mubr.f32.gmra.mrb[0].mxu0 %v1188
      %v1412 = vpop.f32.mrb[0].mxu0
      %v1413 = vadd.f32 0.0, %v1412
      %v1414 = vpop.f32.mrb[0].mxu0
      %1415 = vmatprep.mubr.f32.mxu0 0.0
      %1416 = vmatmul.mubr.f32.gmra.mrb[0].mxu0 %v1191
      %v1417 = vpop.f32.mrb[0].mxu0
      %v1418 = vadd.f32 0.0, %v1417
      %v1419 = vpop.f32.mrb[0].mxu0
      %1420 = vdwg.mxu0
      %v1421 = vadd.f32 %v905, %v1263
      %v1422 = vadd.f32 %v910, %v1268
      %v1423 = vadd.f32 %v915, %v1273
      %v1424 = vadd.f32 %v920, %v1278
      %v1425 = vadd.f32 %v925, %v1283
      %v1426 = vadd.f32 %v930, %v1288
      %v1427 = vadd.f32 %v935, %v1293
      %v1428 = vadd.f32 %v940, %v1298
      %v1429 = vadd.f32 %v945, %v1303
      %v1430 = vadd.f32 %v950, %v1308
      %v1431 = vadd.f32 %v955, %v1313
      %v1432 = vadd.f32 %v960, %v1318
      %v1433 = vadd.f32 %v965, %v1323
      %v1434 = vadd.f32 %v970, %v1328
      %v1435 = vadd.f32 %v975, %v1333
      %v1436 = vadd.f32 %v980, %v1338
      %v1437 = vadd.f32 %v985, %v1343
      %v1438 = vadd.f32 %v990, %v1348
      %v1439 = vadd.f32 %v995, %v1353
      %v1440 = vadd.f32 %v1000, %v1358
      %v1441 = vadd.f32 %v1005, %v1363
      %v1442 = vadd.f32 %v1010, %v1368
      %v1443 = vadd.f32 %v1015, %v1373
      %v1444 = vadd.f32 %v1020, %v1378
      %v1445 = vadd.f32 %v1025, %v1383
      %v1446 = vadd.f32 %v1030, %v1388
      %v1447 = vadd.f32 %v1035, %v1393
      %v1448 = vadd.f32 %v1040, %v1398
      %v1449 = vadd.f32 %v1045, %v1403
      %v1450 = vadd.f32 %v1050, %v1408
      %v1451 = vadd.f32 %v1055, %v1413
      %v1452 = vadd.f32 %v1060, %v1418
      %v1453 = vld [vmem:[%s313] sm:$0xff]
      %v1454 = vld [vmem:[%s313 + $0x8] sm:$0xff]
      %v1455 = vld [vmem:[%s313 + $0x18] sm:$0xff]
      %v1456 = vld [vmem:[%s313 + $0x20] sm:$0xff]
      %v1457 = vld [vmem:[%s313 + $0x30] sm:$0xff]
      %v1458 = vld [vmem:[%s313 + $0x38] sm:$0xff]
      %v1459 = vld [vmem:[%s313 + $0x48] sm:$0xff]
      %v1460 = vld [vmem:[%s313 + $0x50] sm:$0xff]
      %v1461 = vld [vmem:[%s313 + $0x60] sm:$0xff]
      %v1462 = vld [vmem:[%s313 + $0x68] sm:$0xff]
      %v1463 = vld [vmem:[%s313 + $0x78] sm:$0xff]
      %v1464 = vld [vmem:[%s313 + $0x80] sm:$0xff]
      %v1465 = vld [vmem:[%s313 + $0x90] sm:$0xff]
      %v1466 = vld [vmem:[%s313 + $0x98] sm:$0xff]
      %v1467 = vld [vmem:[%s313 + $0xa8] sm:$0xff]
      %v1468 = vld [vmem:[%s313 + $0xb0] sm:$0xff]
      %v1469 = vld [vmem:[%s313 + $0xc0] sm:$0xff]
      %v1470 = vld [vmem:[%s313 + $0xc8] sm:$0xff]
      %v1471 = vld [vmem:[%s313 + $0xd8] sm:$0xff]
      %v1472 = vld [vmem:[%s313 + $0xe0] sm:$0xff]
      %v1473 = vld [vmem:[%s313 + $0xf0] sm:$0xff]
      %v1474 = vld [vmem:[%s313 + $0xf8] sm:$0xff]
      %v1475 = vld [vmem:[%s313 + $0x108] sm:$0xff]
      %v1476 = vld [vmem:[%s313 + $0x110] sm:$0xff]
      %v1477 = vld [vmem:[%s313 + $0x120] sm:$0xff]
      %v1478 = vld [vmem:[%s313 + $0x128] sm:$0xff]
      %v1479 = vld [vmem:[%s313 + $0x138] sm:$0xff]
      %v1480 = vld [vmem:[%s313 + $0x140] sm:$0xff]
      %v1481 = vld [vmem:[%s313 + $0x150] sm:$0xff]
      %v1482 = vld [vmem:[%s313 + $0x158] sm:$0xff]
      %v1483 = vld [vmem:[%s313 + $0x168] sm:$0xff]
      %v1484 = vld [vmem:[%s313 + $0x170] sm:$0xff]
      %s1485 = scalar_lea.vmem %s1, 12
      %v1486 = vld [vmem:[%s1485] sm:$0xf]
      %v1488 = vsel %vm225, %v1453, 0
      %v1491 = vsel %vm225, %v1454, 0
      %v1494 = vsel %vm225, %v1455, 0
      %v1497 = vsel %vm225, %v1456, 0
      %v1500 = vsel %vm225, %v1457, 0
      %v1503 = vsel %vm225, %v1458, 0
      %v1506 = vsel %vm225, %v1459, 0
      %v1509 = vsel %vm225, %v1460, 0
      %v1512 = vsel %vm225, %v1461, 0
      %v1515 = vsel %vm225, %v1462, 0
      %v1518 = vsel %vm225, %v1463, 0
      %v1521 = vsel %vm225, %v1464, 0
      %v1524 = vsel %vm225, %v1465, 0
      %v1527 = vsel %vm225, %v1466, 0
      %v1530 = vsel %vm225, %v1467, 0
      %v1533 = vsel %vm225, %v1468, 0
      %v1536 = vsel %vm225, %v1469, 0
      %v1539 = vsel %vm225, %v1470, 0
      %v1542 = vsel %vm225, %v1471, 0
      %v1545 = vsel %vm225, %v1472, 0
      %v1548 = vsel %vm225, %v1473, 0
      %v1551 = vsel %vm225, %v1474, 0
      %v1554 = vsel %vm225, %v1475, 0
      %v1557 = vsel %vm225, %v1476, 0
      %v1560 = vsel %vm225, %v1477, 0
      %v1563 = vsel %vm225, %v1478, 0
      %v1566 = vsel %vm225, %v1479, 0
      %v1569 = vsel %vm225, %v1480, 0
      %v1572 = vsel %vm225, %v1481, 0
      %v1575 = vsel %vm225, %v1482, 0
      %v1578 = vsel %vm225, %v1483, 0
      %v1581 = vsel %vm225, %v1484, 0
      %v1584 = vsel %vm510, %v1486, 0
      %1586 = vmatprep.subr.mxu0 0.0
      %1587 = vmatpush1.msra.mxu0 %v1584
      %1588 = vmatprep.subr.mxu0 0.0
      %1589 = vmatpush1.msra.mxu0 0.0
      %1590 = vmatprep.subr.mxu0 0.0
      %1591 = vmatpush1.msra.mxu0 0.0
      %1592 = vmatprep.subr.mxu0 0.0
      %1593 = vmatpush1.msra.mxu0 0.0
      %1594 = vmatprep.subr.mxu0 0.0
      %1595 = vmatpush1.msra.mxu0 0.0
      %1596 = vmatprep.subr.mxu0 0.0
      %1597 = vmatpush1.msra.mxu0 0.0
      %1598 = vmatprep.subr.mxu0 0.0
      %1599 = vmatpush1.msra.mxu0 0.0
      %1600 = vmatprep.subr.mxu0 0.0
      %1601 = vmatpush1.msra.mxu0 0.0
      %1602 = vmatprep.subr.mxu0 0.0
      %1603 = vmatpush1.msra.mxu0 0.0
      %1604 = vmatprep.subr.mxu0 0.0
      %1605 = vmatpush1.msra.mxu0 0.0
      %1606 = vmatprep.subr.mxu0 0.0
      %1607 = vmatpush1.msra.mxu0 0.0
      %1608 = vmatprep.subr.mxu0 0.0
      %1609 = vmatpush1.msra.mxu0 0.0
      %1610 = vmatprep.subr.mxu0 0.0
      %1611 = vmatpush1.msra.mxu0 0.0
      %1612 = vmatprep.subr.mxu0 0.0
      %1613 = vmatpush1.msra.mxu0 0.0
      %1614 = vmatprep.subr.mxu0 0.0
      %1615 = vmatpush1.msra.mxu0 0.0
      %1616 = vmatprep.subr.mxu0 0.0
      %1617 = vmatpush1.msra.mxu0 0.0
      %1618 = vmatprep.subr.mxu0 0.0
      %1619 = vmatpush1.msra.mxu0 0.0
      %1620 = vmatprep.subr.mxu0 0.0
      %1621 = vmatpush1.msra.mxu0 0.0
      %1622 = vmatprep.subr.mxu0 0.0
      %1623 = vmatpush1.msra.mxu0 0.0
      %1624 = vmatprep.subr.mxu0 0.0
      %1625 = vmatpush1.msra.mxu0 0.0
      %1626 = vmatprep.subr.mxu0 0.0
      %1627 = vmatpush1.msra.mxu0 0.0
      %1628 = vmatprep.subr.mxu0 0.0
      %1629 = vmatpush1.msra.mxu0 0.0
      %1630 = vmatprep.subr.mxu0 0.0
      %1631 = vmatpush1.msra.mxu0 0.0
      %1632 = vmatprep.subr.mxu0 0.0
      %1633 = vmatpush1.msra.mxu0 0.0
      %1634 = vmatprep.subr.mxu0 0.0
      %1635 = vmatpush1.msra.mxu0 0.0
      %1636 = vmatprep.subr.mxu0 0.0
      %1637 = vmatpush1.msra.mxu0 0.0
      %1638 = vmatprep.subr.mxu0 0.0
      %1639 = vmatpush1.msra.mxu0 0.0
      %1640 = vmatprep.subr.mxu0 0.0
      %1641 = vmatpush1.msra.mxu0 0.0
      %1642 = vmatprep.subr.mxu0 0.0
      %1643 = vmatpush1.msra.mxu0 0.0
      %1644 = vmatprep.subr.mxu0 0.0
      %1645 = vmatpush1.msra.mxu0 0.0
      %1646 = vmatprep.subr.mxu0 0.0
      %1647 = vmatpush1.msra.mxu0 0.0
      %1648 = vmatprep.subr.mxu0 0.0
      %1649 = vmatpush1.msra.mxu0 0.0
      %1650 = vmatprep.mubr.f32.mxu0 0.0
      %1651 = vmatmul.mubr.f32.gmra.mrb[0].mxu0 %v1488
      %v1652 = vpop.f32.mrb[0].mxu0
      %v1653 = vadd.f32 0.0, %v1652
      %v1654 = vpop.f32.mrb[0].mxu0
      %1655 = vmatprep.mubr.f32.mxu0 0.0
      %1656 = vmatmul.mubr.f32.gmra.mrb[0].mxu0 %v1491
      %v1657 = vpop.f32.mrb[0].mxu0
      %v1658 = vadd.f32 0.0, %v1657
      %v1659 = vpop.f32.mrb[0].mxu0
      %1660 = vmatprep.mubr.f32.mxu0 0.0
      %1661 = vmatmul.mubr.f32.gmra.mrb[0].mxu0 %v1494
      %v1662 = vpop.f32.mrb[0].mxu0
      %v1663 = vadd.f32 0.0, %v1662
      %v1664 = vpop.f32.mrb[0].mxu0
      %1665 = vmatprep.mubr.f32.mxu0 0.0
      %1666 = vmatmul.mubr.f32.gmra.mrb[0].mxu0 %v1497
      %v1667 = vpop.f32.mrb[0].mxu0
      %v1668 = vadd.f32 0.0, %v1667
      %v1669 = vpop.f32.mrb[0].mxu0
      %1670 = vmatprep.mubr.f32.mxu0 0.0
      %1671 = vmatmul.mubr.f32.gmra.mrb[0].mxu0 %v1500
      %v1672 = vpop.f32.mrb[0].mxu0
      %v1673 = vadd.f32 0.0, %v1672
      %v1674 = vpop.f32.mrb[0].mxu0
      %1675 = vmatprep.mubr.f32.mxu0 0.0
      %1676 = vmatmul.mubr.f32.gmra.mrb[0].mxu0 %v1503
      %v1677 = vpop.f32.mrb[0].mxu0
      %v1678 = vadd.f32 0.0, %v1677
      %v1679 = vpop.f32.mrb[0].mxu0
      %1680 = vmatprep.mubr.f32.mxu0 0.0
      %1681 = vmatmul.mubr.f32.gmra.mrb[0].mxu0 %v1506
      %v1682 = vpop.f32.mrb[0].mxu0
      %v1683 = vadd.f32 0.0, %v1682
      %v1684 = vpop.f32.mrb[0].mxu0
      %1685 = vmatprep.mubr.f32.mxu0 0.0
      %1686 = vmatmul.mubr.f32.gmra.mrb[0].mxu0 %v1509
      %v1687 = vpop.f32.mrb[0].mxu0
      %v1688 = vadd.f32 0.0, %v1687
      %v1689 = vpop.f32.mrb[0].mxu0
      %1690 = vmatprep.mubr.f32.mxu0 0.0
      %1691 = vmatmul.mubr.f32.gmra.mrb[0].mxu0 %v1512
      %v1692 = vpop.f32.mrb[0].mxu0
      %v1693 = vadd.f32 0.0, %v1692
      %v1694 = vpop.f32.mrb[0].mxu0
      %1695 = vmatprep.mubr.f32.mxu0 0.0
      %1696 = vmatmul.mubr.f32.gmra.mrb[0].mxu0 %v1515
      %v1697 = vpop.f32.mrb[0].mxu0
      %v1698 = vadd.f32 0.0, %v1697
      %v1699 = vpop.f32.mrb[0].mxu0
      %1700 = vmatprep.mubr.f32.mxu0 0.0
      %1701 = vmatmul.mubr.f32.gmra.mrb[0].mxu0 %v1518
      %v1702 = vpop.f32.mrb[0].mxu0
      %v1703 = vadd.f32 0.0, %v1702
      %v1704 = vpop.f32.mrb[0].mxu0
      %1705 = vmatprep.mubr.f32.mxu0 0.0
      %1706 = vmatmul.mubr.f32.gmra.mrb[0].mxu0 %v1521
      %v1707 = vpop.f32.mrb[0].mxu0
      %v1708 = vadd.f32 0.0, %v1707
      %v1709 = vpop.f32.mrb[0].mxu0
      %1710 = vmatprep.mubr.f32.mxu0 0.0
      %1711 = vmatmul.mubr.f32.gmra.mrb[0].mxu0 %v1524
      %v1712 = vpop.f32.mrb[0].mxu0
      %v1713 = vadd.f32 0.0, %v1712
      %v1714 = vpop.f32.mrb[0].mxu0
      %1715 = vmatprep.mubr.f32.mxu0 0.0
      %1716 = vmatmul.mubr.f32.gmra.mrb[0].mxu0 %v1527
      %v1717 = vpop.f32.mrb[0].mxu0
      %v1718 = vadd.f32 0.0, %v1717
      %v1719 = vpop.f32.mrb[0].mxu0
      %1720 = vmatprep.mubr.f32.mxu0 0.0
      %1721 = vmatmul.mubr.f32.gmra.mrb[0].mxu0 %v1530
      %v1722 = vpop.f32.mrb[0].mxu0
      %v1723 = vadd.f32 0.0, %v1722
      %v1724 = vpop.f32.mrb[0].mxu0
      %1725 = vmatprep.mubr.f32.mxu0 0.0
      %1726 = vmatmul.mubr.f32.gmra.mrb[0].mxu0 %v1533
      %v1727 = vpop.f32.mrb[0].mxu0
      %v1728 = vadd.f32 0.0, %v1727
      %v1729 = vpop.f32.mrb[0].mxu0
      %1730 = vmatprep.mubr.f32.mxu0 0.0
      %1731 = vmatmul.mubr.f32.gmra.mrb[0].mxu0 %v1536
      %v1732 = vpop.f32.mrb[0].mxu0
      %v1733 = vadd.f32 0.0, %v1732
      %v1734 = vpop.f32.mrb[0].mxu0
      %1735 = vmatprep.mubr.f32.mxu0 0.0
      %1736 = vmatmul.mubr.f32.gmra.mrb[0].mxu0 %v1539
      %v1737 = vpop.f32.mrb[0].mxu0
      %v1738 = vadd.f32 0.0, %v1737
      %v1739 = vpop.f32.mrb[0].mxu0
      %1740 = vmatprep.mubr.f32.mxu0 0.0
      %1741 = vmatmul.mubr.f32.gmra.mrb[0].mxu0 %v1542
      %v1742 = vpop.f32.mrb[0].mxu0
      %v1743 = vadd.f32 0.0, %v1742
      %v1744 = vpop.f32.mrb[0].mxu0
      %1745 = vmatprep.mubr.f32.mxu0 0.0
      %1746 = vmatmul.mubr.f32.gmra.mrb[0].mxu0 %v1545
      %v1747 = vpop.f32.mrb[0].mxu0
      %v1748 = vadd.f32 0.0, %v1747
      %v1749 = vpop.f32.mrb[0].mxu0
      %1750 = vmatprep.mubr.f32.mxu0 0.0
      %1751 = vmatmul.mubr.f32.gmra.mrb[0].mxu0 %v1548
      %v1752 = vpop.f32.mrb[0].mxu0
      %v1753 = vadd.f32 0.0, %v1752
      %v1754 = vpop.f32.mrb[0].mxu0
      %1755 = vmatprep.mubr.f32.mxu0 0.0
      %1756 = vmatmul.mubr.f32.gmra.mrb[0].mxu0 %v1551
      %v1757 = vpop.f32.mrb[0].mxu0
      %v1758 = vadd.f32 0.0, %v1757
      %v1759 = vpop.f32.mrb[0].mxu0
      %1760 = vmatprep.mubr.f32.mxu0 0.0
      %1761 = vmatmul.mubr.f32.gmra.mrb[0].mxu0 %v1554
      %v1762 = vpop.f32.mrb[0].mxu0
      %v1763 = vadd.f32 0.0, %v1762
      %v1764 = vpop.f32.mrb[0].mxu0
      %1765 = vmatprep.mubr.f32.mxu0 0.0
      %1766 = vmatmul.mubr.f32.gmra.mrb[0].mxu0 %v1557
      %v1767 = vpop.f32.mrb[0].mxu0
      %v1768 = vadd.f32 0.0, %v1767
      %v1769 = vpop.f32.mrb[0].mxu0
      %1770 = vmatprep.mubr.f32.mxu0 0.0
      %1771 = vmatmul.mubr.f32.gmra.mrb[0].mxu0 %v1560
      %v1772 = vpop.f32.mrb[0].mxu0
      %v1773 = vadd.f32 0.0, %v1772
      %v1774 = vpop.f32.mrb[0].mxu0
      %1775 = vmatprep.mubr.f32.mxu0 0.0
      %1776 = vmatmul.mubr.f32.gmra.mrb[0].mxu0 %v1563
      %v1777 = vpop.f32.mrb[0].mxu0
      %v1778 = vadd.f32 0.0, %v1777
      %v1779 = vpop.f32.mrb[0].mxu0
      %1780 = vmatprep.mubr.f32.mxu0 0.0
      %1781 = vmatmul.mubr.f32.gmra.mrb[0].mxu0 %v1566
      %v1782 = vpop.f32.mrb[0].mxu0
      %v1783 = vadd.f32 0.0, %v1782
      %v1784 = vpop.f32.mrb[0].mxu0
      %1785 = vmatprep.mubr.f32.mxu0 0.0
      %1786 = vmatmul.mubr.f32.gmra.mrb[0].mxu0 %v1569
      %v1787 = vpop.f32.mrb[0].mxu0
      %v1788 = vadd.f32 0.0, %v1787
      %v1789 = vpop.f32.mrb[0].mxu0
      %1790 = vmatprep.mubr.f32.mxu0 0.0
      %1791 = vmatmul.mubr.f32.gmra.mrb[0].mxu0 %v1572
      %v1792 = vpop.f32.mrb[0].mxu0
      %v1793 = vadd.f32 0.0, %v1792
      %v1794 = vpop.f32.mrb[0].mxu0
      %1795 = vmatprep.mubr.f32.mxu0 0.0
      %1796 = vmatmul.mubr.f32.gmra.mrb[0].mxu0 %v1575
      %v1797 = vpop.f32.mrb[0].mxu0
      %v1798 = vadd.f32 0.0, %v1797
      %v1799 = vpop.f32.mrb[0].mxu0
      %1800 = vmatprep.mubr.f32.mxu0 0.0
      %1801 = vmatmul.mubr.f32.gmra.mrb[0].mxu0 %v1578
      %v1802 = vpop.f32.mrb[0].mxu0
      %v1803 = vadd.f32 0.0, %v1802
      %v1804 = vpop.f32.mrb[0].mxu0
      %1805 = vmatprep.mubr.f32.mxu0 0.0
      %1806 = vmatmul.mubr.f32.gmra.mrb[0].mxu0 %v1581
      %v1807 = vpop.f32.mrb[0].mxu0
      %v1808 = vadd.f32 0.0, %v1807
      %v1809 = vpop.f32.mrb[0].mxu0
      %1810 = vdwg.mxu0
      %v1811 = vadd.f32 %v1421, %v1653
      %v1812 = vadd.f32 %v1422, %v1658
      %v1813 = vadd.f32 %v1423, %v1663
      %v1814 = vadd.f32 %v1424, %v1668
      %v1815 = vadd.f32 %v1425, %v1673
      %v1816 = vadd.f32 %v1426, %v1678
      %v1817 = vadd.f32 %v1427, %v1683
      %v1818 = vadd.f32 %v1428, %v1688
      %v1819 = vadd.f32 %v1429, %v1693
      %v1820 = vadd.f32 %v1430, %v1698
      %v1821 = vadd.f32 %v1431, %v1703
      %v1822 = vadd.f32 %v1432, %v1708
      %v1823 = vadd.f32 %v1433, %v1713
      %v1824 = vadd.f32 %v1434, %v1718
      %v1825 = vadd.f32 %v1435, %v1723
      %v1826 = vadd.f32 %v1436, %v1728
      %v1827 = vadd.f32 %v1437, %v1733
      %v1828 = vadd.f32 %v1438, %v1738
      %v1829 = vadd.f32 %v1439, %v1743
      %v1830 = vadd.f32 %v1440, %v1748
      %v1831 = vadd.f32 %v1441, %v1753
      %v1832 = vadd.f32 %v1442, %v1758
      %v1833 = vadd.f32 %v1443, %v1763
      %v1834 = vadd.f32 %v1444, %v1768
      %v1835 = vadd.f32 %v1445, %v1773
      %v1836 = vadd.f32 %v1446, %v1778
      %v1837 = vadd.f32 %v1447, %v1783
      %v1838 = vadd.f32 %v1448, %v1788
      %v1839 = vadd.f32 %v1449, %v1793
      %v1840 = vadd.f32 %v1450, %v1798
      %v1841 = vadd.f32 %v1451, %v1803
      %v1842 = vadd.f32 %v1452, %v1808
      %v1843 = vld [vmem:[%s313 + $0x1] sm:$0xff]
      %v1844 = vld [vmem:[%s313 + $0x9] sm:$0xff]
      %v1845 = vld [vmem:[%s313 + $0x19] sm:$0xff]
      %v1846 = vld [vmem:[%s313 + $0x21] sm:$0xff]
      %v1847 = vld [vmem:[%s313 + $0x31] sm:$0xff]
      %v1848 = vld [vmem:[%s313 + $0x39] sm:$0xff]
      %v1849 = vld [vmem:[%s313 + $0x49] sm:$0xff]
      %v1850 = vld [vmem:[%s313 + $0x51] sm:$0xff]
      %v1851 = vld [vmem:[%s313 + $0x61] sm:$0xff]
      %v1852 = vld [vmem:[%s313 + $0x69] sm:$0xff]
      %v1853 = vld [vmem:[%s313 + $0x79] sm:$0xff]
      %v1854 = vld [vmem:[%s313 + $0x81] sm:$0xff]
      %v1855 = vld [vmem:[%s313 + $0x91] sm:$0xff]
      %v1856 = vld [vmem:[%s313 + $0x99] sm:$0xff]
      %v1857 = vld [vmem:[%s313 + $0xa9] sm:$0xff]
      %v1858 = vld [vmem:[%s313 + $0xb1] sm:$0xff]
      %v1859 = vld [vmem:[%s313 + $0xc1] sm:$0xff]
      %v1860 = vld [vmem:[%s313 + $0xc9] sm:$0xff]
      %v1861 = vld [vmem:[%s313 + $0xd9] sm:$0xff]
      %v1862 = vld [vmem:[%s313 + $0xe1] sm:$0xff]
      %v1863 = vld [vmem:[%s313 + $0xf1] sm:$0xff]
      %v1864 = vld [vmem:[%s313 + $0xf9] sm:$0xff]
      %v1865 = vld [vmem:[%s313 + $0x109] sm:$0xff]
      %v1866 = vld [vmem:[%s313 + $0x111] sm:$0xff]
      %v1867 = vld [vmem:[%s313 + $0x121] sm:$0xff]
      %v1868 = vld [vmem:[%s313 + $0x129] sm:$0xff]
      %v1869 = vld [vmem:[%s313 + $0x139] sm:$0xff]
      %v1870 = vld [vmem:[%s313 + $0x141] sm:$0xff]
      %v1871 = vld [vmem:[%s313 + $0x151] sm:$0xff]
      %v1872 = vld [vmem:[%s313 + $0x159] sm:$0xff]
      %v1873 = vld [vmem:[%s313 + $0x169] sm:$0xff]
      %v1874 = vld [vmem:[%s313 + $0x171] sm:$0xff]
      %s1875 = scalar_lea.vmem %s1, 16
      %v1876 = vld [vmem:[%s1875] sm:$0xf]
      %v1878 = vsel %vm225, %v1843, 0
      %v1881 = vsel %vm225, %v1844, 0
      %v1884 = vsel %vm225, %v1845, 0
      %v1887 = vsel %vm225, %v1846, 0
      %v1890 = vsel %vm225, %v1847, 0
      %v1893 = vsel %vm225, %v1848, 0
      %v1896 = vsel %vm225, %v1849, 0
      %v1899 = vsel %vm225, %v1850, 0
      %v1902 = vsel %vm225, %v1851, 0
      %v1905 = vsel %vm225, %v1852, 0
      %v1908 = vsel %vm225, %v1853, 0
      %v1911 = vsel %vm225, %v1854, 0
      %v1914 = vsel %vm225, %v1855, 0
      %v1917 = vsel %vm225, %v1856, 0
      %v1920 = vsel %vm225, %v1857, 0
      %v1923 = vsel %vm225, %v1858, 0
      %v1926 = vsel %vm225, %v1859, 0
      %v1929 = vsel %vm225, %v1860, 0
      %v1932 = vsel %vm225, %v1861, 0
      %v1935 = vsel %vm225, %v1862, 0
      %v1938 = vsel %vm225, %v1863, 0
      %v1941 = vsel %vm225, %v1864, 0
      %v1944 = vsel %vm225, %v1865, 0
      %v1947 = vsel %vm225, %v1866, 0
      %v1950 = vsel %vm225, %v1867, 0
      %v1953 = vsel %vm225, %v1868, 0
      %v1956 = vsel %vm225, %v1869, 0
      %v1959 = vsel %vm225, %v1870, 0
      %v1962 = vsel %vm225, %v1871, 0
      %v1965 = vsel %vm225, %v1872, 0
      %v1968 = vsel %vm225, %v1873, 0
      %v1971 = vsel %vm225, %v1874, 0
      %v1974 = vsel %vm510, %v1876, 0
      %1976 = vmatprep.subr.mxu0 0.0
      %1977 = vmatpush1.msra.mxu0 %v1974
      %1978 = vmatprep.subr.mxu0 0.0
      %1979 = vmatpush1.msra.mxu0 0.0
      %1980 = vmatprep.subr.mxu0 0.0
      %1981 = vmatpush1.msra.mxu0 0.0
      %1982 = vmatprep.subr.mxu0 0.0
      %1983 = vmatpush1.msra.mxu0 0.0
      %1984 = vmatprep.subr.mxu0 0.0
      %1985 = vmatpush1.msra.mxu0 0.0
      %1986 = vmatprep.subr.mxu0 0.0
      %1987 = vmatpush1.msra.mxu0 0.0
      %1988 = vmatprep.subr.mxu0 0.0
      %1989 = vmatpush1.msra.mxu0 0.0
      %1990 = vmatprep.subr.mxu0 0.0
      %1991 = vmatpush1.msra.mxu0 0.0
      %1992 = vmatprep.subr.mxu0 0.0
      %1993 = vmatpush1.msra.mxu0 0.0
      %1994 = vmatprep.subr.mxu0 0.0
      %1995 = vmatpush1.msra.mxu0 0.0
      %1996 = vmatprep.subr.mxu0 0.0
      %1997 = vmatpush1.msra.mxu0 0.0
      %1998 = vmatprep.subr.mxu0 0.0
      %1999 = vmatpush1.msra.mxu0 0.0
      %2000 = vmatprep.subr.mxu0 0.0
      %2001 = vmatpush1.msra.mxu0 0.0
      %2002 = vmatprep.subr.mxu0 0.0
      %2003 = vmatpush1.msra.mxu0 0.0
      %2004 = vmatprep.subr.mxu0 0.0
      %2005 = vmatpush1.msra.mxu0 0.0
      %2006 = vmatprep.subr.mxu0 0.0
      %2007 = vmatpush1.msra.mxu0 0.0
      %2008 = vmatprep.subr.mxu0 0.0
      %2009 = vmatpush1.msra.mxu0 0.0
      %2010 = vmatprep.subr.mxu0 0.0
      %2011 = vmatpush1.msra.mxu0 0.0
      %2012 = vmatprep.subr.mxu0 0.0
      %2013 = vmatpush1.msra.mxu0 0.0
      %2014 = vmatprep.subr.mxu0 0.0
      %2015 = vmatpush1.msra.mxu0 0.0
      %2016 = vmatprep.subr.mxu0 0.0
      %2017 = vmatpush1.msra.mxu0 0.0
      %2018 = vmatprep.subr.mxu0 0.0
      %2019 = vmatpush1.msra.mxu0 0.0
      %2020 = vmatprep.subr.mxu0 0.0
      %2021 = vmatpush1.msra.mxu0 0.0
      %2022 = vmatprep.subr.mxu0 0.0
      %2023 = vmatpush1.msra.mxu0 0.0
      %2024 = vmatprep.subr.mxu0 0.0
      %2025 = vmatpush1.msra.mxu0 0.0
      %2026 = vmatprep.subr.mxu0 0.0
      %2027 = vmatpush1.msra.mxu0 0.0
      %2028 = vmatprep.subr.mxu0 0.0
      %2029 = vmatpush1.msra.mxu0 0.0
      %2030 = vmatprep.subr.mxu0 0.0
      %2031 = vmatpush1.msra.mxu0 0.0
      %2032 = vmatprep.subr.mxu0 0.0
      %2033 = vmatpush1.msra.mxu0 0.0
      %2034 = vmatprep.subr.mxu0 0.0
      %2035 = vmatpush1.msra.mxu0 0.0
      %2036 = vmatprep.subr.mxu0 0.0
      %2037 = vmatpush1.msra.mxu0 0.0
      %2038 = vmatprep.subr.mxu0 0.0
      %2039 = vmatpush1.msra.mxu0 0.0
      %2040 = vmatprep.mubr.f32.mxu0 0.0
      %2041 = vmatmul.mubr.f32.gmra.mrb[0].mxu0 %v1878
      %v2042 = vpop.f32.mrb[0].mxu0
      %v2043 = vadd.f32 0.0, %v2042
      %v2044 = vpop.f32.mrb[0].mxu0
      %2045 = vmatprep.mubr.f32.mxu0 0.0
      %2046 = vmatmul.mubr.f32.gmra.mrb[0].mxu0 %v1881
      %v2047 = vpop.f32.mrb[0].mxu0
      %v2048 = vadd.f32 0.0, %v2047
      %v2049 = vpop.f32.mrb[0].mxu0
      %2050 = vmatprep.mubr.f32.mxu0 0.0
      %2051 = vmatmul.mubr.f32.gmra.mrb[0].mxu0 %v1884
      %v2052 = vpop.f32.mrb[0].mxu0
      %v2053 = vadd.f32 0.0, %v2052
      %v2054 = vpop.f32.mrb[0].mxu0
      %2055 = vmatprep.mubr.f32.mxu0 0.0
      %2056 = vmatmul.mubr.f32.gmra.mrb[0].mxu0 %v1887
      %v2057 = vpop.f32.mrb[0].mxu0
      %v2058 = vadd.f32 0.0, %v2057
      %v2059 = vpop.f32.mrb[0].mxu0
      %2060 = vmatprep.mubr.f32.mxu0 0.0
      %2061 = vmatmul.mubr.f32.gmra.mrb[0].mxu0 %v1890
      %v2062 = vpop.f32.mrb[0].mxu0
      %v2063 = vadd.f32 0.0, %v2062
      %v2064 = vpop.f32.mrb[0].mxu0
      %2065 = vmatprep.mubr.f32.mxu0 0.0
      %2066 = vmatmul.mubr.f32.gmra.mrb[0].mxu0 %v1893
      %v2067 = vpop.f32.mrb[0].mxu0
      %v2068 = vadd.f32 0.0, %v2067
      %v2069 = vpop.f32.mrb[0].mxu0
      %2070 = vmatprep.mubr.f32.mxu0 0.0
      %2071 = vmatmul.mubr.f32.gmra.mrb[0].mxu0 %v1896
      %v2072 = vpop.f32.mrb[0].mxu0
      %v2073 = vadd.f32 0.0, %v2072
      %v2074 = vpop.f32.mrb[0].mxu0
      %2075 = vmatprep.mubr.f32.mxu0 0.0
      %2076 = vmatmul.mubr.f32.gmra.mrb[0].mxu0 %v1899
      %v2077 = vpop.f32.mrb[0].mxu0
      %v2078 = vadd.f32 0.0, %v2077
      %v2079 = vpop.f32.mrb[0].mxu0
      %2080 = vmatprep.mubr.f32.mxu0 0.0
      %2081 = vmatmul.mubr.f32.gmra.mrb[0].mxu0 %v1902
      %v2082 = vpop.f32.mrb[0].mxu0
      %v2083 = vadd.f32 0.0, %v2082
      %v2084 = vpop.f32.mrb[0].mxu0
      %2085 = vmatprep.mubr.f32.mxu0 0.0
      %2086 = vmatmul.mubr.f32.gmra.mrb[0].mxu0 %v1905
      %v2087 = vpop.f32.mrb[0].mxu0
      %v2088 = vadd.f32 0.0, %v2087
      %v2089 = vpop.f32.mrb[0].mxu0
      %2090 = vmatprep.mubr.f32.mxu0 0.0
      %2091 = vmatmul.mubr.f32.gmra.mrb[0].mxu0 %v1908
      %v2092 = vpop.f32.mrb[0].mxu0
      %v2093 = vadd.f32 0.0, %v2092
      %v2094 = vpop.f32.mrb[0].mxu0
      %2095 = vmatprep.mubr.f32.mxu0 0.0
      %2096 = vmatmul.mubr.f32.gmra.mrb[0].mxu0 %v1911
      %v2097 = vpop.f32.mrb[0].mxu0
      %v2098 = vadd.f32 0.0, %v2097
      %v2099 = vpop.f32.mrb[0].mxu0
      %2100 = vmatprep.mubr.f32.mxu0 0.0
      %2101 = vmatmul.mubr.f32.gmra.mrb[0].mxu0 %v1914
      %v2102 = vpop.f32.mrb[0].mxu0
      %v2103 = vadd.f32 0.0, %v2102
      %v2104 = vpop.f32.mrb[0].mxu0
      %2105 = vmatprep.mubr.f32.mxu0 0.0
      %2106 = vmatmul.mubr.f32.gmra.mrb[0].mxu0 %v1917
      %v2107 = vpop.f32.mrb[0].mxu0
      %v2108 = vadd.f32 0.0, %v2107
      %v2109 = vpop.f32.mrb[0].mxu0
      %2110 = vmatprep.mubr.f32.mxu0 0.0
      %2111 = vmatmul.mubr.f32.gmra.mrb[0].mxu0 %v1920
      %v2112 = vpop.f32.mrb[0].mxu0
      %v2113 = vadd.f32 0.0, %v2112
      %v2114 = vpop.f32.mrb[0].mxu0
      %2115 = vmatprep.mubr.f32.mxu0 0.0
      %2116 = vmatmul.mubr.f32.gmra.mrb[0].mxu0 %v1923
      %v2117 = vpop.f32.mrb[0].mxu0
      %v2118 = vadd.f32 0.0, %v2117
      %v2119 = vpop.f32.mrb[0].mxu0
      %2120 = vmatprep.mubr.f32.mxu0 0.0
      %2121 = vmatmul.mubr.f32.gmra.mrb[0].mxu0 %v1926
      %v2122 = vpop.f32.mrb[0].mxu0
      %v2123 = vadd.f32 0.0, %v2122
      %v2124 = vpop.f32.mrb[0].mxu0
      %2125 = vmatprep.mubr.f32.mxu0 0.0
      %2126 = vmatmul.mubr.f32.gmra.mrb[0].mxu0 %v1929
      %v2127 = vpop.f32.mrb[0].mxu0
      %v2128 = vadd.f32 0.0, %v2127
      %v2129 = vpop.f32.mrb[0].mxu0
      %2130 = vmatprep.mubr.f32.mxu0 0.0
      %2131 = vmatmul.mubr.f32.gmra.mrb[0].mxu0 %v1932
      %v2132 = vpop.f32.mrb[0].mxu0
      %v2133 = vadd.f32 0.0, %v2132
      %v2134 = vpop.f32.mrb[0].mxu0
      %2135 = vmatprep.mubr.f32.mxu0 0.0
      %2136 = vmatmul.mubr.f32.gmra.mrb[0].mxu0 %v1935
      %v2137 = vpop.f32.mrb[0].mxu0
      %v2138 = vadd.f32 0.0, %v2137
      %v2139 = vpop.f32.mrb[0].mxu0
      %2140 = vmatprep.mubr.f32.mxu0 0.0
      %2141 = vmatmul.mubr.f32.gmra.mrb[0].mxu0 %v1938
      %v2142 = vpop.f32.mrb[0].mxu0
      %v2143 = vadd.f32 0.0, %v2142
      %v2144 = vpop.f32.mrb[0].mxu0
      %2145 = vmatprep.mubr.f32.mxu0 0.0
      %2146 = vmatmul.mubr.f32.gmra.mrb[0].mxu0 %v1941
      %v2147 = vpop.f32.mrb[0].mxu0
      %v2148 = vadd.f32 0.0, %v2147
      %v2149 = vpop.f32.mrb[0].mxu0
      %2150 = vmatprep.mubr.f32.mxu0 0.0
      %2151 = vmatmul.mubr.f32.gmra.mrb[0].mxu0 %v1944
      %v2152 = vpop.f32.mrb[0].mxu0
      %v2153 = vadd.f32 0.0, %v2152
      %v2154 = vpop.f32.mrb[0].mxu0
      %2155 = vmatprep.mubr.f32.mxu0 0.0
      %2156 = vmatmul.mubr.f32.gmra.mrb[0].mxu0 %v1947
      %v2157 = vpop.f32.mrb[0].mxu0
      %v2158 = vadd.f32 0.0, %v2157
      %v2159 = vpop.f32.mrb[0].mxu0
      %2160 = vmatprep.mubr.f32.mxu0 0.0
      %2161 = vmatmul.mubr.f32.gmra.mrb[0].mxu0 %v1950
      %v2162 = vpop.f32.mrb[0].mxu0
      %v2163 = vadd.f32 0.0, %v2162
      %v2164 = vpop.f32.mrb[0].mxu0
      %2165 = vmatprep.mubr.f32.mxu0 0.0
      %2166 = vmatmul.mubr.f32.gmra.mrb[0].mxu0 %v1953
      %v2167 = vpop.f32.mrb[0].mxu0
      %v2168 = vadd.f32 0.0, %v2167
      %v2169 = vpop.f32.mrb[0].mxu0
      %2170 = vmatprep.mubr.f32.mxu0 0.0
      %2171 = vmatmul.mubr.f32.gmra.mrb[0].mxu0 %v1956
      %v2172 = vpop.f32.mrb[0].mxu0
      %v2173 = vadd.f32 0.0, %v2172
      %v2174 = vpop.f32.mrb[0].mxu0
      %2175 = vmatprep.mubr.f32.mxu0 0.0
      %2176 = vmatmul.mubr.f32.gmra.mrb[0].mxu0 %v1959
      %v2177 = vpop.f32.mrb[0].mxu0
      %v2178 = vadd.f32 0.0, %v2177
      %v2179 = vpop.f32.mrb[0].mxu0
      %2180 = vmatprep.mubr.f32.mxu0 0.0
      %2181 = vmatmul.mubr.f32.gmra.mrb[0].mxu0 %v1962
      %v2182 = vpop.f32.mrb[0].mxu0
      %v2183 = vadd.f32 0.0, %v2182
      %v2184 = vpop.f32.mrb[0].mxu0
      %2185 = vmatprep.mubr.f32.mxu0 0.0
      %2186 = vmatmul.mubr.f32.gmra.mrb[0].mxu0 %v1965
      %v2187 = vpop.f32.mrb[0].mxu0
      %v2188 = vadd.f32 0.0, %v2187
      %v2189 = vpop.f32.mrb[0].mxu0
      %2190 = vmatprep.mubr.f32.mxu0 0.0
      %2191 = vmatmul.mubr.f32.gmra.mrb[0].mxu0 %v1968
      %v2192 = vpop.f32.mrb[0].mxu0
      %v2193 = vadd.f32 0.0, %v2192
      %v2194 = vpop.f32.mrb[0].mxu0
      %2195 = vmatprep.mubr.f32.mxu0 0.0
      %2196 = vmatmul.mubr.f32.gmra.mrb[0].mxu0 %v1971
      %v2197 = vpop.f32.mrb[0].mxu0
      %v2198 = vadd.f32 0.0, %v2197
      %v2199 = vpop.f32.mrb[0].mxu0
      %2200 = vdwg.mxu0
      %v2201 = vadd.f32 %v1811, %v2043
      %v2202 = vadd.f32 %v1812, %v2048
      %v2203 = vadd.f32 %v1813, %v2053
      %v2204 = vadd.f32 %v1814, %v2058
      %v2205 = vadd.f32 %v1815, %v2063
      %v2206 = vadd.f32 %v1816, %v2068
      %v2207 = vadd.f32 %v1817, %v2073
      %v2208 = vadd.f32 %v1818, %v2078
      %v2209 = vadd.f32 %v1819, %v2083
      %v2210 = vadd.f32 %v1820, %v2088
      %v2211 = vadd.f32 %v1821, %v2093
      %v2212 = vadd.f32 %v1822, %v2098
      %v2213 = vadd.f32 %v1823, %v2103
      %v2214 = vadd.f32 %v1824, %v2108
      %v2215 = vadd.f32 %v1825, %v2113
      %v2216 = vadd.f32 %v1826, %v2118
      %v2217 = vadd.f32 %v1827, %v2123
      %v2218 = vadd.f32 %v1828, %v2128
      %v2219 = vadd.f32 %v1829, %v2133
      %v2220 = vadd.f32 %v1830, %v2138
      %v2221 = vadd.f32 %v1831, %v2143
      %v2222 = vadd.f32 %v1832, %v2148
      %v2223 = vadd.f32 %v1833, %v2153
      %v2224 = vadd.f32 %v1834, %v2158
      %v2225 = vadd.f32 %v1835, %v2163
      %v2226 = vadd.f32 %v1836, %v2168
      %v2227 = vadd.f32 %v1837, %v2173
      %v2228 = vadd.f32 %v1838, %v2178
      %v2229 = vadd.f32 %v1839, %v2183
      %v2230 = vadd.f32 %v1840, %v2188
      %v2231 = vadd.f32 %v1841, %v2193
      %v2232 = vadd.f32 %v1842, %v2198
      %v2233 = vld [vmem:[%s313 + $0x2] sm:$0xff]
      %v2234 = vld [vmem:[%s313 + $0xa] sm:$0xff]
      %v2235 = vld [vmem:[%s313 + $0x1a] sm:$0xff]
      %v2236 = vld [vmem:[%s313 + $0x22] sm:$0xff]
      %v2237 = vld [vmem:[%s313 + $0x32] sm:$0xff]
      %v2238 = vld [vmem:[%s313 + $0x3a] sm:$0xff]
      %v2239 = vld [vmem:[%s313 + $0x4a] sm:$0xff]
      %v2240 = vld [vmem:[%s313 + $0x52] sm:$0xff]
      %v2241 = vld [vmem:[%s313 + $0x62] sm:$0xff]
      %v2242 = vld [vmem:[%s313 + $0x6a] sm:$0xff]
      %v2243 = vld [vmem:[%s313 + $0x7a] sm:$0xff]
      %v2244 = vld [vmem:[%s313 + $0x82] sm:$0xff]
      %v2245 = vld [vmem:[%s313 + $0x92] sm:$0xff]
      %v2246 = vld [vmem:[%s313 + $0x9a] sm:$0xff]
      %v2247 = vld [vmem:[%s313 + $0xaa] sm:$0xff]
      %v2248 = vld [vmem:[%s313 + $0xb2] sm:$0xff]
      %v2249 = vld [vmem:[%s313 + $0xc2] sm:$0xff]
      %v2250 = vld [vmem:[%s313 + $0xca] sm:$0xff]
      %v2251 = vld [vmem:[%s313 + $0xda] sm:$0xff]
      %v2252 = vld [vmem:[%s313 + $0xe2] sm:$0xff]
      %v2253 = vld [vmem:[%s313 + $0xf2] sm:$0xff]
      %v2254 = vld [vmem:[%s313 + $0xfa] sm:$0xff]
      %v2255 = vld [vmem:[%s313 + $0x10a] sm:$0xff]
      %v2256 = vld [vmem:[%s313 + $0x112] sm:$0xff]
      %v2257 = vld [vmem:[%s313 + $0x122] sm:$0xff]
      %v2258 = vld [vmem:[%s313 + $0x12a] sm:$0xff]
      %v2259 = vld [vmem:[%s313 + $0x13a] sm:$0xff]
      %v2260 = vld [vmem:[%s313 + $0x142] sm:$0xff]
      %v2261 = vld [vmem:[%s313 + $0x152] sm:$0xff]
      %v2262 = vld [vmem:[%s313 + $0x15a] sm:$0xff]
      %v2263 = vld [vmem:[%s313 + $0x16a] sm:$0xff]
      %v2264 = vld [vmem:[%s313 + $0x172] sm:$0xff]
      %s2265 = scalar_lea.vmem %s1, 20
      %v2266 = vld [vmem:[%s2265] sm:$0xf]
      %v2268 = vsel %vm225, %v2233, 0
      %v2271 = vsel %vm225, %v2234, 0
      %v2274 = vsel %vm225, %v2235, 0
      %v2277 = vsel %vm225, %v2236, 0
      %v2280 = vsel %vm225, %v2237, 0
      %v2283 = vsel %vm225, %v2238, 0
      %v2286 = vsel %vm225, %v2239, 0
      %v2289 = vsel %vm225, %v2240, 0
      %v2292 = vsel %vm225, %v2241, 0
      %v2295 = vsel %vm225, %v2242, 0
      %v2298 = vsel %vm225, %v2243, 0
      %v2301 = vsel %vm225, %v2244, 0
      %v2304 = vsel %vm225, %v2245, 0
      %v2307 = vsel %vm225, %v2246, 0
      %v2310 = vsel %vm225, %v2247, 0
      %v2313 = vsel %vm225, %v2248, 0
      %v2316 = vsel %vm225, %v2249, 0
      %v2319 = vsel %vm225, %v2250, 0
      %v2322 = vsel %vm225, %v2251, 0
      %v2325 = vsel %vm225, %v2252, 0
      %v2328 = vsel %vm225, %v2253, 0
      %v2331 = vsel %vm225, %v2254, 0
      %v2334 = vsel %vm225, %v2255, 0
      %v2337 = vsel %vm225, %v2256, 0
      %v2340 = vsel %vm225, %v2257, 0
      %v2343 = vsel %vm225, %v2258, 0
      %v2346 = vsel %vm225, %v2259, 0
      %v2349 = vsel %vm225, %v2260, 0
      %v2352 = vsel %vm225, %v2261, 0
      %v2355 = vsel %vm225, %v2262, 0
      %v2358 = vsel %vm225, %v2263, 0
      %v2361 = vsel %vm225, %v2264, 0
      %v2364 = vsel %vm510, %v2266, 0
      %2366 = vmatprep.subr.mxu0 0.0
      %2367 = vmatpush1.msra.mxu0 %v2364
      %2368 = vmatprep.subr.mxu0 0.0
      %2369 = vmatpush1.msra.mxu0 0.0
      %2370 = vmatprep.subr.mxu0 0.0
      %2371 = vmatpush1.msra.mxu0 0.0
      %2372 = vmatprep.subr.mxu0 0.0
      %2373 = vmatpush1.msra.mxu0 0.0
      %2374 = vmatprep.subr.mxu0 0.0
      %2375 = vmatpush1.msra.mxu0 0.0
      %2376 = vmatprep.subr.mxu0 0.0
      %2377 = vmatpush1.msra.mxu0 0.0
      %2378 = vmatprep.subr.mxu0 0.0
      %2379 = vmatpush1.msra.mxu0 0.0
      %2380 = vmatprep.subr.mxu0 0.0
      %2381 = vmatpush1.msra.mxu0 0.0
      %2382 = vmatprep.subr.mxu0 0.0
      %2383 = vmatpush1.msra.mxu0 0.0
      %2384 = vmatprep.subr.mxu0 0.0
      %2385 = vmatpush1.msra.mxu0 0.0
      %2386 = vmatprep.subr.mxu0 0.0
      %2387 = vmatpush1.msra.mxu0 0.0
      %2388 = vmatprep.subr.mxu0 0.0
      %2389 = vmatpush1.msra.mxu0 0.0
      %2390 = vmatprep.subr.mxu0 0.0
      %2391 = vmatpush1.msra.mxu0 0.0
      %2392 = vmatprep.subr.mxu0 0.0
      %2393 = vmatpush1.msra.mxu0 0.0
      %2394 = vmatprep.subr.mxu0 0.0
      %2395 = vmatpush1.msra.mxu0 0.0
      %2396 = vmatprep.subr.mxu0 0.0
      %2397 = vmatpush1.msra.mxu0 0.0
      %2398 = vmatprep.subr.mxu0 0.0
      %2399 = vmatpush1.msra.mxu0 0.0
      %2400 = vmatprep.subr.mxu0 0.0
      %2401 = vmatpush1.msra.mxu0 0.0
      %2402 = vmatprep.subr.mxu0 0.0
      %2403 = vmatpush1.msra.mxu0 0.0
      %2404 = vmatprep.subr.mxu0 0.0
      %2405 = vmatpush1.msra.mxu0 0.0
      %2406 = vmatprep.subr.mxu0 0.0
      %2407 = vmatpush1.msra.mxu0 0.0
      %2408 = vmatprep.subr.mxu0 0.0
      %2409 = vmatpush1.msra.mxu0 0.0
      %2410 = vmatprep.subr.mxu0 0.0
      %2411 = vmatpush1.msra.mxu0 0.0
      %2412 = vmatprep.subr.mxu0 0.0
      %2413 = vmatpush1.msra.mxu0 0.0
      %2414 = vmatprep.subr.mxu0 0.0
      %2415 = vmatpush1.msra.mxu0 0.0
      %2416 = vmatprep.subr.mxu0 0.0
      %2417 = vmatpush1.msra.mxu0 0.0
      %2418 = vmatprep.subr.mxu0 0.0
      %2419 = vmatpush1.msra.mxu0 0.0
      %2420 = vmatprep.subr.mxu0 0.0
      %2421 = vmatpush1.msra.mxu0 0.0
      %2422 = vmatprep.subr.mxu0 0.0
      %2423 = vmatpush1.msra.mxu0 0.0
      %2424 = vmatprep.subr.mxu0 0.0
      %2425 = vmatpush1.msra.mxu0 0.0
      %2426 = vmatprep.subr.mxu0 0.0
      %2427 = vmatpush1.msra.mxu0 0.0
      %2428 = vmatprep.subr.mxu0 0.0
      %2429 = vmatpush1.msra.mxu0 0.0
      %2430 = vmatprep.mubr.f32.mxu0 0.0
      %2431 = vmatmul.mubr.f32.gmra.mrb[0].mxu0 %v2268
      %v2432 = vpop.f32.mrb[0].mxu0
      %v2433 = vadd.f32 0.0, %v2432
      %v2434 = vpop.f32.mrb[0].mxu0
      %2435 = vmatprep.mubr.f32.mxu0 0.0
      %2436 = vmatmul.mubr.f32.gmra.mrb[0].mxu0 %v2271
      %v2437 = vpop.f32.mrb[0].mxu0
      %v2438 = vadd.f32 0.0, %v2437
      %v2439 = vpop.f32.mrb[0].mxu0
      %2440 = vmatprep.mubr.f32.mxu0 0.0
      %2441 = vmatmul.mubr.f32.gmra.mrb[0].mxu0 %v2274
      %v2442 = vpop.f32.mrb[0].mxu0
      %v2443 = vadd.f32 0.0, %v2442
      %v2444 = vpop.f32.mrb[0].mxu0
      %2445 = vmatprep.mubr.f32.mxu0 0.0
      %2446 = vmatmul.mubr.f32.gmra.mrb[0].mxu0 %v2277
      %v2447 = vpop.f32.mrb[0].mxu0
      %v2448 = vadd.f32 0.0, %v2447
      %v2449 = vpop.f32.mrb[0].mxu0
      %2450 = vmatprep.mubr.f32.mxu0 0.0
      %2451 = vmatmul.mubr.f32.gmra.mrb[0].mxu0 %v2280
      %v2452 = vpop.f32.mrb[0].mxu0
      %v2453 = vadd.f32 0.0, %v2452
      %v2454 = vpop.f32.mrb[0].mxu0
      %2455 = vmatprep.mubr.f32.mxu0 0.0
      %2456 = vmatmul.mubr.f32.gmra.mrb[0].mxu0 %v2283
      %v2457 = vpop.f32.mrb[0].mxu0
      %v2458 = vadd.f32 0.0, %v2457
      %v2459 = vpop.f32.mrb[0].mxu0
      %2460 = vmatprep.mubr.f32.mxu0 0.0
      %2461 = vmatmul.mubr.f32.gmra.mrb[0].mxu0 %v2286
      %v2462 = vpop.f32.mrb[0].mxu0
      %v2463 = vadd.f32 0.0, %v2462
      %v2464 = vpop.f32.mrb[0].mxu0
      %2465 = vmatprep.mubr.f32.mxu0 0.0
      %2466 = vmatmul.mubr.f32.gmra.mrb[0].mxu0 %v2289
      %v2467 = vpop.f32.mrb[0].mxu0
      %v2468 = vadd.f32 0.0, %v2467
      %v2469 = vpop.f32.mrb[0].mxu0
      %2470 = vmatprep.mubr.f32.mxu0 0.0
      %2471 = vmatmul.mubr.f32.gmra.mrb[0].mxu0 %v2292
      %v2472 = vpop.f32.mrb[0].mxu0
      %v2473 = vadd.f32 0.0, %v2472
      %v2474 = vpop.f32.mrb[0].mxu0
      %2475 = vmatprep.mubr.f32.mxu0 0.0
      %2476 = vmatmul.mubr.f32.gmra.mrb[0].mxu0 %v2295
      %v2477 = vpop.f32.mrb[0].mxu0
      %v2478 = vadd.f32 0.0, %v2477
      %v2479 = vpop.f32.mrb[0].mxu0
      %2480 = vmatprep.mubr.f32.mxu0 0.0
      %2481 = vmatmul.mubr.f32.gmra.mrb[0].mxu0 %v2298
      %v2482 = vpop.f32.mrb[0].mxu0
      %v2483 = vadd.f32 0.0, %v2482
      %v2484 = vpop.f32.mrb[0].mxu0
      %2485 = vmatprep.mubr.f32.mxu0 0.0
      %2486 = vmatmul.mubr.f32.gmra.mrb[0].mxu0 %v2301
      %v2487 = vpop.f32.mrb[0].mxu0
      %v2488 = vadd.f32 0.0, %v2487
      %v2489 = vpop.f32.mrb[0].mxu0
      %2490 = vmatprep.mubr.f32.mxu0 0.0
      %2491 = vmatmul.mubr.f32.gmra.mrb[0].mxu0 %v2304
      %v2492 = vpop.f32.mrb[0].mxu0
      %v2493 = vadd.f32 0.0, %v2492
      %v2494 = vpop.f32.mrb[0].mxu0
      %2495 = vmatprep.mubr.f32.mxu0 0.0
      %2496 = vmatmul.mubr.f32.gmra.mrb[0].mxu0 %v2307
      %v2497 = vpop.f32.mrb[0].mxu0
      %v2498 = vadd.f32 0.0, %v2497
      %v2499 = vpop.f32.mrb[0].mxu0
      %2500 = vmatprep.mubr.f32.mxu0 0.0
      %2501 = vmatmul.mubr.f32.gmra.mrb[0].mxu0 %v2310
      %v2502 = vpop.f32.mrb[0].mxu0
      %v2503 = vadd.f32 0.0, %v2502
      %v2504 = vpop.f32.mrb[0].mxu0
      %2505 = vmatprep.mubr.f32.mxu0 0.0
      %2506 = vmatmul.mubr.f32.gmra.mrb[0].mxu0 %v2313
      %v2507 = vpop.f32.mrb[0].mxu0
      %v2508 = vadd.f32 0.0, %v2507
      %v2509 = vpop.f32.mrb[0].mxu0
      %2510 = vmatprep.mubr.f32.mxu0 0.0
      %2511 = vmatmul.mubr.f32.gmra.mrb[0].mxu0 %v2316
      %v2512 = vpop.f32.mrb[0].mxu0
      %v2513 = vadd.f32 0.0, %v2512
      %v2514 = vpop.f32.mrb[0].mxu0
      %2515 = vmatprep.mubr.f32.mxu0 0.0
      %2516 = vmatmul.mubr.f32.gmra.mrb[0].mxu0 %v2319
      %v2517 = vpop.f32.mrb[0].mxu0
      %v2518 = vadd.f32 0.0, %v2517
      %v2519 = vpop.f32.mrb[0].mxu0
      %2520 = vmatprep.mubr.f32.mxu0 0.0
      %2521 = vmatmul.mubr.f32.gmra.mrb[0].mxu0 %v2322
      %v2522 = vpop.f32.mrb[0].mxu0
      %v2523 = vadd.f32 0.0, %v2522
      %v2524 = vpop.f32.mrb[0].mxu0
      %2525 = vmatprep.mubr.f32.mxu0 0.0
      %2526 = vmatmul.mubr.f32.gmra.mrb[0].mxu0 %v2325
      %v2527 = vpop.f32.mrb[0].mxu0
      %v2528 = vadd.f32 0.0, %v2527
      %v2529 = vpop.f32.mrb[0].mxu0
      %2530 = vmatprep.mubr.f32.mxu0 0.0
      %2531 = vmatmul.mubr.f32.gmra.mrb[0].mxu0 %v2328
      %v2532 = vpop.f32.mrb[0].mxu0
      %v2533 = vadd.f32 0.0, %v2532
      %v2534 = vpop.f32.mrb[0].mxu0
      %2535 = vmatprep.mubr.f32.mxu0 0.0
      %2536 = vmatmul.mubr.f32.gmra.mrb[0].mxu0 %v2331
      %v2537 = vpop.f32.mrb[0].mxu0
      %v2538 = vadd.f32 0.0, %v2537
      %v2539 = vpop.f32.mrb[0].mxu0
      %2540 = vmatprep.mubr.f32.mxu0 0.0
      %2541 = vmatmul.mubr.f32.gmra.mrb[0].mxu0 %v2334
      %v2542 = vpop.f32.mrb[0].mxu0
      %v2543 = vadd.f32 0.0, %v2542
      %v2544 = vpop.f32.mrb[0].mxu0
      %2545 = vmatprep.mubr.f32.mxu0 0.0
      %2546 = vmatmul.mubr.f32.gmra.mrb[0].mxu0 %v2337
      %v2547 = vpop.f32.mrb[0].mxu0
      %v2548 = vadd.f32 0.0, %v2547
      %v2549 = vpop.f32.mrb[0].mxu0
      %2550 = vmatprep.mubr.f32.mxu0 0.0
      %2551 = vmatmul.mubr.f32.gmra.mrb[0].mxu0 %v2340
      %v2552 = vpop.f32.mrb[0].mxu0
      %v2553 = vadd.f32 0.0, %v2552
      %v2554 = vpop.f32.mrb[0].mxu0
      %2555 = vmatprep.mubr.f32.mxu0 0.0
      %2556 = vmatmul.mubr.f32.gmra.mrb[0].mxu0 %v2343
      %v2557 = vpop.f32.mrb[0].mxu0
      %v2558 = vadd.f32 0.0, %v2557
      %v2559 = vpop.f32.mrb[0].mxu0
      %2560 = vmatprep.mubr.f32.mxu0 0.0
      %2561 = vmatmul.mubr.f32.gmra.mrb[0].mxu0 %v2346
      %v2562 = vpop.f32.mrb[0].mxu0
      %v2563 = vadd.f32 0.0, %v2562
      %v2564 = vpop.f32.mrb[0].mxu0
      %2565 = vmatprep.mubr.f32.mxu0 0.0
      %2566 = vmatmul.mubr.f32.gmra.mrb[0].mxu0 %v2349
      %v2567 = vpop.f32.mrb[0].mxu0
      %v2568 = vadd.f32 0.0, %v2567
      %v2569 = vpop.f32.mrb[0].mxu0
      %2570 = vmatprep.mubr.f32.mxu0 0.0
      %2571 = vmatmul.mubr.f32.gmra.mrb[0].mxu0 %v2352
      %v2572 = vpop.f32.mrb[0].mxu0
      %v2573 = vadd.f32 0.0, %v2572
      %v2574 = vpop.f32.mrb[0].mxu0
      %2575 = vmatprep.mubr.f32.mxu0 0.0
      %2576 = vmatmul.mubr.f32.gmra.mrb[0].mxu0 %v2355
      %v2577 = vpop.f32.mrb[0].mxu0
      %v2578 = vadd.f32 0.0, %v2577
      %v2579 = vpop.f32.mrb[0].mxu0
      %2580 = vmatprep.mubr.f32.mxu0 0.0
      %2581 = vmatmul.mubr.f32.gmra.mrb[0].mxu0 %v2358
      %v2582 = vpop.f32.mrb[0].mxu0
      %v2583 = vadd.f32 0.0, %v2582
      %v2584 = vpop.f32.mrb[0].mxu0
      %2585 = vmatprep.mubr.f32.mxu0 0.0
      %2586 = vmatmul.mubr.f32.gmra.mrb[0].mxu0 %v2361
      %v2587 = vpop.f32.mrb[0].mxu0
      %v2588 = vadd.f32 0.0, %v2587
      %v2589 = vpop.f32.mrb[0].mxu0
      %2590 = vdwg.mxu0
      %v2591 = vadd.f32 %v2201, %v2433
      %v2592 = vadd.f32 %v2202, %v2438
      %v2593 = vadd.f32 %v2203, %v2443
      %v2594 = vadd.f32 %v2204, %v2448
      %v2595 = vadd.f32 %v2205, %v2453
      %v2596 = vadd.f32 %v2206, %v2458
      %v2597 = vadd.f32 %v2207, %v2463
      %v2598 = vadd.f32 %v2208, %v2468
      %v2599 = vadd.f32 %v2209, %v2473
      %v2600 = vadd.f32 %v2210, %v2478
      %v2601 = vadd.f32 %v2211, %v2483
      %v2602 = vadd.f32 %v2212, %v2488
      %v2603 = vadd.f32 %v2213, %v2493
      %v2604 = vadd.f32 %v2214, %v2498
      %v2605 = vadd.f32 %v2215, %v2503
      %v2606 = vadd.f32 %v2216, %v2508
      %v2607 = vadd.f32 %v2217, %v2513
      %v2608 = vadd.f32 %v2218, %v2518
      %v2609 = vadd.f32 %v2219, %v2523
      %v2610 = vadd.f32 %v2220, %v2528
      %v2611 = vadd.f32 %v2221, %v2533
      %v2612 = vadd.f32 %v2222, %v2538
      %v2613 = vadd.f32 %v2223, %v2543
      %v2614 = vadd.f32 %v2224, %v2548
      %v2615 = vadd.f32 %v2225, %v2553
      %v2616 = vadd.f32 %v2226, %v2558
      %v2617 = vadd.f32 %v2227, %v2563
      %v2618 = vadd.f32 %v2228, %v2568
      %v2619 = vadd.f32 %v2229, %v2573
      %v2620 = vadd.f32 %v2230, %v2578
      %v2621 = vadd.f32 %v2231, %v2583
      %v2622 = vadd.f32 %v2232, %v2588
      %s2623 = scalar_lea.vmem [#allocation2], 48
      %v2624 = vld [vmem:[%s2623] sm:$0xff]
      %v2625 = vld [vmem:[%s2623 + $0x8] sm:$0xff]
      %v2626 = vld [vmem:[%s2623 + $0x18] sm:$0xff]
      %v2627 = vld [vmem:[%s2623 + $0x20] sm:$0xff]
      %v2628 = vld [vmem:[%s2623 + $0x30] sm:$0xff]
      %v2629 = vld [vmem:[%s2623 + $0x38] sm:$0xff]
      %v2630 = vld [vmem:[%s2623 + $0x48] sm:$0xff]
      %v2631 = vld [vmem:[%s2623 + $0x50] sm:$0xff]
      %v2632 = vld [vmem:[%s2623 + $0x60] sm:$0xff]
      %v2633 = vld [vmem:[%s2623 + $0x68] sm:$0xff]
      %v2634 = vld [vmem:[%s2623 + $0x78] sm:$0xff]
      %v2635 = vld [vmem:[%s2623 + $0x80] sm:$0xff]
      %v2636 = vld [vmem:[%s2623 + $0x90] sm:$0xff]
      %v2637 = vld [vmem:[%s2623 + $0x98] sm:$0xff]
      %v2638 = vld [vmem:[%s2623 + $0xa8] sm:$0xff]
      %v2639 = vld [vmem:[%s2623 + $0xb0] sm:$0xff]
      %v2640 = vld [vmem:[%s2623 + $0xc0] sm:$0xff]
      %v2641 = vld [vmem:[%s2623 + $0xc8] sm:$0xff]
      %v2642 = vld [vmem:[%s2623 + $0xd8] sm:$0xff]
      %v2643 = vld [vmem:[%s2623 + $0xe0] sm:$0xff]
      %v2644 = vld [vmem:[%s2623 + $0xf0] sm:$0xff]
      %v2645 = vld [vmem:[%s2623 + $0xf8] sm:$0xff]
      %v2646 = vld [vmem:[%s2623 + $0x108] sm:$0xff]
      %v2647 = vld [vmem:[%s2623 + $0x110] sm:$0xff]
      %v2648 = vld [vmem:[%s2623 + $0x120] sm:$0xff]
      %v2649 = vld [vmem:[%s2623 + $0x128] sm:$0xff]
      %v2650 = vld [vmem:[%s2623 + $0x138] sm:$0xff]
      %v2651 = vld [vmem:[%s2623 + $0x140] sm:$0xff]
      %v2652 = vld [vmem:[%s2623 + $0x150] sm:$0xff]
      %v2653 = vld [vmem:[%s2623 + $0x158] sm:$0xff]
      %v2654 = vld [vmem:[%s2623 + $0x168] sm:$0xff]
      %v2655 = vld [vmem:[%s2623 + $0x170] sm:$0xff]
      %s2656 = scalar_lea.vmem %s1, 24
      %v2657 = vld [vmem:[%s2656] sm:$0xf]
      %v2659 = vsel %vm225, %v2624, 0
      %v2662 = vsel %vm225, %v2625, 0
      %v2665 = vsel %vm225, %v2626, 0
      %v2668 = vsel %vm225, %v2627, 0
      %v2671 = vsel %vm225, %v2628, 0
      %v2674 = vsel %vm225, %v2629, 0
      %v2677 = vsel %vm225, %v2630, 0
      %v2680 = vsel %vm225, %v2631, 0
      %v2683 = vsel %vm225, %v2632, 0
      %v2686 = vsel %vm225, %v2633, 0
      %v2689 = vsel %vm225, %v2634, 0
      %v2692 = vsel %vm225, %v2635, 0
      %v2695 = vsel %vm225, %v2636, 0
      %v2698 = vsel %vm225, %v2637, 0
      %v2701 = vsel %vm225, %v2638, 0
      %v2704 = vsel %vm225, %v2639, 0
      %v2707 = vsel %vm225, %v2640, 0
      %v2710 = vsel %vm225, %v2641, 0
      %v2713 = vsel %vm225, %v2642, 0
      %v2716 = vsel %vm225, %v2643, 0
      %v2719 = vsel %vm225, %v2644, 0
      %v2722 = vsel %vm225, %v2645, 0
      %v2725 = vsel %vm225, %v2646, 0
      %v2728 = vsel %vm225, %v2647, 0
      %v2731 = vsel %vm225, %v2648, 0
      %v2734 = vsel %vm225, %v2649, 0
      %v2737 = vsel %vm225, %v2650, 0
      %v2740 = vsel %vm225, %v2651, 0
      %v2743 = vsel %vm225, %v2652, 0
      %v2746 = vsel %vm225, %v2653, 0
      %v2749 = vsel %vm225, %v2654, 0
      %v2752 = vsel %vm225, %v2655, 0
      %v2755 = vsel %vm510, %v2657, 0
      %2757 = vmatprep.subr.mxu0 0.0
      %2758 = vmatpush1.msra.mxu0 %v2755
      %2759 = vmatprep.subr.mxu0 0.0
      %2760 = vmatpush1.msra.mxu0 0.0
      %2761 = vmatprep.subr.mxu0 0.0
      %2762 = vmatpush1.msra.mxu0 0.0
      %2763 = vmatprep.subr.mxu0 0.0
      %2764 = vmatpush1.msra.mxu0 0.0
      %2765 = vmatprep.subr.mxu0 0.0
      %2766 = vmatpush1.msra.mxu0 0.0
      %2767 = vmatprep.subr.mxu0 0.0
      %2768 = vmatpush1.msra.mxu0 0.0
      %2769 = vmatprep.subr.mxu0 0.0
      %2770 = vmatpush1.msra.mxu0 0.0
      %2771 = vmatprep.subr.mxu0 0.0
      %2772 = vmatpush1.msra.mxu0 0.0
      %2773 = vmatprep.subr.mxu0 0.0
      %2774 = vmatpush1.msra.mxu0 0.0
      %2775 = vmatprep.subr.mxu0 0.0
      %2776 = vmatpush1.msra.mxu0 0.0
      %2777 = vmatprep.subr.mxu0 0.0
      %2778 = vmatpush1.msra.mxu0 0.0
      %2779 = vmatprep.subr.mxu0 0.0
      %2780 = vmatpush1.msra.mxu0 0.0
      %2781 = vmatprep.subr.mxu0 0.0
      %2782 = vmatpush1.msra.mxu0 0.0
      %2783 = vmatprep.subr.mxu0 0.0
      %2784 = vmatpush1.msra.mxu0 0.0
      %2785 = vmatprep.subr.mxu0 0.0
      %2786 = vmatpush1.msra.mxu0 0.0
      %2787 = vmatprep.subr.mxu0 0.0
      %2788 = vmatpush1.msra.mxu0 0.0
      %2789 = vmatprep.subr.mxu0 0.0
      %2790 = vmatpush1.msra.mxu0 0.0
      %2791 = vmatprep.subr.mxu0 0.0
      %2792 = vmatpush1.msra.mxu0 0.0
      %2793 = vmatprep.subr.mxu0 0.0
      %2794 = vmatpush1.msra.mxu0 0.0
      %2795 = vmatprep.subr.mxu0 0.0
      %2796 = vmatpush1.msra.mxu0 0.0
      %2797 = vmatprep.subr.mxu0 0.0
      %2798 = vmatpush1.msra.mxu0 0.0
      %2799 = vmatprep.subr.mxu0 0.0
      %2800 = vmatpush1.msra.mxu0 0.0
      %2801 = vmatprep.subr.mxu0 0.0
      %2802 = vmatpush1.msra.mxu0 0.0
      %2803 = vmatprep.subr.mxu0 0.0
      %2804 = vmatpush1.msra.mxu0 0.0
      %2805 = vmatprep.subr.mxu0 0.0
      %2806 = vmatpush1.msra.mxu0 0.0
      %2807 = vmatprep.subr.mxu0 0.0
      %2808 = vmatpush1.msra.mxu0 0.0
      %2809 = vmatprep.subr.mxu0 0.0
      %2810 = vmatpush1.msra.mxu0 0.0
      %2811 = vmatprep.subr.mxu0 0.0
      %2812 = vmatpush1.msra.mxu0 0.0
      %2813 = vmatprep.subr.mxu0 0.0
      %2814 = vmatpush1.msra.mxu0 0.0
      %2815 = vmatprep.subr.mxu0 0.0
      %2816 = vmatpush1.msra.mxu0 0.0
      %2817 = vmatprep.subr.mxu0 0.0
      %2818 = vmatpush1.msra.mxu0 0.0
      %2819 = vmatprep.subr.mxu0 0.0
      %2820 = vmatpush1.msra.mxu0 0.0
      %2821 = vmatprep.mubr.f32.mxu0 0.0
      %2822 = vmatmul.mubr.f32.gmra.mrb[0].mxu0 %v2659
      %v2823 = vpop.f32.mrb[0].mxu0
      %v2824 = vadd.f32 0.0, %v2823
      %v2825 = vpop.f32.mrb[0].mxu0
      %2826 = vmatprep.mubr.f32.mxu0 0.0
      %2827 = vmatmul.mubr.f32.gmra.mrb[0].mxu0 %v2662
      %v2828 = vpop.f32.mrb[0].mxu0
      %v2829 = vadd.f32 0.0, %v2828
      %v2830 = vpop.f32.mrb[0].mxu0
      %2831 = vmatprep.mubr.f32.mxu0 0.0
      %2832 = vmatmul.mubr.f32.gmra.mrb[0].mxu0 %v2665
      %v2833 = vpop.f32.mrb[0].mxu0
      %v2834 = vadd.f32 0.0, %v2833
      %v2835 = vpop.f32.mrb[0].mxu0
      %2836 = vmatprep.mubr.f32.mxu0 0.0
      %2837 = vmatmul.mubr.f32.gmra.mrb[0].mxu0 %v2668
      %v2838 = vpop.f32.mrb[0].mxu0
      %v2839 = vadd.f32 0.0, %v2838
      %v2840 = vpop.f32.mrb[0].mxu0
      %2841 = vmatprep.mubr.f32.mxu0 0.0
      %2842 = vmatmul.mubr.f32.gmra.mrb[0].mxu0 %v2671
      %v2843 = vpop.f32.mrb[0].mxu0
      %v2844 = vadd.f32 0.0, %v2843
      %v2845 = vpop.f32.mrb[0].mxu0
      %2846 = vmatprep.mubr.f32.mxu0 0.0
      %2847 = vmatmul.mubr.f32.gmra.mrb[0].mxu0 %v2674
      %v2848 = vpop.f32.mrb[0].mxu0
      %v2849 = vadd.f32 0.0, %v2848
      %v2850 = vpop.f32.mrb[0].mxu0
      %2851 = vmatprep.mubr.f32.mxu0 0.0
      %2852 = vmatmul.mubr.f32.gmra.mrb[0].mxu0 %v2677
      %v2853 = vpop.f32.mrb[0].mxu0
      %v2854 = vadd.f32 0.0, %v2853
      %v2855 = vpop.f32.mrb[0].mxu0
      %2856 = vmatprep.mubr.f32.mxu0 0.0
      %2857 = vmatmul.mubr.f32.gmra.mrb[0].mxu0 %v2680
      %v2858 = vpop.f32.mrb[0].mxu0
      %v2859 = vadd.f32 0.0, %v2858
      %v2860 = vpop.f32.mrb[0].mxu0
      %2861 = vmatprep.mubr.f32.mxu0 0.0
      %2862 = vmatmul.mubr.f32.gmra.mrb[0].mxu0 %v2683
      %v2863 = vpop.f32.mrb[0].mxu0
      %v2864 = vadd.f32 0.0, %v2863
      %v2865 = vpop.f32.mrb[0].mxu0
      %2866 = vmatprep.mubr.f32.mxu0 0.0
      %2867 = vmatmul.mubr.f32.gmra.mrb[0].mxu0 %v2686
      %v2868 = vpop.f32.mrb[0].mxu0
      %v2869 = vadd.f32 0.0, %v2868
      %v2870 = vpop.f32.mrb[0].mxu0
      %2871 = vmatprep.mubr.f32.mxu0 0.0
      %2872 = vmatmul.mubr.f32.gmra.mrb[0].mxu0 %v2689
      %v2873 = vpop.f32.mrb[0].mxu0
      %v2874 = vadd.f32 0.0, %v2873
      %v2875 = vpop.f32.mrb[0].mxu0
      %2876 = vmatprep.mubr.f32.mxu0 0.0
      %2877 = vmatmul.mubr.f32.gmra.mrb[0].mxu0 %v2692
      %v2878 = vpop.f32.mrb[0].mxu0
      %v2879 = vadd.f32 0.0, %v2878
      %v2880 = vpop.f32.mrb[0].mxu0
      %2881 = vmatprep.mubr.f32.mxu0 0.0
      %2882 = vmatmul.mubr.f32.gmra.mrb[0].mxu0 %v2695
      %v2883 = vpop.f32.mrb[0].mxu0
      %v2884 = vadd.f32 0.0, %v2883
      %v2885 = vpop.f32.mrb[0].mxu0
      %2886 = vmatprep.mubr.f32.mxu0 0.0
      %2887 = vmatmul.mubr.f32.gmra.mrb[0].mxu0 %v2698
      %v2888 = vpop.f32.mrb[0].mxu0
      %v2889 = vadd.f32 0.0, %v2888
      %v2890 = vpop.f32.mrb[0].mxu0
      %2891 = vmatprep.mubr.f32.mxu0 0.0
      %2892 = vmatmul.mubr.f32.gmra.mrb[0].mxu0 %v2701
      %v2893 = vpop.f32.mrb[0].mxu0
      %v2894 = vadd.f32 0.0, %v2893
      %v2895 = vpop.f32.mrb[0].mxu0
      %2896 = vmatprep.mubr.f32.mxu0 0.0
      %2897 = vmatmul.mubr.f32.gmra.mrb[0].mxu0 %v2704
      %v2898 = vpop.f32.mrb[0].mxu0
      %v2899 = vadd.f32 0.0, %v2898
      %v2900 = vpop.f32.mrb[0].mxu0
      %2901 = vmatprep.mubr.f32.mxu0 0.0
      %2902 = vmatmul.mubr.f32.gmra.mrb[0].mxu0 %v2707
      %v2903 = vpop.f32.mrb[0].mxu0
      %v2904 = vadd.f32 0.0, %v2903
      %v2905 = vpop.f32.mrb[0].mxu0
      %2906 = vmatprep.mubr.f32.mxu0 0.0
      %2907 = vmatmul.mubr.f32.gmra.mrb[0].mxu0 %v2710
      %v2908 = vpop.f32.mrb[0].mxu0
      %v2909 = vadd.f32 0.0, %v2908
      %v2910 = vpop.f32.mrb[0].mxu0
      %2911 = vmatprep.mubr.f32.mxu0 0.0
      %2912 = vmatmul.mubr.f32.gmra.mrb[0].mxu0 %v2713
      %v2913 = vpop.f32.mrb[0].mxu0
      %v2914 = vadd.f32 0.0, %v2913
      %v2915 = vpop.f32.mrb[0].mxu0
      %2916 = vmatprep.mubr.f32.mxu0 0.0
      %2917 = vmatmul.mubr.f32.gmra.mrb[0].mxu0 %v2716
      %v2918 = vpop.f32.mrb[0].mxu0
      %v2919 = vadd.f32 0.0, %v2918
      %v2920 = vpop.f32.mrb[0].mxu0
      %2921 = vmatprep.mubr.f32.mxu0 0.0
      %2922 = vmatmul.mubr.f32.gmra.mrb[0].mxu0 %v2719
      %v2923 = vpop.f32.mrb[0].mxu0
      %v2924 = vadd.f32 0.0, %v2923
      %v2925 = vpop.f32.mrb[0].mxu0
      %2926 = vmatprep.mubr.f32.mxu0 0.0
      %2927 = vmatmul.mubr.f32.gmra.mrb[0].mxu0 %v2722
      %v2928 = vpop.f32.mrb[0].mxu0
      %v2929 = vadd.f32 0.0, %v2928
      %v2930 = vpop.f32.mrb[0].mxu0
      %2931 = vmatprep.mubr.f32.mxu0 0.0
      %2932 = vmatmul.mubr.f32.gmra.mrb[0].mxu0 %v2725
      %v2933 = vpop.f32.mrb[0].mxu0
      %v2934 = vadd.f32 0.0, %v2933
      %v2935 = vpop.f32.mrb[0].mxu0
      %2936 = vmatprep.mubr.f32.mxu0 0.0
      %2937 = vmatmul.mubr.f32.gmra.mrb[0].mxu0 %v2728
      %v2938 = vpop.f32.mrb[0].mxu0
      %v2939 = vadd.f32 0.0, %v2938
      %v2940 = vpop.f32.mrb[0].mxu0
      %2941 = vmatprep.mubr.f32.mxu0 0.0
      %2942 = vmatmul.mubr.f32.gmra.mrb[0].mxu0 %v2731
      %v2943 = vpop.f32.mrb[0].mxu0
      %v2944 = vadd.f32 0.0, %v2943
      %v2945 = vpop.f32.mrb[0].mxu0
      %2946 = vmatprep.mubr.f32.mxu0 0.0
      %2947 = vmatmul.mubr.f32.gmra.mrb[0].mxu0 %v2734
      %v2948 = vpop.f32.mrb[0].mxu0
      %v2949 = vadd.f32 0.0, %v2948
      %v2950 = vpop.f32.mrb[0].mxu0
      %2951 = vmatprep.mubr.f32.mxu0 0.0
      %2952 = vmatmul.mubr.f32.gmra.mrb[0].mxu0 %v2737
      %v2953 = vpop.f32.mrb[0].mxu0
      %v2954 = vadd.f32 0.0, %v2953
      %v2955 = vpop.f32.mrb[0].mxu0
      %2956 = vmatprep.mubr.f32.mxu0 0.0
      %2957 = vmatmul.mubr.f32.gmra.mrb[0].mxu0 %v2740
      %v2958 = vpop.f32.mrb[0].mxu0
      %v2959 = vadd.f32 0.0, %v2958
      %v2960 = vpop.f32.mrb[0].mxu0
      %2961 = vmatprep.mubr.f32.mxu0 0.0
      %2962 = vmatmul.mubr.f32.gmra.mrb[0].mxu0 %v2743
      %v2963 = vpop.f32.mrb[0].mxu0
      %v2964 = vadd.f32 0.0, %v2963
      %v2965 = vpop.f32.mrb[0].mxu0
      %2966 = vmatprep.mubr.f32.mxu0 0.0
      %2967 = vmatmul.mubr.f32.gmra.mrb[0].mxu0 %v2746
      %v2968 = vpop.f32.mrb[0].mxu0
      %v2969 = vadd.f32 0.0, %v2968
      %v2970 = vpop.f32.mrb[0].mxu0
      %2971 = vmatprep.mubr.f32.mxu0 0.0
      %2972 = vmatmul.mubr.f32.gmra.mrb[0].mxu0 %v2749
      %v2973 = vpop.f32.mrb[0].mxu0
      %v2974 = vadd.f32 0.0, %v2973
      %v2975 = vpop.f32.mrb[0].mxu0
      %2976 = vmatprep.mubr.f32.mxu0 0.0
      %2977 = vmatmul.mubr.f32.gmra.mrb[0].mxu0 %v2752
      %v2978 = vpop.f32.mrb[0].mxu0
      %v2979 = vadd.f32 0.0, %v2978
      %v2980 = vpop.f32.mrb[0].mxu0
      %2981 = vdwg.mxu0
      %v2982 = vadd.f32 %v2591, %v2824
      %v2983 = vadd.f32 %v2592, %v2829
      %v2984 = vadd.f32 %v2593, %v2834
      %v2985 = vadd.f32 %v2594, %v2839
      %v2986 = vadd.f32 %v2595, %v2844
      %v2987 = vadd.f32 %v2596, %v2849
      %v2988 = vadd.f32 %v2597, %v2854
      %v2989 = vadd.f32 %v2598, %v2859
      %v2990 = vadd.f32 %v2599, %v2864
      %v2991 = vadd.f32 %v2600, %v2869
      %v2992 = vadd.f32 %v2601, %v2874
      %v2993 = vadd.f32 %v2602, %v2879
      %v2994 = vadd.f32 %v2603, %v2884
      %v2995 = vadd.f32 %v2604, %v2889
      %v2996 = vadd.f32 %v2605, %v2894
      %v2997 = vadd.f32 %v2606, %v2899
      %v2998 = vadd.f32 %v2607, %v2904
      %v2999 = vadd.f32 %v2608, %v2909
      %v3000 = vadd.f32 %v2609, %v2914
      %v3001 = vadd.f32 %v2610, %v2919
      %v3002 = vadd.f32 %v2611, %v2924
      %v3003 = vadd.f32 %v2612, %v2929
      %v3004 = vadd.f32 %v2613, %v2934
      %v3005 = vadd.f32 %v2614, %v2939
      %v3006 = vadd.f32 %v2615, %v2944
      %v3007 = vadd.f32 %v2616, %v2949
      %v3008 = vadd.f32 %v2617, %v2954
      %v3009 = vadd.f32 %v2618, %v2959
      %v3010 = vadd.f32 %v2619, %v2964
      %v3011 = vadd.f32 %v2620, %v2969
      %v3012 = vadd.f32 %v2621, %v2974
      %v3013 = vadd.f32 %v2622, %v2979
      %v3014 = vld [vmem:[%s2623 + $0x1] sm:$0xff]
      %v3015 = vld [vmem:[%s2623 + $0x9] sm:$0xff]
      %v3016 = vld [vmem:[%s2623 + $0x19] sm:$0xff]
      %v3017 = vld [vmem:[%s2623 + $0x21] sm:$0xff]
      %v3018 = vld [vmem:[%s2623 + $0x31] sm:$0xff]
      %v3019 = vld [vmem:[%s2623 + $0x39] sm:$0xff]
      %v3020 = vld [vmem:[%s2623 + $0x49] sm:$0xff]
      %v3021 = vld [vmem:[%s2623 + $0x51] sm:$0xff]
      %v3022 = vld [vmem:[%s2623 + $0x61] sm:$0xff]
      %v3023 = vld [vmem:[%s2623 + $0x69] sm:$0xff]
      %v3024 = vld [vmem:[%s2623 + $0x79] sm:$0xff]
      %v3025 = vld [vmem:[%s2623 + $0x81] sm:$0xff]
      %v3026 = vld [vmem:[%s2623 + $0x91] sm:$0xff]
      %v3027 = vld [vmem:[%s2623 + $0x99] sm:$0xff]
      %v3028 = vld [vmem:[%s2623 + $0xa9] sm:$0xff]
      %v3029 = vld [vmem:[%s2623 + $0xb1] sm:$0xff]
      %v3030 = vld [vmem:[%s2623 + $0xc1] sm:$0xff]
      %v3031 = vld [vmem:[%s2623 + $0xc9] sm:$0xff]
      %v3032 = vld [vmem:[%s2623 + $0xd9] sm:$0xff]
      %v3033 = vld [vmem:[%s2623 + $0xe1] sm:$0xff]
      %v3034 = vld [vmem:[%s2623 + $0xf1] sm:$0xff]
      %v3035 = vld [vmem:[%s2623 + $0xf9] sm:$0xff]
      %v3036 = vld [vmem:[%s2623 + $0x109] sm:$0xff]
      %v3037 = vld [vmem:[%s2623 + $0x111] sm:$0xff]
      %v3038 = vld [vmem:[%s2623 + $0x121] sm:$0xff]
      %v3039 = vld [vmem:[%s2623 + $0x129] sm:$0xff]
      %v3040 = vld [vmem:[%s2623 + $0x139] sm:$0xff]
      %v3041 = vld [vmem:[%s2623 + $0x141] sm:$0xff]
      %v3042 = vld [vmem:[%s2623 + $0x151] sm:$0xff]
      %v3043 = vld [vmem:[%s2623 + $0x159] sm:$0xff]
      %v3044 = vld [vmem:[%s2623 + $0x169] sm:$0xff]
      %v3045 = vld [vmem:[%s2623 + $0x171] sm:$0xff]
      %s3046 = scalar_lea.vmem %s1, 28
      %v3047 = vld [vmem:[%s3046] sm:$0xf]
      %v3049 = vsel %vm225, %v3014, 0
      %v3052 = vsel %vm225, %v3015, 0
      %v3055 = vsel %vm225, %v3016, 0
      %v3058 = vsel %vm225, %v3017, 0
      %v3061 = vsel %vm225, %v3018, 0
      %v3064 = vsel %vm225, %v3019, 0
      %v3067 = vsel %vm225, %v3020, 0
      %v3070 = vsel %vm225, %v3021, 0
      %v3073 = vsel %vm225, %v3022, 0
      %v3076 = vsel %vm225, %v3023, 0
      %v3079 = vsel %vm225, %v3024, 0
      %v3082 = vsel %vm225, %v3025, 0
      %v3085 = vsel %vm225, %v3026, 0
      %v3088 = vsel %vm225, %v3027, 0
      %v3091 = vsel %vm225, %v3028, 0
      %v3094 = vsel %vm225, %v3029, 0
      %v3097 = vsel %vm225, %v3030, 0
      %v3100 = vsel %vm225, %v3031, 0
      %v3103 = vsel %vm225, %v3032, 0
      %v3106 = vsel %vm225, %v3033, 0
      %v3109 = vsel %vm225, %v3034, 0
      %v3112 = vsel %vm225, %v3035, 0
      %v3115 = vsel %vm225, %v3036, 0
      %v3118 = vsel %vm225, %v3037, 0
      %v3121 = vsel %vm225, %v3038, 0
      %v3124 = vsel %vm225, %v3039, 0
      %v3127 = vsel %vm225, %v3040, 0
      %v3130 = vsel %vm225, %v3041, 0
      %v3133 = vsel %vm225, %v3042, 0
      %v3136 = vsel %vm225, %v3043, 0
      %v3139 = vsel %vm225, %v3044, 0
      %v3142 = vsel %vm225, %v3045, 0
      %v3145 = vsel %vm510, %v3047, 0
      %3147 = vmatprep.subr.mxu0 0.0
      %3148 = vmatpush1.msra.mxu0 %v3145
      %3149 = vmatprep.subr.mxu0 0.0
      %3150 = vmatpush1.msra.mxu0 0.0
      %3151 = vmatprep.subr.mxu0 0.0
      %3152 = vmatpush1.msra.mxu0 0.0
      %3153 = vmatprep.subr.mxu0 0.0
      %3154 = vmatpush1.msra.mxu0 0.0
      %3155 = vmatprep.subr.mxu0 0.0
      %3156 = vmatpush1.msra.mxu0 0.0
      %3157 = vmatprep.subr.mxu0 0.0
      %3158 = vmatpush1.msra.mxu0 0.0
      %3159 = vmatprep.subr.mxu0 0.0
      %3160 = vmatpush1.msra.mxu0 0.0
      %3161 = vmatprep.subr.mxu0 0.0
      %3162 = vmatpush1.msra.mxu0 0.0
      %3163 = vmatprep.subr.mxu0 0.0
      %3164 = vmatpush1.msra.mxu0 0.0
      %3165 = vmatprep.subr.mxu0 0.0
      %3166 = vmatpush1.msra.mxu0 0.0
      %3167 = vmatprep.subr.mxu0 0.0
      %3168 = vmatpush1.msra.mxu0 0.0
      %3169 = vmatprep.subr.mxu0 0.0
      %3170 = vmatpush1.msra.mxu0 0.0
      %3171 = vmatprep.subr.mxu0 0.0
      %3172 = vmatpush1.msra.mxu0 0.0
      %3173 = vmatprep.subr.mxu0 0.0
      %3174 = vmatpush1.msra.mxu0 0.0
      %3175 = vmatprep.subr.mxu0 0.0
      %3176 = vmatpush1.msra.mxu0 0.0
      %3177 = vmatprep.subr.mxu0 0.0
      %3178 = vmatpush1.msra.mxu0 0.0
      %3179 = vmatprep.subr.mxu0 0.0
      %3180 = vmatpush1.msra.mxu0 0.0
      %3181 = vmatprep.subr.mxu0 0.0
      %3182 = vmatpush1.msra.mxu0 0.0
      %3183 = vmatprep.subr.mxu0 0.0
      %3184 = vmatpush1.msra.mxu0 0.0
      %3185 = vmatprep.subr.mxu0 0.0
      %3186 = vmatpush1.msra.mxu0 0.0
      %3187 = vmatprep.subr.mxu0 0.0
      %3188 = vmatpush1.msra.mxu0 0.0
      %3189 = vmatprep.subr.mxu0 0.0
      %3190 = vmatpush1.msra.mxu0 0.0
      %3191 = vmatprep.subr.mxu0 0.0
      %3192 = vmatpush1.msra.mxu0 0.0
      %3193 = vmatprep.subr.mxu0 0.0
      %3194 = vmatpush1.msra.mxu0 0.0
      %3195 = vmatprep.subr.mxu0 0.0
      %3196 = vmatpush1.msra.mxu0 0.0
      %3197 = vmatprep.subr.mxu0 0.0
      %3198 = vmatpush1.msra.mxu0 0.0
      %3199 = vmatprep.subr.mxu0 0.0
      %3200 = vmatpush1.msra.mxu0 0.0
      %3201 = vmatprep.subr.mxu0 0.0
      %3202 = vmatpush1.msra.mxu0 0.0
      %3203 = vmatprep.subr.mxu0 0.0
      %3204 = vmatpush1.msra.mxu0 0.0
      %3205 = vmatprep.subr.mxu0 0.0
      %3206 = vmatpush1.msra.mxu0 0.0
      %3207 = vmatprep.subr.mxu0 0.0
      %3208 = vmatpush1.msra.mxu0 0.0
      %3209 = vmatprep.subr.mxu0 0.0
      %3210 = vmatpush1.msra.mxu0 0.0
      %3211 = vmatprep.mubr.f32.mxu0 0.0
      %3212 = vmatmul.mubr.f32.gmra.mrb[0].mxu0 %v3049
      %v3213 = vpop.f32.mrb[0].mxu0
      %v3214 = vadd.f32 0.0, %v3213
      %v3215 = vpop.f32.mrb[0].mxu0
      %3216 = vmatprep.mubr.f32.mxu0 0.0
      %3217 = vmatmul.mubr.f32.gmra.mrb[0].mxu0 %v3052
      %v3218 = vpop.f32.mrb[0].mxu0
      %v3219 = vadd.f32 0.0, %v3218
      %v3220 = vpop.f32.mrb[0].mxu0
      %3221 = vmatprep.mubr.f32.mxu0 0.0
      %3222 = vmatmul.mubr.f32.gmra.mrb[0].mxu0 %v3055
      %v3223 = vpop.f32.mrb[0].mxu0
      %v3224 = vadd.f32 0.0, %v3223
      %v3225 = vpop.f32.mrb[0].mxu0
      %3226 = vmatprep.mubr.f32.mxu0 0.0
      %3227 = vmatmul.mubr.f32.gmra.mrb[0].mxu0 %v3058
      %v3228 = vpop.f32.mrb[0].mxu0
      %v3229 = vadd.f32 0.0, %v3228
      %v3230 = vpop.f32.mrb[0].mxu0
      %3231 = vmatprep.mubr.f32.mxu0 0.0
      %3232 = vmatmul.mubr.f32.gmra.mrb[0].mxu0 %v3061
      %v3233 = vpop.f32.mrb[0].mxu0
      %v3234 = vadd.f32 0.0, %v3233
      %v3235 = vpop.f32.mrb[0].mxu0
      %3236 = vmatprep.mubr.f32.mxu0 0.0
      %3237 = vmatmul.mubr.f32.gmra.mrb[0].mxu0 %v3064
      %v3238 = vpop.f32.mrb[0].mxu0
      %v3239 = vadd.f32 0.0, %v3238
      %v3240 = vpop.f32.mrb[0].mxu0
      %3241 = vmatprep.mubr.f32.mxu0 0.0
      %3242 = vmatmul.mubr.f32.gmra.mrb[0].mxu0 %v3067
      %v3243 = vpop.f32.mrb[0].mxu0
      %v3244 = vadd.f32 0.0, %v3243
      %v3245 = vpop.f32.mrb[0].mxu0
      %3246 = vmatprep.mubr.f32.mxu0 0.0
      %3247 = vmatmul.mubr.f32.gmra.mrb[0].mxu0 %v3070
      %v3248 = vpop.f32.mrb[0].mxu0
      %v3249 = vadd.f32 0.0, %v3248
      %v3250 = vpop.f32.mrb[0].mxu0
      %3251 = vmatprep.mubr.f32.mxu0 0.0
      %3252 = vmatmul.mubr.f32.gmra.mrb[0].mxu0 %v3073
      %v3253 = vpop.f32.mrb[0].mxu0
      %v3254 = vadd.f32 0.0, %v3253
      %v3255 = vpop.f32.mrb[0].mxu0
      %3256 = vmatprep.mubr.f32.mxu0 0.0
      %3257 = vmatmul.mubr.f32.gmra.mrb[0].mxu0 %v3076
      %v3258 = vpop.f32.mrb[0].mxu0
      %v3259 = vadd.f32 0.0, %v3258
      %v3260 = vpop.f32.mrb[0].mxu0
      %3261 = vmatprep.mubr.f32.mxu0 0.0
      %3262 = vmatmul.mubr.f32.gmra.mrb[0].mxu0 %v3079
      %v3263 = vpop.f32.mrb[0].mxu0
      %v3264 = vadd.f32 0.0, %v3263
      %v3265 = vpop.f32.mrb[0].mxu0
      %3266 = vmatprep.mubr.f32.mxu0 0.0
      %3267 = vmatmul.mubr.f32.gmra.mrb[0].mxu0 %v3082
      %v3268 = vpop.f32.mrb[0].mxu0
      %v3269 = vadd.f32 0.0, %v3268
      %v3270 = vpop.f32.mrb[0].mxu0
      %3271 = vmatprep.mubr.f32.mxu0 0.0
      %3272 = vmatmul.mubr.f32.gmra.mrb[0].mxu0 %v3085
      %v3273 = vpop.f32.mrb[0].mxu0
      %v3274 = vadd.f32 0.0, %v3273
      %v3275 = vpop.f32.mrb[0].mxu0
      %3276 = vmatprep.mubr.f32.mxu0 0.0
      %3277 = vmatmul.mubr.f32.gmra.mrb[0].mxu0 %v3088
      %v3278 = vpop.f32.mrb[0].mxu0
      %v3279 = vadd.f32 0.0, %v3278
      %v3280 = vpop.f32.mrb[0].mxu0
      %3281 = vmatprep.mubr.f32.mxu0 0.0
      %3282 = vmatmul.mubr.f32.gmra.mrb[0].mxu0 %v3091
      %v3283 = vpop.f32.mrb[0].mxu0
      %v3284 = vadd.f32 0.0, %v3283
      %v3285 = vpop.f32.mrb[0].mxu0
      %3286 = vmatprep.mubr.f32.mxu0 0.0
      %3287 = vmatmul.mubr.f32.gmra.mrb[0].mxu0 %v3094
      %v3288 = vpop.f32.mrb[0].mxu0
      %v3289 = vadd.f32 0.0, %v3288
      %v3290 = vpop.f32.mrb[0].mxu0
      %3291 = vmatprep.mubr.f32.mxu0 0.0
      %3292 = vmatmul.mubr.f32.gmra.mrb[0].mxu0 %v3097
      %v3293 = vpop.f32.mrb[0].mxu0
      %v3294 = vadd.f32 0.0, %v3293
      %v3295 = vpop.f32.mrb[0].mxu0
      %3296 = vmatprep.mubr.f32.mxu0 0.0
      %3297 = vmatmul.mubr.f32.gmra.mrb[0].mxu0 %v3100
      %v3298 = vpop.f32.mrb[0].mxu0
      %v3299 = vadd.f32 0.0, %v3298
      %v3300 = vpop.f32.mrb[0].mxu0
      %3301 = vmatprep.mubr.f32.mxu0 0.0
      %3302 = vmatmul.mubr.f32.gmra.mrb[0].mxu0 %v3103
      %v3303 = vpop.f32.mrb[0].mxu0
      %v3304 = vadd.f32 0.0, %v3303
      %v3305 = vpop.f32.mrb[0].mxu0
      %3306 = vmatprep.mubr.f32.mxu0 0.0
      %3307 = vmatmul.mubr.f32.gmra.mrb[0].mxu0 %v3106
      %v3308 = vpop.f32.mrb[0].mxu0
      %v3309 = vadd.f32 0.0, %v3308
      %v3310 = vpop.f32.mrb[0].mxu0
      %3311 = vmatprep.mubr.f32.mxu0 0.0
      %3312 = vmatmul.mubr.f32.gmra.mrb[0].mxu0 %v3109
      %v3313 = vpop.f32.mrb[0].mxu0
      %v3314 = vadd.f32 0.0, %v3313
      %v3315 = vpop.f32.mrb[0].mxu0
      %3316 = vmatprep.mubr.f32.mxu0 0.0
      %3317 = vmatmul.mubr.f32.gmra.mrb[0].mxu0 %v3112
      %v3318 = vpop.f32.mrb[0].mxu0
      %v3319 = vadd.f32 0.0, %v3318
      %v3320 = vpop.f32.mrb[0].mxu0
      %3321 = vmatprep.mubr.f32.mxu0 0.0
      %3322 = vmatmul.mubr.f32.gmra.mrb[0].mxu0 %v3115
      %v3323 = vpop.f32.mrb[0].mxu0
      %v3324 = vadd.f32 0.0, %v3323
      %v3325 = vpop.f32.mrb[0].mxu0
      %3326 = vmatprep.mubr.f32.mxu0 0.0
      %3327 = vmatmul.mubr.f32.gmra.mrb[0].mxu0 %v3118
      %v3328 = vpop.f32.mrb[0].mxu0
      %v3329 = vadd.f32 0.0, %v3328
      %v3330 = vpop.f32.mrb[0].mxu0
      %3331 = vmatprep.mubr.f32.mxu0 0.0
      %3332 = vmatmul.mubr.f32.gmra.mrb[0].mxu0 %v3121
      %v3333 = vpop.f32.mrb[0].mxu0
      %v3334 = vadd.f32 0.0, %v3333
      %v3335 = vpop.f32.mrb[0].mxu0
      %3336 = vmatprep.mubr.f32.mxu0 0.0
      %3337 = vmatmul.mubr.f32.gmra.mrb[0].mxu0 %v3124
      %v3338 = vpop.f32.mrb[0].mxu0
      %v3339 = vadd.f32 0.0, %v3338
      %v3340 = vpop.f32.mrb[0].mxu0
      %3341 = vmatprep.mubr.f32.mxu0 0.0
      %3342 = vmatmul.mubr.f32.gmra.mrb[0].mxu0 %v3127
      %v3343 = vpop.f32.mrb[0].mxu0
      %v3344 = vadd.f32 0.0, %v3343
      %v3345 = vpop.f32.mrb[0].mxu0
      %3346 = vmatprep.mubr.f32.mxu0 0.0
      %3347 = vmatmul.mubr.f32.gmra.mrb[0].mxu0 %v3130
      %v3348 = vpop.f32.mrb[0].mxu0
      %v3349 = vadd.f32 0.0, %v3348
      %v3350 = vpop.f32.mrb[0].mxu0
      %3351 = vmatprep.mubr.f32.mxu0 0.0
      %3352 = vmatmul.mubr.f32.gmra.mrb[0].mxu0 %v3133
      %v3353 = vpop.f32.mrb[0].mxu0
      %v3354 = vadd.f32 0.0, %v3353
      %v3355 = vpop.f32.mrb[0].mxu0
      %3356 = vmatprep.mubr.f32.mxu0 0.0
      %3357 = vmatmul.mubr.f32.gmra.mrb[0].mxu0 %v3136
      %v3358 = vpop.f32.mrb[0].mxu0
      %v3359 = vadd.f32 0.0, %v3358
      %v3360 = vpop.f32.mrb[0].mxu0
      %3361 = vmatprep.mubr.f32.mxu0 0.0
      %3362 = vmatmul.mubr.f32.gmra.mrb[0].mxu0 %v3139
      %v3363 = vpop.f32.mrb[0].mxu0
      %v3364 = vadd.f32 0.0, %v3363
      %v3365 = vpop.f32.mrb[0].mxu0
      %3366 = vmatprep.mubr.f32.mxu0 0.0
      %3367 = vmatmul.mubr.f32.gmra.mrb[0].mxu0 %v3142
      %v3368 = vpop.f32.mrb[0].mxu0
      %v3369 = vadd.f32 0.0, %v3368
      %v3370 = vpop.f32.mrb[0].mxu0
      %3371 = vdwg.mxu0
      %v3372 = vadd.f32 %v2982, %v3214
      %v3373 = vadd.f32 %v2983, %v3219
      %v3374 = vadd.f32 %v2984, %v3224
      %v3375 = vadd.f32 %v2985, %v3229
      %v3376 = vadd.f32 %v2986, %v3234
      %v3377 = vadd.f32 %v2987, %v3239
      %v3378 = vadd.f32 %v2988, %v3244
      %v3379 = vadd.f32 %v2989, %v3249
      %v3380 = vadd.f32 %v2990, %v3254
      %v3381 = vadd.f32 %v2991, %v3259
      %v3382 = vadd.f32 %v2992, %v3264
      %v3383 = vadd.f32 %v2993, %v3269
      %v3384 = vadd.f32 %v2994, %v3274
      %v3385 = vadd.f32 %v2995, %v3279
      %v3386 = vadd.f32 %v2996, %v3284
      %v3387 = vadd.f32 %v2997, %v3289
      %v3388 = vadd.f32 %v2998, %v3294
      %v3389 = vadd.f32 %v2999, %v3299
      %v3390 = vadd.f32 %v3000, %v3304
      %v3391 = vadd.f32 %v3001, %v3309
      %v3392 = vadd.f32 %v3002, %v3314
      %v3393 = vadd.f32 %v3003, %v3319
      %v3394 = vadd.f32 %v3004, %v3324
      %v3395 = vadd.f32 %v3005, %v3329
      %v3396 = vadd.f32 %v3006, %v3334
      %v3397 = vadd.f32 %v3007, %v3339
      %v3398 = vadd.f32 %v3008, %v3344
      %v3399 = vadd.f32 %v3009, %v3349
      %v3400 = vadd.f32 %v3010, %v3354
      %v3401 = vadd.f32 %v3011, %v3359
      %v3402 = vadd.f32 %v3012, %v3364
      %v3403 = vadd.f32 %v3013, %v3369
      %v3404 = vld [vmem:[%s2623 + $0x2] sm:$0xff]
      %v3405 = vld [vmem:[%s2623 + $0xa] sm:$0xff]
      %v3406 = vld [vmem:[%s2623 + $0x1a] sm:$0xff]
      %v3407 = vld [vmem:[%s2623 + $0x22] sm:$0xff]
      %v3408 = vld [vmem:[%s2623 + $0x32] sm:$0xff]
      %v3409 = vld [vmem:[%s2623 + $0x3a] sm:$0xff]
      %v3410 = vld [vmem:[%s2623 + $0x4a] sm:$0xff]
      %v3411 = vld [vmem:[%s2623 + $0x52] sm:$0xff]
      %v3412 = vld [vmem:[%s2623 + $0x62] sm:$0xff]
      %v3413 = vld [vmem:[%s2623 + $0x6a] sm:$0xff]
      %v3414 = vld [vmem:[%s2623 + $0x7a] sm:$0xff]
      %v3415 = vld [vmem:[%s2623 + $0x82] sm:$0xff]
      %v3416 = vld [vmem:[%s2623 + $0x92] sm:$0xff]
      %v3417 = vld [vmem:[%s2623 + $0x9a] sm:$0xff]
      %v3418 = vld [vmem:[%s2623 + $0xaa] sm:$0xff]
      %v3419 = vld [vmem:[%s2623 + $0xb2] sm:$0xff]
      %v3420 = vld [vmem:[%s2623 + $0xc2] sm:$0xff]
      %v3421 = vld [vmem:[%s2623 + $0xca] sm:$0xff]
      %v3422 = vld [vmem:[%s2623 + $0xda] sm:$0xff]
      %v3423 = vld [vmem:[%s2623 + $0xe2] sm:$0xff]
      %v3424 = vld [vmem:[%s2623 + $0xf2] sm:$0xff]
      %v3425 = vld [vmem:[%s2623 + $0xfa] sm:$0xff]
      %v3426 = vld [vmem:[%s2623 + $0x10a] sm:$0xff]
      %v3427 = vld [vmem:[%s2623 + $0x112] sm:$0xff]
      %v3428 = vld [vmem:[%s2623 + $0x122] sm:$0xff]
      %v3429 = vld [vmem:[%s2623 + $0x12a] sm:$0xff]
      %v3430 = vld [vmem:[%s2623 + $0x13a] sm:$0xff]
      %v3431 = vld [vmem:[%s2623 + $0x142] sm:$0xff]
      %v3432 = vld [vmem:[%s2623 + $0x152] sm:$0xff]
      %v3433 = vld [vmem:[%s2623 + $0x15a] sm:$0xff]
      %v3434 = vld [vmem:[%s2623 + $0x16a] sm:$0xff]
      %v3435 = vld [vmem:[%s2623 + $0x172] sm:$0xff]
      %s3436 = scalar_lea.vmem %s1, 32
      %v3437 = vld [vmem:[%s3436] sm:$0xf]
      %v3439 = vsel %vm225, %v3404, 0
      %v3442 = vsel %vm225, %v3405, 0
      %v3445 = vsel %vm225, %v3406, 0
      %v3448 = vsel %vm225, %v3407, 0
      %v3451 = vsel %vm225, %v3408, 0
      %v3454 = vsel %vm225, %v3409, 0
      %v3457 = vsel %vm225, %v3410, 0
      %v3460 = vsel %vm225, %v3411, 0
      %v3463 = vsel %vm225, %v3412, 0
      %v3466 = vsel %vm225, %v3413, 0
      %v3469 = vsel %vm225, %v3414, 0
      %v3472 = vsel %vm225, %v3415, 0
      %v3475 = vsel %vm225, %v3416, 0
      %v3478 = vsel %vm225, %v3417, 0
      %v3481 = vsel %vm225, %v3418, 0
      %v3484 = vsel %vm225, %v3419, 0
      %v3487 = vsel %vm225, %v3420, 0
      %v3490 = vsel %vm225, %v3421, 0
      %v3493 = vsel %vm225, %v3422, 0
      %v3496 = vsel %vm225, %v3423, 0
      %v3499 = vsel %vm225, %v3424, 0
      %v3502 = vsel %vm225, %v3425, 0
      %v3505 = vsel %vm225, %v3426, 0
      %v3508 = vsel %vm225, %v3427, 0
      %v3511 = vsel %vm225, %v3428, 0
      %v3514 = vsel %vm225, %v3429, 0
      %v3517 = vsel %vm225, %v3430, 0
      %v3520 = vsel %vm225, %v3431, 0
      %v3523 = vsel %vm225, %v3432, 0
      %v3526 = vsel %vm225, %v3433, 0
      %v3529 = vsel %vm225, %v3434, 0
      %v3532 = vsel %vm225, %v3435, 0
      %v3535 = vsel %vm510, %v3437, 0
      %3537 = vmatprep.subr.mxu0 0.0
      %3538 = vmatpush1.msra.mxu0 %v3535
      %3539 = vmatprep.subr.mxu0 0.0
      %3540 = vmatpush1.msra.mxu0 0.0
      %3541 = vmatprep.subr.mxu0 0.0
      %3542 = vmatpush1.msra.mxu0 0.0
      %3543 = vmatprep.subr.mxu0 0.0
      %3544 = vmatpush1.msra.mxu0 0.0
      %3545 = vmatprep.subr.mxu0 0.0
      %3546 = vmatpush1.msra.mxu0 0.0
      %3547 = vmatprep.subr.mxu0 0.0
      %3548 = vmatpush1.msra.mxu0 0.0
      %3549 = vmatprep.subr.mxu0 0.0
      %3550 = vmatpush1.msra.mxu0 0.0
      %3551 = vmatprep.subr.mxu0 0.0
      %3552 = vmatpush1.msra.mxu0 0.0
      %3553 = vmatprep.subr.mxu0 0.0
      %3554 = vmatpush1.msra.mxu0 0.0
      %3555 = vmatprep.subr.mxu0 0.0
      %3556 = vmatpush1.msra.mxu0 0.0
      %3557 = vmatprep.subr.mxu0 0.0
      %3558 = vmatpush1.msra.mxu0 0.0
      %3559 = vmatprep.subr.mxu0 0.0
      %3560 = vmatpush1.msra.mxu0 0.0
      %3561 = vmatprep.subr.mxu0 0.0
      %3562 = vmatpush1.msra.mxu0 0.0
      %3563 = vmatprep.subr.mxu0 0.0
      %3564 = vmatpush1.msra.mxu0 0.0
      %3565 = vmatprep.subr.mxu0 0.0
      %3566 = vmatpush1.msra.mxu0 0.0
      %3567 = vmatprep.subr.mxu0 0.0
      %3568 = vmatpush1.msra.mxu0 0.0
      %3569 = vmatprep.subr.mxu0 0.0
      %3570 = vmatpush1.msra.mxu0 0.0
      %3571 = vmatprep.subr.mxu0 0.0
      %3572 = vmatpush1.msra.mxu0 0.0
      %3573 = vmatprep.subr.mxu0 0.0
      %3574 = vmatpush1.msra.mxu0 0.0
      %3575 = vmatprep.subr.mxu0 0.0
      %3576 = vmatpush1.msra.mxu0 0.0
      %3577 = vmatprep.subr.mxu0 0.0
      %3578 = vmatpush1.msra.mxu0 0.0
      %3579 = vmatprep.subr.mxu0 0.0
      %3580 = vmatpush1.msra.mxu0 0.0
      %3581 = vmatprep.subr.mxu0 0.0
      %3582 = vmatpush1.msra.mxu0 0.0
      %3583 = vmatprep.subr.mxu0 0.0
      %3584 = vmatpush1.msra.mxu0 0.0
      %3585 = vmatprep.subr.mxu0 0.0
      %3586 = vmatpush1.msra.mxu0 0.0
      %3587 = vmatprep.subr.mxu0 0.0
      %3588 = vmatpush1.msra.mxu0 0.0
      %3589 = vmatprep.subr.mxu0 0.0
      %3590 = vmatpush1.msra.mxu0 0.0
      %3591 = vmatprep.subr.mxu0 0.0
      %3592 = vmatpush1.msra.mxu0 0.0
      %3593 = vmatprep.subr.mxu0 0.0
      %3594 = vmatpush1.msra.mxu0 0.0
      %3595 = vmatprep.subr.mxu0 0.0
      %3596 = vmatpush1.msra.mxu0 0.0
      %3597 = vmatprep.subr.mxu0 0.0
      %3598 = vmatpush1.msra.mxu0 0.0
      %3599 = vmatprep.subr.mxu0 0.0
      %3600 = vmatpush1.msra.mxu0 0.0
      %3601 = vmatprep.mubr.f32.mxu0 0.0
      %3602 = vmatmul.mubr.f32.gmra.mrb[0].mxu0 %v3439
      %v3603 = vpop.f32.mrb[0].mxu0
      %v3604 = vadd.f32 0.0, %v3603
      %v3605 = vpop.f32.mrb[0].mxu0
      %3606 = vmatprep.mubr.f32.mxu0 0.0
      %3607 = vmatmul.mubr.f32.gmra.mrb[0].mxu0 %v3442
      %v3608 = vpop.f32.mrb[0].mxu0
      %v3609 = vadd.f32 0.0, %v3608
      %v3610 = vpop.f32.mrb[0].mxu0
      %3611 = vmatprep.mubr.f32.mxu0 0.0
      %3612 = vmatmul.mubr.f32.gmra.mrb[0].mxu0 %v3445
      %v3613 = vpop.f32.mrb[0].mxu0
      %v3614 = vadd.f32 0.0, %v3613
      %v3615 = vpop.f32.mrb[0].mxu0
      %3616 = vmatprep.mubr.f32.mxu0 0.0
      %3617 = vmatmul.mubr.f32.gmra.mrb[0].mxu0 %v3448
      %v3618 = vpop.f32.mrb[0].mxu0
      %v3619 = vadd.f32 0.0, %v3618
      %v3620 = vpop.f32.mrb[0].mxu0
      %3621 = vmatprep.mubr.f32.mxu0 0.0
      %3622 = vmatmul.mubr.f32.gmra.mrb[0].mxu0 %v3451
      %v3623 = vpop.f32.mrb[0].mxu0
      %v3624 = vadd.f32 0.0, %v3623
      %v3625 = vpop.f32.mrb[0].mxu0
      %3626 = vmatprep.mubr.f32.mxu0 0.0
      %3627 = vmatmul.mubr.f32.gmra.mrb[0].mxu0 %v3454
      %v3628 = vpop.f32.mrb[0].mxu0
      %v3629 = vadd.f32 0.0, %v3628
      %v3630 = vpop.f32.mrb[0].mxu0
      %3631 = vmatprep.mubr.f32.mxu0 0.0
      %3632 = vmatmul.mubr.f32.gmra.mrb[0].mxu0 %v3457
      %v3633 = vpop.f32.mrb[0].mxu0
      %v3634 = vadd.f32 0.0, %v3633
      %v3635 = vpop.f32.mrb[0].mxu0
      %3636 = vmatprep.mubr.f32.mxu0 0.0
      %3637 = vmatmul.mubr.f32.gmra.mrb[0].mxu0 %v3460
      %v3638 = vpop.f32.mrb[0].mxu0
      %v3639 = vadd.f32 0.0, %v3638
      %v3640 = vpop.f32.mrb[0].mxu0
      %3641 = vmatprep.mubr.f32.mxu0 0.0
      %3642 = vmatmul.mubr.f32.gmra.mrb[0].mxu0 %v3463
      %v3643 = vpop.f32.mrb[0].mxu0
      %v3644 = vadd.f32 0.0, %v3643
      %v3645 = vpop.f32.mrb[0].mxu0
      %3646 = vmatprep.mubr.f32.mxu0 0.0
      %3647 = vmatmul.mubr.f32.gmra.mrb[0].mxu0 %v3466
      %v3648 = vpop.f32.mrb[0].mxu0
      %v3649 = vadd.f32 0.0, %v3648
      %v3650 = vpop.f32.mrb[0].mxu0
      %3651 = vmatprep.mubr.f32.mxu0 0.0
      %3652 = vmatmul.mubr.f32.gmra.mrb[0].mxu0 %v3469
      %v3653 = vpop.f32.mrb[0].mxu0
      %v3654 = vadd.f32 0.0, %v3653
      %v3655 = vpop.f32.mrb[0].mxu0
      %3656 = vmatprep.mubr.f32.mxu0 0.0
      %3657 = vmatmul.mubr.f32.gmra.mrb[0].mxu0 %v3472
      %v3658 = vpop.f32.mrb[0].mxu0
      %v3659 = vadd.f32 0.0, %v3658
      %v3660 = vpop.f32.mrb[0].mxu0
      %3661 = vmatprep.mubr.f32.mxu0 0.0
      %3662 = vmatmul.mubr.f32.gmra.mrb[0].mxu0 %v3475
      %v3663 = vpop.f32.mrb[0].mxu0
      %v3664 = vadd.f32 0.0, %v3663
      %v3665 = vpop.f32.mrb[0].mxu0
      %3666 = vmatprep.mubr.f32.mxu0 0.0
      %3667 = vmatmul.mubr.f32.gmra.mrb[0].mxu0 %v3478
      %v3668 = vpop.f32.mrb[0].mxu0
      %v3669 = vadd.f32 0.0, %v3668
      %v3670 = vpop.f32.mrb[0].mxu0
      %3671 = vmatprep.mubr.f32.mxu0 0.0
      %3672 = vmatmul.mubr.f32.gmra.mrb[0].mxu0 %v3481
      %v3673 = vpop.f32.mrb[0].mxu0
      %v3674 = vadd.f32 0.0, %v3673
      %v3675 = vpop.f32.mrb[0].mxu0
      %3676 = vmatprep.mubr.f32.mxu0 0.0
      %3677 = vmatmul.mubr.f32.gmra.mrb[0].mxu0 %v3484
      %v3678 = vpop.f32.mrb[0].mxu0
      %v3679 = vadd.f32 0.0, %v3678
      %v3680 = vpop.f32.mrb[0].mxu0
      %3681 = vmatprep.mubr.f32.mxu0 0.0
      %3682 = vmatmul.mubr.f32.gmra.mrb[0].mxu0 %v3487
      %v3683 = vpop.f32.mrb[0].mxu0
      %v3684 = vadd.f32 0.0, %v3683
      %v3685 = vpop.f32.mrb[0].mxu0
      %3686 = vmatprep.mubr.f32.mxu0 0.0
      %3687 = vmatmul.mubr.f32.gmra.mrb[0].mxu0 %v3490
      %v3688 = vpop.f32.mrb[0].mxu0
      %v3689 = vadd.f32 0.0, %v3688
      %v3690 = vpop.f32.mrb[0].mxu0
      %3691 = vmatprep.mubr.f32.mxu0 0.0
      %3692 = vmatmul.mubr.f32.gmra.mrb[0].mxu0 %v3493
      %v3693 = vpop.f32.mrb[0].mxu0
      %v3694 = vadd.f32 0.0, %v3693
      %v3695 = vpop.f32.mrb[0].mxu0
      %3696 = vmatprep.mubr.f32.mxu0 0.0
      %3697 = vmatmul.mubr.f32.gmra.mrb[0].mxu0 %v3496
      %v3698 = vpop.f32.mrb[0].mxu0
      %v3699 = vadd.f32 0.0, %v3698
      %v3700 = vpop.f32.mrb[0].mxu0
      %3701 = vmatprep.mubr.f32.mxu0 0.0
      %3702 = vmatmul.mubr.f32.gmra.mrb[0].mxu0 %v3499
      %v3703 = vpop.f32.mrb[0].mxu0
      %v3704 = vadd.f32 0.0, %v3703
      %v3705 = vpop.f32.mrb[0].mxu0
      %3706 = vmatprep.mubr.f32.mxu0 0.0
      %3707 = vmatmul.mubr.f32.gmra.mrb[0].mxu0 %v3502
      %v3708 = vpop.f32.mrb[0].mxu0
      %v3709 = vadd.f32 0.0, %v3708
      %v3710 = vpop.f32.mrb[0].mxu0
      %3711 = vmatprep.mubr.f32.mxu0 0.0
      %3712 = vmatmul.mubr.f32.gmra.mrb[0].mxu0 %v3505
      %v3713 = vpop.f32.mrb[0].mxu0
      %v3714 = vadd.f32 0.0, %v3713
      %v3715 = vpop.f32.mrb[0].mxu0
      %3716 = vmatprep.mubr.f32.mxu0 0.0
      %3717 = vmatmul.mubr.f32.gmra.mrb[0].mxu0 %v3508
      %v3718 = vpop.f32.mrb[0].mxu0
      %v3719 = vadd.f32 0.0, %v3718
      %v3720 = vpop.f32.mrb[0].mxu0
      %3721 = vmatprep.mubr.f32.mxu0 0.0
      %3722 = vmatmul.mubr.f32.gmra.mrb[0].mxu0 %v3511
      %v3723 = vpop.f32.mrb[0].mxu0
      %v3724 = vadd.f32 0.0, %v3723
      %v3725 = vpop.f32.mrb[0].mxu0
      %3726 = vmatprep.mubr.f32.mxu0 0.0
      %3727 = vmatmul.mubr.f32.gmra.mrb[0].mxu0 %v3514
      %v3728 = vpop.f32.mrb[0].mxu0
      %v3729 = vadd.f32 0.0, %v3728
      %v3730 = vpop.f32.mrb[0].mxu0
      %3731 = vmatprep.mubr.f32.mxu0 0.0
      %3732 = vmatmul.mubr.f32.gmra.mrb[0].mxu0 %v3517
      %v3733 = vpop.f32.mrb[0].mxu0
      %v3734 = vadd.f32 0.0, %v3733
      %v3735 = vpop.f32.mrb[0].mxu0
      %3736 = vmatprep.mubr.f32.mxu0 0.0
      %3737 = vmatmul.mubr.f32.gmra.mrb[0].mxu0 %v3520
      %v3738 = vpop.f32.mrb[0].mxu0
      %v3739 = vadd.f32 0.0, %v3738
      %v3740 = vpop.f32.mrb[0].mxu0
      %3741 = vmatprep.mubr.f32.mxu0 0.0
      %3742 = vmatmul.mubr.f32.gmra.mrb[0].mxu0 %v3523
      %v3743 = vpop.f32.mrb[0].mxu0
      %v3744 = vadd.f32 0.0, %v3743
      %v3745 = vpop.f32.mrb[0].mxu0
      %3746 = vmatprep.mubr.f32.mxu0 0.0
      %3747 = vmatmul.mubr.f32.gmra.mrb[0].mxu0 %v3526
      %v3748 = vpop.f32.mrb[0].mxu0
      %v3749 = vadd.f32 0.0, %v3748
      %v3750 = vpop.f32.mrb[0].mxu0
      %3751 = vmatprep.mubr.f32.mxu0 0.0
      %3752 = vmatmul.mubr.f32.gmra.mrb[0].mxu0 %v3529
      %v3753 = vpop.f32.mrb[0].mxu0
      %v3754 = vadd.f32 0.0, %v3753
      %v3755 = vpop.f32.mrb[0].mxu0
      %3756 = vmatprep.mubr.f32.mxu0 0.0
      %3757 = vmatmul.mubr.f32.gmra.mrb[0].mxu0 %v3532
      %v3758 = vpop.f32.mrb[0].mxu0
      %v3759 = vadd.f32 0.0, %v3758
      %v3760 = vpop.f32.mrb[0].mxu0
      %3761 = vdwg.mxu0
      %v3762 = vadd.f32 %v3372, %v3604
      %v3763 = vadd.f32 %v3373, %v3609
      %v3764 = vadd.f32 %v3374, %v3614
      %v3765 = vadd.f32 %v3375, %v3619
      %v3766 = vadd.f32 %v3376, %v3624
      %v3767 = vadd.f32 %v3377, %v3629
      %v3768 = vadd.f32 %v3378, %v3634
      %v3769 = vadd.f32 %v3379, %v3639
      %v3770 = vadd.f32 %v3380, %v3644
      %v3771 = vadd.f32 %v3381, %v3649
      %v3772 = vadd.f32 %v3382, %v3654
      %v3773 = vadd.f32 %v3383, %v3659
      %v3774 = vadd.f32 %v3384, %v3664
      %v3775 = vadd.f32 %v3385, %v3669
      %v3776 = vadd.f32 %v3386, %v3674
      %v3777 = vadd.f32 %v3387, %v3679
      %v3778 = vadd.f32 %v3388, %v3684
      %v3779 = vadd.f32 %v3389, %v3689
      %v3780 = vadd.f32 %v3390, %v3694
      %v3781 = vadd.f32 %v3391, %v3699
      %v3782 = vadd.f32 %v3392, %v3704
      %v3783 = vadd.f32 %v3393, %v3709
      %v3784 = vadd.f32 %v3394, %v3714
      %v3785 = vadd.f32 %v3395, %v3719
      %v3786 = vadd.f32 %v3396, %v3724
      %v3787 = vadd.f32 %v3397, %v3729
      %v3788 = vadd.f32 %v3398, %v3734
      %v3789 = vadd.f32 %v3399, %v3739
      %v3790 = vadd.f32 %v3400, %v3744
      %v3791 = vadd.f32 %v3401, %v3749
      %v3792 = vadd.f32 %v3402, %v3754
      %v3793 = vadd.f32 %v3403, %v3759
      %v3795 = vlaneseq
      %v3796 = vshrl.u32 %v3795, 7
      %v3797 = vsub.s32 0, %v3796
      %v3798 = vrot.slane %v346, %v3797
      %v3800 = vadd.f32 %v3762, %v3798
      %v3801 = vadd.f32 %v3763, %v3798
      %v3802 = vadd.f32 %v3764, %v3798
      %v3803 = vadd.f32 %v3765, %v3798
      %v3804 = vadd.f32 %v3766, %v3798
      %v3805 = vadd.f32 %v3767, %v3798
      %v3806 = vadd.f32 %v3768, %v3798
      %v3807 = vadd.f32 %v3769, %v3798
      %v3808 = vadd.f32 %v3770, %v3798
      %v3809 = vadd.f32 %v3771, %v3798
      %v3810 = vadd.f32 %v3772, %v3798
      %v3811 = vadd.f32 %v3773, %v3798
      %v3812 = vadd.f32 %v3774, %v3798
      %v3813 = vadd.f32 %v3775, %v3798
      %v3814 = vadd.f32 %v3776, %v3798
      %v3815 = vadd.f32 %v3777, %v3798
      %v3816 = vadd.f32 %v3778, %v3798
      %v3817 = vadd.f32 %v3779, %v3798
      %v3818 = vadd.f32 %v3780, %v3798
      %v3819 = vadd.f32 %v3781, %v3798
      %v3820 = vadd.f32 %v3782, %v3798
      %v3821 = vadd.f32 %v3783, %v3798
      %v3822 = vadd.f32 %v3784, %v3798
      %v3823 = vadd.f32 %v3785, %v3798
      %v3824 = vadd.f32 %v3786, %v3798
      %v3825 = vadd.f32 %v3787, %v3798
      %v3826 = vadd.f32 %v3788, %v3798
      %v3827 = vadd.f32 %v3789, %v3798
      %v3828 = vadd.f32 %v3790, %v3798
      %v3829 = vadd.f32 %v3791, %v3798
      %v3830 = vadd.f32 %v3792, %v3798
      %v3831 = vadd.f32 %v3793, %v3798
      %v3832 = vtanh.pop %v3800
      %v3833 = vtanh.pop %v3801
      %v3834 = vtanh.pop %v3802
      %v3835 = vtanh.pop %v3803
      %v3836 = vtanh.pop %v3804
      %v3837 = vtanh.pop %v3805
      %v3838 = vtanh.pop %v3806
      %v3839 = vtanh.pop %v3807
      %v3840 = vtanh.pop %v3808
      %v3841 = vtanh.pop %v3809
      %v3842 = vtanh.pop %v3810
      %v3843 = vtanh.pop %v3811
      %v3844 = vtanh.pop %v3812
      %v3845 = vtanh.pop %v3813
      %v3846 = vtanh.pop %v3814
      %v3847 = vtanh.pop %v3815
      %v3848 = vtanh.pop %v3816
      %v3849 = vtanh.pop %v3817
      %v3850 = vtanh.pop %v3818
      %v3851 = vtanh.pop %v3819
      %v3852 = vtanh.pop %v3820
      %v3853 = vtanh.pop %v3821
      %v3854 = vtanh.pop %v3822
      %v3855 = vtanh.pop %v3823
      %v3856 = vtanh.pop %v3824
      %v3857 = vtanh.pop %v3825
      %v3858 = vtanh.pop %v3826
      %v3859 = vtanh.pop %v3827
      %v3860 = vtanh.pop %v3828
      %v3861 = vtanh.pop %v3829
      %v3862 = vtanh.pop %v3830
      %v3863 = vtanh.pop %v3831
      %vm3864 = vcmask 523264
      %3865 = vst.msk [vmem:[#allocation3] sm:$0xff] %vm3864, 0.0
      %3866 = vst.msk [vmem:[#allocation3 + $0x8] sm:$0xff] %vm3864, 0.0
      %vm3867 = vcmask 517120
      %3868 = vst.msk [vmem:[#allocation3 + $0x10] sm:$0x3] %vm3867, 0.0
      %3869 = vst.msk [vmem:[#allocation3 + $0x18] sm:$0xff] %vm3864, 0.0
      %3870 = vst.msk [vmem:[#allocation3 + $0x20] sm:$0xff] %vm3864, 0.0
      %3871 = vst.msk [vmem:[#allocation3 + $0x28] sm:$0x3] %vm3867, 0.0
      %3872 = vst.msk [vmem:[#allocation3 + $0x30] sm:$0xff] %vm3864, 0.0
      %3873 = vst.msk [vmem:[#allocation3 + $0x38] sm:$0xff] %vm3864, 0.0
      %3874 = vst.msk [vmem:[#allocation3 + $0x40] sm:$0x3] %vm3867, 0.0
      %3875 = vst.msk [vmem:[#allocation3 + $0x48] sm:$0xff] %vm3864, 0.0
      %3876 = vst.msk [vmem:[#allocation3 + $0x50] sm:$0xff] %vm3864, 0.0
      %3877 = vst.msk [vmem:[#allocation3 + $0x58] sm:$0x3] %vm3867, 0.0
      %3878 = vst.msk [vmem:[#allocation3 + $0x60] sm:$0xff] %vm3864, 0.0
      %3879 = vst.msk [vmem:[#allocation3 + $0x68] sm:$0xff] %vm3864, 0.0
      %3880 = vst.msk [vmem:[#allocation3 + $0x70] sm:$0x3] %vm3867, 0.0
      %3881 = vst.msk [vmem:[#allocation3 + $0x78] sm:$0xff] %vm3864, 0.0
      %3882 = vst.msk [vmem:[#allocation3 + $0x80] sm:$0xff] %vm3864, 0.0
      %3883 = vst.msk [vmem:[#allocation3 + $0x88] sm:$0x3] %vm3867, 0.0
      %3884 = vst.msk [vmem:[#allocation3 + $0x90] sm:$0xff] %vm3864, 0.0
      %3885 = vst.msk [vmem:[#allocation3 + $0x98] sm:$0xff] %vm3864, 0.0
      %3886 = vst.msk [vmem:[#allocation3 + $0xa0] sm:$0x3] %vm3867, 0.0
      %3887 = vst.msk [vmem:[#allocation3 + $0xa8] sm:$0xff] %vm3864, 0.0
      %3888 = vst.msk [vmem:[#allocation3 + $0xb0] sm:$0xff] %vm3864, 0.0
      %3889 = vst.msk [vmem:[#allocation3 + $0xb8] sm:$0x3] %vm3867, 0.0
      %3890 = vst.msk [vmem:[#allocation3 + $0xc0] sm:$0xff] %vm3864, 0.0
      %3891 = vst.msk [vmem:[#allocation3 + $0xc8] sm:$0xff] %vm3864, 0.0
      %3892 = vst.msk [vmem:[#allocation3 + $0xd0] sm:$0x3] %vm3867, 0.0
      %3893 = vst.msk [vmem:[#allocation3 + $0xd8] sm:$0xff] %vm3864, 0.0
      %3894 = vst.msk [vmem:[#allocation3 + $0xe0] sm:$0xff] %vm3864, 0.0
      %3895 = vst.msk [vmem:[#allocation3 + $0xe8] sm:$0x3] %vm3867, 0.0
      %3896 = vst.msk [vmem:[#allocation3 + $0xf0] sm:$0xff] %vm3864, 0.0
      %3897 = vst.msk [vmem:[#allocation3 + $0xf8] sm:$0xff] %vm3864, 0.0
      %3898 = vst.msk [vmem:[#allocation3 + $0x100] sm:$0x3] %vm3867, 0.0
      %3899 = vst.msk [vmem:[#allocation3 + $0x108] sm:$0xff] %vm3864, 0.0
      %3900 = vst.msk [vmem:[#allocation3 + $0x110] sm:$0xff] %vm3864, 0.0
      %3901 = vst.msk [vmem:[#allocation3 + $0x118] sm:$0x3] %vm3867, 0.0
      %3902 = vst.msk [vmem:[#allocation3 + $0x120] sm:$0xff] %vm3864, 0.0
      %3903 = vst.msk [vmem:[#allocation3 + $0x128] sm:$0xff] %vm3864, 0.0
      %3904 = vst.msk [vmem:[#allocation3 + $0x130] sm:$0x3] %vm3867, 0.0
      %3905 = vst.msk [vmem:[#allocation3 + $0x138] sm:$0xff] %vm3864, 0.0
      %3906 = vst.msk [vmem:[#allocation3 + $0x140] sm:$0xff] %vm3864, 0.0
      %3907 = vst.msk [vmem:[#allocation3 + $0x148] sm:$0x3] %vm3867, 0.0
      %3908 = vst.msk [vmem:[#allocation3 + $0x150] sm:$0xff] %vm3864, 0.0
      %3909 = vst.msk [vmem:[#allocation3 + $0x158] sm:$0xff] %vm3864, 0.0
      %3910 = vst.msk [vmem:[#allocation3 + $0x160] sm:$0x3] %vm3867, 0.0
      %3911 = vst.msk [vmem:[#allocation3 + $0x168] sm:$0xff] %vm3864, 0.0
      %3912 = vst.msk [vmem:[#allocation3 + $0x170] sm:$0xff] %vm3864, 0.0
      %3913 = vst.msk [vmem:[#allocation3 + $0x178] sm:$0x3] %vm3867, 0.0
      %3914 = vst.msk [vmem:[#allocation3 + $0x180] sm:$0xff] %vm3864, 0.0
      %3915 = vst.msk [vmem:[#allocation3 + $0x188] sm:$0xff] %vm3864, 0.0
      %3916 = vst.msk [vmem:[#allocation3 + $0x190] sm:$0x3] %vm3867, 0.0
      %3917 = vst.msk [vmem:[#allocation3 + $0x198] sm:$0xff] %vm3864, 0.0
      %3918 = vst.msk [vmem:[#allocation3 + $0x1a0] sm:$0xff] %vm3864, 0.0
      %3919 = vst.msk [vmem:[#allocation3 + $0x1a8] sm:$0x3] %vm3867, 0.0
      %s3920 = scalar_lea.vmem [#allocation3], 24
      %3921 = vst.msk [vmem:[%s3920 + $0x1] sm:$0xff] %vm3864, %v3832
      %3922 = vst.msk [vmem:[%s3920 + $0x9] sm:$0xff] %vm3864, %v3833
      %3923 = vst.msk [vmem:[%s3920 + $0x19] sm:$0xff] %vm3864, %v3834
      %3924 = vst.msk [vmem:[%s3920 + $0x21] sm:$0xff] %vm3864, %v3835
      %3925 = vst.msk [vmem:[%s3920 + $0x31] sm:$0xff] %vm3864, %v3836
      %3926 = vst.msk [vmem:[%s3920 + $0x39] sm:$0xff] %vm3864, %v3837
      %3927 = vst.msk [vmem:[%s3920 + $0x49] sm:$0xff] %vm3864, %v3838
      %3928 = vst.msk [vmem:[%s3920 + $0x51] sm:$0xff] %vm3864, %v3839
      %3929 = vst.msk [vmem:[%s3920 + $0x61] sm:$0xff] %vm3864, %v3840
      %3930 = vst.msk [vmem:[%s3920 + $0x69] sm:$0xff] %vm3864, %v3841
      %3931 = vst.msk [vmem:[%s3920 + $0x79] sm:$0xff] %vm3864, %v3842
      %3932 = vst.msk [vmem:[%s3920 + $0x81] sm:$0xff] %vm3864, %v3843
      %3933 = vst.msk [vmem:[%s3920 + $0x91] sm:$0xff] %vm3864, %v3844
      %3934 = vst.msk [vmem:[%s3920 + $0x99] sm:$0xff] %vm3864, %v3845
      %3935 = vst.msk [vmem:[%s3920 + $0xa9] sm:$0xff] %vm3864, %v3846
      %3936 = vst.msk [vmem:[%s3920 + $0xb1] sm:$0xff] %vm3864, %v3847
      %3937 = vst.msk [vmem:[%s3920 + $0xc1] sm:$0xff] %vm3864, %v3848
      %3938 = vst.msk [vmem:[%s3920 + $0xc9] sm:$0xff] %vm3864, %v3849
      %3939 = vst.msk [vmem:[%s3920 + $0xd9] sm:$0xff] %vm3864, %v3850
      %3940 = vst.msk [vmem:[%s3920 + $0xe1] sm:$0xff] %vm3864, %v3851
      %3941 = vst.msk [vmem:[%s3920 + $0xf1] sm:$0xff] %vm3864, %v3852
      %3942 = vst.msk [vmem:[%s3920 + $0xf9] sm:$0xff] %vm3864, %v3853
      %3943 = vst.msk [vmem:[%s3920 + $0x109] sm:$0xff] %vm3864, %v3854
      %3944 = vst.msk [vmem:[%s3920 + $0x111] sm:$0xff] %vm3864, %v3855
      %3945 = vst.msk [vmem:[%s3920 + $0x121] sm:$0xff] %vm3864, %v3856
      %3946 = vst.msk [vmem:[%s3920 + $0x129] sm:$0xff] %vm3864, %v3857
      %3947 = vst.msk [vmem:[%s3920 + $0x139] sm:$0xff] %vm3864, %v3858
      %3948 = vst.msk [vmem:[%s3920 + $0x141] sm:$0xff] %vm3864, %v3859
      %3949 = vst.msk [vmem:[%s3920 + $0x151] sm:$0xff] %vm3864, %v3860
      %3950 = vst.msk [vmem:[%s3920 + $0x159] sm:$0xff] %vm3864, %v3861
      %3951 = vst.msk [vmem:[%s3920 + $0x169] sm:$0xff] %vm3864, %v3862
      %3952 = vst.msk [vmem:[%s3920 + $0x171] sm:$0xff] %vm3864, %v3863
      %v3953 = vld [vmem:[%s4] sm:$0x1]
      %v3954 = vld [vmem:[#allocation3] sm:$0xff]
      %v3955 = vld [vmem:[#allocation3 + $0x8] sm:$0xff]
      %v3956 = vld [vmem:[#allocation3 + $0x18] sm:$0xff]
      %v3957 = vld [vmem:[#allocation3 + $0x20] sm:$0xff]
      %v3958 = vld [vmem:[#allocation3 + $0x30] sm:$0xff]
      %v3959 = vld [vmem:[#allocation3 + $0x38] sm:$0xff]
      %v3960 = vld [vmem:[#allocation3 + $0x48] sm:$0xff]
      %v3961 = vld [vmem:[#allocation3 + $0x50] sm:$0xff]
      %v3962 = vld [vmem:[#allocation3 + $0x60] sm:$0xff]
      %v3963 = vld [vmem:[#allocation3 + $0x68] sm:$0xff]
      %v3964 = vld [vmem:[#allocation3 + $0x78] sm:$0xff]
      %v3965 = vld [vmem:[#allocation3 + $0x80] sm:$0xff]
      %v3966 = vld [vmem:[#allocation3 + $0x90] sm:$0xff]
      %v3967 = vld [vmem:[#allocation3 + $0x98] sm:$0xff]
      %v3968 = vld [vmem:[#allocation3 + $0xa8] sm:$0xff]
      %v3969 = vld [vmem:[#allocation3 + $0xb0] sm:$0xff]
      %v3970 = vld [vmem:[#allocation3 + $0xc0] sm:$0xff]
      %v3971 = vld [vmem:[#allocation3 + $0xc8] sm:$0xff]
      %v3972 = vld [vmem:[#allocation3 + $0xd8] sm:$0xff]
      %v3973 = vld [vmem:[#allocation3 + $0xe0] sm:$0xff]
      %v3974 = vld [vmem:[#allocation3 + $0xf0] sm:$0xff]
      %v3975 = vld [vmem:[#allocation3 + $0xf8] sm:$0xff]
      %v3976 = vld [vmem:[#allocation3 + $0x108] sm:$0xff]
      %v3977 = vld [vmem:[#allocation3 + $0x110] sm:$0xff]
      %v3978 = vld [vmem:[#allocation3 + $0x120] sm:$0xff]
      %v3979 = vld [vmem:[#allocation3 + $0x128] sm:$0xff]
      %v3980 = vld [vmem:[#allocation3 + $0x138] sm:$0xff]
      %v3981 = vld [vmem:[#allocation3 + $0x140] sm:$0xff]
      %v3982 = vld [vmem:[#allocation3 + $0x150] sm:$0xff]
      %v3983 = vld [vmem:[#allocation3 + $0x158] sm:$0xff]
      %v3984 = vld [vmem:[#allocation3 + $0x168] sm:$0xff]
      %v3985 = vld [vmem:[#allocation3 + $0x170] sm:$0xff]
      %v3986 = vld [vmem:[%s3] sm:$0xff]
      %v3987 = vld [vmem:[%s3 + $0x8] sm:$0xff]
      %v3988 = vld [vmem:[%s3 + $0x10] sm:$0xff]
      %v3989 = vld [vmem:[%s3 + $0x18] sm:$0xff]
      %v3990 = vld [vmem:[%s3 + $0x20] sm:$0xff]
      %v3991 = vld [vmem:[%s3 + $0x28] sm:$0xff]
      %v3992 = vld [vmem:[%s3 + $0x30] sm:$0xff]
      %v3993 = vld [vmem:[%s3 + $0x38] sm:$0xff]
      %v3994 = vld [vmem:[#allocation3 + $0x1] sm:$0xff]
      %v3995 = vld [vmem:[#allocation3 + $0x9] sm:$0xff]
      %v3996 = vld [vmem:[#allocation3 + $0x19] sm:$0xff]
      %v3997 = vld [vmem:[#allocation3 + $0x21] sm:$0xff]
      %v3998 = vld [vmem:[#allocation3 + $0x31] sm:$0xff]
      %v3999 = vld [vmem:[#allocation3 + $0x39] sm:$0xff]
      %v4000 = vld [vmem:[#allocation3 + $0x49] sm:$0xff]
      %v4001 = vld [vmem:[#allocation3 + $0x51] sm:$0xff]
      %v4002 = vld [vmem:[#allocation3 + $0x61] sm:$0xff]
      %v4003 = vld [vmem:[#allocation3 + $0x69] sm:$0xff]
      %v4004 = vld [vmem:[#allocation3 + $0x79] sm:$0xff]
      %v4005 = vld [vmem:[#allocation3 + $0x81] sm:$0xff]
      %v4006 = vld [vmem:[#allocation3 + $0x91] sm:$0xff]
      %v4007 = vld [vmem:[#allocation3 + $0x99] sm:$0xff]
      %v4008 = vld [vmem:[#allocation3 + $0xa9] sm:$0xff]
      %v4009 = vld [vmem:[#allocation3 + $0xb1] sm:$0xff]
      %v4010 = vld [vmem:[#allocation3 + $0xc1] sm:$0xff]
      %v4011 = vld [vmem:[#allocation3 + $0xc9] sm:$0xff]
      %v4012 = vld [vmem:[#allocation3 + $0xd9] sm:$0xff]
      %v4013 = vld [vmem:[#allocation3 + $0xe1] sm:$0xff]
      %v4014 = vld [vmem:[#allocation3 + $0xf1] sm:$0xff]
      %v4015 = vld [vmem:[#allocation3 + $0xf9] sm:$0xff]
      %v4016 = vld [vmem:[#allocation3 + $0x109] sm:$0xff]
      %v4017 = vld [vmem:[#allocation3 + $0x111] sm:$0xff]
      %v4018 = vld [vmem:[#allocation3 + $0x121] sm:$0xff]
      %v4019 = vld [vmem:[#allocation3 + $0x129] sm:$0xff]
      %v4020 = vld [vmem:[#allocation3 + $0x139] sm:$0xff]
      %v4021 = vld [vmem:[#allocation3 + $0x141] sm:$0xff]
      %v4022 = vld [vmem:[#allocation3 + $0x151] sm:$0xff]
      %v4023 = vld [vmem:[#allocation3 + $0x159] sm:$0xff]
      %v4024 = vld [vmem:[#allocation3 + $0x169] sm:$0xff]
      %v4025 = vld [vmem:[#allocation3 + $0x171] sm:$0xff]
      %s4026 = scalar_lea.vmem %s3, 64
      %v4027 = vld [vmem:[%s4026] sm:$0xff]
      %v4028 = vld [vmem:[%s4026 + $0x8] sm:$0xff]
      %v4029 = vld [vmem:[%s4026 + $0x10] sm:$0xff]
      %v4030 = vld [vmem:[%s4026 + $0x18] sm:$0xff]
      %v4031 = vld [vmem:[%s4026 + $0x20] sm:$0xff]
      %v4032 = vld [vmem:[%s4026 + $0x28] sm:$0xff]
      %v4033 = vld [vmem:[%s4026 + $0x30] sm:$0xff]
      %v4034 = vld [vmem:[%s4026 + $0x38] sm:$0xff]
      %v4036 = vsel %vm3864, %v3994, 0
      %v4039 = vsel %vm3864, %v3995, 0
      %v4042 = vsel %vm3864, %v3996, 0
      %v4045 = vsel %vm3864, %v3997, 0
      %v4048 = vsel %vm3864, %v3998, 0
      %v4051 = vsel %vm3864, %v3999, 0
      %v4054 = vsel %vm3864, %v4000, 0
      %v4057 = vsel %vm3864, %v4001, 0
      %v4060 = vsel %vm3864, %v4002, 0
      %v4063 = vsel %vm3864, %v4003, 0
      %v4066 = vsel %vm3864, %v4004, 0
      %v4069 = vsel %vm3864, %v4005, 0
      %v4072 = vsel %vm3864, %v4006, 0
      %v4075 = vsel %vm3864, %v4007, 0
      %v4078 = vsel %vm3864, %v4008, 0
      %v4081 = vsel %vm3864, %v4009, 0
      %v4084 = vsel %vm3864, %v4010, 0
      %v4087 = vsel %vm3864, %v4011, 0
      %v4090 = vsel %vm3864, %v4012, 0
      %v4093 = vsel %vm3864, %v4013, 0
      %v4096 = vsel %vm3864, %v4014, 0
      %v4099 = vsel %vm3864, %v4015, 0
      %v4102 = vsel %vm3864, %v4016, 0
      %v4105 = vsel %vm3864, %v4017, 0
      %v4108 = vsel %vm3864, %v4018, 0
      %v4111 = vsel %vm3864, %v4019, 0
      %v4114 = vsel %vm3864, %v4020, 0
      %v4117 = vsel %vm3864, %v4021, 0
      %v4120 = vsel %vm3864, %v4022, 0
      %v4123 = vsel %vm3864, %v4023, 0
      %v4126 = vsel %vm3864, %v4024, 0
      %v4129 = vsel %vm3864, %v4025, 0
      %4131 = vmatprep.subr.mxu0 0.0
      %4132 = vmatpush1.msra.mxu0 %v4027
      %4133 = vmatprep.subr.mxu0 0.0
      %4134 = vmatpush1.msra.mxu0 %v4028
      %4135 = vmatprep.subr.mxu0 0.0
      %4136 = vmatpush1.msra.mxu0 %v4029
      %4137 = vmatprep.subr.mxu0 0.0
      %4138 = vmatpush1.msra.mxu0 %v4030
      %4139 = vmatprep.subr.mxu0 0.0
      %4140 = vmatpush1.msra.mxu0 %v4031
      %4141 = vmatprep.subr.mxu0 0.0
      %4142 = vmatpush1.msra.mxu0 %v4032
      %4143 = vmatprep.subr.mxu0 0.0
      %4144 = vmatpush1.msra.mxu0 %v4033
      %4145 = vmatprep.subr.mxu0 0.0
      %4146 = vmatpush1.msra.mxu0 %v4034
      %4147 = vmatprep.subr.mxu0 0.0
      %4148 = vmatpush1.msra.mxu0 0.0
      %4149 = vmatprep.subr.mxu0 0.0
      %4150 = vmatpush1.msra.mxu0 0.0
      %4151 = vmatprep.subr.mxu0 0.0
      %4152 = vmatpush1.msra.mxu0 0.0
      %4153 = vmatprep.subr.mxu0 0.0
      %4154 = vmatpush1.msra.mxu0 0.0
      %4155 = vmatprep.subr.mxu0 0.0
      %4156 = vmatpush1.msra.mxu0 0.0
      %4157 = vmatprep.subr.mxu0 0.0
      %4158 = vmatpush1.msra.mxu0 0.0
      %4159 = vmatprep.subr.mxu0 0.0
      %4160 = vmatpush1.msra.mxu0 0.0
      %4161 = vmatprep.subr.mxu0 0.0
      %4162 = vmatpush1.msra.mxu0 0.0
      %4163 = vmatprep.subr.mxu0 0.0
      %4164 = vmatpush1.msra.mxu0 0.0
      %4165 = vmatprep.subr.mxu0 0.0
      %4166 = vmatpush1.msra.mxu0 0.0
      %4167 = vmatprep.subr.mxu0 0.0
      %4168 = vmatpush1.msra.mxu0 0.0
      %4169 = vmatprep.subr.mxu0 0.0
      %4170 = vmatpush1.msra.mxu0 0.0
      %4171 = vmatprep.subr.mxu0 0.0
      %4172 = vmatpush1.msra.mxu0 0.0
      %4173 = vmatprep.subr.mxu0 0.0
      %4174 = vmatpush1.msra.mxu0 0.0
      %4175 = vmatprep.subr.mxu0 0.0
      %4176 = vmatpush1.msra.mxu0 0.0
      %4177 = vmatprep.subr.mxu0 0.0
      %4178 = vmatpush1.msra.mxu0 0.0
      %4179 = vmatprep.subr.mxu0 0.0
      %4180 = vmatpush1.msra.mxu0 0.0
      %4181 = vmatprep.subr.mxu0 0.0
      %4182 = vmatpush1.msra.mxu0 0.0
      %4183 = vmatprep.subr.mxu0 0.0
      %4184 = vmatpush1.msra.mxu0 0.0
      %4185 = vmatprep.subr.mxu0 0.0
      %4186 = vmatpush1.msra.mxu0 0.0
      %4187 = vmatprep.subr.mxu0 0.0
      %4188 = vmatpush1.msra.mxu0 0.0
      %4189 = vmatprep.subr.mxu0 0.0
      %4190 = vmatpush1.msra.mxu0 0.0
      %4191 = vmatprep.subr.mxu0 0.0
      %4192 = vmatpush1.msra.mxu0 0.0
      %4193 = vmatprep.subr.mxu0 0.0
      %4194 = vmatpush1.msra.mxu0 0.0
      %4195 = vmatprep.mubr.f32.mxu0 0.0
      %4196 = vmatmul.mubr.f32.gmra.mrb[0].mxu0 %v4036
      %v4197 = vpop.f32.mrb[0].mxu0
      %v4198 = vadd.f32 0.0, %v4197
      %v4199 = vpop.f32.mrb[0].mxu0
      %4200 = vmatprep.mubr.f32.mxu0 0.0
      %4201 = vmatmul.mubr.f32.gmra.mrb[0].mxu0 %v4039
      %v4202 = vpop.f32.mrb[0].mxu0
      %v4203 = vadd.f32 0.0, %v4202
      %v4204 = vpop.f32.mrb[0].mxu0
      %4205 = vmatprep.mubr.f32.mxu0 0.0
      %4206 = vmatmul.mubr.f32.gmra.mrb[0].mxu0 %v4042
      %v4207 = vpop.f32.mrb[0].mxu0
      %v4208 = vadd.f32 0.0, %v4207
      %v4209 = vpop.f32.mrb[0].mxu0
      %4210 = vmatprep.mubr.f32.mxu0 0.0
      %4211 = vmatmul.mubr.f32.gmra.mrb[0].mxu0 %v4045
      %v4212 = vpop.f32.mrb[0].mxu0
      %v4213 = vadd.f32 0.0, %v4212
      %v4214 = vpop.f32.mrb[0].mxu0
      %4215 = vmatprep.mubr.f32.mxu0 0.0
      %4216 = vmatmul.mubr.f32.gmra.mrb[0].mxu0 %v4048
      %v4217 = vpop.f32.mrb[0].mxu0
      %v4218 = vadd.f32 0.0, %v4217
      %v4219 = vpop.f32.mrb[0].mxu0
      %4220 = vmatprep.mubr.f32.mxu0 0.0
      %4221 = vmatmul.mubr.f32.gmra.mrb[0].mxu0 %v4051
      %v4222 = vpop.f32.mrb[0].mxu0
      %v4223 = vadd.f32 0.0, %v4222
      %v4224 = vpop.f32.mrb[0].mxu0
      %4225 = vmatprep.mubr.f32.mxu0 0.0
      %4226 = vmatmul.mubr.f32.gmra.mrb[0].mxu0 %v4054
      %v4227 = vpop.f32.mrb[0].mxu0
      %v4228 = vadd.f32 0.0, %v4227
      %v4229 = vpop.f32.mrb[0].mxu0
      %4230 = vmatprep.mubr.f32.mxu0 0.0
      %4231 = vmatmul.mubr.f32.gmra.mrb[0].mxu0 %v4057
      %v4232 = vpop.f32.mrb[0].mxu0
      %v4233 = vadd.f32 0.0, %v4232
      %v4234 = vpop.f32.mrb[0].mxu0
      %4235 = vmatprep.mubr.f32.mxu0 0.0
      %4236 = vmatmul.mubr.f32.gmra.mrb[0].mxu0 %v4060
      %v4237 = vpop.f32.mrb[0].mxu0
      %v4238 = vadd.f32 0.0, %v4237
      %v4239 = vpop.f32.mrb[0].mxu0
      %4240 = vmatprep.mubr.f32.mxu0 0.0
      %4241 = vmatmul.mubr.f32.gmra.mrb[0].mxu0 %v4063
      %v4242 = vpop.f32.mrb[0].mxu0
      %v4243 = vadd.f32 0.0, %v4242
      %v4244 = vpop.f32.mrb[0].mxu0
      %4245 = vmatprep.mubr.f32.mxu0 0.0
      %4246 = vmatmul.mubr.f32.gmra.mrb[0].mxu0 %v4066
      %v4247 = vpop.f32.mrb[0].mxu0
      %v4248 = vadd.f32 0.0, %v4247
      %v4249 = vpop.f32.mrb[0].mxu0
      %4250 = vmatprep.mubr.f32.mxu0 0.0
      %4251 = vmatmul.mubr.f32.gmra.mrb[0].mxu0 %v4069
      %v4252 = vpop.f32.mrb[0].mxu0
      %v4253 = vadd.f32 0.0, %v4252
      %v4254 = vpop.f32.mrb[0].mxu0
      %4255 = vmatprep.mubr.f32.mxu0 0.0
      %4256 = vmatmul.mubr.f32.gmra.mrb[0].mxu0 %v4072
      %v4257 = vpop.f32.mrb[0].mxu0
      %v4258 = vadd.f32 0.0, %v4257
      %v4259 = vpop.f32.mrb[0].mxu0
      %4260 = vmatprep.mubr.f32.mxu0 0.0
      %4261 = vmatmul.mubr.f32.gmra.mrb[0].mxu0 %v4075
      %v4262 = vpop.f32.mrb[0].mxu0
      %v4263 = vadd.f32 0.0, %v4262
      %v4264 = vpop.f32.mrb[0].mxu0
      %4265 = vmatprep.mubr.f32.mxu0 0.0
      %4266 = vmatmul.mubr.f32.gmra.mrb[0].mxu0 %v4078
      %v4267 = vpop.f32.mrb[0].mxu0
      %v4268 = vadd.f32 0.0, %v4267
      %v4269 = vpop.f32.mrb[0].mxu0
      %4270 = vmatprep.mubr.f32.mxu0 0.0
      %4271 = vmatmul.mubr.f32.gmra.mrb[0].mxu0 %v4081
      %v4272 = vpop.f32.mrb[0].mxu0
      %v4273 = vadd.f32 0.0, %v4272
      %v4274 = vpop.f32.mrb[0].mxu0
      %4275 = vmatprep.mubr.f32.mxu0 0.0
      %4276 = vmatmul.mubr.f32.gmra.mrb[0].mxu0 %v4084
      %v4277 = vpop.f32.mrb[0].mxu0
      %v4278 = vadd.f32 0.0, %v4277
      %v4279 = vpop.f32.mrb[0].mxu0
      %4280 = vmatprep.mubr.f32.mxu0 0.0
      %4281 = vmatmul.mubr.f32.gmra.mrb[0].mxu0 %v4087
      %v4282 = vpop.f32.mrb[0].mxu0
      %v4283 = vadd.f32 0.0, %v4282
      %v4284 = vpop.f32.mrb[0].mxu0
      %4285 = vmatprep.mubr.f32.mxu0 0.0
      %4286 = vmatmul.mubr.f32.gmra.mrb[0].mxu0 %v4090
      %v4287 = vpop.f32.mrb[0].mxu0
      %v4288 = vadd.f32 0.0, %v4287
      %v4289 = vpop.f32.mrb[0].mxu0
      %4290 = vmatprep.mubr.f32.mxu0 0.0
      %4291 = vmatmul.mubr.f32.gmra.mrb[0].mxu0 %v4093
      %v4292 = vpop.f32.mrb[0].mxu0
      %v4293 = vadd.f32 0.0, %v4292
      %v4294 = vpop.f32.mrb[0].mxu0
      %4295 = vmatprep.mubr.f32.mxu0 0.0
      %4296 = vmatmul.mubr.f32.gmra.mrb[0].mxu0 %v4096
      %v4297 = vpop.f32.mrb[0].mxu0
      %v4298 = vadd.f32 0.0, %v4297
      %v4299 = vpop.f32.mrb[0].mxu0
      %4300 = vmatprep.mubr.f32.mxu0 0.0
      %4301 = vmatmul.mubr.f32.gmra.mrb[0].mxu0 %v4099
      %v4302 = vpop.f32.mrb[0].mxu0
      %v4303 = vadd.f32 0.0, %v4302
      %v4304 = vpop.f32.mrb[0].mxu0
      %4305 = vmatprep.mubr.f32.mxu0 0.0
      %4306 = vmatmul.mubr.f32.gmra.mrb[0].mxu0 %v4102
      %v4307 = vpop.f32.mrb[0].mxu0
      %v4308 = vadd.f32 0.0, %v4307
      %v4309 = vpop.f32.mrb[0].mxu0
      %4310 = vmatprep.mubr.f32.mxu0 0.0
      %4311 = vmatmul.mubr.f32.gmra.mrb[0].mxu0 %v4105
      %v4312 = vpop.f32.mrb[0].mxu0
      %v4313 = vadd.f32 0.0, %v4312
      %v4314 = vpop.f32.mrb[0].mxu0
      %4315 = vmatprep.mubr.f32.mxu0 0.0
      %4316 = vmatmul.mubr.f32.gmra.mrb[0].mxu0 %v4108
      %v4317 = vpop.f32.mrb[0].mxu0
      %v4318 = vadd.f32 0.0, %v4317
      %v4319 = vpop.f32.mrb[0].mxu0
      %4320 = vmatprep.mubr.f32.mxu0 0.0
      %4321 = vmatmul.mubr.f32.gmra.mrb[0].mxu0 %v4111
      %v4322 = vpop.f32.mrb[0].mxu0
      %v4323 = vadd.f32 0.0, %v4322
      %v4324 = vpop.f32.mrb[0].mxu0
      %4325 = vmatprep.mubr.f32.mxu0 0.0
      %4326 = vmatmul.mubr.f32.gmra.mrb[0].mxu0 %v4114
      %v4327 = vpop.f32.mrb[0].mxu0
      %v4328 = vadd.f32 0.0, %v4327
      %v4329 = vpop.f32.mrb[0].mxu0
      %4330 = vmatprep.mubr.f32.mxu0 0.0
      %4331 = vmatmul.mubr.f32.gmra.mrb[0].mxu0 %v4117
      %v4332 = vpop.f32.mrb[0].mxu0
      %v4333 = vadd.f32 0.0, %v4332
      %v4334 = vpop.f32.mrb[0].mxu0
      %4335 = vmatprep.mubr.f32.mxu0 0.0
      %4336 = vmatmul.mubr.f32.gmra.mrb[0].mxu0 %v4120
      %v4337 = vpop.f32.mrb[0].mxu0
      %v4338 = vadd.f32 0.0, %v4337
      %v4339 = vpop.f32.mrb[0].mxu0
      %4340 = vmatprep.mubr.f32.mxu0 0.0
      %4341 = vmatmul.mubr.f32.gmra.mrb[0].mxu0 %v4123
      %v4342 = vpop.f32.mrb[0].mxu0
      %v4343 = vadd.f32 0.0, %v4342
      %v4344 = vpop.f32.mrb[0].mxu0
      %4345 = vmatprep.mubr.f32.mxu0 0.0
      %4346 = vmatmul.mubr.f32.gmra.mrb[0].mxu0 %v4126
      %v4347 = vpop.f32.mrb[0].mxu0
      %v4348 = vadd.f32 0.0, %v4347
      %v4349 = vpop.f32.mrb[0].mxu0
      %4350 = vmatprep.mubr.f32.mxu0 0.0
      %4351 = vmatmul.mubr.f32.gmra.mrb[0].mxu0 %v4129
      %v4352 = vpop.f32.mrb[0].mxu0
      %v4353 = vadd.f32 0.0, %v4352
      %v4354 = vpop.f32.mrb[0].mxu0
      %4355 = vdwg.mxu0
      %v4357 = vsel %vm3864, %v3954, 0
      %v4360 = vsel %vm3864, %v3955, 0
      %v4363 = vsel %vm3864, %v3956, 0
      %v4366 = vsel %vm3864, %v3957, 0
      %v4369 = vsel %vm3864, %v3958, 0
      %v4372 = vsel %vm3864, %v3959, 0
      %v4375 = vsel %vm3864, %v3960, 0
      %v4378 = vsel %vm3864, %v3961, 0
      %v4381 = vsel %vm3864, %v3962, 0
      %v4384 = vsel %vm3864, %v3963, 0
      %v4387 = vsel %vm3864, %v3964, 0
      %v4390 = vsel %vm3864, %v3965, 0
      %v4393 = vsel %vm3864, %v3966, 0
      %v4396 = vsel %vm3864, %v3967, 0
      %v4399 = vsel %vm3864, %v3968, 0
      %v4402 = vsel %vm3864, %v3969, 0
      %v4405 = vsel %vm3864, %v3970, 0
      %v4408 = vsel %vm3864, %v3971, 0
      %v4411 = vsel %vm3864, %v3972, 0
      %v4414 = vsel %vm3864, %v3973, 0
      %v4417 = vsel %vm3864, %v3974, 0
      %v4420 = vsel %vm3864, %v3975, 0
      %v4423 = vsel %vm3864, %v3976, 0
      %v4426 = vsel %vm3864, %v3977, 0
      %v4429 = vsel %vm3864, %v3978, 0
      %v4432 = vsel %vm3864, %v3979, 0
      %v4435 = vsel %vm3864, %v3980, 0
      %v4438 = vsel %vm3864, %v3981, 0
      %v4441 = vsel %vm3864, %v3982, 0
      %v4444 = vsel %vm3864, %v3983, 0
      %v4447 = vsel %vm3864, %v3984, 0
      %v4450 = vsel %vm3864, %v3985, 0
      %4452 = vmatprep.subr.mxu0 0.0
      %4453 = vmatpush1.msra.mxu0 %v3986
      %4454 = vmatprep.subr.mxu0 0.0
      %4455 = vmatpush1.msra.mxu0 %v3987
      %4456 = vmatprep.subr.mxu0 0.0
      %4457 = vmatpush1.msra.mxu0 %v3988
      %4458 = vmatprep.subr.mxu0 0.0
      %4459 = vmatpush1.msra.mxu0 %v3989
      %4460 = vmatprep.subr.mxu0 0.0
      %4461 = vmatpush1.msra.mxu0 %v3990
      %4462 = vmatprep.subr.mxu0 0.0
      %4463 = vmatpush1.msra.mxu0 %v3991
      %4464 = vmatprep.subr.mxu0 0.0
      %4465 = vmatpush1.msra.mxu0 %v3992
      %4466 = vmatprep.subr.mxu0 0.0
      %4467 = vmatpush1.msra.mxu0 %v3993
      %4468 = vmatprep.subr.mxu0 0.0
      %4469 = vmatpush1.msra.mxu0 0.0
      %4470 = vmatprep.subr.mxu0 0.0
      %4471 = vmatpush1.msra.mxu0 0.0
      %4472 = vmatprep.subr.mxu0 0.0
      %4473 = vmatpush1.msra.mxu0 0.0
      %4474 = vmatprep.subr.mxu0 0.0
      %4475 = vmatpush1.msra.mxu0 0.0
      %4476 = vmatprep.subr.mxu0 0.0
      %4477 = vmatpush1.msra.mxu0 0.0
      %4478 = vmatprep.subr.mxu0 0.0
      %4479 = vmatpush1.msra.mxu0 0.0
      %4480 = vmatprep.subr.mxu0 0.0
      %4481 = vmatpush1.msra.mxu0 0.0
      %4482 = vmatprep.subr.mxu0 0.0
      %4483 = vmatpush1.msra.mxu0 0.0
      %4484 = vmatprep.subr.mxu0 0.0
      %4485 = vmatpush1.msra.mxu0 0.0
      %4486 = vmatprep.subr.mxu0 0.0
      %4487 = vmatpush1.msra.mxu0 0.0
      %4488 = vmatprep.subr.mxu0 0.0
      %4489 = vmatpush1.msra.mxu0 0.0
      %4490 = vmatprep.subr.mxu0 0.0
      %4491 = vmatpush1.msra.mxu0 0.0
      %4492 = vmatprep.subr.mxu0 0.0
      %4493 = vmatpush1.msra.mxu0 0.0
      %4494 = vmatprep.subr.mxu0 0.0
      %4495 = vmatpush1.msra.mxu0 0.0
      %4496 = vmatprep.subr.mxu0 0.0
      %4497 = vmatpush1.msra.mxu0 0.0
      %4498 = vmatprep.subr.mxu0 0.0
      %4499 = vmatpush1.msra.mxu0 0.0
      %4500 = vmatprep.subr.mxu0 0.0
      %4501 = vmatpush1.msra.mxu0 0.0
      %4502 = vmatprep.subr.mxu0 0.0
      %4503 = vmatpush1.msra.mxu0 0.0
      %4504 = vmatprep.subr.mxu0 0.0
      %4505 = vmatpush1.msra.mxu0 0.0
      %4506 = vmatprep.subr.mxu0 0.0
      %4507 = vmatpush1.msra.mxu0 0.0
      %4508 = vmatprep.subr.mxu0 0.0
      %4509 = vmatpush1.msra.mxu0 0.0
      %4510 = vmatprep.subr.mxu0 0.0
      %4511 = vmatpush1.msra.mxu0 0.0
      %4512 = vmatprep.subr.mxu0 0.0
      %4513 = vmatpush1.msra.mxu0 0.0
      %4514 = vmatprep.subr.mxu0 0.0
      %4515 = vmatpush1.msra.mxu0 0.0
      %4516 = vmatprep.mubr.f32.mxu0 0.0
      %4517 = vmatmul.mubr.f32.gmra.mrb[0].mxu0 %v4357
      %v4518 = vpop.f32.mrb[0].mxu0
      %v4519 = vadd.f32 %v4198, %v4518
      %v4520 = vpop.f32.mrb[0].mxu0
      %4521 = vmatprep.mubr.f32.mxu0 0.0
      %4522 = vmatmul.mubr.f32.gmra.mrb[0].mxu0 %v4360
      %v4523 = vpop.f32.mrb[0].mxu0
      %v4524 = vadd.f32 %v4203, %v4523
      %v4525 = vpop.f32.mrb[0].mxu0
      %4526 = vmatprep.mubr.f32.mxu0 0.0
      %4527 = vmatmul.mubr.f32.gmra.mrb[0].mxu0 %v4363
      %v4528 = vpop.f32.mrb[0].mxu0
      %v4529 = vadd.f32 %v4208, %v4528
      %v4530 = vpop.f32.mrb[0].mxu0
      %4531 = vmatprep.mubr.f32.mxu0 0.0
      %4532 = vmatmul.mubr.f32.gmra.mrb[0].mxu0 %v4366
      %v4533 = vpop.f32.mrb[0].mxu0
      %v4534 = vadd.f32 %v4213, %v4533
      %v4535 = vpop.f32.mrb[0].mxu0
      %4536 = vmatprep.mubr.f32.mxu0 0.0
      %4537 = vmatmul.mubr.f32.gmra.mrb[0].mxu0 %v4369
      %v4538 = vpop.f32.mrb[0].mxu0
      %v4539 = vadd.f32 %v4218, %v4538
      %v4540 = vpop.f32.mrb[0].mxu0
      %4541 = vmatprep.mubr.f32.mxu0 0.0
      %4542 = vmatmul.mubr.f32.gmra.mrb[0].mxu0 %v4372
      %v4543 = vpop.f32.mrb[0].mxu0
      %v4544 = vadd.f32 %v4223, %v4543
      %v4545 = vpop.f32.mrb[0].mxu0
      %4546 = vmatprep.mubr.f32.mxu0 0.0
      %4547 = vmatmul.mubr.f32.gmra.mrb[0].mxu0 %v4375
      %v4548 = vpop.f32.mrb[0].mxu0
      %v4549 = vadd.f32 %v4228, %v4548
      %v4550 = vpop.f32.mrb[0].mxu0
      %4551 = vmatprep.mubr.f32.mxu0 0.0
      %4552 = vmatmul.mubr.f32.gmra.mrb[0].mxu0 %v4378
      %v4553 = vpop.f32.mrb[0].mxu0
      %v4554 = vadd.f32 %v4233, %v4553
      %v4555 = vpop.f32.mrb[0].mxu0
      %4556 = vmatprep.mubr.f32.mxu0 0.0
      %4557 = vmatmul.mubr.f32.gmra.mrb[0].mxu0 %v4381
      %v4558 = vpop.f32.mrb[0].mxu0
      %v4559 = vadd.f32 %v4238, %v4558
      %v4560 = vpop.f32.mrb[0].mxu0
      %4561 = vmatprep.mubr.f32.mxu0 0.0
      %4562 = vmatmul.mubr.f32.gmra.mrb[0].mxu0 %v4384
      %v4563 = vpop.f32.mrb[0].mxu0
      %v4564 = vadd.f32 %v4243, %v4563
      %v4565 = vpop.f32.mrb[0].mxu0
      %4566 = vmatprep.mubr.f32.mxu0 0.0
      %4567 = vmatmul.mubr.f32.gmra.mrb[0].mxu0 %v4387
      %v4568 = vpop.f32.mrb[0].mxu0
      %v4569 = vadd.f32 %v4248, %v4568
      %v4570 = vpop.f32.mrb[0].mxu0
      %4571 = vmatprep.mubr.f32.mxu0 0.0
      %4572 = vmatmul.mubr.f32.gmra.mrb[0].mxu0 %v4390
      %v4573 = vpop.f32.mrb[0].mxu0
      %v4574 = vadd.f32 %v4253, %v4573
      %v4575 = vpop.f32.mrb[0].mxu0
      %4576 = vmatprep.mubr.f32.mxu0 0.0
      %4577 = vmatmul.mubr.f32.gmra.mrb[0].mxu0 %v4393
      %v4578 = vpop.f32.mrb[0].mxu0
      %v4579 = vadd.f32 %v4258, %v4578
      %v4580 = vpop.f32.mrb[0].mxu0
      %4581 = vmatprep.mubr.f32.mxu0 0.0
      %4582 = vmatmul.mubr.f32.gmra.mrb[0].mxu0 %v4396
      %v4583 = vpop.f32.mrb[0].mxu0
      %v4584 = vadd.f32 %v4263, %v4583
      %v4585 = vpop.f32.mrb[0].mxu0
      %4586 = vmatprep.mubr.f32.mxu0 0.0
      %4587 = vmatmul.mubr.f32.gmra.mrb[0].mxu0 %v4399
      %v4588 = vpop.f32.mrb[0].mxu0
      %v4589 = vadd.f32 %v4268, %v4588
      %v4590 = vpop.f32.mrb[0].mxu0
      %4591 = vmatprep.mubr.f32.mxu0 0.0
      %4592 = vmatmul.mubr.f32.gmra.mrb[0].mxu0 %v4402
      %v4593 = vpop.f32.mrb[0].mxu0
      %v4594 = vadd.f32 %v4273, %v4593
      %v4595 = vpop.f32.mrb[0].mxu0
      %4596 = vmatprep.mubr.f32.mxu0 0.0
      %4597 = vmatmul.mubr.f32.gmra.mrb[0].mxu0 %v4405
      %v4598 = vpop.f32.mrb[0].mxu0
      %v4599 = vadd.f32 %v4278, %v4598
      %v4600 = vpop.f32.mrb[0].mxu0
      %4601 = vmatprep.mubr.f32.mxu0 0.0
      %4602 = vmatmul.mubr.f32.gmra.mrb[0].mxu0 %v4408
      %v4603 = vpop.f32.mrb[0].mxu0
      %v4604 = vadd.f32 %v4283, %v4603
      %v4605 = vpop.f32.mrb[0].mxu0
      %4606 = vmatprep.mubr.f32.mxu0 0.0
      %4607 = vmatmul.mubr.f32.gmra.mrb[0].mxu0 %v4411
      %v4608 = vpop.f32.mrb[0].mxu0
      %v4609 = vadd.f32 %v4288, %v4608
      %v4610 = vpop.f32.mrb[0].mxu0
      %4611 = vmatprep.mubr.f32.mxu0 0.0
      %4612 = vmatmul.mubr.f32.gmra.mrb[0].mxu0 %v4414
      %v4613 = vpop.f32.mrb[0].mxu0
      %v4614 = vadd.f32 %v4293, %v4613
      %v4615 = vpop.f32.mrb[0].mxu0
      %4616 = vmatprep.mubr.f32.mxu0 0.0
      %4617 = vmatmul.mubr.f32.gmra.mrb[0].mxu0 %v4417
      %v4618 = vpop.f32.mrb[0].mxu0
      %v4619 = vadd.f32 %v4298, %v4618
      %v4620 = vpop.f32.mrb[0].mxu0
      %4621 = vmatprep.mubr.f32.mxu0 0.0
      %4622 = vmatmul.mubr.f32.gmra.mrb[0].mxu0 %v4420
      %v4623 = vpop.f32.mrb[0].mxu0
      %v4624 = vadd.f32 %v4303, %v4623
      %v4625 = vpop.f32.mrb[0].mxu0
      %4626 = vmatprep.mubr.f32.mxu0 0.0
      %4627 = vmatmul.mubr.f32.gmra.mrb[0].mxu0 %v4423
      %v4628 = vpop.f32.mrb[0].mxu0
      %v4629 = vadd.f32 %v4308, %v4628
      %v4630 = vpop.f32.mrb[0].mxu0
      %4631 = vmatprep.mubr.f32.mxu0 0.0
      %4632 = vmatmul.mubr.f32.gmra.mrb[0].mxu0 %v4426
      %v4633 = vpop.f32.mrb[0].mxu0
      %v4634 = vadd.f32 %v4313, %v4633
      %v4635 = vpop.f32.mrb[0].mxu0
      %4636 = vmatprep.mubr.f32.mxu0 0.0
      %4637 = vmatmul.mubr.f32.gmra.mrb[0].mxu0 %v4429
      %v4638 = vpop.f32.mrb[0].mxu0
      %v4639 = vadd.f32 %v4318, %v4638
      %v4640 = vpop.f32.mrb[0].mxu0
      %4641 = vmatprep.mubr.f32.mxu0 0.0
      %4642 = vmatmul.mubr.f32.gmra.mrb[0].mxu0 %v4432
      %v4643 = vpop.f32.mrb[0].mxu0
      %v4644 = vadd.f32 %v4323, %v4643
      %v4645 = vpop.f32.mrb[0].mxu0
      %4646 = vmatprep.mubr.f32.mxu0 0.0
      %4647 = vmatmul.mubr.f32.gmra.mrb[0].mxu0 %v4435
      %v4648 = vpop.f32.mrb[0].mxu0
      %v4649 = vadd.f32 %v4328, %v4648
      %v4650 = vpop.f32.mrb[0].mxu0
      %4651 = vmatprep.mubr.f32.mxu0 0.0
      %4652 = vmatmul.mubr.f32.gmra.mrb[0].mxu0 %v4438
      %v4653 = vpop.f32.mrb[0].mxu0
      %v4654 = vadd.f32 %v4333, %v4653
      %v4655 = vpop.f32.mrb[0].mxu0
      %4656 = vmatprep.mubr.f32.mxu0 0.0
      %4657 = vmatmul.mubr.f32.gmra.mrb[0].mxu0 %v4441
      %v4658 = vpop.f32.mrb[0].mxu0
      %v4659 = vadd.f32 %v4338, %v4658
      %v4660 = vpop.f32.mrb[0].mxu0
      %4661 = vmatprep.mubr.f32.mxu0 0.0
      %4662 = vmatmul.mubr.f32.gmra.mrb[0].mxu0 %v4444
      %v4663 = vpop.f32.mrb[0].mxu0
      %v4664 = vadd.f32 %v4343, %v4663
      %v4665 = vpop.f32.mrb[0].mxu0
      %4666 = vmatprep.mubr.f32.mxu0 0.0
      %4667 = vmatmul.mubr.f32.gmra.mrb[0].mxu0 %v4447
      %v4668 = vpop.f32.mrb[0].mxu0
      %v4669 = vadd.f32 %v4348, %v4668
      %v4670 = vpop.f32.mrb[0].mxu0
      %4671 = vmatprep.mubr.f32.mxu0 0.0
      %4672 = vmatmul.mubr.f32.gmra.mrb[0].mxu0 %v4450
      %v4673 = vpop.f32.mrb[0].mxu0
      %v4674 = vadd.f32 %v4353, %v4673
      %v4675 = vpop.f32.mrb[0].mxu0
      %4676 = vdwg.mxu0
      %v4677 = vld [vmem:[#allocation3 + $0x2] sm:$0xff]
      %v4678 = vld [vmem:[#allocation3 + $0xa] sm:$0xff]
      %v4679 = vld [vmem:[#allocation3 + $0x1a] sm:$0xff]
      %v4680 = vld [vmem:[#allocation3 + $0x22] sm:$0xff]
      %v4681 = vld [vmem:[#allocation3 + $0x32] sm:$0xff]
      %v4682 = vld [vmem:[#allocation3 + $0x3a] sm:$0xff]
      %v4683 = vld [vmem:[#allocation3 + $0x4a] sm:$0xff]
      %v4684 = vld [vmem:[#allocation3 + $0x52] sm:$0xff]
      %v4685 = vld [vmem:[#allocation3 + $0x62] sm:$0xff]
      %v4686 = vld [vmem:[#allocation3 + $0x6a] sm:$0xff]
      %v4687 = vld [vmem:[#allocation3 + $0x7a] sm:$0xff]
      %v4688 = vld [vmem:[#allocation3 + $0x82] sm:$0xff]
      %v4689 = vld [vmem:[#allocation3 + $0x92] sm:$0xff]
      %v4690 = vld [vmem:[#allocation3 + $0x9a] sm:$0xff]
      %v4691 = vld [vmem:[#allocation3 + $0xaa] sm:$0xff]
      %v4692 = vld [vmem:[#allocation3 + $0xb2] sm:$0xff]
      %v4693 = vld [vmem:[#allocation3 + $0xc2] sm:$0xff]
      %v4694 = vld [vmem:[#allocation3 + $0xca] sm:$0xff]
      %v4695 = vld [vmem:[#allocation3 + $0xda] sm:$0xff]
      %v4696 = vld [vmem:[#allocation3 + $0xe2] sm:$0xff]
      %v4697 = vld [vmem:[#allocation3 + $0xf2] sm:$0xff]
      %v4698 = vld [vmem:[#allocation3 + $0xfa] sm:$0xff]
      %v4699 = vld [vmem:[#allocation3 + $0x10a] sm:$0xff]
      %v4700 = vld [vmem:[#allocation3 + $0x112] sm:$0xff]
      %v4701 = vld [vmem:[#allocation3 + $0x122] sm:$0xff]
      %v4702 = vld [vmem:[#allocation3 + $0x12a] sm:$0xff]
      %v4703 = vld [vmem:[#allocation3 + $0x13a] sm:$0xff]
      %v4704 = vld [vmem:[#allocation3 + $0x142] sm:$0xff]
      %v4705 = vld [vmem:[#allocation3 + $0x152] sm:$0xff]
      %v4706 = vld [vmem:[#allocation3 + $0x15a] sm:$0xff]
      %v4707 = vld [vmem:[#allocation3 + $0x16a] sm:$0xff]
      %v4708 = vld [vmem:[#allocation3 + $0x172] sm:$0xff]
      %s4709 = scalar_lea.vmem %s3, 128
      %v4710 = vld [vmem:[%s4709] sm:$0xff]
      %v4711 = vld [vmem:[%s4709 + $0x8] sm:$0xff]
      %v4712 = vld [vmem:[%s4709 + $0x10] sm:$0xff]
      %v4713 = vld [vmem:[%s4709 + $0x18] sm:$0xff]
      %v4714 = vld [vmem:[%s4709 + $0x20] sm:$0xff]
      %v4715 = vld [vmem:[%s4709 + $0x28] sm:$0xff]
      %v4716 = vld [vmem:[%s4709 + $0x30] sm:$0xff]
      %v4717 = vld [vmem:[%s4709 + $0x38] sm:$0xff]
      %v4719 = vsel %vm3864, %v4677, 0
      %v4722 = vsel %vm3864, %v4678, 0
      %v4725 = vsel %vm3864, %v4679, 0
      %v4728 = vsel %vm3864, %v4680, 0
      %v4731 = vsel %vm3864, %v4681, 0
      %v4734 = vsel %vm3864, %v4682, 0
      %v4737 = vsel %vm3864, %v4683, 0
      %v4740 = vsel %vm3864, %v4684, 0
      %v4743 = vsel %vm3864, %v4685, 0
      %v4746 = vsel %vm3864, %v4686, 0
      %v4749 = vsel %vm3864, %v4687, 0
      %v4752 = vsel %vm3864, %v4688, 0
      %v4755 = vsel %vm3864, %v4689, 0
      %v4758 = vsel %vm3864, %v4690, 0
      %v4761 = vsel %vm3864, %v4691, 0
      %v4764 = vsel %vm3864, %v4692, 0
      %v4767 = vsel %vm3864, %v4693, 0
      %v4770 = vsel %vm3864, %v4694, 0
      %v4773 = vsel %vm3864, %v4695, 0
      %v4776 = vsel %vm3864, %v4696, 0
      %v4779 = vsel %vm3864, %v4697, 0
      %v4782 = vsel %vm3864, %v4698, 0
      %v4785 = vsel %vm3864, %v4699, 0
      %v4788 = vsel %vm3864, %v4700, 0
      %v4791 = vsel %vm3864, %v4701, 0
      %v4794 = vsel %vm3864, %v4702, 0
      %v4797 = vsel %vm3864, %v4703, 0
      %v4800 = vsel %vm3864, %v4704, 0
      %v4803 = vsel %vm3864, %v4705, 0
      %v4806 = vsel %vm3864, %v4706, 0
      %v4809 = vsel %vm3864, %v4707, 0
      %v4812 = vsel %vm3864, %v4708, 0
      %4814 = vmatprep.subr.mxu0 0.0
      %4815 = vmatpush1.msra.mxu0 %v4710
      %4816 = vmatprep.subr.mxu0 0.0
      %4817 = vmatpush1.msra.mxu0 %v4711
      %4818 = vmatprep.subr.mxu0 0.0
      %4819 = vmatpush1.msra.mxu0 %v4712
      %4820 = vmatprep.subr.mxu0 0.0
      %4821 = vmatpush1.msra.mxu0 %v4713
      %4822 = vmatprep.subr.mxu0 0.0
      %4823 = vmatpush1.msra.mxu0 %v4714
      %4824 = vmatprep.subr.mxu0 0.0
      %4825 = vmatpush1.msra.mxu0 %v4715
      %4826 = vmatprep.subr.mxu0 0.0
      %4827 = vmatpush1.msra.mxu0 %v4716
      %4828 = vmatprep.subr.mxu0 0.0
      %4829 = vmatpush1.msra.mxu0 %v4717
      %4830 = vmatprep.subr.mxu0 0.0
      %4831 = vmatpush1.msra.mxu0 0.0
      %4832 = vmatprep.subr.mxu0 0.0
      %4833 = vmatpush1.msra.mxu0 0.0
      %4834 = vmatprep.subr.mxu0 0.0
      %4835 = vmatpush1.msra.mxu0 0.0
      %4836 = vmatprep.subr.mxu0 0.0
      %4837 = vmatpush1.msra.mxu0 0.0
      %4838 = vmatprep.subr.mxu0 0.0
      %4839 = vmatpush1.msra.mxu0 0.0
      %4840 = vmatprep.subr.mxu0 0.0
      %4841 = vmatpush1.msra.mxu0 0.0
      %4842 = vmatprep.subr.mxu0 0.0
      %4843 = vmatpush1.msra.mxu0 0.0
      %4844 = vmatprep.subr.mxu0 0.0
      %4845 = vmatpush1.msra.mxu0 0.0
      %4846 = vmatprep.subr.mxu0 0.0
      %4847 = vmatpush1.msra.mxu0 0.0
      %4848 = vmatprep.subr.mxu0 0.0
      %4849 = vmatpush1.msra.mxu0 0.0
      %4850 = vmatprep.subr.mxu0 0.0
      %4851 = vmatpush1.msra.mxu0 0.0
      %4852 = vmatprep.subr.mxu0 0.0
      %4853 = vmatpush1.msra.mxu0 0.0
      %4854 = vmatprep.subr.mxu0 0.0
      %4855 = vmatpush1.msra.mxu0 0.0
      %4856 = vmatprep.subr.mxu0 0.0
      %4857 = vmatpush1.msra.mxu0 0.0
      %4858 = vmatprep.subr.mxu0 0.0
      %4859 = vmatpush1.msra.mxu0 0.0
      %4860 = vmatprep.subr.mxu0 0.0
      %4861 = vmatpush1.msra.mxu0 0.0
      %4862 = vmatprep.subr.mxu0 0.0
      %4863 = vmatpush1.msra.mxu0 0.0
      %4864 = vmatprep.subr.mxu0 0.0
      %4865 = vmatpush1.msra.mxu0 0.0
      %4866 = vmatprep.subr.mxu0 0.0
      %4867 = vmatpush1.msra.mxu0 0.0
      %4868 = vmatprep.subr.mxu0 0.0
      %4869 = vmatpush1.msra.mxu0 0.0
      %4870 = vmatprep.subr.mxu0 0.0
      %4871 = vmatpush1.msra.mxu0 0.0
      %4872 = vmatprep.subr.mxu0 0.0
      %4873 = vmatpush1.msra.mxu0 0.0
      %4874 = vmatprep.subr.mxu0 0.0
      %4875 = vmatpush1.msra.mxu0 0.0
      %4876 = vmatprep.subr.mxu0 0.0
      %4877 = vmatpush1.msra.mxu0 0.0
      %4878 = vmatprep.mubr.f32.mxu0 0.0
      %4879 = vmatmul.mubr.f32.gmra.mrb[0].mxu0 %v4719
      %v4880 = vpop.f32.mrb[0].mxu0
      %v4881 = vadd.f32 0.0, %v4880
      %v4882 = vpop.f32.mrb[0].mxu0
      %4883 = vmatprep.mubr.f32.mxu0 0.0
      %4884 = vmatmul.mubr.f32.gmra.mrb[0].mxu0 %v4722
      %v4885 = vpop.f32.mrb[0].mxu0
      %v4886 = vadd.f32 0.0, %v4885
      %v4887 = vpop.f32.mrb[0].mxu0
      %4888 = vmatprep.mubr.f32.mxu0 0.0
      %4889 = vmatmul.mubr.f32.gmra.mrb[0].mxu0 %v4725
      %v4890 = vpop.f32.mrb[0].mxu0
      %v4891 = vadd.f32 0.0, %v4890
      %v4892 = vpop.f32.mrb[0].mxu0
      %4893 = vmatprep.mubr.f32.mxu0 0.0
      %4894 = vmatmul.mubr.f32.gmra.mrb[0].mxu0 %v4728
      %v4895 = vpop.f32.mrb[0].mxu0
      %v4896 = vadd.f32 0.0, %v4895
      %v4897 = vpop.f32.mrb[0].mxu0
      %4898 = vmatprep.mubr.f32.mxu0 0.0
      %4899 = vmatmul.mubr.f32.gmra.mrb[0].mxu0 %v4731
      %v4900 = vpop.f32.mrb[0].mxu0
      %v4901 = vadd.f32 0.0, %v4900
      %v4902 = vpop.f32.mrb[0].mxu0
      %4903 = vmatprep.mubr.f32.mxu0 0.0
      %4904 = vmatmul.mubr.f32.gmra.mrb[0].mxu0 %v4734
      %v4905 = vpop.f32.mrb[0].mxu0
      %v4906 = vadd.f32 0.0, %v4905
      %v4907 = vpop.f32.mrb[0].mxu0
      %4908 = vmatprep.mubr.f32.mxu0 0.0
      %4909 = vmatmul.mubr.f32.gmra.mrb[0].mxu0 %v4737
      %v4910 = vpop.f32.mrb[0].mxu0
      %v4911 = vadd.f32 0.0, %v4910
      %v4912 = vpop.f32.mrb[0].mxu0
      %4913 = vmatprep.mubr.f32.mxu0 0.0
      %4914 = vmatmul.mubr.f32.gmra.mrb[0].mxu0 %v4740
      %v4915 = vpop.f32.mrb[0].mxu0
      %v4916 = vadd.f32 0.0, %v4915
      %v4917 = vpop.f32.mrb[0].mxu0
      %4918 = vmatprep.mubr.f32.mxu0 0.0
      %4919 = vmatmul.mubr.f32.gmra.mrb[0].mxu0 %v4743
      %v4920 = vpop.f32.mrb[0].mxu0
      %v4921 = vadd.f32 0.0, %v4920
      %v4922 = vpop.f32.mrb[0].mxu0
      %4923 = vmatprep.mubr.f32.mxu0 0.0
      %4924 = vmatmul.mubr.f32.gmra.mrb[0].mxu0 %v4746
      %v4925 = vpop.f32.mrb[0].mxu0
      %v4926 = vadd.f32 0.0, %v4925
      %v4927 = vpop.f32.mrb[0].mxu0
      %4928 = vmatprep.mubr.f32.mxu0 0.0
      %4929 = vmatmul.mubr.f32.gmra.mrb[0].mxu0 %v4749
      %v4930 = vpop.f32.mrb[0].mxu0
      %v4931 = vadd.f32 0.0, %v4930
      %v4932 = vpop.f32.mrb[0].mxu0
      %4933 = vmatprep.mubr.f32.mxu0 0.0
      %4934 = vmatmul.mubr.f32.gmra.mrb[0].mxu0 %v4752
      %v4935 = vpop.f32.mrb[0].mxu0
      %v4936 = vadd.f32 0.0, %v4935
      %v4937 = vpop.f32.mrb[0].mxu0
      %4938 = vmatprep.mubr.f32.mxu0 0.0
      %4939 = vmatmul.mubr.f32.gmra.mrb[0].mxu0 %v4755
      %v4940 = vpop.f32.mrb[0].mxu0
      %v4941 = vadd.f32 0.0, %v4940
      %v4942 = vpop.f32.mrb[0].mxu0
      %4943 = vmatprep.mubr.f32.mxu0 0.0
      %4944 = vmatmul.mubr.f32.gmra.mrb[0].mxu0 %v4758
      %v4945 = vpop.f32.mrb[0].mxu0
      %v4946 = vadd.f32 0.0, %v4945
      %v4947 = vpop.f32.mrb[0].mxu0
      %4948 = vmatprep.mubr.f32.mxu0 0.0
      %4949 = vmatmul.mubr.f32.gmra.mrb[0].mxu0 %v4761
      %v4950 = vpop.f32.mrb[0].mxu0
      %v4951 = vadd.f32 0.0, %v4950
      %v4952 = vpop.f32.mrb[0].mxu0
      %4953 = vmatprep.mubr.f32.mxu0 0.0
      %4954 = vmatmul.mubr.f32.gmra.mrb[0].mxu0 %v4764
      %v4955 = vpop.f32.mrb[0].mxu0
      %v4956 = vadd.f32 0.0, %v4955
      %v4957 = vpop.f32.mrb[0].mxu0
      %4958 = vmatprep.mubr.f32.mxu0 0.0
      %4959 = vmatmul.mubr.f32.gmra.mrb[0].mxu0 %v4767
      %v4960 = vpop.f32.mrb[0].mxu0
      %v4961 = vadd.f32 0.0, %v4960
      %v4962 = vpop.f32.mrb[0].mxu0
      %4963 = vmatprep.mubr.f32.mxu0 0.0
      %4964 = vmatmul.mubr.f32.gmra.mrb[0].mxu0 %v4770
      %v4965 = vpop.f32.mrb[0].mxu0
      %v4966 = vadd.f32 0.0, %v4965
      %v4967 = vpop.f32.mrb[0].mxu0
      %4968 = vmatprep.mubr.f32.mxu0 0.0
      %4969 = vmatmul.mubr.f32.gmra.mrb[0].mxu0 %v4773
      %v4970 = vpop.f32.mrb[0].mxu0
      %v4971 = vadd.f32 0.0, %v4970
      %v4972 = vpop.f32.mrb[0].mxu0
      %4973 = vmatprep.mubr.f32.mxu0 0.0
      %4974 = vmatmul.mubr.f32.gmra.mrb[0].mxu0 %v4776
      %v4975 = vpop.f32.mrb[0].mxu0
      %v4976 = vadd.f32 0.0, %v4975
      %v4977 = vpop.f32.mrb[0].mxu0
      %4978 = vmatprep.mubr.f32.mxu0 0.0
      %4979 = vmatmul.mubr.f32.gmra.mrb[0].mxu0 %v4779
      %v4980 = vpop.f32.mrb[0].mxu0
      %v4981 = vadd.f32 0.0, %v4980
      %v4982 = vpop.f32.mrb[0].mxu0
      %4983 = vmatprep.mubr.f32.mxu0 0.0
      %4984 = vmatmul.mubr.f32.gmra.mrb[0].mxu0 %v4782
      %v4985 = vpop.f32.mrb[0].mxu0
      %v4986 = vadd.f32 0.0, %v4985
      %v4987 = vpop.f32.mrb[0].mxu0
      %4988 = vmatprep.mubr.f32.mxu0 0.0
      %4989 = vmatmul.mubr.f32.gmra.mrb[0].mxu0 %v4785
      %v4990 = vpop.f32.mrb[0].mxu0
      %v4991 = vadd.f32 0.0, %v4990
      %v4992 = vpop.f32.mrb[0].mxu0
      %4993 = vmatprep.mubr.f32.mxu0 0.0
      %4994 = vmatmul.mubr.f32.gmra.mrb[0].mxu0 %v4788
      %v4995 = vpop.f32.mrb[0].mxu0
      %v4996 = vadd.f32 0.0, %v4995
      %v4997 = vpop.f32.mrb[0].mxu0
      %4998 = vmatprep.mubr.f32.mxu0 0.0
      %4999 = vmatmul.mubr.f32.gmra.mrb[0].mxu0 %v4791
      %v5000 = vpop.f32.mrb[0].mxu0
      %v5001 = vadd.f32 0.0, %v5000
      %v5002 = vpop.f32.mrb[0].mxu0
      %5003 = vmatprep.mubr.f32.mxu0 0.0
      %5004 = vmatmul.mubr.f32.gmra.mrb[0].mxu0 %v4794
      %v5005 = vpop.f32.mrb[0].mxu0
      %v5006 = vadd.f32 0.0, %v5005
      %v5007 = vpop.f32.mrb[0].mxu0
      %5008 = vmatprep.mubr.f32.mxu0 0.0
      %5009 = vmatmul.mubr.f32.gmra.mrb[0].mxu0 %v4797
      %v5010 = vpop.f32.mrb[0].mxu0
      %v5011 = vadd.f32 0.0, %v5010
      %v5012 = vpop.f32.mrb[0].mxu0
      %5013 = vmatprep.mubr.f32.mxu0 0.0
      %5014 = vmatmul.mubr.f32.gmra.mrb[0].mxu0 %v4800
      %v5015 = vpop.f32.mrb[0].mxu0
      %v5016 = vadd.f32 0.0, %v5015
      %v5017 = vpop.f32.mrb[0].mxu0
      %5018 = vmatprep.mubr.f32.mxu0 0.0
      %5019 = vmatmul.mubr.f32.gmra.mrb[0].mxu0 %v4803
      %v5020 = vpop.f32.mrb[0].mxu0
      %v5021 = vadd.f32 0.0, %v5020
      %v5022 = vpop.f32.mrb[0].mxu0
      %5023 = vmatprep.mubr.f32.mxu0 0.0
      %5024 = vmatmul.mubr.f32.gmra.mrb[0].mxu0 %v4806
      %v5025 = vpop.f32.mrb[0].mxu0
      %v5026 = vadd.f32 0.0, %v5025
      %v5027 = vpop.f32.mrb[0].mxu0
      %5028 = vmatprep.mubr.f32.mxu0 0.0
      %5029 = vmatmul.mubr.f32.gmra.mrb[0].mxu0 %v4809
      %v5030 = vpop.f32.mrb[0].mxu0
      %v5031 = vadd.f32 0.0, %v5030
      %v5032 = vpop.f32.mrb[0].mxu0
      %5033 = vmatprep.mubr.f32.mxu0 0.0
      %5034 = vmatmul.mubr.f32.gmra.mrb[0].mxu0 %v4812
      %v5035 = vpop.f32.mrb[0].mxu0
      %v5036 = vadd.f32 0.0, %v5035
      %v5037 = vpop.f32.mrb[0].mxu0
      %5038 = vdwg.mxu0
      %v5039 = vadd.f32 %v4519, %v4881
      %v5040 = vadd.f32 %v4524, %v4886
      %v5041 = vadd.f32 %v4529, %v4891
      %v5042 = vadd.f32 %v4534, %v4896
      %v5043 = vadd.f32 %v4539, %v4901
      %v5044 = vadd.f32 %v4544, %v4906
      %v5045 = vadd.f32 %v4549, %v4911
      %v5046 = vadd.f32 %v4554, %v4916
      %v5047 = vadd.f32 %v4559, %v4921
      %v5048 = vadd.f32 %v4564, %v4926
      %v5049 = vadd.f32 %v4569, %v4931
      %v5050 = vadd.f32 %v4574, %v4936
      %v5051 = vadd.f32 %v4579, %v4941
      %v5052 = vadd.f32 %v4584, %v4946
      %v5053 = vadd.f32 %v4589, %v4951
      %v5054 = vadd.f32 %v4594, %v4956
      %v5055 = vadd.f32 %v4599, %v4961
      %v5056 = vadd.f32 %v4604, %v4966
      %v5057 = vadd.f32 %v4609, %v4971
      %v5058 = vadd.f32 %v4614, %v4976
      %v5059 = vadd.f32 %v4619, %v4981
      %v5060 = vadd.f32 %v4624, %v4986
      %v5061 = vadd.f32 %v4629, %v4991
      %v5062 = vadd.f32 %v4634, %v4996
      %v5063 = vadd.f32 %v4639, %v5001
      %v5064 = vadd.f32 %v4644, %v5006
      %v5065 = vadd.f32 %v4649, %v5011
      %v5066 = vadd.f32 %v4654, %v5016
      %v5067 = vadd.f32 %v4659, %v5021
      %v5068 = vadd.f32 %v4664, %v5026
      %v5069 = vadd.f32 %v4669, %v5031
      %v5070 = vadd.f32 %v4674, %v5036
      %v5071 = vld [vmem:[%s3920] sm:$0xff]
      %v5072 = vld [vmem:[%s3920 + $0x8] sm:$0xff]
      %v5073 = vld [vmem:[%s3920 + $0x18] sm:$0xff]
      %v5074 = vld [vmem:[%s3920 + $0x20] sm:$0xff]
      %v5075 = vld [vmem:[%s3920 + $0x30] sm:$0xff]
      %v5076 = vld [vmem:[%s3920 + $0x38] sm:$0xff]
      %v5077 = vld [vmem:[%s3920 + $0x48] sm:$0xff]
      %v5078 = vld [vmem:[%s3920 + $0x50] sm:$0xff]
      %v5079 = vld [vmem:[%s3920 + $0x60] sm:$0xff]
      %v5080 = vld [vmem:[%s3920 + $0x68] sm:$0xff]
      %v5081 = vld [vmem:[%s3920 + $0x78] sm:$0xff]
      %v5082 = vld [vmem:[%s3920 + $0x80] sm:$0xff]
      %v5083 = vld [vmem:[%s3920 + $0x90] sm:$0xff]
      %v5084 = vld [vmem:[%s3920 + $0x98] sm:$0xff]
      %v5085 = vld [vmem:[%s3920 + $0xa8] sm:$0xff]
      %v5086 = vld [vmem:[%s3920 + $0xb0] sm:$0xff]
      %v5087 = vld [vmem:[%s3920 + $0xc0] sm:$0xff]
      %v5088 = vld [vmem:[%s3920 + $0xc8] sm:$0xff]
      %v5089 = vld [vmem:[%s3920 + $0xd8] sm:$0xff]
      %v5090 = vld [vmem:[%s3920 + $0xe0] sm:$0xff]
      %v5091 = vld [vmem:[%s3920 + $0xf0] sm:$0xff]
      %v5092 = vld [vmem:[%s3920 + $0xf8] sm:$0xff]
      %v5093 = vld [vmem:[%s3920 + $0x108] sm:$0xff]
      %v5094 = vld [vmem:[%s3920 + $0x110] sm:$0xff]
      %v5095 = vld [vmem:[%s3920 + $0x120] sm:$0xff]
      %v5096 = vld [vmem:[%s3920 + $0x128] sm:$0xff]
      %v5097 = vld [vmem:[%s3920 + $0x138] sm:$0xff]
      %v5098 = vld [vmem:[%s3920 + $0x140] sm:$0xff]
      %v5099 = vld [vmem:[%s3920 + $0x150] sm:$0xff]
      %v5100 = vld [vmem:[%s3920 + $0x158] sm:$0xff]
      %v5101 = vld [vmem:[%s3920 + $0x168] sm:$0xff]
      %v5102 = vld [vmem:[%s3920 + $0x170] sm:$0xff]
      %s5103 = scalar_lea.vmem %s3, 192
      %v5104 = vld [vmem:[%s5103] sm:$0xff]
      %v5105 = vld [vmem:[%s5103 + $0x8] sm:$0xff]
      %v5106 = vld [vmem:[%s5103 + $0x10] sm:$0xff]
      %v5107 = vld [vmem:[%s5103 + $0x18] sm:$0xff]
      %v5108 = vld [vmem:[%s5103 + $0x20] sm:$0xff]
      %v5109 = vld [vmem:[%s5103 + $0x28] sm:$0xff]
      %v5110 = vld [vmem:[%s5103 + $0x30] sm:$0xff]
      %v5111 = vld [vmem:[%s5103 + $0x38] sm:$0xff]
      %v5113 = vsel %vm3864, %v5071, 0
      %v5116 = vsel %vm3864, %v5072, 0
      %v5119 = vsel %vm3864, %v5073, 0
      %v5122 = vsel %vm3864, %v5074, 0
      %v5125 = vsel %vm3864, %v5075, 0
      %v5128 = vsel %vm3864, %v5076, 0
      %v5131 = vsel %vm3864, %v5077, 0
      %v5134 = vsel %vm3864, %v5078, 0
      %v5137 = vsel %vm3864, %v5079, 0
      %v5140 = vsel %vm3864, %v5080, 0
      %v5143 = vsel %vm3864, %v5081, 0
      %v5146 = vsel %vm3864, %v5082, 0
      %v5149 = vsel %vm3864, %v5083, 0
      %v5152 = vsel %vm3864, %v5084, 0
      %v5155 = vsel %vm3864, %v5085, 0
      %v5158 = vsel %vm3864, %v5086, 0
      %v5161 = vsel %vm3864, %v5087, 0
      %v5164 = vsel %vm3864, %v5088, 0
      %v5167 = vsel %vm3864, %v5089, 0
      %v5170 = vsel %vm3864, %v5090, 0
      %v5173 = vsel %vm3864, %v5091, 0
      %v5176 = vsel %vm3864, %v5092, 0
      %v5179 = vsel %vm3864, %v5093, 0
      %v5182 = vsel %vm3864, %v5094, 0
      %v5185 = vsel %vm3864, %v5095, 0
      %v5188 = vsel %vm3864, %v5096, 0
      %v5191 = vsel %vm3864, %v5097, 0
      %v5194 = vsel %vm3864, %v5098, 0
      %v5197 = vsel %vm3864, %v5099, 0
      %v5200 = vsel %vm3864, %v5100, 0
      %v5203 = vsel %vm3864, %v5101, 0
      %v5206 = vsel %vm3864, %v5102, 0
      %5208 = vmatprep.subr.mxu0 0.0
      %5209 = vmatpush1.msra.mxu0 %v5104
      %5210 = vmatprep.subr.mxu0 0.0
      %5211 = vmatpush1.msra.mxu0 %v5105
      %5212 = vmatprep.subr.mxu0 0.0
      %5213 = vmatpush1.msra.mxu0 %v5106
      %5214 = vmatprep.subr.mxu0 0.0
      %5215 = vmatpush1.msra.mxu0 %v5107
      %5216 = vmatprep.subr.mxu0 0.0
      %5217 = vmatpush1.msra.mxu0 %v5108
      %5218 = vmatprep.subr.mxu0 0.0
      %5219 = vmatpush1.msra.mxu0 %v5109
      %5220 = vmatprep.subr.mxu0 0.0
      %5221 = vmatpush1.msra.mxu0 %v5110
      %5222 = vmatprep.subr.mxu0 0.0
      %5223 = vmatpush1.msra.mxu0 %v5111
      %5224 = vmatprep.subr.mxu0 0.0
      %5225 = vmatpush1.msra.mxu0 0.0
      %5226 = vmatprep.subr.mxu0 0.0
      %5227 = vmatpush1.msra.mxu0 0.0
      %5228 = vmatprep.subr.mxu0 0.0
      %5229 = vmatpush1.msra.mxu0 0.0
      %5230 = vmatprep.subr.mxu0 0.0
      %5231 = vmatpush1.msra.mxu0 0.0
      %5232 = vmatprep.subr.mxu0 0.0
      %5233 = vmatpush1.msra.mxu0 0.0
      %5234 = vmatprep.subr.mxu0 0.0
      %5235 = vmatpush1.msra.mxu0 0.0
      %5236 = vmatprep.subr.mxu0 0.0
      %5237 = vmatpush1.msra.mxu0 0.0
      %5238 = vmatprep.subr.mxu0 0.0
      %5239 = vmatpush1.msra.mxu0 0.0
      %5240 = vmatprep.subr.mxu0 0.0
      %5241 = vmatpush1.msra.mxu0 0.0
      %5242 = vmatprep.subr.mxu0 0.0
      %5243 = vmatpush1.msra.mxu0 0.0
      %5244 = vmatprep.subr.mxu0 0.0
      %5245 = vmatpush1.msra.mxu0 0.0
      %5246 = vmatprep.subr.mxu0 0.0
      %5247 = vmatpush1.msra.mxu0 0.0
      %5248 = vmatprep.subr.mxu0 0.0
      %5249 = vmatpush1.msra.mxu0 0.0
      %5250 = vmatprep.subr.mxu0 0.0
      %5251 = vmatpush1.msra.mxu0 0.0
      %5252 = vmatprep.subr.mxu0 0.0
      %5253 = vmatpush1.msra.mxu0 0.0
      %5254 = vmatprep.subr.mxu0 0.0
      %5255 = vmatpush1.msra.mxu0 0.0
      %5256 = vmatprep.subr.mxu0 0.0
      %5257 = vmatpush1.msra.mxu0 0.0
      %5258 = vmatprep.subr.mxu0 0.0
      %5259 = vmatpush1.msra.mxu0 0.0
      %5260 = vmatprep.subr.mxu0 0.0
      %5261 = vmatpush1.msra.mxu0 0.0
      %5262 = vmatprep.subr.mxu0 0.0
      %5263 = vmatpush1.msra.mxu0 0.0
      %5264 = vmatprep.subr.mxu0 0.0
      %5265 = vmatpush1.msra.mxu0 0.0
      %5266 = vmatprep.subr.mxu0 0.0
      %5267 = vmatpush1.msra.mxu0 0.0
      %5268 = vmatprep.subr.mxu0 0.0
      %5269 = vmatpush1.msra.mxu0 0.0
      %5270 = vmatprep.subr.mxu0 0.0
      %5271 = vmatpush1.msra.mxu0 0.0
      %5272 = vmatprep.mubr.f32.mxu0 0.0
      %5273 = vmatmul.mubr.f32.gmra.mrb[0].mxu0 %v5113
      %v5274 = vpop.f32.mrb[0].mxu0
      %v5275 = vadd.f32 0.0, %v5274
      %v5276 = vpop.f32.mrb[0].mxu0
      %5277 = vmatprep.mubr.f32.mxu0 0.0
      %5278 = vmatmul.mubr.f32.gmra.mrb[0].mxu0 %v5116
      %v5279 = vpop.f32.mrb[0].mxu0
      %v5280 = vadd.f32 0.0, %v5279
      %v5281 = vpop.f32.mrb[0].mxu0
      %5282 = vmatprep.mubr.f32.mxu0 0.0
      %5283 = vmatmul.mubr.f32.gmra.mrb[0].mxu0 %v5119
      %v5284 = vpop.f32.mrb[0].mxu0
      %v5285 = vadd.f32 0.0, %v5284
      %v5286 = vpop.f32.mrb[0].mxu0
      %5287 = vmatprep.mubr.f32.mxu0 0.0
      %5288 = vmatmul.mubr.f32.gmra.mrb[0].mxu0 %v5122
      %v5289 = vpop.f32.mrb[0].mxu0
      %v5290 = vadd.f32 0.0, %v5289
      %v5291 = vpop.f32.mrb[0].mxu0
      %5292 = vmatprep.mubr.f32.mxu0 0.0
      %5293 = vmatmul.mubr.f32.gmra.mrb[0].mxu0 %v5125
      %v5294 = vpop.f32.mrb[0].mxu0
      %v5295 = vadd.f32 0.0, %v5294
      %v5296 = vpop.f32.mrb[0].mxu0
      %5297 = vmatprep.mubr.f32.mxu0 0.0
      %5298 = vmatmul.mubr.f32.gmra.mrb[0].mxu0 %v5128
      %v5299 = vpop.f32.mrb[0].mxu0
      %v5300 = vadd.f32 0.0, %v5299
      %v5301 = vpop.f32.mrb[0].mxu0
      %5302 = vmatprep.mubr.f32.mxu0 0.0
      %5303 = vmatmul.mubr.f32.gmra.mrb[0].mxu0 %v5131
      %v5304 = vpop.f32.mrb[0].mxu0
      %v5305 = vadd.f32 0.0, %v5304
      %v5306 = vpop.f32.mrb[0].mxu0
      %5307 = vmatprep.mubr.f32.mxu0 0.0
      %5308 = vmatmul.mubr.f32.gmra.mrb[0].mxu0 %v5134
      %v5309 = vpop.f32.mrb[0].mxu0
      %v5310 = vadd.f32 0.0, %v5309
      %v5311 = vpop.f32.mrb[0].mxu0
      %5312 = vmatprep.mubr.f32.mxu0 0.0
      %5313 = vmatmul.mubr.f32.gmra.mrb[0].mxu0 %v5137
      %v5314 = vpop.f32.mrb[0].mxu0
      %v5315 = vadd.f32 0.0, %v5314
      %v5316 = vpop.f32.mrb[0].mxu0
      %5317 = vmatprep.mubr.f32.mxu0 0.0
      %5318 = vmatmul.mubr.f32.gmra.mrb[0].mxu0 %v5140
      %v5319 = vpop.f32.mrb[0].mxu0
      %v5320 = vadd.f32 0.0, %v5319
      %v5321 = vpop.f32.mrb[0].mxu0
      %5322 = vmatprep.mubr.f32.mxu0 0.0
      %5323 = vmatmul.mubr.f32.gmra.mrb[0].mxu0 %v5143
      %v5324 = vpop.f32.mrb[0].mxu0
      %v5325 = vadd.f32 0.0, %v5324
      %v5326 = vpop.f32.mrb[0].mxu0
      %5327 = vmatprep.mubr.f32.mxu0 0.0
      %5328 = vmatmul.mubr.f32.gmra.mrb[0].mxu0 %v5146
      %v5329 = vpop.f32.mrb[0].mxu0
      %v5330 = vadd.f32 0.0, %v5329
      %v5331 = vpop.f32.mrb[0].mxu0
      %5332 = vmatprep.mubr.f32.mxu0 0.0
      %5333 = vmatmul.mubr.f32.gmra.mrb[0].mxu0 %v5149
      %v5334 = vpop.f32.mrb[0].mxu0
      %v5335 = vadd.f32 0.0, %v5334
      %v5336 = vpop.f32.mrb[0].mxu0
      %5337 = vmatprep.mubr.f32.mxu0 0.0
      %5338 = vmatmul.mubr.f32.gmra.mrb[0].mxu0 %v5152
      %v5339 = vpop.f32.mrb[0].mxu0
      %v5340 = vadd.f32 0.0, %v5339
      %v5341 = vpop.f32.mrb[0].mxu0
      %5342 = vmatprep.mubr.f32.mxu0 0.0
      %5343 = vmatmul.mubr.f32.gmra.mrb[0].mxu0 %v5155
      %v5344 = vpop.f32.mrb[0].mxu0
      %v5345 = vadd.f32 0.0, %v5344
      %v5346 = vpop.f32.mrb[0].mxu0
      %5347 = vmatprep.mubr.f32.mxu0 0.0
      %5348 = vmatmul.mubr.f32.gmra.mrb[0].mxu0 %v5158
      %v5349 = vpop.f32.mrb[0].mxu0
      %v5350 = vadd.f32 0.0, %v5349
      %v5351 = vpop.f32.mrb[0].mxu0
      %5352 = vmatprep.mubr.f32.mxu0 0.0
      %5353 = vmatmul.mubr.f32.gmra.mrb[0].mxu0 %v5161
      %v5354 = vpop.f32.mrb[0].mxu0
      %v5355 = vadd.f32 0.0, %v5354
      %v5356 = vpop.f32.mrb[0].mxu0
      %5357 = vmatprep.mubr.f32.mxu0 0.0
      %5358 = vmatmul.mubr.f32.gmra.mrb[0].mxu0 %v5164
      %v5359 = vpop.f32.mrb[0].mxu0
      %v5360 = vadd.f32 0.0, %v5359
      %v5361 = vpop.f32.mrb[0].mxu0
      %5362 = vmatprep.mubr.f32.mxu0 0.0
      %5363 = vmatmul.mubr.f32.gmra.mrb[0].mxu0 %v5167
      %v5364 = vpop.f32.mrb[0].mxu0
      %v5365 = vadd.f32 0.0, %v5364
      %v5366 = vpop.f32.mrb[0].mxu0
      %5367 = vmatprep.mubr.f32.mxu0 0.0
      %5368 = vmatmul.mubr.f32.gmra.mrb[0].mxu0 %v5170
      %v5369 = vpop.f32.mrb[0].mxu0
      %v5370 = vadd.f32 0.0, %v5369
      %v5371 = vpop.f32.mrb[0].mxu0
      %5372 = vmatprep.mubr.f32.mxu0 0.0
      %5373 = vmatmul.mubr.f32.gmra.mrb[0].mxu0 %v5173
      %v5374 = vpop.f32.mrb[0].mxu0
      %v5375 = vadd.f32 0.0, %v5374
      %v5376 = vpop.f32.mrb[0].mxu0
      %5377 = vmatprep.mubr.f32.mxu0 0.0
      %5378 = vmatmul.mubr.f32.gmra.mrb[0].mxu0 %v5176
      %v5379 = vpop.f32.mrb[0].mxu0
      %v5380 = vadd.f32 0.0, %v5379
      %v5381 = vpop.f32.mrb[0].mxu0
      %5382 = vmatprep.mubr.f32.mxu0 0.0
      %5383 = vmatmul.mubr.f32.gmra.mrb[0].mxu0 %v5179
      %v5384 = vpop.f32.mrb[0].mxu0
      %v5385 = vadd.f32 0.0, %v5384
      %v5386 = vpop.f32.mrb[0].mxu0
      %5387 = vmatprep.mubr.f32.mxu0 0.0
      %5388 = vmatmul.mubr.f32.gmra.mrb[0].mxu0 %v5182
      %v5389 = vpop.f32.mrb[0].mxu0
      %v5390 = vadd.f32 0.0, %v5389
      %v5391 = vpop.f32.mrb[0].mxu0
      %5392 = vmatprep.mubr.f32.mxu0 0.0
      %5393 = vmatmul.mubr.f32.gmra.mrb[0].mxu0 %v5185
      %v5394 = vpop.f32.mrb[0].mxu0
      %v5395 = vadd.f32 0.0, %v5394
      %v5396 = vpop.f32.mrb[0].mxu0
      %5397 = vmatprep.mubr.f32.mxu0 0.0
      %5398 = vmatmul.mubr.f32.gmra.mrb[0].mxu0 %v5188
      %v5399 = vpop.f32.mrb[0].mxu0
      %v5400 = vadd.f32 0.0, %v5399
      %v5401 = vpop.f32.mrb[0].mxu0
      %5402 = vmatprep.mubr.f32.mxu0 0.0
      %5403 = vmatmul.mubr.f32.gmra.mrb[0].mxu0 %v5191
      %v5404 = vpop.f32.mrb[0].mxu0
      %v5405 = vadd.f32 0.0, %v5404
      %v5406 = vpop.f32.mrb[0].mxu0
      %5407 = vmatprep.mubr.f32.mxu0 0.0
      %5408 = vmatmul.mubr.f32.gmra.mrb[0].mxu0 %v5194
      %v5409 = vpop.f32.mrb[0].mxu0
      %v5410 = vadd.f32 0.0, %v5409
      %v5411 = vpop.f32.mrb[0].mxu0
      %5412 = vmatprep.mubr.f32.mxu0 0.0
      %5413 = vmatmul.mubr.f32.gmra.mrb[0].mxu0 %v5197
      %v5414 = vpop.f32.mrb[0].mxu0
      %v5415 = vadd.f32 0.0, %v5414
      %v5416 = vpop.f32.mrb[0].mxu0
      %5417 = vmatprep.mubr.f32.mxu0 0.0
      %5418 = vmatmul.mubr.f32.gmra.mrb[0].mxu0 %v5200
      %v5419 = vpop.f32.mrb[0].mxu0
      %v5420 = vadd.f32 0.0, %v5419
      %v5421 = vpop.f32.mrb[0].mxu0
      %5422 = vmatprep.mubr.f32.mxu0 0.0
      %5423 = vmatmul.mubr.f32.gmra.mrb[0].mxu0 %v5203
      %v5424 = vpop.f32.mrb[0].mxu0
      %v5425 = vadd.f32 0.0, %v5424
      %v5426 = vpop.f32.mrb[0].mxu0
      %5427 = vmatprep.mubr.f32.mxu0 0.0
      %5428 = vmatmul.mubr.f32.gmra.mrb[0].mxu0 %v5206
      %v5429 = vpop.f32.mrb[0].mxu0
      %v5430 = vadd.f32 0.0, %v5429
      %v5431 = vpop.f32.mrb[0].mxu0
      %5432 = vdwg.mxu0
      %v5433 = vadd.f32 %v5039, %v5275
      %v5434 = vadd.f32 %v5040, %v5280
      %v5435 = vadd.f32 %v5041, %v5285
      %v5436 = vadd.f32 %v5042, %v5290
      %v5437 = vadd.f32 %v5043, %v5295
      %v5438 = vadd.f32 %v5044, %v5300
      %v5439 = vadd.f32 %v5045, %v5305
      %v5440 = vadd.f32 %v5046, %v5310
      %v5441 = vadd.f32 %v5047, %v5315
      %v5442 = vadd.f32 %v5048, %v5320
      %v5443 = vadd.f32 %v5049, %v5325
      %v5444 = vadd.f32 %v5050, %v5330
      %v5445 = vadd.f32 %v5051, %v5335
      %v5446 = vadd.f32 %v5052, %v5340
      %v5447 = vadd.f32 %v5053, %v5345
      %v5448 = vadd.f32 %v5054, %v5350
      %v5449 = vadd.f32 %v5055, %v5355
      %v5450 = vadd.f32 %v5056, %v5360
      %v5451 = vadd.f32 %v5057, %v5365
      %v5452 = vadd.f32 %v5058, %v5370
      %v5453 = vadd.f32 %v5059, %v5375
      %v5454 = vadd.f32 %v5060, %v5380
      %v5455 = vadd.f32 %v5061, %v5385
      %v5456 = vadd.f32 %v5062, %v5390
      %v5457 = vadd.f32 %v5063, %v5395
      %v5458 = vadd.f32 %v5064, %v5400
      %v5459 = vadd.f32 %v5065, %v5405
      %v5460 = vadd.f32 %v5066, %v5410
      %v5461 = vadd.f32 %v5067, %v5415
      %v5462 = vadd.f32 %v5068, %v5420
      %v5463 = vadd.f32 %v5069, %v5425
      %v5464 = vadd.f32 %v5070, %v5430
      %v5465 = vld [vmem:[%s3920 + $0x1] sm:$0xff]
      %v5466 = vld [vmem:[%s3920 + $0x9] sm:$0xff]
      %v5467 = vld [vmem:[%s3920 + $0x19] sm:$0xff]
      %v5468 = vld [vmem:[%s3920 + $0x21] sm:$0xff]
      %v5469 = vld [vmem:[%s3920 + $0x31] sm:$0xff]
      %v5470 = vld [vmem:[%s3920 + $0x39] sm:$0xff]
      %v5471 = vld [vmem:[%s3920 + $0x49] sm:$0xff]
      %v5472 = vld [vmem:[%s3920 + $0x51] sm:$0xff]
      %v5473 = vld [vmem:[%s3920 + $0x61] sm:$0xff]
      %v5474 = vld [vmem:[%s3920 + $0x69] sm:$0xff]
      %v5475 = vld [vmem:[%s3920 + $0x79] sm:$0xff]
      %v5476 = vld [vmem:[%s3920 + $0x81] sm:$0xff]
      %v5477 = vld [vmem:[%s3920 + $0x91] sm:$0xff]
      %v5478 = vld [vmem:[%s3920 + $0x99] sm:$0xff]
      %v5479 = vld [vmem:[%s3920 + $0xa9] sm:$0xff]
      %v5480 = vld [vmem:[%s3920 + $0xb1] sm:$0xff]
      %v5481 = vld [vmem:[%s3920 + $0xc1] sm:$0xff]
      %v5482 = vld [vmem:[%s3920 + $0xc9] sm:$0xff]
      %v5483 = vld [vmem:[%s3920 + $0xd9] sm:$0xff]
      %v5484 = vld [vmem:[%s3920 + $0xe1] sm:$0xff]
      %v5485 = vld [vmem:[%s3920 + $0xf1] sm:$0xff]
      %v5486 = vld [vmem:[%s3920 + $0xf9] sm:$0xff]
      %v5487 = vld [vmem:[%s3920 + $0x109] sm:$0xff]
      %v5488 = vld [vmem:[%s3920 + $0x111] sm:$0xff]
      %v5489 = vld [vmem:[%s3920 + $0x121] sm:$0xff]
      %v5490 = vld [vmem:[%s3920 + $0x129] sm:$0xff]
      %v5491 = vld [vmem:[%s3920 + $0x139] sm:$0xff]
      %v5492 = vld [vmem:[%s3920 + $0x141] sm:$0xff]
      %v5493 = vld [vmem:[%s3920 + $0x151] sm:$0xff]
      %v5494 = vld [vmem:[%s3920 + $0x159] sm:$0xff]
      %v5495 = vld [vmem:[%s3920 + $0x169] sm:$0xff]
      %v5496 = vld [vmem:[%s3920 + $0x171] sm:$0xff]
      %s5497 = scalar_lea.vmem %s3, 256
      %v5498 = vld [vmem:[%s5497] sm:$0xff]
      %v5499 = vld [vmem:[%s5497 + $0x8] sm:$0xff]
      %v5500 = vld [vmem:[%s5497 + $0x10] sm:$0xff]
      %v5501 = vld [vmem:[%s5497 + $0x18] sm:$0xff]
      %v5502 = vld [vmem:[%s5497 + $0x20] sm:$0xff]
      %v5503 = vld [vmem:[%s5497 + $0x28] sm:$0xff]
      %v5504 = vld [vmem:[%s5497 + $0x30] sm:$0xff]
      %v5505 = vld [vmem:[%s5497 + $0x38] sm:$0xff]
      %v5507 = vsel %vm3864, %v5465, 0
      %v5510 = vsel %vm3864, %v5466, 0
      %v5513 = vsel %vm3864, %v5467, 0
      %v5516 = vsel %vm3864, %v5468, 0
      %v5519 = vsel %vm3864, %v5469, 0
      %v5522 = vsel %vm3864, %v5470, 0
      %v5525 = vsel %vm3864, %v5471, 0
      %v5528 = vsel %vm3864, %v5472, 0
      %v5531 = vsel %vm3864, %v5473, 0
      %v5534 = vsel %vm3864, %v5474, 0
      %v5537 = vsel %vm3864, %v5475, 0
      %v5540 = vsel %vm3864, %v5476, 0
      %v5543 = vsel %vm3864, %v5477, 0
      %v5546 = vsel %vm3864, %v5478, 0
      %v5549 = vsel %vm3864, %v5479, 0
      %v5552 = vsel %vm3864, %v5480, 0
      %v5555 = vsel %vm3864, %v5481, 0
      %v5558 = vsel %vm3864, %v5482, 0
      %v5561 = vsel %vm3864, %v5483, 0
      %v5564 = vsel %vm3864, %v5484, 0
      %v5567 = vsel %vm3864, %v5485, 0
      %v5570 = vsel %vm3864, %v5486, 0
      %v5573 = vsel %vm3864, %v5487, 0
      %v5576 = vsel %vm3864, %v5488, 0
      %v5579 = vsel %vm3864, %v5489, 0
      %v5582 = vsel %vm3864, %v5490, 0
      %v5585 = vsel %vm3864, %v5491, 0
      %v5588 = vsel %vm3864, %v5492, 0
      %v5591 = vsel %vm3864, %v5493, 0
      %v5594 = vsel %vm3864, %v5494, 0
      %v5597 = vsel %vm3864, %v5495, 0
      %v5600 = vsel %vm3864, %v5496, 0
      %5602 = vmatprep.subr.mxu0 0.0
      %5603 = vmatpush1.msra.mxu0 %v5498
      %5604 = vmatprep.subr.mxu0 0.0
      %5605 = vmatpush1.msra.mxu0 %v5499
      %5606 = vmatprep.subr.mxu0 0.0
      %5607 = vmatpush1.msra.mxu0 %v5500
      %5608 = vmatprep.subr.mxu0 0.0
      %5609 = vmatpush1.msra.mxu0 %v5501
      %5610 = vmatprep.subr.mxu0 0.0
      %5611 = vmatpush1.msra.mxu0 %v5502
      %5612 = vmatprep.subr.mxu0 0.0
      %5613 = vmatpush1.msra.mxu0 %v5503
      %5614 = vmatprep.subr.mxu0 0.0
      %5615 = vmatpush1.msra.mxu0 %v5504
      %5616 = vmatprep.subr.mxu0 0.0
      %5617 = vmatpush1.msra.mxu0 %v5505
      %5618 = vmatprep.subr.mxu0 0.0
      %5619 = vmatpush1.msra.mxu0 0.0
      %5620 = vmatprep.subr.mxu0 0.0
      %5621 = vmatpush1.msra.mxu0 0.0
      %5622 = vmatprep.subr.mxu0 0.0
      %5623 = vmatpush1.msra.mxu0 0.0
      %5624 = vmatprep.subr.mxu0 0.0
      %5625 = vmatpush1.msra.mxu0 0.0
      %5626 = vmatprep.subr.mxu0 0.0
      %5627 = vmatpush1.msra.mxu0 0.0
      %5628 = vmatprep.subr.mxu0 0.0
      %5629 = vmatpush1.msra.mxu0 0.0
      %5630 = vmatprep.subr.mxu0 0.0
      %5631 = vmatpush1.msra.mxu0 0.0
      %5632 = vmatprep.subr.mxu0 0.0
      %5633 = vmatpush1.msra.mxu0 0.0
      %5634 = vmatprep.subr.mxu0 0.0
      %5635 = vmatpush1.msra.mxu0 0.0
      %5636 = vmatprep.subr.mxu0 0.0
      %5637 = vmatpush1.msra.mxu0 0.0
      %5638 = vmatprep.subr.mxu0 0.0
      %5639 = vmatpush1.msra.mxu0 0.0
      %5640 = vmatprep.subr.mxu0 0.0
      %5641 = vmatpush1.msra.mxu0 0.0
      %5642 = vmatprep.subr.mxu0 0.0
      %5643 = vmatpush1.msra.mxu0 0.0
      %5644 = vmatprep.subr.mxu0 0.0
      %5645 = vmatpush1.msra.mxu0 0.0
      %5646 = vmatprep.subr.mxu0 0.0
      %5647 = vmatpush1.msra.mxu0 0.0
      %5648 = vmatprep.subr.mxu0 0.0
      %5649 = vmatpush1.msra.mxu0 0.0
      %5650 = vmatprep.subr.mxu0 0.0
      %5651 = vmatpush1.msra.mxu0 0.0
      %5652 = vmatprep.subr.mxu0 0.0
      %5653 = vmatpush1.msra.mxu0 0.0
      %5654 = vmatprep.subr.mxu0 0.0
      %5655 = vmatpush1.msra.mxu0 0.0
      %5656 = vmatprep.subr.mxu0 0.0
      %5657 = vmatpush1.msra.mxu0 0.0
      %5658 = vmatprep.subr.mxu0 0.0
      %5659 = vmatpush1.msra.mxu0 0.0
      %5660 = vmatprep.subr.mxu0 0.0
      %5661 = vmatpush1.msra.mxu0 0.0
      %5662 = vmatprep.subr.mxu0 0.0
      %5663 = vmatpush1.msra.mxu0 0.0
      %5664 = vmatprep.subr.mxu0 0.0
      %5665 = vmatpush1.msra.mxu0 0.0
      %5666 = vmatprep.mubr.f32.mxu0 0.0
      %5667 = vmatmul.mubr.f32.gmra.mrb[0].mxu0 %v5507
      %v5668 = vpop.f32.mrb[0].mxu0
      %v5669 = vadd.f32 0.0, %v5668
      %v5670 = vpop.f32.mrb[0].mxu0
      %5671 = vmatprep.mubr.f32.mxu0 0.0
      %5672 = vmatmul.mubr.f32.gmra.mrb[0].mxu0 %v5510
      %v5673 = vpop.f32.mrb[0].mxu0
      %v5674 = vadd.f32 0.0, %v5673
      %v5675 = vpop.f32.mrb[0].mxu0
      %5676 = vmatprep.mubr.f32.mxu0 0.0
      %5677 = vmatmul.mubr.f32.gmra.mrb[0].mxu0 %v5513
      %v5678 = vpop.f32.mrb[0].mxu0
      %v5679 = vadd.f32 0.0, %v5678
      %v5680 = vpop.f32.mrb[0].mxu0
      %5681 = vmatprep.mubr.f32.mxu0 0.0
      %5682 = vmatmul.mubr.f32.gmra.mrb[0].mxu0 %v5516
      %v5683 = vpop.f32.mrb[0].mxu0
      %v5684 = vadd.f32 0.0, %v5683
      %v5685 = vpop.f32.mrb[0].mxu0
      %5686 = vmatprep.mubr.f32.mxu0 0.0
      %5687 = vmatmul.mubr.f32.gmra.mrb[0].mxu0 %v5519
      %v5688 = vpop.f32.mrb[0].mxu0
      %v5689 = vadd.f32 0.0, %v5688
      %v5690 = vpop.f32.mrb[0].mxu0
      %5691 = vmatprep.mubr.f32.mxu0 0.0
      %5692 = vmatmul.mubr.f32.gmra.mrb[0].mxu0 %v5522
      %v5693 = vpop.f32.mrb[0].mxu0
      %v5694 = vadd.f32 0.0, %v5693
      %v5695 = vpop.f32.mrb[0].mxu0
      %5696 = vmatprep.mubr.f32.mxu0 0.0
      %5697 = vmatmul.mubr.f32.gmra.mrb[0].mxu0 %v5525
      %v5698 = vpop.f32.mrb[0].mxu0
      %v5699 = vadd.f32 0.0, %v5698
      %v5700 = vpop.f32.mrb[0].mxu0
      %5701 = vmatprep.mubr.f32.mxu0 0.0
      %5702 = vmatmul.mubr.f32.gmra.mrb[0].mxu0 %v5528
      %v5703 = vpop.f32.mrb[0].mxu0
      %v5704 = vadd.f32 0.0, %v5703
      %v5705 = vpop.f32.mrb[0].mxu0
      %5706 = vmatprep.mubr.f32.mxu0 0.0
      %5707 = vmatmul.mubr.f32.gmra.mrb[0].mxu0 %v5531
      %v5708 = vpop.f32.mrb[0].mxu0
      %v5709 = vadd.f32 0.0, %v5708
      %v5710 = vpop.f32.mrb[0].mxu0
      %5711 = vmatprep.mubr.f32.mxu0 0.0
      %5712 = vmatmul.mubr.f32.gmra.mrb[0].mxu0 %v5534
      %v5713 = vpop.f32.mrb[0].mxu0
      %v5714 = vadd.f32 0.0, %v5713
      %v5715 = vpop.f32.mrb[0].mxu0
      %5716 = vmatprep.mubr.f32.mxu0 0.0
      %5717 = vmatmul.mubr.f32.gmra.mrb[0].mxu0 %v5537
      %v5718 = vpop.f32.mrb[0].mxu0
      %v5719 = vadd.f32 0.0, %v5718
      %v5720 = vpop.f32.mrb[0].mxu0
      %5721 = vmatprep.mubr.f32.mxu0 0.0
      %5722 = vmatmul.mubr.f32.gmra.mrb[0].mxu0 %v5540
      %v5723 = vpop.f32.mrb[0].mxu0
      %v5724 = vadd.f32 0.0, %v5723
      %v5725 = vpop.f32.mrb[0].mxu0
      %5726 = vmatprep.mubr.f32.mxu0 0.0
      %5727 = vmatmul.mubr.f32.gmra.mrb[0].mxu0 %v5543
      %v5728 = vpop.f32.mrb[0].mxu0
      %v5729 = vadd.f32 0.0, %v5728
      %v5730 = vpop.f32.mrb[0].mxu0
      %5731 = vmatprep.mubr.f32.mxu0 0.0
      %5732 = vmatmul.mubr.f32.gmra.mrb[0].mxu0 %v5546
      %v5733 = vpop.f32.mrb[0].mxu0
      %v5734 = vadd.f32 0.0, %v5733
      %v5735 = vpop.f32.mrb[0].mxu0
      %5736 = vmatprep.mubr.f32.mxu0 0.0
      %5737 = vmatmul.mubr.f32.gmra.mrb[0].mxu0 %v5549
      %v5738 = vpop.f32.mrb[0].mxu0
      %v5739 = vadd.f32 0.0, %v5738
      %v5740 = vpop.f32.mrb[0].mxu0
      %5741 = vmatprep.mubr.f32.mxu0 0.0
      %5742 = vmatmul.mubr.f32.gmra.mrb[0].mxu0 %v5552
      %v5743 = vpop.f32.mrb[0].mxu0
      %v5744 = vadd.f32 0.0, %v5743
      %v5745 = vpop.f32.mrb[0].mxu0
      %5746 = vmatprep.mubr.f32.mxu0 0.0
      %5747 = vmatmul.mubr.f32.gmra.mrb[0].mxu0 %v5555
      %v5748 = vpop.f32.mrb[0].mxu0
      %v5749 = vadd.f32 0.0, %v5748
      %v5750 = vpop.f32.mrb[0].mxu0
      %5751 = vmatprep.mubr.f32.mxu0 0.0
      %5752 = vmatmul.mubr.f32.gmra.mrb[0].mxu0 %v5558
      %v5753 = vpop.f32.mrb[0].mxu0
      %v5754 = vadd.f32 0.0, %v5753
      %v5755 = vpop.f32.mrb[0].mxu0
      %5756 = vmatprep.mubr.f32.mxu0 0.0
      %5757 = vmatmul.mubr.f32.gmra.mrb[0].mxu0 %v5561
      %v5758 = vpop.f32.mrb[0].mxu0
      %v5759 = vadd.f32 0.0, %v5758
      %v5760 = vpop.f32.mrb[0].mxu0
      %5761 = vmatprep.mubr.f32.mxu0 0.0
      %5762 = vmatmul.mubr.f32.gmra.mrb[0].mxu0 %v5564
      %v5763 = vpop.f32.mrb[0].mxu0
      %v5764 = vadd.f32 0.0, %v5763
      %v5765 = vpop.f32.mrb[0].mxu0
      %5766 = vmatprep.mubr.f32.mxu0 0.0
      %5767 = vmatmul.mubr.f32.gmra.mrb[0].mxu0 %v5567
      %v5768 = vpop.f32.mrb[0].mxu0
      %v5769 = vadd.f32 0.0, %v5768
      %v5770 = vpop.f32.mrb[0].mxu0
      %5771 = vmatprep.mubr.f32.mxu0 0.0
      %5772 = vmatmul.mubr.f32.gmra.mrb[0].mxu0 %v5570
      %v5773 = vpop.f32.mrb[0].mxu0
      %v5774 = vadd.f32 0.0, %v5773
      %v5775 = vpop.f32.mrb[0].mxu0
      %5776 = vmatprep.mubr.f32.mxu0 0.0
      %5777 = vmatmul.mubr.f32.gmra.mrb[0].mxu0 %v5573
      %v5778 = vpop.f32.mrb[0].mxu0
      %v5779 = vadd.f32 0.0, %v5778
      %v5780 = vpop.f32.mrb[0].mxu0
      %5781 = vmatprep.mubr.f32.mxu0 0.0
      %5782 = vmatmul.mubr.f32.gmra.mrb[0].mxu0 %v5576
      %v5783 = vpop.f32.mrb[0].mxu0
      %v5784 = vadd.f32 0.0, %v5783
      %v5785 = vpop.f32.mrb[0].mxu0
      %5786 = vmatprep.mubr.f32.mxu0 0.0
      %5787 = vmatmul.mubr.f32.gmra.mrb[0].mxu0 %v5579
      %v5788 = vpop.f32.mrb[0].mxu0
      %v5789 = vadd.f32 0.0, %v5788
      %v5790 = vpop.f32.mrb[0].mxu0
      %5791 = vmatprep.mubr.f32.mxu0 0.0
      %5792 = vmatmul.mubr.f32.gmra.mrb[0].mxu0 %v5582
      %v5793 = vpop.f32.mrb[0].mxu0
      %v5794 = vadd.f32 0.0, %v5793
      %v5795 = vpop.f32.mrb[0].mxu0
      %5796 = vmatprep.mubr.f32.mxu0 0.0
      %5797 = vmatmul.mubr.f32.gmra.mrb[0].mxu0 %v5585
      %v5798 = vpop.f32.mrb[0].mxu0
      %v5799 = vadd.f32 0.0, %v5798
      %v5800 = vpop.f32.mrb[0].mxu0
      %5801 = vmatprep.mubr.f32.mxu0 0.0
      %5802 = vmatmul.mubr.f32.gmra.mrb[0].mxu0 %v5588
      %v5803 = vpop.f32.mrb[0].mxu0
      %v5804 = vadd.f32 0.0, %v5803
      %v5805 = vpop.f32.mrb[0].mxu0
      %5806 = vmatprep.mubr.f32.mxu0 0.0
      %5807 = vmatmul.mubr.f32.gmra.mrb[0].mxu0 %v5591
      %v5808 = vpop.f32.mrb[0].mxu0
      %v5809 = vadd.f32 0.0, %v5808
      %v5810 = vpop.f32.mrb[0].mxu0
      %5811 = vmatprep.mubr.f32.mxu0 0.0
      %5812 = vmatmul.mubr.f32.gmra.mrb[0].mxu0 %v5594
      %v5813 = vpop.f32.mrb[0].mxu0
      %v5814 = vadd.f32 0.0, %v5813
      %v5815 = vpop.f32.mrb[0].mxu0
      %5816 = vmatprep.mubr.f32.mxu0 0.0
      %5817 = vmatmul.mubr.f32.gmra.mrb[0].mxu0 %v5597
      %v5818 = vpop.f32.mrb[0].mxu0
      %v5819 = vadd.f32 0.0, %v5818
      %v5820 = vpop.f32.mrb[0].mxu0
      %5821 = vmatprep.mubr.f32.mxu0 0.0
      %5822 = vmatmul.mubr.f32.gmra.mrb[0].mxu0 %v5600
      %v5823 = vpop.f32.mrb[0].mxu0
      %v5824 = vadd.f32 0.0, %v5823
      %v5825 = vpop.f32.mrb[0].mxu0
      %5826 = vdwg.mxu0
      %v5827 = vadd.f32 %v5433, %v5669
      %v5828 = vadd.f32 %v5434, %v5674
      %v5829 = vadd.f32 %v5435, %v5679
      %v5830 = vadd.f32 %v5436, %v5684
      %v5831 = vadd.f32 %v5437, %v5689
      %v5832 = vadd.f32 %v5438, %v5694
      %v5833 = vadd.f32 %v5439, %v5699
      %v5834 = vadd.f32 %v5440, %v5704
      %v5835 = vadd.f32 %v5441, %v5709
      %v5836 = vadd.f32 %v5442, %v5714
      %v5837 = vadd.f32 %v5443, %v5719
      %v5838 = vadd.f32 %v5444, %v5724
      %v5839 = vadd.f32 %v5445, %v5729
      %v5840 = vadd.f32 %v5446, %v5734
      %v5841 = vadd.f32 %v5447, %v5739
      %v5842 = vadd.f32 %v5448, %v5744
      %v5843 = vadd.f32 %v5449, %v5749
      %v5844 = vadd.f32 %v5450, %v5754
      %v5845 = vadd.f32 %v5451, %v5759
      %v5846 = vadd.f32 %v5452, %v5764
      %v5847 = vadd.f32 %v5453, %v5769
      %v5848 = vadd.f32 %v5454, %v5774
      %v5849 = vadd.f32 %v5455, %v5779
      %v5850 = vadd.f32 %v5456, %v5784
      %v5851 = vadd.f32 %v5457, %v5789
      %v5852 = vadd.f32 %v5458, %v5794
      %v5853 = vadd.f32 %v5459, %v5799
      %v5854 = vadd.f32 %v5460, %v5804
      %v5855 = vadd.f32 %v5461, %v5809
      %v5856 = vadd.f32 %v5462, %v5814
      %v5857 = vadd.f32 %v5463, %v5819
      %v5858 = vadd.f32 %v5464, %v5824
      %v5859 = vld [vmem:[%s3920 + $0x2] sm:$0xff]
      %v5860 = vld [vmem:[%s3920 + $0xa] sm:$0xff]
      %v5861 = vld [vmem:[%s3920 + $0x1a] sm:$0xff]
      %v5862 = vld [vmem:[%s3920 + $0x22] sm:$0xff]
      %v5863 = vld [vmem:[%s3920 + $0x32] sm:$0xff]
      %v5864 = vld [vmem:[%s3920 + $0x3a] sm:$0xff]
      %v5865 = vld [vmem:[%s3920 + $0x4a] sm:$0xff]
      %v5866 = vld [vmem:[%s3920 + $0x52] sm:$0xff]
      %v5867 = vld [vmem:[%s3920 + $0x62] sm:$0xff]
      %v5868 = vld [vmem:[%s3920 + $0x6a] sm:$0xff]
      %v5869 = vld [vmem:[%s3920 + $0x7a] sm:$0xff]
      %v5870 = vld [vmem:[%s3920 + $0x82] sm:$0xff]
      %v5871 = vld [vmem:[%s3920 + $0x92] sm:$0xff]
      %v5872 = vld [vmem:[%s3920 + $0x9a] sm:$0xff]
      %v5873 = vld [vmem:[%s3920 + $0xaa] sm:$0xff]
      %v5874 = vld [vmem:[%s3920 + $0xb2] sm:$0xff]
      %v5875 = vld [vmem:[%s3920 + $0xc2] sm:$0xff]
      %v5876 = vld [vmem:[%s3920 + $0xca] sm:$0xff]
      %v5877 = vld [vmem:[%s3920 + $0xda] sm:$0xff]
      %v5878 = vld [vmem:[%s3920 + $0xe2] sm:$0xff]
      %v5879 = vld [vmem:[%s3920 + $0xf2] sm:$0xff]
      %v5880 = vld [vmem:[%s3920 + $0xfa] sm:$0xff]
      %v5881 = vld [vmem:[%s3920 + $0x10a] sm:$0xff]
      %v5882 = vld [vmem:[%s3920 + $0x112] sm:$0xff]
      %v5883 = vld [vmem:[%s3920 + $0x122] sm:$0xff]
      %v5884 = vld [vmem:[%s3920 + $0x12a] sm:$0xff]
      %v5885 = vld [vmem:[%s3920 + $0x13a] sm:$0xff]
      %v5886 = vld [vmem:[%s3920 + $0x142] sm:$0xff]
      %v5887 = vld [vmem:[%s3920 + $0x152] sm:$0xff]
      %v5888 = vld [vmem:[%s3920 + $0x15a] sm:$0xff]
      %v5889 = vld [vmem:[%s3920 + $0x16a] sm:$0xff]
      %v5890 = vld [vmem:[%s3920 + $0x172] sm:$0xff]
      %s5891 = scalar_lea.vmem %s3, 320
      %v5892 = vld [vmem:[%s5891] sm:$0xff]
      %v5893 = vld [vmem:[%s5891 + $0x8] sm:$0xff]
      %v5894 = vld [vmem:[%s5891 + $0x10] sm:$0xff]
      %v5895 = vld [vmem:[%s5891 + $0x18] sm:$0xff]
      %v5896 = vld [vmem:[%s5891 + $0x20] sm:$0xff]
      %v5897 = vld [vmem:[%s5891 + $0x28] sm:$0xff]
      %v5898 = vld [vmem:[%s5891 + $0x30] sm:$0xff]
      %v5899 = vld [vmem:[%s5891 + $0x38] sm:$0xff]
      %v5901 = vsel %vm3864, %v5859, 0
      %v5904 = vsel %vm3864, %v5860, 0
      %v5907 = vsel %vm3864, %v5861, 0
      %v5910 = vsel %vm3864, %v5862, 0
      %v5913 = vsel %vm3864, %v5863, 0
      %v5916 = vsel %vm3864, %v5864, 0
      %v5919 = vsel %vm3864, %v5865, 0
      %v5922 = vsel %vm3864, %v5866, 0
      %v5925 = vsel %vm3864, %v5867, 0
      %v5928 = vsel %vm3864, %v5868, 0
      %v5931 = vsel %vm3864, %v5869, 0
      %v5934 = vsel %vm3864, %v5870, 0
      %v5937 = vsel %vm3864, %v5871, 0
      %v5940 = vsel %vm3864, %v5872, 0
      %v5943 = vsel %vm3864, %v5873, 0
      %v5946 = vsel %vm3864, %v5874, 0
      %v5949 = vsel %vm3864, %v5875, 0
      %v5952 = vsel %vm3864, %v5876, 0
      %v5955 = vsel %vm3864, %v5877, 0
      %v5958 = vsel %vm3864, %v5878, 0
      %v5961 = vsel %vm3864, %v5879, 0
      %v5964 = vsel %vm3864, %v5880, 0
      %v5967 = vsel %vm3864, %v5881, 0
      %v5970 = vsel %vm3864, %v5882, 0
      %v5973 = vsel %vm3864, %v5883, 0
      %v5976 = vsel %vm3864, %v5884, 0
      %v5979 = vsel %vm3864, %v5885, 0
      %v5982 = vsel %vm3864, %v5886, 0
      %v5985 = vsel %vm3864, %v5887, 0
      %v5988 = vsel %vm3864, %v5888, 0
      %v5991 = vsel %vm3864, %v5889, 0
      %v5994 = vsel %vm3864, %v5890, 0
      %5996 = vmatprep.subr.mxu0 0.0
      %5997 = vmatpush1.msra.mxu0 %v5892
      %5998 = vmatprep.subr.mxu0 0.0
      %5999 = vmatpush1.msra.mxu0 %v5893
      %6000 = vmatprep.subr.mxu0 0.0
      %6001 = vmatpush1.msra.mxu0 %v5894
      %6002 = vmatprep.subr.mxu0 0.0
      %6003 = vmatpush1.msra.mxu0 %v5895
      %6004 = vmatprep.subr.mxu0 0.0
      %6005 = vmatpush1.msra.mxu0 %v5896
      %6006 = vmatprep.subr.mxu0 0.0
      %6007 = vmatpush1.msra.mxu0 %v5897
      %6008 = vmatprep.subr.mxu0 0.0
      %6009 = vmatpush1.msra.mxu0 %v5898
      %6010 = vmatprep.subr.mxu0 0.0
      %6011 = vmatpush1.msra.mxu0 %v5899
      %6012 = vmatprep.subr.mxu0 0.0
      %6013 = vmatpush1.msra.mxu0 0.0
      %6014 = vmatprep.subr.mxu0 0.0
      %6015 = vmatpush1.msra.mxu0 0.0
      %6016 = vmatprep.subr.mxu0 0.0
      %6017 = vmatpush1.msra.mxu0 0.0
      %6018 = vmatprep.subr.mxu0 0.0
      %6019 = vmatpush1.msra.mxu0 0.0
      %6020 = vmatprep.subr.mxu0 0.0
      %6021 = vmatpush1.msra.mxu0 0.0
      %6022 = vmatprep.subr.mxu0 0.0
      %6023 = vmatpush1.msra.mxu0 0.0
      %6024 = vmatprep.subr.mxu0 0.0
      %6025 = vmatpush1.msra.mxu0 0.0
      %6026 = vmatprep.subr.mxu0 0.0
      %6027 = vmatpush1.msra.mxu0 0.0
      %6028 = vmatprep.subr.mxu0 0.0
      %6029 = vmatpush1.msra.mxu0 0.0
      %6030 = vmatprep.subr.mxu0 0.0
      %6031 = vmatpush1.msra.mxu0 0.0
      %6032 = vmatprep.subr.mxu0 0.0
      %6033 = vmatpush1.msra.mxu0 0.0
      %6034 = vmatprep.subr.mxu0 0.0
      %6035 = vmatpush1.msra.mxu0 0.0
      %6036 = vmatprep.subr.mxu0 0.0
      %6037 = vmatpush1.msra.mxu0 0.0
      %6038 = vmatprep.subr.mxu0 0.0
      %6039 = vmatpush1.msra.mxu0 0.0
      %6040 = vmatprep.subr.mxu0 0.0
      %6041 = vmatpush1.msra.mxu0 0.0
      %6042 = vmatprep.subr.mxu0 0.0
      %6043 = vmatpush1.msra.mxu0 0.0
      %6044 = vmatprep.subr.mxu0 0.0
      %6045 = vmatpush1.msra.mxu0 0.0
      %6046 = vmatprep.subr.mxu0 0.0
      %6047 = vmatpush1.msra.mxu0 0.0
      %6048 = vmatprep.subr.mxu0 0.0
      %6049 = vmatpush1.msra.mxu0 0.0
      %6050 = vmatprep.subr.mxu0 0.0
      %6051 = vmatpush1.msra.mxu0 0.0
      %6052 = vmatprep.subr.mxu0 0.0
      %6053 = vmatpush1.msra.mxu0 0.0
      %6054 = vmatprep.subr.mxu0 0.0
      %6055 = vmatpush1.msra.mxu0 0.0
      %6056 = vmatprep.subr.mxu0 0.0
      %6057 = vmatpush1.msra.mxu0 0.0
      %6058 = vmatprep.subr.mxu0 0.0
      %6059 = vmatpush1.msra.mxu0 0.0
      %6060 = vmatprep.mubr.f32.mxu0 0.0
      %6061 = vmatmul.mubr.f32.gmra.mrb[0].mxu0 %v5901
      %v6062 = vpop.f32.mrb[0].mxu0
      %v6063 = vadd.f32 0.0, %v6062
      %v6064 = vpop.f32.mrb[0].mxu0
      %6065 = vmatprep.mubr.f32.mxu0 0.0
      %6066 = vmatmul.mubr.f32.gmra.mrb[0].mxu0 %v5904
      %v6067 = vpop.f32.mrb[0].mxu0
      %v6068 = vadd.f32 0.0, %v6067
      %v6069 = vpop.f32.mrb[0].mxu0
      %6070 = vmatprep.mubr.f32.mxu0 0.0
      %6071 = vmatmul.mubr.f32.gmra.mrb[0].mxu0 %v5907
      %v6072 = vpop.f32.mrb[0].mxu0
      %v6073 = vadd.f32 0.0, %v6072
      %v6074 = vpop.f32.mrb[0].mxu0
      %6075 = vmatprep.mubr.f32.mxu0 0.0
      %6076 = vmatmul.mubr.f32.gmra.mrb[0].mxu0 %v5910
      %v6077 = vpop.f32.mrb[0].mxu0
      %v6078 = vadd.f32 0.0, %v6077
      %v6079 = vpop.f32.mrb[0].mxu0
      %6080 = vmatprep.mubr.f32.mxu0 0.0
      %6081 = vmatmul.mubr.f32.gmra.mrb[0].mxu0 %v5913
      %v6082 = vpop.f32.mrb[0].mxu0
      %v6083 = vadd.f32 0.0, %v6082
      %v6084 = vpop.f32.mrb[0].mxu0
      %6085 = vmatprep.mubr.f32.mxu0 0.0
      %6086 = vmatmul.mubr.f32.gmra.mrb[0].mxu0 %v5916
      %v6087 = vpop.f32.mrb[0].mxu0
      %v6088 = vadd.f32 0.0, %v6087
      %v6089 = vpop.f32.mrb[0].mxu0
      %6090 = vmatprep.mubr.f32.mxu0 0.0
      %6091 = vmatmul.mubr.f32.gmra.mrb[0].mxu0 %v5919
      %v6092 = vpop.f32.mrb[0].mxu0
      %v6093 = vadd.f32 0.0, %v6092
      %v6094 = vpop.f32.mrb[0].mxu0
      %6095 = vmatprep.mubr.f32.mxu0 0.0
      %6096 = vmatmul.mubr.f32.gmra.mrb[0].mxu0 %v5922
      %v6097 = vpop.f32.mrb[0].mxu0
      %v6098 = vadd.f32 0.0, %v6097
      %v6099 = vpop.f32.mrb[0].mxu0
      %6100 = vmatprep.mubr.f32.mxu0 0.0
      %6101 = vmatmul.mubr.f32.gmra.mrb[0].mxu0 %v5925
      %v6102 = vpop.f32.mrb[0].mxu0
      %v6103 = vadd.f32 0.0, %v6102
      %v6104 = vpop.f32.mrb[0].mxu0
      %6105 = vmatprep.mubr.f32.mxu0 0.0
      %6106 = vmatmul.mubr.f32.gmra.mrb[0].mxu0 %v5928
      %v6107 = vpop.f32.mrb[0].mxu0
      %v6108 = vadd.f32 0.0, %v6107
      %v6109 = vpop.f32.mrb[0].mxu0
      %6110 = vmatprep.mubr.f32.mxu0 0.0
      %6111 = vmatmul.mubr.f32.gmra.mrb[0].mxu0 %v5931
      %v6112 = vpop.f32.mrb[0].mxu0
      %v6113 = vadd.f32 0.0, %v6112
      %v6114 = vpop.f32.mrb[0].mxu0
      %6115 = vmatprep.mubr.f32.mxu0 0.0
      %6116 = vmatmul.mubr.f32.gmra.mrb[0].mxu0 %v5934
      %v6117 = vpop.f32.mrb[0].mxu0
      %v6118 = vadd.f32 0.0, %v6117
      %v6119 = vpop.f32.mrb[0].mxu0
      %6120 = vmatprep.mubr.f32.mxu0 0.0
      %6121 = vmatmul.mubr.f32.gmra.mrb[0].mxu0 %v5937
      %v6122 = vpop.f32.mrb[0].mxu0
      %v6123 = vadd.f32 0.0, %v6122
      %v6124 = vpop.f32.mrb[0].mxu0
      %6125 = vmatprep.mubr.f32.mxu0 0.0
      %6126 = vmatmul.mubr.f32.gmra.mrb[0].mxu0 %v5940
      %v6127 = vpop.f32.mrb[0].mxu0
      %v6128 = vadd.f32 0.0, %v6127
      %v6129 = vpop.f32.mrb[0].mxu0
      %6130 = vmatprep.mubr.f32.mxu0 0.0
      %6131 = vmatmul.mubr.f32.gmra.mrb[0].mxu0 %v5943
      %v6132 = vpop.f32.mrb[0].mxu0
      %v6133 = vadd.f32 0.0, %v6132
      %v6134 = vpop.f32.mrb[0].mxu0
      %6135 = vmatprep.mubr.f32.mxu0 0.0
      %6136 = vmatmul.mubr.f32.gmra.mrb[0].mxu0 %v5946
      %v6137 = vpop.f32.mrb[0].mxu0
      %v6138 = vadd.f32 0.0, %v6137
      %v6139 = vpop.f32.mrb[0].mxu0
      %6140 = vmatprep.mubr.f32.mxu0 0.0
      %6141 = vmatmul.mubr.f32.gmra.mrb[0].mxu0 %v5949
      %v6142 = vpop.f32.mrb[0].mxu0
      %v6143 = vadd.f32 0.0, %v6142
      %v6144 = vpop.f32.mrb[0].mxu0
      %6145 = vmatprep.mubr.f32.mxu0 0.0
      %6146 = vmatmul.mubr.f32.gmra.mrb[0].mxu0 %v5952
      %v6147 = vpop.f32.mrb[0].mxu0
      %v6148 = vadd.f32 0.0, %v6147
      %v6149 = vpop.f32.mrb[0].mxu0
      %6150 = vmatprep.mubr.f32.mxu0 0.0
      %6151 = vmatmul.mubr.f32.gmra.mrb[0].mxu0 %v5955
      %v6152 = vpop.f32.mrb[0].mxu0
      %v6153 = vadd.f32 0.0, %v6152
      %v6154 = vpop.f32.mrb[0].mxu0
      %6155 = vmatprep.mubr.f32.mxu0 0.0
      %6156 = vmatmul.mubr.f32.gmra.mrb[0].mxu0 %v5958
      %v6157 = vpop.f32.mrb[0].mxu0
      %v6158 = vadd.f32 0.0, %v6157
      %v6159 = vpop.f32.mrb[0].mxu0
      %6160 = vmatprep.mubr.f32.mxu0 0.0
      %6161 = vmatmul.mubr.f32.gmra.mrb[0].mxu0 %v5961
      %v6162 = vpop.f32.mrb[0].mxu0
      %v6163 = vadd.f32 0.0, %v6162
      %v6164 = vpop.f32.mrb[0].mxu0
      %6165 = vmatprep.mubr.f32.mxu0 0.0
      %6166 = vmatmul.mubr.f32.gmra.mrb[0].mxu0 %v5964
      %v6167 = vpop.f32.mrb[0].mxu0
      %v6168 = vadd.f32 0.0, %v6167
      %v6169 = vpop.f32.mrb[0].mxu0
      %6170 = vmatprep.mubr.f32.mxu0 0.0
      %6171 = vmatmul.mubr.f32.gmra.mrb[0].mxu0 %v5967
      %v6172 = vpop.f32.mrb[0].mxu0
      %v6173 = vadd.f32 0.0, %v6172
      %v6174 = vpop.f32.mrb[0].mxu0
      %6175 = vmatprep.mubr.f32.mxu0 0.0
      %6176 = vmatmul.mubr.f32.gmra.mrb[0].mxu0 %v5970
      %v6177 = vpop.f32.mrb[0].mxu0
      %v6178 = vadd.f32 0.0, %v6177
      %v6179 = vpop.f32.mrb[0].mxu0
      %6180 = vmatprep.mubr.f32.mxu0 0.0
      %6181 = vmatmul.mubr.f32.gmra.mrb[0].mxu0 %v5973
      %v6182 = vpop.f32.mrb[0].mxu0
      %v6183 = vadd.f32 0.0, %v6182
      %v6184 = vpop.f32.mrb[0].mxu0
      %6185 = vmatprep.mubr.f32.mxu0 0.0
      %6186 = vmatmul.mubr.f32.gmra.mrb[0].mxu0 %v5976
      %v6187 = vpop.f32.mrb[0].mxu0
      %v6188 = vadd.f32 0.0, %v6187
      %v6189 = vpop.f32.mrb[0].mxu0
      %6190 = vmatprep.mubr.f32.mxu0 0.0
      %6191 = vmatmul.mubr.f32.gmra.mrb[0].mxu0 %v5979
      %v6192 = vpop.f32.mrb[0].mxu0
      %v6193 = vadd.f32 0.0, %v6192
      %v6194 = vpop.f32.mrb[0].mxu0
      %6195 = vmatprep.mubr.f32.mxu0 0.0
      %6196 = vmatmul.mubr.f32.gmra.mrb[0].mxu0 %v5982
      %v6197 = vpop.f32.mrb[0].mxu0
      %v6198 = vadd.f32 0.0, %v6197
      %v6199 = vpop.f32.mrb[0].mxu0
      %6200 = vmatprep.mubr.f32.mxu0 0.0
      %6201 = vmatmul.mubr.f32.gmra.mrb[0].mxu0 %v5985
      %v6202 = vpop.f32.mrb[0].mxu0
      %v6203 = vadd.f32 0.0, %v6202
      %v6204 = vpop.f32.mrb[0].mxu0
      %6205 = vmatprep.mubr.f32.mxu0 0.0
      %6206 = vmatmul.mubr.f32.gmra.mrb[0].mxu0 %v5988
      %v6207 = vpop.f32.mrb[0].mxu0
      %v6208 = vadd.f32 0.0, %v6207
      %v6209 = vpop.f32.mrb[0].mxu0
      %6210 = vmatprep.mubr.f32.mxu0 0.0
      %6211 = vmatmul.mubr.f32.gmra.mrb[0].mxu0 %v5991
      %v6212 = vpop.f32.mrb[0].mxu0
      %v6213 = vadd.f32 0.0, %v6212
      %v6214 = vpop.f32.mrb[0].mxu0
      %6215 = vmatprep.mubr.f32.mxu0 0.0
      %6216 = vmatmul.mubr.f32.gmra.mrb[0].mxu0 %v5994
      %v6217 = vpop.f32.mrb[0].mxu0
      %v6218 = vadd.f32 0.0, %v6217
      %v6219 = vpop.f32.mrb[0].mxu0
      %6220 = vdwg.mxu0
      %v6221 = vadd.f32 %v5827, %v6063
      %v6222 = vadd.f32 %v5828, %v6068
      %v6223 = vadd.f32 %v5829, %v6073
      %v6224 = vadd.f32 %v5830, %v6078
      %v6225 = vadd.f32 %v5831, %v6083
      %v6226 = vadd.f32 %v5832, %v6088
      %v6227 = vadd.f32 %v5833, %v6093
      %v6228 = vadd.f32 %v5834, %v6098
      %v6229 = vadd.f32 %v5835, %v6103
      %v6230 = vadd.f32 %v5836, %v6108
      %v6231 = vadd.f32 %v5837, %v6113
      %v6232 = vadd.f32 %v5838, %v6118
      %v6233 = vadd.f32 %v5839, %v6123
      %v6234 = vadd.f32 %v5840, %v6128
      %v6235 = vadd.f32 %v5841, %v6133
      %v6236 = vadd.f32 %v5842, %v6138
      %v6237 = vadd.f32 %v5843, %v6143
      %v6238 = vadd.f32 %v5844, %v6148
      %v6239 = vadd.f32 %v5845, %v6153
      %v6240 = vadd.f32 %v5846, %v6158
      %v6241 = vadd.f32 %v5847, %v6163
      %v6242 = vadd.f32 %v5848, %v6168
      %v6243 = vadd.f32 %v5849, %v6173
      %v6244 = vadd.f32 %v5850, %v6178
      %v6245 = vadd.f32 %v5851, %v6183
      %v6246 = vadd.f32 %v5852, %v6188
      %v6247 = vadd.f32 %v5853, %v6193
      %v6248 = vadd.f32 %v5854, %v6198
      %v6249 = vadd.f32 %v5855, %v6203
      %v6250 = vadd.f32 %v5856, %v6208
      %v6251 = vadd.f32 %v5857, %v6213
      %v6252 = vadd.f32 %v5858, %v6218
      %s6253 = scalar_lea.vmem [#allocation3], 48
      %v6254 = vld [vmem:[%s6253] sm:$0xff]
      %v6255 = vld [vmem:[%s6253 + $0x8] sm:$0xff]
      %v6256 = vld [vmem:[%s6253 + $0x18] sm:$0xff]
      %v6257 = vld [vmem:[%s6253 + $0x20] sm:$0xff]
      %v6258 = vld [vmem:[%s6253 + $0x30] sm:$0xff]
      %v6259 = vld [vmem:[%s6253 + $0x38] sm:$0xff]
      %v6260 = vld [vmem:[%s6253 + $0x48] sm:$0xff]
      %v6261 = vld [vmem:[%s6253 + $0x50] sm:$0xff]
      %v6262 = vld [vmem:[%s6253 + $0x60] sm:$0xff]
      %v6263 = vld [vmem:[%s6253 + $0x68] sm:$0xff]
      %v6264 = vld [vmem:[%s6253 + $0x78] sm:$0xff]
      %v6265 = vld [vmem:[%s6253 + $0x80] sm:$0xff]
      %v6266 = vld [vmem:[%s6253 + $0x90] sm:$0xff]
      %v6267 = vld [vmem:[%s6253 + $0x98] sm:$0xff]
      %v6268 = vld [vmem:[%s6253 + $0xa8] sm:$0xff]
      %v6269 = vld [vmem:[%s6253 + $0xb0] sm:$0xff]
      %v6270 = vld [vmem:[%s6253 + $0xc0] sm:$0xff]
      %v6271 = vld [vmem:[%s6253 + $0xc8] sm:$0xff]
      %v6272 = vld [vmem:[%s6253 + $0xd8] sm:$0xff]
      %v6273 = vld [vmem:[%s6253 + $0xe0] sm:$0xff]
      %v6274 = vld [vmem:[%s6253 + $0xf0] sm:$0xff]
      %v6275 = vld [vmem:[%s6253 + $0xf8] sm:$0xff]
      %v6276 = vld [vmem:[%s6253 + $0x108] sm:$0xff]
      %v6277 = vld [vmem:[%s6253 + $0x110] sm:$0xff]
      %v6278 = vld [vmem:[%s6253 + $0x120] sm:$0xff]
      %v6279 = vld [vmem:[%s6253 + $0x128] sm:$0xff]
      %v6280 = vld [vmem:[%s6253 + $0x138] sm:$0xff]
      %v6281 = vld [vmem:[%s6253 + $0x140] sm:$0xff]
      %v6282 = vld [vmem:[%s6253 + $0x150] sm:$0xff]
      %v6283 = vld [vmem:[%s6253 + $0x158] sm:$0xff]
      %v6284 = vld [vmem:[%s6253 + $0x168] sm:$0xff]
      %v6285 = vld [vmem:[%s6253 + $0x170] sm:$0xff]
      %s6286 = scalar_lea.vmem %s3, 384
      %v6287 = vld [vmem:[%s6286] sm:$0xff]
      %v6288 = vld [vmem:[%s6286 + $0x8] sm:$0xff]
      %v6289 = vld [vmem:[%s6286 + $0x10] sm:$0xff]
      %v6290 = vld [vmem:[%s6286 + $0x18] sm:$0xff]
      %v6291 = vld [vmem:[%s6286 + $0x20] sm:$0xff]
      %v6292 = vld [vmem:[%s6286 + $0x28] sm:$0xff]
      %v6293 = vld [vmem:[%s6286 + $0x30] sm:$0xff]
      %v6294 = vld [vmem:[%s6286 + $0x38] sm:$0xff]
      %v6296 = vsel %vm3864, %v6254, 0
      %v6299 = vsel %vm3864, %v6255, 0
      %v6302 = vsel %vm3864, %v6256, 0
      %v6305 = vsel %vm3864, %v6257, 0
      %v6308 = vsel %vm3864, %v6258, 0
      %v6311 = vsel %vm3864, %v6259, 0
      %v6314 = vsel %vm3864, %v6260, 0
      %v6317 = vsel %vm3864, %v6261, 0
      %v6320 = vsel %vm3864, %v6262, 0
      %v6323 = vsel %vm3864, %v6263, 0
      %v6326 = vsel %vm3864, %v6264, 0
      %v6329 = vsel %vm3864, %v6265, 0
      %v6332 = vsel %vm3864, %v6266, 0
      %v6335 = vsel %vm3864, %v6267, 0
      %v6338 = vsel %vm3864, %v6268, 0
      %v6341 = vsel %vm3864, %v6269, 0
      %v6344 = vsel %vm3864, %v6270, 0
      %v6347 = vsel %vm3864, %v6271, 0
      %v6350 = vsel %vm3864, %v6272, 0
      %v6353 = vsel %vm3864, %v6273, 0
      %v6356 = vsel %vm3864, %v6274, 0
      %v6359 = vsel %vm3864, %v6275, 0
      %v6362 = vsel %vm3864, %v6276, 0
      %v6365 = vsel %vm3864, %v6277, 0
      %v6368 = vsel %vm3864, %v6278, 0
      %v6371 = vsel %vm3864, %v6279, 0
      %v6374 = vsel %vm3864, %v6280, 0
      %v6377 = vsel %vm3864, %v6281, 0
      %v6380 = vsel %vm3864, %v6282, 0
      %v6383 = vsel %vm3864, %v6283, 0
      %v6386 = vsel %vm3864, %v6284, 0
      %v6389 = vsel %vm3864, %v6285, 0
      %6391 = vmatprep.subr.mxu0 0.0
      %6392 = vmatpush1.msra.mxu0 %v6287
      %6393 = vmatprep.subr.mxu0 0.0
      %6394 = vmatpush1.msra.mxu0 %v6288
      %6395 = vmatprep.subr.mxu0 0.0
      %6396 = vmatpush1.msra.mxu0 %v6289
      %6397 = vmatprep.subr.mxu0 0.0
      %6398 = vmatpush1.msra.mxu0 %v6290
      %6399 = vmatprep.subr.mxu0 0.0
      %6400 = vmatpush1.msra.mxu0 %v6291
      %6401 = vmatprep.subr.mxu0 0.0
      %6402 = vmatpush1.msra.mxu0 %v6292
      %6403 = vmatprep.subr.mxu0 0.0
      %6404 = vmatpush1.msra.mxu0 %v6293
      %6405 = vmatprep.subr.mxu0 0.0
      %6406 = vmatpush1.msra.mxu0 %v6294
      %6407 = vmatprep.subr.mxu0 0.0
      %6408 = vmatpush1.msra.mxu0 0.0
      %6409 = vmatprep.subr.mxu0 0.0
      %6410 = vmatpush1.msra.mxu0 0.0
      %6411 = vmatprep.subr.mxu0 0.0
      %6412 = vmatpush1.msra.mxu0 0.0
      %6413 = vmatprep.subr.mxu0 0.0
      %6414 = vmatpush1.msra.mxu0 0.0
      %6415 = vmatprep.subr.mxu0 0.0
      %6416 = vmatpush1.msra.mxu0 0.0
      %6417 = vmatprep.subr.mxu0 0.0
      %6418 = vmatpush1.msra.mxu0 0.0
      %6419 = vmatprep.subr.mxu0 0.0
      %6420 = vmatpush1.msra.mxu0 0.0
      %6421 = vmatprep.subr.mxu0 0.0
      %6422 = vmatpush1.msra.mxu0 0.0
      %6423 = vmatprep.subr.mxu0 0.0
      %6424 = vmatpush1.msra.mxu0 0.0
      %6425 = vmatprep.subr.mxu0 0.0
      %6426 = vmatpush1.msra.mxu0 0.0
      %6427 = vmatprep.subr.mxu0 0.0
      %6428 = vmatpush1.msra.mxu0 0.0
      %6429 = vmatprep.subr.mxu0 0.0
      %6430 = vmatpush1.msra.mxu0 0.0
      %6431 = vmatprep.subr.mxu0 0.0
      %6432 = vmatpush1.msra.mxu0 0.0
      %6433 = vmatprep.subr.mxu0 0.0
      %6434 = vmatpush1.msra.mxu0 0.0
      %6435 = vmatprep.subr.mxu0 0.0
      %6436 = vmatpush1.msra.mxu0 0.0
      %6437 = vmatprep.subr.mxu0 0.0
      %6438 = vmatpush1.msra.mxu0 0.0
      %6439 = vmatprep.subr.mxu0 0.0
      %6440 = vmatpush1.msra.mxu0 0.0
      %6441 = vmatprep.subr.mxu0 0.0
      %6442 = vmatpush1.msra.mxu0 0.0
      %6443 = vmatprep.subr.mxu0 0.0
      %6444 = vmatpush1.msra.mxu0 0.0
      %6445 = vmatprep.subr.mxu0 0.0
      %6446 = vmatpush1.msra.mxu0 0.0
      %6447 = vmatprep.subr.mxu0 0.0
      %6448 = vmatpush1.msra.mxu0 0.0
      %6449 = vmatprep.subr.mxu0 0.0
      %6450 = vmatpush1.msra.mxu0 0.0
      %6451 = vmatprep.subr.mxu0 0.0
      %6452 = vmatpush1.msra.mxu0 0.0
      %6453 = vmatprep.subr.mxu0 0.0
      %6454 = vmatpush1.msra.mxu0 0.0
      %6455 = vmatprep.mubr.f32.mxu0 0.0
      %6456 = vmatmul.mubr.f32.gmra.mrb[0].mxu0 %v6296
      %v6457 = vpop.f32.mrb[0].mxu0
      %v6458 = vadd.f32 0.0, %v6457
      %v6459 = vpop.f32.mrb[0].mxu0
      %6460 = vmatprep.mubr.f32.mxu0 0.0
      %6461 = vmatmul.mubr.f32.gmra.mrb[0].mxu0 %v6299
      %v6462 = vpop.f32.mrb[0].mxu0
      %v6463 = vadd.f32 0.0, %v6462
      %v6464 = vpop.f32.mrb[0].mxu0
      %6465 = vmatprep.mubr.f32.mxu0 0.0
      %6466 = vmatmul.mubr.f32.gmra.mrb[0].mxu0 %v6302
      %v6467 = vpop.f32.mrb[0].mxu0
      %v6468 = vadd.f32 0.0, %v6467
      %v6469 = vpop.f32.mrb[0].mxu0
      %6470 = vmatprep.mubr.f32.mxu0 0.0
      %6471 = vmatmul.mubr.f32.gmra.mrb[0].mxu0 %v6305
      %v6472 = vpop.f32.mrb[0].mxu0
      %v6473 = vadd.f32 0.0, %v6472
      %v6474 = vpop.f32.mrb[0].mxu0
      %6475 = vmatprep.mubr.f32.mxu0 0.0
      %6476 = vmatmul.mubr.f32.gmra.mrb[0].mxu0 %v6308
      %v6477 = vpop.f32.mrb[0].mxu0
      %v6478 = vadd.f32 0.0, %v6477
      %v6479 = vpop.f32.mrb[0].mxu0
      %6480 = vmatprep.mubr.f32.mxu0 0.0
      %6481 = vmatmul.mubr.f32.gmra.mrb[0].mxu0 %v6311
      %v6482 = vpop.f32.mrb[0].mxu0
      %v6483 = vadd.f32 0.0, %v6482
      %v6484 = vpop.f32.mrb[0].mxu0
      %6485 = vmatprep.mubr.f32.mxu0 0.0
      %6486 = vmatmul.mubr.f32.gmra.mrb[0].mxu0 %v6314
      %v6487 = vpop.f32.mrb[0].mxu0
      %v6488 = vadd.f32 0.0, %v6487
      %v6489 = vpop.f32.mrb[0].mxu0
      %6490 = vmatprep.mubr.f32.mxu0 0.0
      %6491 = vmatmul.mubr.f32.gmra.mrb[0].mxu0 %v6317
      %v6492 = vpop.f32.mrb[0].mxu0
      %v6493 = vadd.f32 0.0, %v6492
      %v6494 = vpop.f32.mrb[0].mxu0
      %6495 = vmatprep.mubr.f32.mxu0 0.0
      %6496 = vmatmul.mubr.f32.gmra.mrb[0].mxu0 %v6320
      %v6497 = vpop.f32.mrb[0].mxu0
      %v6498 = vadd.f32 0.0, %v6497
      %v6499 = vpop.f32.mrb[0].mxu0
      %6500 = vmatprep.mubr.f32.mxu0 0.0
      %6501 = vmatmul.mubr.f32.gmra.mrb[0].mxu0 %v6323
      %v6502 = vpop.f32.mrb[0].mxu0
      %v6503 = vadd.f32 0.0, %v6502
      %v6504 = vpop.f32.mrb[0].mxu0
      %6505 = vmatprep.mubr.f32.mxu0 0.0
      %6506 = vmatmul.mubr.f32.gmra.mrb[0].mxu0 %v6326
      %v6507 = vpop.f32.mrb[0].mxu0
      %v6508 = vadd.f32 0.0, %v6507
      %v6509 = vpop.f32.mrb[0].mxu0
      %6510 = vmatprep.mubr.f32.mxu0 0.0
      %6511 = vmatmul.mubr.f32.gmra.mrb[0].mxu0 %v6329
      %v6512 = vpop.f32.mrb[0].mxu0
      %v6513 = vadd.f32 0.0, %v6512
      %v6514 = vpop.f32.mrb[0].mxu0
      %6515 = vmatprep.mubr.f32.mxu0 0.0
      %6516 = vmatmul.mubr.f32.gmra.mrb[0].mxu0 %v6332
      %v6517 = vpop.f32.mrb[0].mxu0
      %v6518 = vadd.f32 0.0, %v6517
      %v6519 = vpop.f32.mrb[0].mxu0
      %6520 = vmatprep.mubr.f32.mxu0 0.0
      %6521 = vmatmul.mubr.f32.gmra.mrb[0].mxu0 %v6335
      %v6522 = vpop.f32.mrb[0].mxu0
      %v6523 = vadd.f32 0.0, %v6522
      %v6524 = vpop.f32.mrb[0].mxu0
      %6525 = vmatprep.mubr.f32.mxu0 0.0
      %6526 = vmatmul.mubr.f32.gmra.mrb[0].mxu0 %v6338
      %v6527 = vpop.f32.mrb[0].mxu0
      %v6528 = vadd.f32 0.0, %v6527
      %v6529 = vpop.f32.mrb[0].mxu0
      %6530 = vmatprep.mubr.f32.mxu0 0.0
      %6531 = vmatmul.mubr.f32.gmra.mrb[0].mxu0 %v6341
      %v6532 = vpop.f32.mrb[0].mxu0
      %v6533 = vadd.f32 0.0, %v6532
      %v6534 = vpop.f32.mrb[0].mxu0
      %6535 = vmatprep.mubr.f32.mxu0 0.0
      %6536 = vmatmul.mubr.f32.gmra.mrb[0].mxu0 %v6344
      %v6537 = vpop.f32.mrb[0].mxu0
      %v6538 = vadd.f32 0.0, %v6537
      %v6539 = vpop.f32.mrb[0].mxu0
      %6540 = vmatprep.mubr.f32.mxu0 0.0
      %6541 = vmatmul.mubr.f32.gmra.mrb[0].mxu0 %v6347
      %v6542 = vpop.f32.mrb[0].mxu0
      %v6543 = vadd.f32 0.0, %v6542
      %v6544 = vpop.f32.mrb[0].mxu0
      %6545 = vmatprep.mubr.f32.mxu0 0.0
      %6546 = vmatmul.mubr.f32.gmra.mrb[0].mxu0 %v6350
      %v6547 = vpop.f32.mrb[0].mxu0
      %v6548 = vadd.f32 0.0, %v6547
      %v6549 = vpop.f32.mrb[0].mxu0
      %6550 = vmatprep.mubr.f32.mxu0 0.0
      %6551 = vmatmul.mubr.f32.gmra.mrb[0].mxu0 %v6353
      %v6552 = vpop.f32.mrb[0].mxu0
      %v6553 = vadd.f32 0.0, %v6552
      %v6554 = vpop.f32.mrb[0].mxu0
      %6555 = vmatprep.mubr.f32.mxu0 0.0
      %6556 = vmatmul.mubr.f32.gmra.mrb[0].mxu0 %v6356
      %v6557 = vpop.f32.mrb[0].mxu0
      %v6558 = vadd.f32 0.0, %v6557
      %v6559 = vpop.f32.mrb[0].mxu0
      %6560 = vmatprep.mubr.f32.mxu0 0.0
      %6561 = vmatmul.mubr.f32.gmra.mrb[0].mxu0 %v6359
      %v6562 = vpop.f32.mrb[0].mxu0
      %v6563 = vadd.f32 0.0, %v6562
      %v6564 = vpop.f32.mrb[0].mxu0
      %6565 = vmatprep.mubr.f32.mxu0 0.0
      %6566 = vmatmul.mubr.f32.gmra.mrb[0].mxu0 %v6362
      %v6567 = vpop.f32.mrb[0].mxu0
      %v6568 = vadd.f32 0.0, %v6567
      %v6569 = vpop.f32.mrb[0].mxu0
      %6570 = vmatprep.mubr.f32.mxu0 0.0
      %6571 = vmatmul.mubr.f32.gmra.mrb[0].mxu0 %v6365
      %v6572 = vpop.f32.mrb[0].mxu0
      %v6573 = vadd.f32 0.0, %v6572
      %v6574 = vpop.f32.mrb[0].mxu0
      %6575 = vmatprep.mubr.f32.mxu0 0.0
      %6576 = vmatmul.mubr.f32.gmra.mrb[0].mxu0 %v6368
      %v6577 = vpop.f32.mrb[0].mxu0
      %v6578 = vadd.f32 0.0, %v6577
      %v6579 = vpop.f32.mrb[0].mxu0
      %6580 = vmatprep.mubr.f32.mxu0 0.0
      %6581 = vmatmul.mubr.f32.gmra.mrb[0].mxu0 %v6371
      %v6582 = vpop.f32.mrb[0].mxu0
      %v6583 = vadd.f32 0.0, %v6582
      %v6584 = vpop.f32.mrb[0].mxu0
      %6585 = vmatprep.mubr.f32.mxu0 0.0
      %6586 = vmatmul.mubr.f32.gmra.mrb[0].mxu0 %v6374
      %v6587 = vpop.f32.mrb[0].mxu0
      %v6588 = vadd.f32 0.0, %v6587
      %v6589 = vpop.f32.mrb[0].mxu0
      %6590 = vmatprep.mubr.f32.mxu0 0.0
      %6591 = vmatmul.mubr.f32.gmra.mrb[0].mxu0 %v6377
      %v6592 = vpop.f32.mrb[0].mxu0
      %v6593 = vadd.f32 0.0, %v6592
      %v6594 = vpop.f32.mrb[0].mxu0
      %6595 = vmatprep.mubr.f32.mxu0 0.0
      %6596 = vmatmul.mubr.f32.gmra.mrb[0].mxu0 %v6380
      %v6597 = vpop.f32.mrb[0].mxu0
      %v6598 = vadd.f32 0.0, %v6597
      %v6599 = vpop.f32.mrb[0].mxu0
      %6600 = vmatprep.mubr.f32.mxu0 0.0
      %6601 = vmatmul.mubr.f32.gmra.mrb[0].mxu0 %v6383
      %v6602 = vpop.f32.mrb[0].mxu0
      %v6603 = vadd.f32 0.0, %v6602
      %v6604 = vpop.f32.mrb[0].mxu0
      %6605 = vmatprep.mubr.f32.mxu0 0.0
      %6606 = vmatmul.mubr.f32.gmra.mrb[0].mxu0 %v6386
      %v6607 = vpop.f32.mrb[0].mxu0
      %v6608 = vadd.f32 0.0, %v6607
      %v6609 = vpop.f32.mrb[0].mxu0
      %6610 = vmatprep.mubr.f32.mxu0 0.0
      %6611 = vmatmul.mubr.f32.gmra.mrb[0].mxu0 %v6389
      %v6612 = vpop.f32.mrb[0].mxu0
      %v6613 = vadd.f32 0.0, %v6612
      %v6614 = vpop.f32.mrb[0].mxu0
      %6615 = vdwg.mxu0
      %v6616 = vadd.f32 %v6221, %v6458
      %v6617 = vadd.f32 %v6222, %v6463
      %v6618 = vadd.f32 %v6223, %v6468
      %v6619 = vadd.f32 %v6224, %v6473
      %v6620 = vadd.f32 %v6225, %v6478
      %v6621 = vadd.f32 %v6226, %v6483
      %v6622 = vadd.f32 %v6227, %v6488
      %v6623 = vadd.f32 %v6228, %v6493
      %v6624 = vadd.f32 %v6229, %v6498
      %v6625 = vadd.f32 %v6230, %v6503
      %v6626 = vadd.f32 %v6231, %v6508
      %v6627 = vadd.f32 %v6232, %v6513
      %v6628 = vadd.f32 %v6233, %v6518
      %v6629 = vadd.f32 %v6234, %v6523
      %v6630 = vadd.f32 %v6235, %v6528
      %v6631 = vadd.f32 %v6236, %v6533
      %v6632 = vadd.f32 %v6237, %v6538
      %v6633 = vadd.f32 %v6238, %v6543
      %v6634 = vadd.f32 %v6239, %v6548
      %v6635 = vadd.f32 %v6240, %v6553
      %v6636 = vadd.f32 %v6241, %v6558
      %v6637 = vadd.f32 %v6242, %v6563
      %v6638 = vadd.f32 %v6243, %v6568
      %v6639 = vadd.f32 %v6244, %v6573
      %v6640 = vadd.f32 %v6245, %v6578
      %v6641 = vadd.f32 %v6246, %v6583
      %v6642 = vadd.f32 %v6247, %v6588
      %v6643 = vadd.f32 %v6248, %v6593
      %v6644 = vadd.f32 %v6249, %v6598
      %v6645 = vadd.f32 %v6250, %v6603
      %v6646 = vadd.f32 %v6251, %v6608
      %v6647 = vadd.f32 %v6252, %v6613
      %v6648 = vld [vmem:[%s6253 + $0x1] sm:$0xff]
      %v6649 = vld [vmem:[%s6253 + $0x9] sm:$0xff]
      %v6650 = vld [vmem:[%s6253 + $0x19] sm:$0xff]
      %v6651 = vld [vmem:[%s6253 + $0x21] sm:$0xff]
      %v6652 = vld [vmem:[%s6253 + $0x31] sm:$0xff]
      %v6653 = vld [vmem:[%s6253 + $0x39] sm:$0xff]
      %v6654 = vld [vmem:[%s6253 + $0x49] sm:$0xff]
      %v6655 = vld [vmem:[%s6253 + $0x51] sm:$0xff]
      %v6656 = vld [vmem:[%s6253 + $0x61] sm:$0xff]
      %v6657 = vld [vmem:[%s6253 + $0x69] sm:$0xff]
      %v6658 = vld [vmem:[%s6253 + $0x79] sm:$0xff]
      %v6659 = vld [vmem:[%s6253 + $0x81] sm:$0xff]
      %v6660 = vld [vmem:[%s6253 + $0x91] sm:$0xff]
      %v6661 = vld [vmem:[%s6253 + $0x99] sm:$0xff]
      %v6662 = vld [vmem:[%s6253 + $0xa9] sm:$0xff]
      %v6663 = vld [vmem:[%s6253 + $0xb1] sm:$0xff]
      %v6664 = vld [vmem:[%s6253 + $0xc1] sm:$0xff]
      %v6665 = vld [vmem:[%s6253 + $0xc9] sm:$0xff]
      %v6666 = vld [vmem:[%s6253 + $0xd9] sm:$0xff]
      %v6667 = vld [vmem:[%s6253 + $0xe1] sm:$0xff]
      %v6668 = vld [vmem:[%s6253 + $0xf1] sm:$0xff]
      %v6669 = vld [vmem:[%s6253 + $0xf9] sm:$0xff]
      %v6670 = vld [vmem:[%s6253 + $0x109] sm:$0xff]
      %v6671 = vld [vmem:[%s6253 + $0x111] sm:$0xff]
      %v6672 = vld [vmem:[%s6253 + $0x121] sm:$0xff]
      %v6673 = vld [vmem:[%s6253 + $0x129] sm:$0xff]
      %v6674 = vld [vmem:[%s6253 + $0x139] sm:$0xff]
      %v6675 = vld [vmem:[%s6253 + $0x141] sm:$0xff]
      %v6676 = vld [vmem:[%s6253 + $0x151] sm:$0xff]
      %v6677 = vld [vmem:[%s6253 + $0x159] sm:$0xff]
      %v6678 = vld [vmem:[%s6253 + $0x169] sm:$0xff]
      %v6679 = vld [vmem:[%s6253 + $0x171] sm:$0xff]
      %s6680 = scalar_lea.vmem %s3, 448
      %v6681 = vld [vmem:[%s6680] sm:$0xff]
      %v6682 = vld [vmem:[%s6680 + $0x8] sm:$0xff]
      %v6683 = vld [vmem:[%s6680 + $0x10] sm:$0xff]
      %v6684 = vld [vmem:[%s6680 + $0x18] sm:$0xff]
      %v6685 = vld [vmem:[%s6680 + $0x20] sm:$0xff]
      %v6686 = vld [vmem:[%s6680 + $0x28] sm:$0xff]
      %v6687 = vld [vmem:[%s6680 + $0x30] sm:$0xff]
      %v6688 = vld [vmem:[%s6680 + $0x38] sm:$0xff]
      %v6690 = vsel %vm3864, %v6648, 0
      %v6693 = vsel %vm3864, %v6649, 0
      %v6696 = vsel %vm3864, %v6650, 0
      %v6699 = vsel %vm3864, %v6651, 0
      %v6702 = vsel %vm3864, %v6652, 0
      %v6705 = vsel %vm3864, %v6653, 0
      %v6708 = vsel %vm3864, %v6654, 0
      %v6711 = vsel %vm3864, %v6655, 0
      %v6714 = vsel %vm3864, %v6656, 0
      %v6717 = vsel %vm3864, %v6657, 0
      %v6720 = vsel %vm3864, %v6658, 0
      %v6723 = vsel %vm3864, %v6659, 0
      %v6726 = vsel %vm3864, %v6660, 0
      %v6729 = vsel %vm3864, %v6661, 0
      %v6732 = vsel %vm3864, %v6662, 0
      %v6735 = vsel %vm3864, %v6663, 0
      %v6738 = vsel %vm3864, %v6664, 0
      %v6741 = vsel %vm3864, %v6665, 0
      %v6744 = vsel %vm3864, %v6666, 0
      %v6747 = vsel %vm3864, %v6667, 0
      %v6750 = vsel %vm3864, %v6668, 0
      %v6753 = vsel %vm3864, %v6669, 0
      %v6756 = vsel %vm3864, %v6670, 0
      %v6759 = vsel %vm3864, %v6671, 0
      %v6762 = vsel %vm3864, %v6672, 0
      %v6765 = vsel %vm3864, %v6673, 0
      %v6768 = vsel %vm3864, %v6674, 0
      %v6771 = vsel %vm3864, %v6675, 0
      %v6774 = vsel %vm3864, %v6676, 0
      %v6777 = vsel %vm3864, %v6677, 0
      %v6780 = vsel %vm3864, %v6678, 0
      %v6783 = vsel %vm3864, %v6679, 0
      %6785 = vmatprep.subr.mxu0 0.0
      %6786 = vmatpush1.msra.mxu0 %v6681
      %6787 = vmatprep.subr.mxu0 0.0
      %6788 = vmatpush1.msra.mxu0 %v6682
      %6789 = vmatprep.subr.mxu0 0.0
      %6790 = vmatpush1.msra.mxu0 %v6683
      %6791 = vmatprep.subr.mxu0 0.0
      %6792 = vmatpush1.msra.mxu0 %v6684
      %6793 = vmatprep.subr.mxu0 0.0
      %6794 = vmatpush1.msra.mxu0 %v6685
      %6795 = vmatprep.subr.mxu0 0.0
      %6796 = vmatpush1.msra.mxu0 %v6686
      %6797 = vmatprep.subr.mxu0 0.0
      %6798 = vmatpush1.msra.mxu0 %v6687
      %6799 = vmatprep.subr.mxu0 0.0
      %6800 = vmatpush1.msra.mxu0 %v6688
      %6801 = vmatprep.subr.mxu0 0.0
      %6802 = vmatpush1.msra.mxu0 0.0
      %6803 = vmatprep.subr.mxu0 0.0
      %6804 = vmatpush1.msra.mxu0 0.0
      %6805 = vmatprep.subr.mxu0 0.0
      %6806 = vmatpush1.msra.mxu0 0.0
      %6807 = vmatprep.subr.mxu0 0.0
      %6808 = vmatpush1.msra.mxu0 0.0
      %6809 = vmatprep.subr.mxu0 0.0
      %6810 = vmatpush1.msra.mxu0 0.0
      %6811 = vmatprep.subr.mxu0 0.0
      %6812 = vmatpush1.msra.mxu0 0.0
      %6813 = vmatprep.subr.mxu0 0.0
      %6814 = vmatpush1.msra.mxu0 0.0
      %6815 = vmatprep.subr.mxu0 0.0
      %6816 = vmatpush1.msra.mxu0 0.0
      %6817 = vmatprep.subr.mxu0 0.0
      %6818 = vmatpush1.msra.mxu0 0.0
      %6819 = vmatprep.subr.mxu0 0.0
      %6820 = vmatpush1.msra.mxu0 0.0
      %6821 = vmatprep.subr.mxu0 0.0
      %6822 = vmatpush1.msra.mxu0 0.0
      %6823 = vmatprep.subr.mxu0 0.0
      %6824 = vmatpush1.msra.mxu0 0.0
      %6825 = vmatprep.subr.mxu0 0.0
      %6826 = vmatpush1.msra.mxu0 0.0
      %6827 = vmatprep.subr.mxu0 0.0
      %6828 = vmatpush1.msra.mxu0 0.0
      %6829 = vmatprep.subr.mxu0 0.0
      %6830 = vmatpush1.msra.mxu0 0.0
      %6831 = vmatprep.subr.mxu0 0.0
      %6832 = vmatpush1.msra.mxu0 0.0
      %6833 = vmatprep.subr.mxu0 0.0
      %6834 = vmatpush1.msra.mxu0 0.0
      %6835 = vmatprep.subr.mxu0 0.0
      %6836 = vmatpush1.msra.mxu0 0.0
      %6837 = vmatprep.subr.mxu0 0.0
      %6838 = vmatpush1.msra.mxu0 0.0
      %6839 = vmatprep.subr.mxu0 0.0
      %6840 = vmatpush1.msra.mxu0 0.0
      %6841 = vmatprep.subr.mxu0 0.0
      %6842 = vmatpush1.msra.mxu0 0.0
      %6843 = vmatprep.subr.mxu0 0.0
      %6844 = vmatpush1.msra.mxu0 0.0
      %6845 = vmatprep.subr.mxu0 0.0
      %6846 = vmatpush1.msra.mxu0 0.0
      %6847 = vmatprep.subr.mxu0 0.0
      %6848 = vmatpush1.msra.mxu0 0.0
      %6849 = vmatprep.mubr.f32.mxu0 0.0
      %6850 = vmatmul.mubr.f32.gmra.mrb[0].mxu0 %v6690
      %v6851 = vpop.f32.mrb[0].mxu0
      %v6852 = vadd.f32 0.0, %v6851
      %v6853 = vpop.f32.mrb[0].mxu0
      %6854 = vmatprep.mubr.f32.mxu0 0.0
      %6855 = vmatmul.mubr.f32.gmra.mrb[0].mxu0 %v6693
      %v6856 = vpop.f32.mrb[0].mxu0
      %v6857 = vadd.f32 0.0, %v6856
      %v6858 = vpop.f32.mrb[0].mxu0
      %6859 = vmatprep.mubr.f32.mxu0 0.0
      %6860 = vmatmul.mubr.f32.gmra.mrb[0].mxu0 %v6696
      %v6861 = vpop.f32.mrb[0].mxu0
      %v6862 = vadd.f32 0.0, %v6861
      %v6863 = vpop.f32.mrb[0].mxu0
      %6864 = vmatprep.mubr.f32.mxu0 0.0
      %6865 = vmatmul.mubr.f32.gmra.mrb[0].mxu0 %v6699
      %v6866 = vpop.f32.mrb[0].mxu0
      %v6867 = vadd.f32 0.0, %v6866
      %v6868 = vpop.f32.mrb[0].mxu0
      %6869 = vmatprep.mubr.f32.mxu0 0.0
      %6870 = vmatmul.mubr.f32.gmra.mrb[0].mxu0 %v6702
      %v6871 = vpop.f32.mrb[0].mxu0
      %v6872 = vadd.f32 0.0, %v6871
      %v6873 = vpop.f32.mrb[0].mxu0
      %6874 = vmatprep.mubr.f32.mxu0 0.0
      %6875 = vmatmul.mubr.f32.gmra.mrb[0].mxu0 %v6705
      %v6876 = vpop.f32.mrb[0].mxu0
      %v6877 = vadd.f32 0.0, %v6876
      %v6878 = vpop.f32.mrb[0].mxu0
      %6879 = vmatprep.mubr.f32.mxu0 0.0
      %6880 = vmatmul.mubr.f32.gmra.mrb[0].mxu0 %v6708
      %v6881 = vpop.f32.mrb[0].mxu0
      %v6882 = vadd.f32 0.0, %v6881
      %v6883 = vpop.f32.mrb[0].mxu0
      %6884 = vmatprep.mubr.f32.mxu0 0.0
      %6885 = vmatmul.mubr.f32.gmra.mrb[0].mxu0 %v6711
      %v6886 = vpop.f32.mrb[0].mxu0
      %v6887 = vadd.f32 0.0, %v6886
      %v6888 = vpop.f32.mrb[0].mxu0
      %6889 = vmatprep.mubr.f32.mxu0 0.0
      %6890 = vmatmul.mubr.f32.gmra.mrb[0].mxu0 %v6714
      %v6891 = vpop.f32.mrb[0].mxu0
      %v6892 = vadd.f32 0.0, %v6891
      %v6893 = vpop.f32.mrb[0].mxu0
      %6894 = vmatprep.mubr.f32.mxu0 0.0
      %6895 = vmatmul.mubr.f32.gmra.mrb[0].mxu0 %v6717
      %v6896 = vpop.f32.mrb[0].mxu0
      %v6897 = vadd.f32 0.0, %v6896
      %v6898 = vpop.f32.mrb[0].mxu0
      %6899 = vmatprep.mubr.f32.mxu0 0.0
      %6900 = vmatmul.mubr.f32.gmra.mrb[0].mxu0 %v6720
      %v6901 = vpop.f32.mrb[0].mxu0
      %v6902 = vadd.f32 0.0, %v6901
      %v6903 = vpop.f32.mrb[0].mxu0
      %6904 = vmatprep.mubr.f32.mxu0 0.0
      %6905 = vmatmul.mubr.f32.gmra.mrb[0].mxu0 %v6723
      %v6906 = vpop.f32.mrb[0].mxu0
      %v6907 = vadd.f32 0.0, %v6906
      %v6908 = vpop.f32.mrb[0].mxu0
      %6909 = vmatprep.mubr.f32.mxu0 0.0
      %6910 = vmatmul.mubr.f32.gmra.mrb[0].mxu0 %v6726
      %v6911 = vpop.f32.mrb[0].mxu0
      %v6912 = vadd.f32 0.0, %v6911
      %v6913 = vpop.f32.mrb[0].mxu0
      %6914 = vmatprep.mubr.f32.mxu0 0.0
      %6915 = vmatmul.mubr.f32.gmra.mrb[0].mxu0 %v6729
      %v6916 = vpop.f32.mrb[0].mxu0
      %v6917 = vadd.f32 0.0, %v6916
      %v6918 = vpop.f32.mrb[0].mxu0
      %6919 = vmatprep.mubr.f32.mxu0 0.0
      %6920 = vmatmul.mubr.f32.gmra.mrb[0].mxu0 %v6732
      %v6921 = vpop.f32.mrb[0].mxu0
      %v6922 = vadd.f32 0.0, %v6921
      %v6923 = vpop.f32.mrb[0].mxu0
      %6924 = vmatprep.mubr.f32.mxu0 0.0
      %6925 = vmatmul.mubr.f32.gmra.mrb[0].mxu0 %v6735
      %v6926 = vpop.f32.mrb[0].mxu0
      %v6927 = vadd.f32 0.0, %v6926
      %v6928 = vpop.f32.mrb[0].mxu0
      %6929 = vmatprep.mubr.f32.mxu0 0.0
      %6930 = vmatmul.mubr.f32.gmra.mrb[0].mxu0 %v6738
      %v6931 = vpop.f32.mrb[0].mxu0
      %v6932 = vadd.f32 0.0, %v6931
      %v6933 = vpop.f32.mrb[0].mxu0
      %6934 = vmatprep.mubr.f32.mxu0 0.0
      %6935 = vmatmul.mubr.f32.gmra.mrb[0].mxu0 %v6741
      %v6936 = vpop.f32.mrb[0].mxu0
      %v6937 = vadd.f32 0.0, %v6936
      %v6938 = vpop.f32.mrb[0].mxu0
      %6939 = vmatprep.mubr.f32.mxu0 0.0
      %6940 = vmatmul.mubr.f32.gmra.mrb[0].mxu0 %v6744
      %v6941 = vpop.f32.mrb[0].mxu0
      %v6942 = vadd.f32 0.0, %v6941
      %v6943 = vpop.f32.mrb[0].mxu0
      %6944 = vmatprep.mubr.f32.mxu0 0.0
      %6945 = vmatmul.mubr.f32.gmra.mrb[0].mxu0 %v6747
      %v6946 = vpop.f32.mrb[0].mxu0
      %v6947 = vadd.f32 0.0, %v6946
      %v6948 = vpop.f32.mrb[0].mxu0
      %6949 = vmatprep.mubr.f32.mxu0 0.0
      %6950 = vmatmul.mubr.f32.gmra.mrb[0].mxu0 %v6750
      %v6951 = vpop.f32.mrb[0].mxu0
      %v6952 = vadd.f32 0.0, %v6951
      %v6953 = vpop.f32.mrb[0].mxu0
      %6954 = vmatprep.mubr.f32.mxu0 0.0
      %6955 = vmatmul.mubr.f32.gmra.mrb[0].mxu0 %v6753
      %v6956 = vpop.f32.mrb[0].mxu0
      %v6957 = vadd.f32 0.0, %v6956
      %v6958 = vpop.f32.mrb[0].mxu0
      %6959 = vmatprep.mubr.f32.mxu0 0.0
      %6960 = vmatmul.mubr.f32.gmra.mrb[0].mxu0 %v6756
      %v6961 = vpop.f32.mrb[0].mxu0
      %v6962 = vadd.f32 0.0, %v6961
      %v6963 = vpop.f32.mrb[0].mxu0
      %6964 = vmatprep.mubr.f32.mxu0 0.0
      %6965 = vmatmul.mubr.f32.gmra.mrb[0].mxu0 %v6759
      %v6966 = vpop.f32.mrb[0].mxu0
      %v6967 = vadd.f32 0.0, %v6966
      %v6968 = vpop.f32.mrb[0].mxu0
      %6969 = vmatprep.mubr.f32.mxu0 0.0
      %6970 = vmatmul.mubr.f32.gmra.mrb[0].mxu0 %v6762
      %v6971 = vpop.f32.mrb[0].mxu0
      %v6972 = vadd.f32 0.0, %v6971
      %v6973 = vpop.f32.mrb[0].mxu0
      %6974 = vmatprep.mubr.f32.mxu0 0.0
      %6975 = vmatmul.mubr.f32.gmra.mrb[0].mxu0 %v6765
      %v6976 = vpop.f32.mrb[0].mxu0
      %v6977 = vadd.f32 0.0, %v6976
      %v6978 = vpop.f32.mrb[0].mxu0
      %6979 = vmatprep.mubr.f32.mxu0 0.0
      %6980 = vmatmul.mubr.f32.gmra.mrb[0].mxu0 %v6768
      %v6981 = vpop.f32.mrb[0].mxu0
      %v6982 = vadd.f32 0.0, %v6981
      %v6983 = vpop.f32.mrb[0].mxu0
      %6984 = vmatprep.mubr.f32.mxu0 0.0
      %6985 = vmatmul.mubr.f32.gmra.mrb[0].mxu0 %v6771
      %v6986 = vpop.f32.mrb[0].mxu0
      %v6987 = vadd.f32 0.0, %v6986
      %v6988 = vpop.f32.mrb[0].mxu0
      %6989 = vmatprep.mubr.f32.mxu0 0.0
      %6990 = vmatmul.mubr.f32.gmra.mrb[0].mxu0 %v6774
      %v6991 = vpop.f32.mrb[0].mxu0
      %v6992 = vadd.f32 0.0, %v6991
      %v6993 = vpop.f32.mrb[0].mxu0
      %6994 = vmatprep.mubr.f32.mxu0 0.0
      %6995 = vmatmul.mubr.f32.gmra.mrb[0].mxu0 %v6777
      %v6996 = vpop.f32.mrb[0].mxu0
      %v6997 = vadd.f32 0.0, %v6996
      %v6998 = vpop.f32.mrb[0].mxu0
      %6999 = vmatprep.mubr.f32.mxu0 0.0
      %7000 = vmatmul.mubr.f32.gmra.mrb[0].mxu0 %v6780
      %v7001 = vpop.f32.mrb[0].mxu0
      %v7002 = vadd.f32 0.0, %v7001
      %v7003 = vpop.f32.mrb[0].mxu0
      %7004 = vmatprep.mubr.f32.mxu0 0.0
      %7005 = vmatmul.mubr.f32.gmra.mrb[0].mxu0 %v6783
      %v7006 = vpop.f32.mrb[0].mxu0
      %v7007 = vadd.f32 0.0, %v7006
      %v7008 = vpop.f32.mrb[0].mxu0
      %7009 = vdwg.mxu0
      %v7010 = vadd.f32 %v6616, %v6852
      %v7011 = vadd.f32 %v6617, %v6857
      %v7012 = vadd.f32 %v6618, %v6862
      %v7013 = vadd.f32 %v6619, %v6867
      %v7014 = vadd.f32 %v6620, %v6872
      %v7015 = vadd.f32 %v6621, %v6877
      %v7016 = vadd.f32 %v6622, %v6882
      %v7017 = vadd.f32 %v6623, %v6887
      %v7018 = vadd.f32 %v6624, %v6892
      %v7019 = vadd.f32 %v6625, %v6897
      %v7020 = vadd.f32 %v6626, %v6902
      %v7021 = vadd.f32 %v6627, %v6907
      %v7022 = vadd.f32 %v6628, %v6912
      %v7023 = vadd.f32 %v6629, %v6917
      %v7024 = vadd.f32 %v6630, %v6922
      %v7025 = vadd.f32 %v6631, %v6927
      %v7026 = vadd.f32 %v6632, %v6932
      %v7027 = vadd.f32 %v6633, %v6937
      %v7028 = vadd.f32 %v6634, %v6942
      %v7029 = vadd.f32 %v6635, %v6947
      %v7030 = vadd.f32 %v6636, %v6952
      %v7031 = vadd.f32 %v6637, %v6957
      %v7032 = vadd.f32 %v6638, %v6962
      %v7033 = vadd.f32 %v6639, %v6967
      %v7034 = vadd.f32 %v6640, %v6972
      %v7035 = vadd.f32 %v6641, %v6977
      %v7036 = vadd.f32 %v6642, %v6982
      %v7037 = vadd.f32 %v6643, %v6987
      %v7038 = vadd.f32 %v6644, %v6992
      %v7039 = vadd.f32 %v6645, %v6997
      %v7040 = vadd.f32 %v6646, %v7002
      %v7041 = vadd.f32 %v6647, %v7007
      %v7042 = vld [vmem:[%s6253 + $0x2] sm:$0xff]
      %v7043 = vld [vmem:[%s6253 + $0xa] sm:$0xff]
      %v7044 = vld [vmem:[%s6253 + $0x1a] sm:$0xff]
      %v7045 = vld [vmem:[%s6253 + $0x22] sm:$0xff]
      %v7046 = vld [vmem:[%s6253 + $0x32] sm:$0xff]
      %v7047 = vld [vmem:[%s6253 + $0x3a] sm:$0xff]
      %v7048 = vld [vmem:[%s6253 + $0x4a] sm:$0xff]
      %v7049 = vld [vmem:[%s6253 + $0x52] sm:$0xff]
      %v7050 = vld [vmem:[%s6253 + $0x62] sm:$0xff]
      %v7051 = vld [vmem:[%s6253 + $0x6a] sm:$0xff]
      %v7052 = vld [vmem:[%s6253 + $0x7a] sm:$0xff]
      %v7053 = vld [vmem:[%s6253 + $0x82] sm:$0xff]
      %v7054 = vld [vmem:[%s6253 + $0x92] sm:$0xff]
      %v7055 = vld [vmem:[%s6253 + $0x9a] sm:$0xff]
      %v7056 = vld [vmem:[%s6253 + $0xaa] sm:$0xff]
      %v7057 = vld [vmem:[%s6253 + $0xb2] sm:$0xff]
      %v7058 = vld [vmem:[%s6253 + $0xc2] sm:$0xff]
      %v7059 = vld [vmem:[%s6253 + $0xca] sm:$0xff]
      %v7060 = vld [vmem:[%s6253 + $0xda] sm:$0xff]
      %v7061 = vld [vmem:[%s6253 + $0xe2] sm:$0xff]
      %v7062 = vld [vmem:[%s6253 + $0xf2] sm:$0xff]
      %v7063 = vld [vmem:[%s6253 + $0xfa] sm:$0xff]
      %v7064 = vld [vmem:[%s6253 + $0x10a] sm:$0xff]
      %v7065 = vld [vmem:[%s6253 + $0x112] sm:$0xff]
      %v7066 = vld [vmem:[%s6253 + $0x122] sm:$0xff]
      %v7067 = vld [vmem:[%s6253 + $0x12a] sm:$0xff]
      %v7068 = vld [vmem:[%s6253 + $0x13a] sm:$0xff]
      %v7069 = vld [vmem:[%s6253 + $0x142] sm:$0xff]
      %v7070 = vld [vmem:[%s6253 + $0x152] sm:$0xff]
      %v7071 = vld [vmem:[%s6253 + $0x15a] sm:$0xff]
      %v7072 = vld [vmem:[%s6253 + $0x16a] sm:$0xff]
      %v7073 = vld [vmem:[%s6253 + $0x172] sm:$0xff]
      %s7074 = scalar_lea.vmem %s3, 512
      %v7075 = vld [vmem:[%s7074] sm:$0xff]
      %v7076 = vld [vmem:[%s7074 + $0x8] sm:$0xff]
      %v7077 = vld [vmem:[%s7074 + $0x10] sm:$0xff]
      %v7078 = vld [vmem:[%s7074 + $0x18] sm:$0xff]
      %v7079 = vld [vmem:[%s7074 + $0x20] sm:$0xff]
      %v7080 = vld [vmem:[%s7074 + $0x28] sm:$0xff]
      %v7081 = vld [vmem:[%s7074 + $0x30] sm:$0xff]
      %v7082 = vld [vmem:[%s7074 + $0x38] sm:$0xff]
      %v7084 = vsel %vm3864, %v7042, 0
      %v7087 = vsel %vm3864, %v7043, 0
      %v7090 = vsel %vm3864, %v7044, 0
      %v7093 = vsel %vm3864, %v7045, 0
      %v7096 = vsel %vm3864, %v7046, 0
      %v7099 = vsel %vm3864, %v7047, 0
      %v7102 = vsel %vm3864, %v7048, 0
      %v7105 = vsel %vm3864, %v7049, 0
      %v7108 = vsel %vm3864, %v7050, 0
      %v7111 = vsel %vm3864, %v7051, 0
      %v7114 = vsel %vm3864, %v7052, 0
      %v7117 = vsel %vm3864, %v7053, 0
      %v7120 = vsel %vm3864, %v7054, 0
      %v7123 = vsel %vm3864, %v7055, 0
      %v7126 = vsel %vm3864, %v7056, 0
      %v7129 = vsel %vm3864, %v7057, 0
      %v7132 = vsel %vm3864, %v7058, 0
      %v7135 = vsel %vm3864, %v7059, 0
      %v7138 = vsel %vm3864, %v7060, 0
      %v7141 = vsel %vm3864, %v7061, 0
      %v7144 = vsel %vm3864, %v7062, 0
      %v7147 = vsel %vm3864, %v7063, 0
      %v7150 = vsel %vm3864, %v7064, 0
      %v7153 = vsel %vm3864, %v7065, 0
      %v7156 = vsel %vm3864, %v7066, 0
      %v7159 = vsel %vm3864, %v7067, 0
      %v7162 = vsel %vm3864, %v7068, 0
      %v7165 = vsel %vm3864, %v7069, 0
      %v7168 = vsel %vm3864, %v7070, 0
      %v7171 = vsel %vm3864, %v7071, 0
      %v7174 = vsel %vm3864, %v7072, 0
      %v7177 = vsel %vm3864, %v7073, 0
      %7179 = vmatprep.subr.mxu0 0.0
      %7180 = vmatpush1.msra.mxu0 %v7075
      %7181 = vmatprep.subr.mxu0 0.0
      %7182 = vmatpush1.msra.mxu0 %v7076
      %7183 = vmatprep.subr.mxu0 0.0
      %7184 = vmatpush1.msra.mxu0 %v7077
      %7185 = vmatprep.subr.mxu0 0.0
      %7186 = vmatpush1.msra.mxu0 %v7078
      %7187 = vmatprep.subr.mxu0 0.0
      %7188 = vmatpush1.msra.mxu0 %v7079
      %7189 = vmatprep.subr.mxu0 0.0
      %7190 = vmatpush1.msra.mxu0 %v7080
      %7191 = vmatprep.subr.mxu0 0.0
      %7192 = vmatpush1.msra.mxu0 %v7081
      %7193 = vmatprep.subr.mxu0 0.0
      %7194 = vmatpush1.msra.mxu0 %v7082
      %7195 = vmatprep.subr.mxu0 0.0
      %7196 = vmatpush1.msra.mxu0 0.0
      %7197 = vmatprep.subr.mxu0 0.0
      %7198 = vmatpush1.msra.mxu0 0.0
      %7199 = vmatprep.subr.mxu0 0.0
      %7200 = vmatpush1.msra.mxu0 0.0
      %7201 = vmatprep.subr.mxu0 0.0
      %7202 = vmatpush1.msra.mxu0 0.0
      %7203 = vmatprep.subr.mxu0 0.0
      %7204 = vmatpush1.msra.mxu0 0.0
      %7205 = vmatprep.subr.mxu0 0.0
      %7206 = vmatpush1.msra.mxu0 0.0
      %7207 = vmatprep.subr.mxu0 0.0
      %7208 = vmatpush1.msra.mxu0 0.0
      %7209 = vmatprep.subr.mxu0 0.0
      %7210 = vmatpush1.msra.mxu0 0.0
      %7211 = vmatprep.subr.mxu0 0.0
      %7212 = vmatpush1.msra.mxu0 0.0
      %7213 = vmatprep.subr.mxu0 0.0
      %7214 = vmatpush1.msra.mxu0 0.0
      %7215 = vmatprep.subr.mxu0 0.0
      %7216 = vmatpush1.msra.mxu0 0.0
      %7217 = vmatprep.subr.mxu0 0.0
      %7218 = vmatpush1.msra.mxu0 0.0
      %7219 = vmatprep.subr.mxu0 0.0
      %7220 = vmatpush1.msra.mxu0 0.0
      %7221 = vmatprep.subr.mxu0 0.0
      %7222 = vmatpush1.msra.mxu0 0.0
      %7223 = vmatprep.subr.mxu0 0.0
      %7224 = vmatpush1.msra.mxu0 0.0
      %7225 = vmatprep.subr.mxu0 0.0
      %7226 = vmatpush1.msra.mxu0 0.0
      %7227 = vmatprep.subr.mxu0 0.0
      %7228 = vmatpush1.msra.mxu0 0.0
      %7229 = vmatprep.subr.mxu0 0.0
      %7230 = vmatpush1.msra.mxu0 0.0
      %7231 = vmatprep.subr.mxu0 0.0
      %7232 = vmatpush1.msra.mxu0 0.0
      %7233 = vmatprep.subr.mxu0 0.0
      %7234 = vmatpush1.msra.mxu0 0.0
      %7235 = vmatprep.subr.mxu0 0.0
      %7236 = vmatpush1.msra.mxu0 0.0
      %7237 = vmatprep.subr.mxu0 0.0
      %7238 = vmatpush1.msra.mxu0 0.0
      %7239 = vmatprep.subr.mxu0 0.0
      %7240 = vmatpush1.msra.mxu0 0.0
      %7241 = vmatprep.subr.mxu0 0.0
      %7242 = vmatpush1.msra.mxu0 0.0
      %7243 = vmatprep.mubr.f32.mxu0 0.0
      %7244 = vmatmul.mubr.f32.gmra.mrb[0].mxu0 %v7084
      %v7245 = vpop.f32.mrb[0].mxu0
      %v7246 = vadd.f32 0.0, %v7245
      %v7247 = vpop.f32.mrb[0].mxu0
      %7248 = vmatprep.mubr.f32.mxu0 0.0
      %7249 = vmatmul.mubr.f32.gmra.mrb[0].mxu0 %v7087
      %v7250 = vpop.f32.mrb[0].mxu0
      %v7251 = vadd.f32 0.0, %v7250
      %v7252 = vpop.f32.mrb[0].mxu0
      %7253 = vmatprep.mubr.f32.mxu0 0.0
      %7254 = vmatmul.mubr.f32.gmra.mrb[0].mxu0 %v7090
      %v7255 = vpop.f32.mrb[0].mxu0
      %v7256 = vadd.f32 0.0, %v7255
      %v7257 = vpop.f32.mrb[0].mxu0
      %7258 = vmatprep.mubr.f32.mxu0 0.0
      %7259 = vmatmul.mubr.f32.gmra.mrb[0].mxu0 %v7093
      %v7260 = vpop.f32.mrb[0].mxu0
      %v7261 = vadd.f32 0.0, %v7260
      %v7262 = vpop.f32.mrb[0].mxu0
      %7263 = vmatprep.mubr.f32.mxu0 0.0
      %7264 = vmatmul.mubr.f32.gmra.mrb[0].mxu0 %v7096
      %v7265 = vpop.f32.mrb[0].mxu0
      %v7266 = vadd.f32 0.0, %v7265
      %v7267 = vpop.f32.mrb[0].mxu0
      %7268 = vmatprep.mubr.f32.mxu0 0.0
      %7269 = vmatmul.mubr.f32.gmra.mrb[0].mxu0 %v7099
      %v7270 = vpop.f32.mrb[0].mxu0
      %v7271 = vadd.f32 0.0, %v7270
      %v7272 = vpop.f32.mrb[0].mxu0
      %7273 = vmatprep.mubr.f32.mxu0 0.0
      %7274 = vmatmul.mubr.f32.gmra.mrb[0].mxu0 %v7102
      %v7275 = vpop.f32.mrb[0].mxu0
      %v7276 = vadd.f32 0.0, %v7275
      %v7277 = vpop.f32.mrb[0].mxu0
      %7278 = vmatprep.mubr.f32.mxu0 0.0
      %7279 = vmatmul.mubr.f32.gmra.mrb[0].mxu0 %v7105
      %v7280 = vpop.f32.mrb[0].mxu0
      %v7281 = vadd.f32 0.0, %v7280
      %v7282 = vpop.f32.mrb[0].mxu0
      %7283 = vmatprep.mubr.f32.mxu0 0.0
      %7284 = vmatmul.mubr.f32.gmra.mrb[0].mxu0 %v7108
      %v7285 = vpop.f32.mrb[0].mxu0
      %v7286 = vadd.f32 0.0, %v7285
      %v7287 = vpop.f32.mrb[0].mxu0
      %7288 = vmatprep.mubr.f32.mxu0 0.0
      %7289 = vmatmul.mubr.f32.gmra.mrb[0].mxu0 %v7111
      %v7290 = vpop.f32.mrb[0].mxu0
      %v7291 = vadd.f32 0.0, %v7290
      %v7292 = vpop.f32.mrb[0].mxu0
      %7293 = vmatprep.mubr.f32.mxu0 0.0
      %7294 = vmatmul.mubr.f32.gmra.mrb[0].mxu0 %v7114
      %v7295 = vpop.f32.mrb[0].mxu0
      %v7296 = vadd.f32 0.0, %v7295
      %v7297 = vpop.f32.mrb[0].mxu0
      %7298 = vmatprep.mubr.f32.mxu0 0.0
      %7299 = vmatmul.mubr.f32.gmra.mrb[0].mxu0 %v7117
      %v7300 = vpop.f32.mrb[0].mxu0
      %v7301 = vadd.f32 0.0, %v7300
      %v7302 = vpop.f32.mrb[0].mxu0
      %7303 = vmatprep.mubr.f32.mxu0 0.0
      %7304 = vmatmul.mubr.f32.gmra.mrb[0].mxu0 %v7120
      %v7305 = vpop.f32.mrb[0].mxu0
      %v7306 = vadd.f32 0.0, %v7305
      %v7307 = vpop.f32.mrb[0].mxu0
      %7308 = vmatprep.mubr.f32.mxu0 0.0
      %7309 = vmatmul.mubr.f32.gmra.mrb[0].mxu0 %v7123
      %v7310 = vpop.f32.mrb[0].mxu0
      %v7311 = vadd.f32 0.0, %v7310
      %v7312 = vpop.f32.mrb[0].mxu0
      %7313 = vmatprep.mubr.f32.mxu0 0.0
      %7314 = vmatmul.mubr.f32.gmra.mrb[0].mxu0 %v7126
      %v7315 = vpop.f32.mrb[0].mxu0
      %v7316 = vadd.f32 0.0, %v7315
      %v7317 = vpop.f32.mrb[0].mxu0
      %7318 = vmatprep.mubr.f32.mxu0 0.0
      %7319 = vmatmul.mubr.f32.gmra.mrb[0].mxu0 %v7129
      %v7320 = vpop.f32.mrb[0].mxu0
      %v7321 = vadd.f32 0.0, %v7320
      %v7322 = vpop.f32.mrb[0].mxu0
      %7323 = vmatprep.mubr.f32.mxu0 0.0
      %7324 = vmatmul.mubr.f32.gmra.mrb[0].mxu0 %v7132
      %v7325 = vpop.f32.mrb[0].mxu0
      %v7326 = vadd.f32 0.0, %v7325
      %v7327 = vpop.f32.mrb[0].mxu0
      %7328 = vmatprep.mubr.f32.mxu0 0.0
      %7329 = vmatmul.mubr.f32.gmra.mrb[0].mxu0 %v7135
      %v7330 = vpop.f32.mrb[0].mxu0
      %v7331 = vadd.f32 0.0, %v7330
      %v7332 = vpop.f32.mrb[0].mxu0
      %7333 = vmatprep.mubr.f32.mxu0 0.0
      %7334 = vmatmul.mubr.f32.gmra.mrb[0].mxu0 %v7138
      %v7335 = vpop.f32.mrb[0].mxu0
      %v7336 = vadd.f32 0.0, %v7335
      %v7337 = vpop.f32.mrb[0].mxu0
      %7338 = vmatprep.mubr.f32.mxu0 0.0
      %7339 = vmatmul.mubr.f32.gmra.mrb[0].mxu0 %v7141
      %v7340 = vpop.f32.mrb[0].mxu0
      %v7341 = vadd.f32 0.0, %v7340
      %v7342 = vpop.f32.mrb[0].mxu0
      %7343 = vmatprep.mubr.f32.mxu0 0.0
      %7344 = vmatmul.mubr.f32.gmra.mrb[0].mxu0 %v7144
      %v7345 = vpop.f32.mrb[0].mxu0
      %v7346 = vadd.f32 0.0, %v7345
      %v7347 = vpop.f32.mrb[0].mxu0
      %7348 = vmatprep.mubr.f32.mxu0 0.0
      %7349 = vmatmul.mubr.f32.gmra.mrb[0].mxu0 %v7147
      %v7350 = vpop.f32.mrb[0].mxu0
      %v7351 = vadd.f32 0.0, %v7350
      %v7352 = vpop.f32.mrb[0].mxu0
      %7353 = vmatprep.mubr.f32.mxu0 0.0
      %7354 = vmatmul.mubr.f32.gmra.mrb[0].mxu0 %v7150
      %v7355 = vpop.f32.mrb[0].mxu0
      %v7356 = vadd.f32 0.0, %v7355
      %v7357 = vpop.f32.mrb[0].mxu0
      %7358 = vmatprep.mubr.f32.mxu0 0.0
      %7359 = vmatmul.mubr.f32.gmra.mrb[0].mxu0 %v7153
      %v7360 = vpop.f32.mrb[0].mxu0
      %v7361 = vadd.f32 0.0, %v7360
      %v7362 = vpop.f32.mrb[0].mxu0
      %7363 = vmatprep.mubr.f32.mxu0 0.0
      %7364 = vmatmul.mubr.f32.gmra.mrb[0].mxu0 %v7156
      %v7365 = vpop.f32.mrb[0].mxu0
      %v7366 = vadd.f32 0.0, %v7365
      %v7367 = vpop.f32.mrb[0].mxu0
      %7368 = vmatprep.mubr.f32.mxu0 0.0
      %7369 = vmatmul.mubr.f32.gmra.mrb[0].mxu0 %v7159
      %v7370 = vpop.f32.mrb[0].mxu0
      %v7371 = vadd.f32 0.0, %v7370
      %v7372 = vpop.f32.mrb[0].mxu0
      %7373 = vmatprep.mubr.f32.mxu0 0.0
      %7374 = vmatmul.mubr.f32.gmra.mrb[0].mxu0 %v7162
      %v7375 = vpop.f32.mrb[0].mxu0
      %v7376 = vadd.f32 0.0, %v7375
      %v7377 = vpop.f32.mrb[0].mxu0
      %7378 = vmatprep.mubr.f32.mxu0 0.0
      %7379 = vmatmul.mubr.f32.gmra.mrb[0].mxu0 %v7165
      %v7380 = vpop.f32.mrb[0].mxu0
      %v7381 = vadd.f32 0.0, %v7380
      %v7382 = vpop.f32.mrb[0].mxu0
      %7383 = vmatprep.mubr.f32.mxu0 0.0
      %7384 = vmatmul.mubr.f32.gmra.mrb[0].mxu0 %v7168
      %v7385 = vpop.f32.mrb[0].mxu0
      %v7386 = vadd.f32 0.0, %v7385
      %v7387 = vpop.f32.mrb[0].mxu0
      %7388 = vmatprep.mubr.f32.mxu0 0.0
      %7389 = vmatmul.mubr.f32.gmra.mrb[0].mxu0 %v7171
      %v7390 = vpop.f32.mrb[0].mxu0
      %v7391 = vadd.f32 0.0, %v7390
      %v7392 = vpop.f32.mrb[0].mxu0
      %7393 = vmatprep.mubr.f32.mxu0 0.0
      %7394 = vmatmul.mubr.f32.gmra.mrb[0].mxu0 %v7174
      %v7395 = vpop.f32.mrb[0].mxu0
      %v7396 = vadd.f32 0.0, %v7395
      %v7397 = vpop.f32.mrb[0].mxu0
      %7398 = vmatprep.mubr.f32.mxu0 0.0
      %7399 = vmatmul.mubr.f32.gmra.mrb[0].mxu0 %v7177
      %v7400 = vpop.f32.mrb[0].mxu0
      %v7401 = vadd.f32 0.0, %v7400
      %v7402 = vpop.f32.mrb[0].mxu0
      %7403 = vdwg.mxu0
      %v7404 = vadd.f32 %v7010, %v7246
      %v7405 = vadd.f32 %v7011, %v7251
      %v7406 = vadd.f32 %v7012, %v7256
      %v7407 = vadd.f32 %v7013, %v7261
      %v7408 = vadd.f32 %v7014, %v7266
      %v7409 = vadd.f32 %v7015, %v7271
      %v7410 = vadd.f32 %v7016, %v7276
      %v7411 = vadd.f32 %v7017, %v7281
      %v7412 = vadd.f32 %v7018, %v7286
      %v7413 = vadd.f32 %v7019, %v7291
      %v7414 = vadd.f32 %v7020, %v7296
      %v7415 = vadd.f32 %v7021, %v7301
      %v7416 = vadd.f32 %v7022, %v7306
      %v7417 = vadd.f32 %v7023, %v7311
      %v7418 = vadd.f32 %v7024, %v7316
      %v7419 = vadd.f32 %v7025, %v7321
      %v7420 = vadd.f32 %v7026, %v7326
      %v7421 = vadd.f32 %v7027, %v7331
      %v7422 = vadd.f32 %v7028, %v7336
      %v7423 = vadd.f32 %v7029, %v7341
      %v7424 = vadd.f32 %v7030, %v7346
      %v7425 = vadd.f32 %v7031, %v7351
      %v7426 = vadd.f32 %v7032, %v7356
      %v7427 = vadd.f32 %v7033, %v7361
      %v7428 = vadd.f32 %v7034, %v7366
      %v7429 = vadd.f32 %v7035, %v7371
      %v7430 = vadd.f32 %v7036, %v7376
      %v7431 = vadd.f32 %v7037, %v7381
      %v7432 = vadd.f32 %v7038, %v7386
      %v7433 = vadd.f32 %v7039, %v7391
      %v7434 = vadd.f32 %v7040, %v7396
      %v7435 = vadd.f32 %v7041, %v7401
      %v7437 = vlaneseq
      %v7438 = vshrl.u32 %v7437, 7
      %v7439 = vsub.s32 0, %v7438
      %v7440 = vrot.slane %v3953, %v7439
      %v7442 = vadd.f32 %v7404, %v7440
      %v7443 = vadd.f32 %v7405, %v7440
      %v7444 = vadd.f32 %v7406, %v7440
      %v7445 = vadd.f32 %v7407, %v7440
      %v7446 = vadd.f32 %v7408, %v7440
      %v7447 = vadd.f32 %v7409, %v7440
      %v7448 = vadd.f32 %v7410, %v7440
      %v7449 = vadd.f32 %v7411, %v7440
      %v7450 = vadd.f32 %v7412, %v7440
      %v7451 = vadd.f32 %v7413, %v7440
      %v7452 = vadd.f32 %v7414, %v7440
      %v7453 = vadd.f32 %v7415, %v7440
      %v7454 = vadd.f32 %v7416, %v7440
      %v7455 = vadd.f32 %v7417, %v7440
      %v7456 = vadd.f32 %v7418, %v7440
      %v7457 = vadd.f32 %v7419, %v7440
      %v7458 = vadd.f32 %v7420, %v7440
      %v7459 = vadd.f32 %v7421, %v7440
      %v7460 = vadd.f32 %v7422, %v7440
      %v7461 = vadd.f32 %v7423, %v7440
      %v7462 = vadd.f32 %v7424, %v7440
      %v7463 = vadd.f32 %v7425, %v7440
      %v7464 = vadd.f32 %v7426, %v7440
      %v7465 = vadd.f32 %v7427, %v7440
      %v7466 = vadd.f32 %v7428, %v7440
      %v7467 = vadd.f32 %v7429, %v7440
      %v7468 = vadd.f32 %v7430, %v7440
      %v7469 = vadd.f32 %v7431, %v7440
      %v7470 = vadd.f32 %v7432, %v7440
      %v7471 = vadd.f32 %v7433, %v7440
      %v7472 = vadd.f32 %v7434, %v7440
      %v7473 = vadd.f32 %v7435, %v7440
      %7474 = vst.msk [vmem:[%s224] sm:$0xff] %vm225, %v7442
      %7475 = vst.msk [vmem:[%s224 + $0x8] sm:$0xff] %vm225, %v7443
      %7476 = vst.msk [vmem:[%s224 + $0x10] sm:$0xff] %vm225, %v7444
      %7477 = vst.msk [vmem:[%s224 + $0x18] sm:$0xff] %vm225, %v7445
      %7478 = vst.msk [vmem:[%s224 + $0x20] sm:$0xff] %vm225, %v7446
      %7479 = vst.msk [vmem:[%s224 + $0x28] sm:$0xff] %vm225, %v7447
      %7480 = vst.msk [vmem:[%s224 + $0x30] sm:$0xff] %vm225, %v7448
      %7481 = vst.msk [vmem:[%s224 + $0x38] sm:$0xff] %vm225, %v7449
      %7482 = vst.msk [vmem:[%s224 + $0x40] sm:$0xff] %vm225, %v7450
      %7483 = vst.msk [vmem:[%s224 + $0x48] sm:$0xff] %vm225, %v7451
      %7484 = vst.msk [vmem:[%s224 + $0x50] sm:$0xff] %vm225, %v7452
      %7485 = vst.msk [vmem:[%s224 + $0x58] sm:$0xff] %vm225, %v7453
      %7486 = vst.msk [vmem:[%s224 + $0x60] sm:$0xff] %vm225, %v7454
      %7487 = vst.msk [vmem:[%s224 + $0x68] sm:$0xff] %vm225, %v7455
      %7488 = vst.msk [vmem:[%s224 + $0x70] sm:$0xff] %vm225, %v7456
      %7489 = vst.msk [vmem:[%s224 + $0x78] sm:$0xff] %vm225, %v7457
      %7490 = vst.msk [vmem:[%s224 + $0x80] sm:$0xff] %vm225, %v7458
      %7491 = vst.msk [vmem:[%s224 + $0x88] sm:$0xff] %vm225, %v7459
      %7492 = vst.msk [vmem:[%s224 + $0x90] sm:$0xff] %vm225, %v7460
      %7493 = vst.msk [vmem:[%s224 + $0x98] sm:$0xff] %vm225, %v7461
      %7494 = vst.msk [vmem:[%s224 + $0xa0] sm:$0xff] %vm225, %v7462
      %7495 = vst.msk [vmem:[%s224 + $0xa8] sm:$0xff] %vm225, %v7463
      %7496 = vst.msk [vmem:[%s224 + $0xb0] sm:$0xff] %vm225, %v7464
      %7497 = vst.msk [vmem:[%s224 + $0xb8] sm:$0xff] %vm225, %v7465
      %7498 = vst.msk [vmem:[%s224 + $0xc0] sm:$0xff] %vm225, %v7466
      %7499 = vst.msk [vmem:[%s224 + $0xc8] sm:$0xff] %vm225, %v7467
      %7500 = vst.msk [vmem:[%s224 + $0xd0] sm:$0xff] %vm225, %v7468
      %7501 = vst.msk [vmem:[%s224 + $0xd8] sm:$0xff] %vm225, %v7469
      %7502 = vst.msk [vmem:[%s224 + $0xe0] sm:$0xff] %vm225, %v7470
      %7503 = vst.msk [vmem:[%s224 + $0xe8] sm:$0xff] %vm225, %v7471
      %7504 = vst.msk [vmem:[%s224 + $0xf0] sm:$0xff] %vm225, %v7472
      %7505 = vst.msk [vmem:[%s224 + $0xf8] sm:$0xff] %vm225, %v7473
      %p7506 = scmp.lt.s32.totalorder %s16, 1
      %s7507 = scalar_select %p7506, %s16, 1
      %s7508 = smul.addr %s7507, 32
      %s7509 = smul.addr %s7508, 8
      %s7510 = scalar_lea.vmem %s5, %s7509
      // Predicated region
      $region41: #{tpu_custom_call.1} parent=39 // pred_check
        %p7511 = pneg %p144
      $region42: #{tpu_custom_call.1} parent=39 // pred_check_branch
        %7513 = sbr.rel (%p7511) target = $region44
      $region43: #{tpu_custom_call.1} parent=39 // pred_region
        _
      $region44: #{tpu_custom_call.1} parent=39 // pred_fallthru
        _
    $region40: #{tpu_custom_call.1} parent=5 // pred_fallthru
      _
    %p7514 = scmp.le.s32.totalorder 2, %s11
    // Predicated region
    $region45: #{tpu_custom_call.1} parent=5 // pred_check
      %p7515 = pneg %p7514
    $region46: #{tpu_custom_call.1} parent=5 // pred_check_branch
      %7517 = sbr.rel (%p7515) target = $region48
    $region47: #{tpu_custom_call.1} parent=5 // pred_region
      %s7518 = ssub.s32 %s11, 2
      // Predicated region
      $region49: #{tpu_custom_call.1} parent=47 // pred_check
        %p7519 = pneg %p150
      $region50: #{tpu_custom_call.1} parent=47 // pred_check_branch
        %7521 = sbr.rel (%p7519) target = $region52
      $region51: #{tpu_custom_call.1} parent=47 // pred_region
        %p7522 = scmp.lt.s32.totalorder %s17, 1
        %s7523 = scalar_select %p7522, %s17, 1
        %s7524 = smul.addr %s7523, 32
        %s7525 = smul.addr %s7524, 8
        %s7526 = scalar_lea.vmem %s5, %s7525
      $region52: #{tpu_custom_call.1} parent=47 // pred_fallthru
        _
    $region48: #{tpu_custom_call.1} parent=5 // pred_fallthru
      _
  $region6: #{tpu_custom_call.1} parent=0 // loop_footer
    %s15 = sadd.s32 1, %s11
  $region7: #{tpu_custom_call.1} parent=0 // loop_footer_branch
    %10 = sbr.rel target = $region3
  $region8: #{tpu_custom_call.1} parent=0 // loop_exit
    _

</llo_original>
